<compile_context>
chip_gen: v7x
topology: tpu7x:2x2x1
jax: 0.10.0
libtpu: 0.0.40
codegen_flags: <defaults>
</compile_context>

<pallas_src>
import functools
import math

import jax
import jax.numpy as jnp
from jax.experimental import pallas as pl
from jax.experimental.pallas import tpu as pltpu


def _round_up(x, m):
    return (x + m - 1) // m * m


# ----------------------------------------------------------------------------
# Fused kernel: goal-CVAE + traj-net + losses  ->  6 scalars (SMEM)
# ----------------------------------------------------------------------------
def _tscnet_kernel(gt_ref, cond_ref, eps_ref, gmask_ref,
                   q_ref, kv_ref, goal_ref, smask_ref, cmask_ref,
                   sgt_ref, sgtm_ref, w_ref, o_ref,
                   *, meta, latent_dim, attn_scale, kld_weight):
    f32 = jnp.float32

    # ---- packed-weight helpers (offsets / dims are static Python ints) ----
    def dense(x, m, extra=None, split=None, relu=True):
        off, din, dout = m
        if extra is None:
            y = jnp.dot(x, w_ref[off:off + din, :dout],
                        preferred_element_type=f32)
        else:
            # Layer whose input is concat([x, extra], channel): realized as
            # two matmuls against split weight rows (no concat materialized).
            y = jnp.dot(x, w_ref[off:off + split, :dout],
                        preferred_element_type=f32)
            y = y + jnp.dot(extra, w_ref[off + split:off + din, :dout],
                            preferred_element_type=f32)
        y = y + w_ref[off + din:off + din + 1, :dout]          # bias row
        return jnp.maximum(y, 0.0) if relu else y

    def mlp(x, layers, extra=None, split=None):
        n = len(layers)
        for i, m in enumerate(layers):
            x = dense(x, m,
                      extra=extra if i == 0 else None,
                      split=split if i == 0 else None,
                      relu=i < n - 1)
        return x

    def smooth_l1_sums(gtv, maskv, predv):
        d = gtv * maskv - predv * maskv
        ad = jnp.abs(d)
        l = jnp.where(ad < 1.0, 0.5 * d * d, ad - 0.5)
        col = jax.lax.broadcasted_iota(jnp.int32, l.shape, 1)
        conf = jnp.sum(jnp.where(col == 0, l, 0.0))
        off = jnp.sum(jnp.where(col == 0, 0.0, l))
        return conf, off

    # ----------------------------- Goal CVAE -------------------------------
    gt = gt_ref[...]                      # (Ng, 3)
    cond = cond_ref[...]                  # (Ng, Dc)

    gtemb = mlp(gt, meta["gt_emb"])
    x = gtemb
    for i, m in enumerate(meta["enc_hidden"]):
        x = dense(x, m,
                  extra=cond if i == 0 else None,
                  split=gtemb.shape[-1] if i == 0 else None,
                  relu=True)
    if len(meta["enc_hidden"]) == 0:
        mu = dense(x, meta["mu"], extra=cond, split=gtemb.shape[-1], relu=False)
        log_var = dense(x, meta["lv"], extra=cond, split=gtemb.shape[-1],
                        relu=False)
    else:
        mu = dense(x, meta["mu"], relu=False)
        log_var = dense(x, meta["lv"], relu=False)

    z = eps_ref[...] * jnp.exp(0.5 * log_var) + mu
    recon = mlp(z, meta["decoder"], extra=cond, split=latent_dim)

    # Head epilogue: sigmoid on confidence channel, clamp offsets to +/-40.
    gcol = jax.lax.broadcasted_iota(jnp.int32, recon.shape, 1)
    recon = jnp.where(gcol == 0, jax.nn.sigmoid(recon),
                      jnp.clip(recon, -40.0, 40.0))

    # Goal losses (SmoothL1 on masked conf / offset channels + KLD).
    n_goal = gt.shape[0]
    n_goal_off = gt.shape[1] - 1
    rc_sum, ro_sum = smooth_l1_sums(gt, gmask_ref[...], recon)
    kld_sum = -0.5 * jnp.sum(1.0 + log_var - mu * mu - jnp.exp(log_var))

    # ------------------------------ TrajNet ---------------------------------
    q = q_ref[...]                        # (BP, Tq, D)
    kv = kv_ref[...]                      # (BP, Tk, D)
    bp, tq, d_attn = q.shape

    def attn(qq, kk, vv, mask):
        s = jnp.einsum("bqd,bkd->bqk", qq, kk,
                       preferred_element_type=f32) * attn_scale + mask
        s = s - jnp.max(s, axis=-1, keepdims=True)
        p = jnp.exp(s)
        p = p / jnp.sum(p, axis=-1, keepdims=True)       # exact softmax
        return jnp.einsum("bqk,bkd->bqd", p, vv, preferred_element_type=f32)

    # TODO(synk): StepDecoder stand-in (single-head residual self+cross attn).
    h = q + attn(q, q, q, smask_ref[...])
    h = h + attn(h, kv, kv, cmask_ref[...])

    # Prediction MLP on the flattened (BP*Tq, D) token matrix; first layer
    # consumes concat([attn, goal.repeat(Tq)]) via split weights, with the goal
    # contribution computed once per (b, p) and broadcast-added.
    pred_meta = meta["pred"]
    h2 = h.reshape(bp * tq, d_attn)
    off0, din0, dout0 = pred_meta[0]
    x = jnp.dot(h2, w_ref[off0:off0 + d_attn, :dout0],
                preferred_element_type=f32)
    gcontrib = jnp.dot(goal_ref[...], w_ref[off0 + d_attn:off0 + din0, :dout0],
                       preferred_element_type=f32)       # (BP, dout0)
    x = x + jnp.broadcast_to(gcontrib[:, None, :],
                             (bp, tq, dout0)).reshape(bp * tq, dout0)
    x = x + w_ref[off0 + din0:off0 + din0 + 1, :dout0]
    if len(pred_meta) > 1:
        x = jnp.maximum(x, 0.0)
    for i in range(1, len(pred_meta)):
        x = dense(x, pred_meta[i], relu=i < len(pred_meta) - 1)

    # Head epilogue: sigmoid on confidence channel only (no clamp).
    scol = jax.lax.broadcasted_iota(jnp.int32, x.shape, 1)
    step_pred = jnp.where(scol == 0, jax.nn.sigmoid(x), x)

    sgt = sgt_ref[...]                    # (Ns, 3)
    n_step = sgt.shape[0]
    n_step_off = sgt.shape[1] - 1
    tc_sum, to_sum = smooth_l1_sums(sgt, sgtm_ref[...], step_pred)

    # --------------------------- reduce + store -----------------------------
    rc = rc_sum / n_goal
    ro = ro_sum / (n_goal * n_goal_off)
    kldw = kld_weight * (kld_sum / n_goal)   # sum over latent, mean over tokens
    tc = tc_sum / n_step
    to = to_sum / (n_step * n_step_off)
    o_ref[0, 0] = rc + ro + kldw + tc + to
    o_ref[0, 1] = rc
    o_ref[0, 2] = ro
    o_ref[0, 3] = kldw
    o_ref[0, 4] = tc
    o_ref[0, 5] = to


# ----------------------------------------------------------------------------
# Weight packing: all MLP layers into one padded f32 slab (bias = extra row)
# ----------------------------------------------------------------------------
def _pack_weight_slab(layer_lists):
    """metas[k][i] = (row_offset, in_dim, out_dim); each block 8-row aligned."""
    max_out = max(int(w.shape[1]) for wbs in layer_lists for (w, _) in wbs)
    blocks, metas, rows = [], [], 0
    for wbs in layer_lists:
        meta = []
        for (w, b) in wbs:
            din, dout = int(w.shape[0]), int(w.shape[1])
            blk_rows = _round_up(din + 1, 8)
            blk = jnp.zeros((blk_rows, max_out), jnp.float32)
            blk = blk.at[:din, :dout].set(w.astype(jnp.float32))
            blk = blk.at[din, :dout].set(b.astype(jnp.float32).reshape(dout))
            blocks.append(blk)
            meta.append((rows, din, dout))
            rows += blk_rows
        metas.append(tuple(meta))
    return jnp.concatenate(blocks, axis=0), metas


# ----------------------------------------------------------------------------
# Glue
# ----------------------------------------------------------------------------
def _nchw_to_tokens(x):
    """(B, C, ...) -> (B * prod(...), C) channels-last token matrix."""
    c = x.shape[1]
    perm = (0,) + tuple(range(2, x.ndim)) + (1,)
    return jnp.transpose(x, perm).reshape(-1, c).astype(jnp.float32)


def tscnet_train_by_gt(params, batch, eps, kld_weight, obs, latent_dim):
    # TODO(synk): FeatureBuilding not provided; its outputs (anchor_goal_attn,
    # anchor_step_feat, cell_attn, cell_goal_feat, attention masks) are taken
    # as precomputed inputs in `batch`.
    gt = _nchw_to_tokens(batch["anchor_goal_gt"])           # (Ng, 3)
    cond = _nchw_to_tokens(batch["anchor_goal_attn"])       # (Ng, Dc)
    eps_t = _nchw_to_tokens(eps)                            # (Ng, L)
    gmask = _nchw_to_tokens(batch["anchor_goal_gtmask"])    # (Ng, 3)

    feat = batch["anchor_step_feat"]                        # (B, D, P, F, NCELL)
    nb, nd, np_, nf, nc = feat.shape
    tq, bp = nf * nc, nb * np_
    q = jnp.transpose(feat.reshape(nb, nd, np_, tq), (0, 2, 3, 1))
    q = q.reshape(bp, tq, nd).astype(jnp.float32)
    kv = batch["cell_attn"][:, :, :, :-1]
    tk = kv.shape[-1]
    kv = jnp.transpose(kv, (0, 2, 3, 1)).reshape(bp, tk, nd).astype(jnp.float32)
    goal = jnp.transpose(batch["cell_goal_feat"], (0, 2, 3, 1))
    goal = goal.reshape(bp, -1).astype(jnp.float32)         # (BP, Dg)

    sgt = _nchw_to_tokens(batch["anchor_step_gt"][:, :, :, obs:, :])
    sgm = _nchw_to_tokens(batch["anchor_step_gtmask"][:, :, :, obs:, :])

    gp, tp = params["goal"], params["traj"]
    enc = gp["encoder"]
    w_last, b_last = enc[-1]
    layer_lists = [
        gp["gt_emb"],
        list(enc[:-1]),
        [(w_last[:, :latent_dim], b_last[:latent_dim])],    # W_mu head
        [(w_last[:, latent_dim:], b_last[latent_dim:])],    # W_logvar head
        gp["decoder"],
        tp["prediction"],
    ]
    slab, metas = _pack_weight_slab(layer_lists)
    meta = {"gt_emb": metas[0], "enc_hidden": metas[1], "mu": metas[2][0],
            "lv": metas[3][0], "decoder": metas[4], "pred": metas[5]}

    kernel = functools.partial(
        _tscnet_kernel, meta=meta, latent_dim=int(latent_dim),
        attn_scale=1.0 / math.sqrt(nd), kld_weight=float(kld_weight))

    # Toy sizes: everything fits comfortably in VMEM as whole-array blocks.
    # TODO(synk): at production batch sizes, switch to a token-blocked grid
    # with an accumulator so the loss inputs are not whole-array VMEM blocks.
    vmem = pl.BlockSpec(memory_space=pltpu.MemorySpace.VMEM)
    out = pl.pallas_call(
        kernel,
        out_shape=jax.ShapeDtypeStruct((1, 6), jnp.float32),
        in_specs=[vmem] * 12,
        out_specs=pl.BlockSpec(memory_space=pltpu.MemorySpace.SMEM),
        compiler_params=pltpu.CompilerParams(vmem_limit_bytes=32 * 1024 * 1024),
    )(gt, cond, eps_t, gmask, q, kv, goal,
      batch["self_attn_mask"].astype(jnp.float32),
      batch["cross_attn_mask"].astype(jnp.float32),
      sgt, sgm, slab)

    loss, rc, ro, kldw, tc, to_ = (out[0, 0], out[0, 1], out[0, 2],
                                   out[0, 3], out[0, 4], out[0, 5])
    # TODO(synk): goal_fde / min_ade / min_fde need FeatureBuilding coordinate
    # conversions (cnovert_anchor_*_pred_to_traj_training); returning zeros.
    zero = jnp.float32(0.0)
    return loss, rc, ro, kldw, tc, to_, zero, zero, zero


# ----------------------------------------------------------------------------
# Parameter init (assumed 1x1-conv MLP weights)
# ----------------------------------------------------------------------------
def init_mlp(key, dims):
    params = []
    for i in range(len(dims) - 1):
        key, k1, k2 = jax.random.split(key, 3)
        w = jax.random.normal(k1, (dims[i], dims[i + 1]),
                              jnp.float32) / math.sqrt(dims[i])
        b = 0.01 * jax.random.normal(k2, (dims[i + 1],), jnp.float32)
        params.append((w, b))
    return params, key


# ----------------------------------------------------------------------------
# Driver
# ----------------------------------------------------------------------------
if __name__ == "__main__":
    B, P, NCELL = 2, 4, 8
    OBS, FUTURE = 8, 4
    CLIP = OBS + FUTURE
    COND_DIM, LATENT, GT_C = 32, 8, 3
    STEP_D, GOAL_FEAT_D = 32, 16
    KLD_WEIGHT = 0.1
    TQ = FUTURE * NCELL
    TK = CLIP - 1

    root = jax.random.PRNGKey(0)
    pkey, dkey = jax.random.split(root)

    gt_emb, pkey = init_mlp(pkey, [GT_C, 16, 16])
    enc, pkey = init_mlp(pkey, [16 + COND_DIM, 32, 2 * LATENT])
    dec, pkey = init_mlp(pkey, [LATENT + COND_DIM, 32, GT_C])
    pred, pkey = init_mlp(pkey, [STEP_D + GOAL_FEAT_D, 32, GT_C])
    params = {
        "goal": {"gt_emb": gt_emb, "encoder": enc, "decoder": dec},
        "traj": {"prediction": pred},
    }

    ks = jax.random.split(dkey, 10)
    batch = {
        "anchor_goal_attn": jax.random.normal(ks[0], (B, COND_DIM, P, NCELL)),
        "anchor_goal_gt": jax.random.normal(ks[1], (B, GT_C, P, NCELL)),
        "anchor_goal_gtmask": (
            jax.random.uniform(ks[2], (B, GT_C, P, NCELL)) > 0.5
        ).astype(jnp.float32),
        "anchor_step_feat": jax.random.normal(ks[3], (B, STEP_D, P, FUTURE, NCELL)),
        "cell_attn": jax.random.normal(ks[4], (B, STEP_D, P, CLIP)),
        "cell_goal_feat": jax.random.normal(ks[5], (B, GOAL_FEAT_D, P, 1)),
        "anchor_step_gt": jax.random.normal(ks[6], (B, GT_C, P, CLIP, NCELL)),
        "anchor_step_gtmask": (
            jax.random.uniform(ks[7], (B, GT_C, P, CLIP, NCELL)) > 0.5
        ).astype(jnp.float32),
        # TODO(synk): build_traj_net_training_mask not provided; zero masks.
        "self_attn_mask": jnp.zeros((TQ, TQ), jnp.float32),
        "cross_attn_mask": jnp.zeros((TQ, TK), jnp.float32),
    }
    eps = jax.random.normal(ks[8], (B, LATENT, P, NCELL))   # reparameterize noise

    fwd = jax.jit(
        functools.partial(
            tscnet_train_by_gt, kld_weight=KLD_WEIGHT, obs=OBS, latent_dim=LATENT
        )
    )
    outs = jax.block_until_ready(fwd(params, batch, eps))
    assert all(math.isfinite(float(v)) for v in outs), "non-finite output"
    print("KERNEL_OK")
</pallas_src>

<mosaic_0001>
module attributes {stable_mosaic.version = 11 : i64} {
  func.func @_tscnet_kernel(%arg0: memref<64x3xf32, #tpu.memory_space<vmem>>, %arg1: memref<64x32xf32, #tpu.memory_space<vmem>>, %arg2: memref<64x8xf32, #tpu.memory_space<vmem>>, %arg3: memref<64x3xf32, #tpu.memory_space<vmem>>, %arg4: memref<8x32x32xf32, #tpu.memory_space<vmem>>, %arg5: memref<8x11x32xf32, #tpu.memory_space<vmem>>, %arg6: memref<8x16xf32, #tpu.memory_space<vmem>>, %arg7: memref<32x32xf32, #tpu.memory_space<vmem>>, %arg8: memref<32x11xf32, #tpu.memory_space<vmem>>, %arg9: memref<256x3xf32, #tpu.memory_space<vmem>>, %arg10: memref<256x3xf32, #tpu.memory_space<vmem>>, %arg11: memref<352x32xf32, #tpu.memory_space<vmem>>, %arg12: memref<1x6xf32, #tpu.memory_space<smem>>) attributes {dimension_semantics = [], scalar_prefetch = 0 : i64, scratch_operands = 0 : i64, tpu.core_type = #tpu.core_type<tc>} {
    %c0 = arith.constant 0 : index
    %c0_0 = arith.constant 0 : index
    %0 = vector.load %arg0[%c0, %c0_0] : memref<64x3xf32, #tpu.memory_space<vmem>>, vector<64x3xf32>
    %c0_1 = arith.constant 0 : index
    %c0_2 = arith.constant 0 : index
    %1 = vector.load %arg1[%c0_1, %c0_2] : memref<64x32xf32, #tpu.memory_space<vmem>>, vector<64x32xf32>
    %c0_3 = arith.constant 0 : index
    %c0_4 = arith.constant 0 : index
    %2 = vector.load %arg11[%c0_3, %c0_4] : memref<352x32xf32, #tpu.memory_space<vmem>>, vector<3x16xf32>
    %cst = arith.constant dense<0.000000e+00> : vector<64x16xf32>
    %3 = tpu.matmul %0, %2, %cst {dimension_numbers = #tpu.dot_dimension_numbers<[1], [0], [0], [1], [0, 0, 1, 1], [], []>} : vector<64x3xf32>, vector<3x16xf32>, vector<64x16xf32> -> vector<64x16xf32>
    %c3 = arith.constant 3 : index
    %c0_5 = arith.constant 0 : index
    %4 = vector.load %arg11[%c3, %c0_5] : memref<352x32xf32, #tpu.memory_space<vmem>>, vector<1x16xf32>
    %5 = vector.broadcast %4 : vector<1x16xf32> to vector<64x16xf32>
    %6 = arith.addf %3, %5 : vector<64x16xf32>
    %cst_6 = arith.constant 0.000000e+00 : f32
    %7 = vector.broadcast %cst_6 : f32 to vector<64x16xf32>
    %8 = arith.maximumf %6, %7 : vector<64x16xf32>
    %c8 = arith.constant 8 : index
    %c0_7 = arith.constant 0 : index
    %9 = vector.load %arg11[%c8, %c0_7] : memref<352x32xf32, #tpu.memory_space<vmem>>, vector<16x16xf32>
    %cst_8 = arith.constant dense<0.000000e+00> : vector<64x16xf32>
    %10 = tpu.matmul %8, %9, %cst_8 {dimension_numbers = #tpu.dot_dimension_numbers<[1], [0], [0], [1], [0, 0, 1, 1], [], []>} : vector<64x16xf32>, vector<16x16xf32>, vector<64x16xf32> -> vector<64x16xf32>
    %c24 = arith.constant 24 : index
    %c0_9 = arith.constant 0 : index
    %11 = vector.load %arg11[%c24, %c0_9] : memref<352x32xf32, #tpu.memory_space<vmem>>, vector<1x16xf32>
    %12 = vector.broadcast %11 : vector<1x16xf32> to vector<64x16xf32>
    %13 = arith.addf %10, %12 : vector<64x16xf32>
    %c32 = arith.constant 32 : index
    %c0_10 = arith.constant 0 : index
    %14 = vector.load %arg11[%c32, %c0_10] : memref<352x32xf32, #tpu.memory_space<vmem>>, vector<16x32xf32>
    %cst_11 = arith.constant dense<0.000000e+00> : vector<64x32xf32>
    %15 = tpu.matmul %13, %14, %cst_11 {dimension_numbers = #tpu.dot_dimension_numbers<[1], [0], [0], [1], [0, 0, 1, 1], [], []>} : vector<64x16xf32>, vector<16x32xf32>, vector<64x32xf32> -> vector<64x32xf32>
    %c48 = arith.constant 48 : index
    %c0_12 = arith.constant 0 : index
    %16 = vector.load %arg11[%c48, %c0_12] : memref<352x32xf32, #tpu.memory_space<vmem>>, vector<32x32xf32>
    %cst_13 = arith.constant dense<0.000000e+00> : vector<64x32xf32>
    %17 = tpu.matmul %1, %16, %cst_13 {dimension_numbers = #tpu.dot_dimension_numbers<[1], [0], [0], [1], [0, 0, 1, 1], [], []>} : vector<64x32xf32>, vector<32x32xf32>, vector<64x32xf32> -> vector<64x32xf32>
    %18 = arith.addf %15, %17 : vector<64x32xf32>
    %c80 = arith.constant 80 : index
    %c0_14 = arith.constant 0 : index
    %19 = vector.load %arg11[%c80, %c0_14] : memref<352x32xf32, #tpu.memory_space<vmem>>, vector<1x32xf32>
    %20 = vector.broadcast %19 : vector<1x32xf32> to vector<64x32xf32>
    %21 = arith.addf %18, %20 : vector<64x32xf32>
    %cst_15 = arith.constant 0.000000e+00 : f32
    %22 = vector.broadcast %cst_15 : f32 to vector<64x32xf32>
    %23 = arith.maximumf %21, %22 : vector<64x32xf32>
    %c88 = arith.constant 88 : index
    %c0_16 = arith.constant 0 : index
    %24 = vector.load %arg11[%c88, %c0_16] : memref<352x32xf32, #tpu.memory_space<vmem>>, vector<32x8xf32>
    %cst_17 = arith.constant dense<0.000000e+00> : vector<64x8xf32>
    %25 = tpu.matmul %23, %24, %cst_17 {dimension_numbers = #tpu.dot_dimension_numbers<[1], [0], [0], [1], [0, 0, 1, 1], [], []>} : vector<64x32xf32>, vector<32x8xf32>, vector<64x8xf32> -> vector<64x8xf32>
    %c120 = arith.constant 120 : index
    %c0_18 = arith.constant 0 : index
    %26 = vector.load %arg11[%c120, %c0_18] : memref<352x32xf32, #tpu.memory_space<vmem>>, vector<1x8xf32>
    %27 = vector.broadcast %26 : vector<1x8xf32> to vector<64x8xf32>
    %28 = arith.addf %25, %27 : vector<64x8xf32>
    %c128 = arith.constant 128 : index
    %c0_19 = arith.constant 0 : index
    %29 = vector.load %arg11[%c128, %c0_19] : memref<352x32xf32, #tpu.memory_space<vmem>>, vector<32x8xf32>
    %cst_20 = arith.constant dense<0.000000e+00> : vector<64x8xf32>
    %30 = tpu.matmul %23, %29, %cst_20 {dimension_numbers = #tpu.dot_dimension_numbers<[1], [0], [0], [1], [0, 0, 1, 1], [], []>} : vector<64x32xf32>, vector<32x8xf32>, vector<64x8xf32> -> vector<64x8xf32>
    %c160 = arith.constant 160 : index
    %c0_21 = arith.constant 0 : index
    %31 = vector.load %arg11[%c160, %c0_21] : memref<352x32xf32, #tpu.memory_space<vmem>>, vector<1x8xf32>
    %32 = vector.broadcast %31 : vector<1x8xf32> to vector<64x8xf32>
    %33 = arith.addf %30, %32 : vector<64x8xf32>
    %c0_22 = arith.constant 0 : index
    %c0_23 = arith.constant 0 : index
    %34 = vector.load %arg2[%c0_22, %c0_23] : memref<64x8xf32, #tpu.memory_space<vmem>>, vector<64x8xf32>
    %cst_24 = arith.constant 5.000000e-01 : f32
    %35 = vector.broadcast %cst_24 : f32 to vector<64x8xf32>
    %36 = arith.mulf %35, %33 : vector<64x8xf32>
    %37 = math.exp %36 : vector<64x8xf32>
    %38 = arith.mulf %34, %37 : vector<64x8xf32>
    %39 = arith.addf %38, %28 : vector<64x8xf32>
    %c168 = arith.constant 168 : index
    %c0_25 = arith.constant 0 : index
    %40 = vector.load %arg11[%c168, %c0_25] : memref<352x32xf32, #tpu.memory_space<vmem>>, vector<8x32xf32>
    %cst_26 = arith.constant dense<0.000000e+00> : vector<64x32xf32>
    %41 = tpu.matmul %39, %40, %cst_26 {dimension_numbers = #tpu.dot_dimension_numbers<[1], [0], [0], [1], [0, 0, 1, 1], [], []>} : vector<64x8xf32>, vector<8x32xf32>, vector<64x32xf32> -> vector<64x32xf32>
    %c176 = arith.constant 176 : index
    %c0_27 = arith.constant 0 : index
    %42 = vector.load %arg11[%c176, %c0_27] : memref<352x32xf32, #tpu.memory_space<vmem>>, vector<32x32xf32>
    %cst_28 = arith.constant dense<0.000000e+00> : vector<64x32xf32>
    %43 = tpu.matmul %1, %42, %cst_28 {dimension_numbers = #tpu.dot_dimension_numbers<[1], [0], [0], [1], [0, 0, 1, 1], [], []>} : vector<64x32xf32>, vector<32x32xf32>, vector<64x32xf32> -> vector<64x32xf32>
    %44 = arith.addf %41, %43 : vector<64x32xf32>
    %c208 = arith.constant 208 : index
    %c0_29 = arith.constant 0 : index
    %45 = vector.load %arg11[%c208, %c0_29] : memref<352x32xf32, #tpu.memory_space<vmem>>, vector<1x32xf32>
    %46 = vector.broadcast %45 : vector<1x32xf32> to vector<64x32xf32>
    %47 = arith.addf %44, %46 : vector<64x32xf32>
    %cst_30 = arith.constant 0.000000e+00 : f32
    %48 = vector.broadcast %cst_30 : f32 to vector<64x32xf32>
    %49 = arith.maximumf %47, %48 : vector<64x32xf32>
    %c216 = arith.constant 216 : index
    %c0_31 = arith.constant 0 : index
    %50 = vector.load %arg11[%c216, %c0_31] : memref<352x32xf32, #tpu.memory_space<vmem>>, vector<32x3xf32>
    %cst_32 = arith.constant dense<0.000000e+00> : vector<64x3xf32>
    %51 = tpu.matmul %49, %50, %cst_32 {dimension_numbers = #tpu.dot_dimension_numbers<[1], [0], [0], [1], [0, 0, 1, 1], [], []>} : vector<64x32xf32>, vector<32x3xf32>, vector<64x3xf32> -> vector<64x3xf32>
    %c248 = arith.constant 248 : index
    %c0_33 = arith.constant 0 : index
    %52 = vector.load %arg11[%c248, %c0_33] : memref<352x32xf32, #tpu.memory_space<vmem>>, vector<1x3xf32>
    %53 = vector.broadcast %52 : vector<1x3xf32> to vector<64x3xf32>
    %54 = arith.addf %51, %53 : vector<64x3xf32>
    %55 = tpu.iota {dimensions = array<i32: 1>} : vector<64x3xi32>
    %c0_i32 = arith.constant 0 : i32
    %56 = vector.broadcast %c0_i32 : i32 to vector<64x3xi32>
    %57 = arith.cmpi eq, %55, %56 : vector<64x3xi32>
    %58 = arith.negf %54 : vector<64x3xf32>
    %59 = math.exp %58 : vector<64x3xf32>
    %cst_34 = arith.constant 1.000000e+00 : f32
    %60 = vector.broadcast %cst_34 : f32 to vector<64x3xf32>
    %61 = arith.addf %60, %59 : vector<64x3xf32>
    %62 = arith.divf %60, %61 : vector<64x3xf32>
    %cst_35 = arith.constant -4.000000e+01 : f32
    %cst_36 = arith.constant 4.000000e+01 : f32
    %63 = vector.broadcast %cst_35 : f32 to vector<64x3xf32>
    %64 = arith.maximumf %63, %54 : vector<64x3xf32>
    %65 = vector.broadcast %cst_36 : f32 to vector<64x3xf32>
    %66 = arith.minimumf %65, %64 : vector<64x3xf32>
    %67 = arith.select %57, %62, %66 : vector<64x3xi1>, vector<64x3xf32>
    %c0_37 = arith.constant 0 : index
    %c0_38 = arith.constant 0 : index
    %68 = vector.load %arg3[%c0_37, %c0_38] : memref<64x3xf32, #tpu.memory_space<vmem>>, vector<64x3xf32>
    %69 = arith.mulf %0, %68 : vector<64x3xf32>
    %70 = arith.mulf %67, %68 : vector<64x3xf32>
    %71 = arith.subf %69, %70 : vector<64x3xf32>
    %72 = math.absf %71 : vector<64x3xf32>
    %cst_39 = arith.constant 1.000000e+00 : f32
    %73 = vector.broadcast %cst_39 : f32 to vector<64x3xf32>
    %74 = arith.cmpf olt, %72, %73 : vector<64x3xf32>
    %cst_40 = arith.constant 5.000000e-01 : f32
    %75 = vector.broadcast %cst_40 : f32 to vector<64x3xf32>
    %76 = arith.mulf %75, %71 : vector<64x3xf32>
    %77 = arith.mulf %76, %71 : vector<64x3xf32>
    %cst_41 = arith.constant 5.000000e-01 : f32
    %78 = vector.broadcast %cst_41 : f32 to vector<64x3xf32>
    %79 = arith.subf %72, %78 : vector<64x3xf32>
    %80 = arith.select %74, %77, %79 : vector<64x3xi1>, vector<64x3xf32>
    %81 = tpu.iota {dimensions = array<i32: 1>} : vector<64x3xi32>
    %c0_i32_42 = arith.constant 0 : i32
    %82 = vector.broadcast %c0_i32_42 : i32 to vector<64x3xi32>
    %83 = arith.cmpi eq, %81, %82 : vector<64x3xi32>
    %cst_43 = arith.constant 0.000000e+00 : f32
    %84 = vector.broadcast %cst_43 : f32 to vector<64x3xf32>
    %85 = arith.select %83, %80, %84 : vector<64x3xi1>, vector<64x3xf32>
    %86 = vector.shape_cast %85 : vector<64x3xf32> to vector<1x64x3xf32>
    %cst_44 = arith.constant dense<0.000000e+00> : vector<1xf32>
    %87 = vector.multi_reduction <add>, %86, %cst_44 [1, 2] : vector<1x64x3xf32> to vector<1xf32>
    %88 = vector.shape_cast %87 : vector<1xf32> to vector<1x1x1xf32>
    %89 = vector.extract %88[0, 0, 0] : f32 from vector<1x1x1xf32>
    %c0_i32_45 = arith.constant 0 : i32
    %90 = vector.broadcast %c0_i32_45 : i32 to vector<64x3xi32>
    %91 = arith.cmpi eq, %81, %90 : vector<64x3xi32>
    %cst_46 = arith.constant 0.000000e+00 : f32
    %92 = vector.broadcast %cst_46 : f32 to vector<64x3xf32>
    %93 = arith.select %91, %92, %80 : vector<64x3xi1>, vector<64x3xf32>
    %94 = vector.shape_cast %93 : vector<64x3xf32> to vector<1x64x3xf32>
    %cst_47 = arith.constant dense<0.000000e+00> : vector<1xf32>
    %95 = vector.multi_reduction <add>, %94, %cst_47 [1, 2] : vector<1x64x3xf32> to vector<1xf32>
    %96 = vector.shape_cast %95 : vector<1xf32> to vector<1x1x1xf32>
    %97 = vector.extract %96[0, 0, 0] : f32 from vector<1x1x1xf32>
    %cst_48 = arith.constant 1.000000e+00 : f32
    %98 = vector.broadcast %cst_48 : f32 to vector<64x8xf32>
    %99 = arith.addf %98, %33 : vector<64x8xf32>
    %100 = arith.mulf %28, %28 : vector<64x8xf32>
    %101 = arith.subf %99, %100 : vector<64x8xf32>
    %102 = math.exp %33 : vector<64x8xf32>
    %103 = arith.subf %101, %102 : vector<64x8xf32>
    %104 = vector.shape_cast %103 : vector<64x8xf32> to vector<1x64x8xf32>
    %cst_49 = arith.constant dense<0.000000e+00> : vector<1xf32>
    %105 = vector.multi_reduction <add>, %104, %cst_49 [1, 2] : vector<1x64x8xf32> to vector<1xf32>
    %106 = vector.shape_cast %105 : vector<1xf32> to vector<1x1x1xf32>
    %107 = vector.extract %106[0, 0, 0] : f32 from vector<1x1x1xf32>
    %cst_50 = arith.constant -5.000000e-01 : f32
    %108 = arith.mulf %cst_50, %107 : f32
    %c0_51 = arith.constant 0 : index
    %c0_52 = arith.constant 0 : index
    %c0_53 = arith.constant 0 : index
    %109 = vector.load %arg4[%c0_51, %c0_52, %c0_53] : memref<8x32x32xf32, #tpu.memory_space<vmem>>, vector<8x32x32xf32>
    %c0_54 = arith.constant 0 : index
    %c0_55 = arith.constant 0 : index
    %c0_56 = arith.constant 0 : index
    %110 = vector.load %arg5[%c0_54, %c0_55, %c0_56] : memref<8x11x32xf32, #tpu.memory_space<vmem>>, vector<8x11x32xf32>
    %c0_57 = arith.constant 0 : index
    %c0_58 = arith.constant 0 : index
    %111 = vector.load %arg7[%c0_57, %c0_58] : memref<32x32xf32, #tpu.memory_space<vmem>>, vector<32x32xf32>
    "tpu.trace_start"() <{level = 10 : i32, message = "bqd,bkd->bqk"}> : () -> ()
    %cst_59 = arith.constant dense<0.000000e+00> : vector<8x32x32xf32>
    %112 = tpu.matmul %109, %109, %cst_59 {dimension_numbers = #tpu.dot_dimension_numbers<[2], [2], [1], [1], [0, 0, 0, 1, 1, 1], [0], [0]>} : vector<8x32x32xf32>, vector<8x32x32xf32>, vector<8x32x32xf32> -> vector<8x32x32xf32>
    "tpu.trace_stop"() : () -> ()
    %cst_60 = arith.constant 0.176776692 : f32
    %113 = vector.broadcast %cst_60 : f32 to vector<8x32x32xf32>
    %114 = arith.mulf %112, %113 : vector<8x32x32xf32>
    %115 = vector.shape_cast %111 : vector<32x32xf32> to vector<1x32x32xf32>
    %116 = vector.broadcast %115 : vector<1x32x32xf32> to vector<8x32x32xf32>
    %117 = arith.addf %114, %116 : vector<8x32x32xf32>
    %cst_61 = arith.constant dense<0xFF800000> : vector<8x32xf32>
    %118 = vector.multi_reduction <maximumf>, %117, %cst_61 [2] : vector<8x32x32xf32> to vector<8x32xf32>
    %119 = vector.shape_cast %118 : vector<8x32xf32> to vector<8x32x1xf32>
    %120 = vector.broadcast %119 : vector<8x32x1xf32> to vector<8x32x32xf32>
    %121 = arith.subf %117, %120 : vector<8x32x32xf32>
    %122 = math.exp %121 : vector<8x32x32xf32>
    %cst_62 = arith.constant dense<0.000000e+00> : vector<8x32xf32>
    %123 = vector.multi_reduction <add>, %122, %cst_62 [2] : vector<8x32x32xf32> to vector<8x32xf32>
    %124 = vector.shape_cast %123 : vector<8x32xf32> to vector<8x32x1xf32>
    %125 = vector.broadcast %124 : vector<8x32x1xf32> to vector<8x32x32xf32>
    %126 = arith.divf %122, %125 : vector<8x32x32xf32>
    "tpu.trace_start"() <{level = 10 : i32, message = "bqk,bkd->bqd"}> : () -> ()
    %cst_63 = arith.constant dense<0.000000e+00> : vector<8x32x32xf32>
    %127 = tpu.matmul %126, %109, %cst_63 {dimension_numbers = #tpu.dot_dimension_numbers<[2], [1], [1], [2], [0, 0, 0, 1, 1, 2], [0], [0]>} : vector<8x32x32xf32>, vector<8x32x32xf32>, vector<8x32x32xf32> -> vector<8x32x32xf32>
    "tpu.trace_stop"() : () -> ()
    %128 = arith.addf %109, %127 : vector<8x32x32xf32>
    %c0_64 = arith.constant 0 : index
    %c0_65 = arith.constant 0 : index
    %129 = vector.load %arg8[%c0_64, %c0_65] : memref<32x11xf32, #tpu.memory_space<vmem>>, vector<32x11xf32>
    "tpu.trace_start"() <{level = 10 : i32, message = "bqd,bkd->bqk"}> : () -> ()
    %cst_66 = arith.constant dense<0.000000e+00> : vector<8x32x11xf32>
    %130 = tpu.matmul %128, %110, %cst_66 {dimension_numbers = #tpu.dot_dimension_numbers<[2], [2], [1], [1], [0, 0, 0, 1, 1, 1], [0], [0]>} : vector<8x32x32xf32>, vector<8x11x32xf32>, vector<8x32x11xf32> -> vector<8x32x11xf32>
    "tpu.trace_stop"() : () -> ()
    %cst_67 = arith.constant 0.176776692 : f32
    %131 = vector.broadcast %cst_67 : f32 to vector<8x32x11xf32>
    %132 = arith.mulf %130, %131 : vector<8x32x11xf32>
    %133 = vector.shape_cast %129 : vector<32x11xf32> to vector<1x32x11xf32>
    %134 = vector.broadcast %133 : vector<1x32x11xf32> to vector<8x32x11xf32>
    %135 = arith.addf %132, %134 : vector<8x32x11xf32>
    %cst_68 = arith.constant dense<0xFF800000> : vector<8x32xf32>
    %136 = vector.multi_reduction <maximumf>, %135, %cst_68 [2] : vector<8x32x11xf32> to vector<8x32xf32>
    %137 = vector.shape_cast %136 : vector<8x32xf32> to vector<8x32x1xf32>
    %138 = vector.broadcast %137 : vector<8x32x1xf32> to vector<8x32x11xf32>
    %139 = arith.subf %135, %138 : vector<8x32x11xf32>
    %140 = math.exp %139 : vector<8x32x11xf32>
    %cst_69 = arith.constant dense<0.000000e+00> : vector<8x32xf32>
    %141 = vector.multi_reduction <add>, %140, %cst_69 [2] : vector<8x32x11xf32> to vector<8x32xf32>
    %142 = vector.shape_cast %141 : vector<8x32xf32> to vector<8x32x1xf32>
    %143 = vector.broadcast %142 : vector<8x32x1xf32> to vector<8x32x11xf32>
    %144 = arith.divf %140, %143 : vector<8x32x11xf32>
    "tpu.trace_start"() <{level = 10 : i32, message = "bqk,bkd->bqd"}> : () -> ()
    %cst_70 = arith.constant dense<0.000000e+00> : vector<8x32x32xf32>
    %145 = tpu.matmul %144, %110, %cst_70 {dimension_numbers = #tpu.dot_dimension_numbers<[2], [1], [1], [2], [0, 0, 0, 1, 1, 2], [0], [0]>} : vector<8x32x11xf32>, vector<8x11x32xf32>, vector<8x32x32xf32> -> vector<8x32x32xf32>
    "tpu.trace_stop"() : () -> ()
    %146 = arith.addf %128, %145 : vector<8x32x32xf32>
    %147 = vector.shape_cast %146 : vector<8x32x32xf32> to vector<256x32xf32>
    %c256 = arith.constant 256 : index
    %c0_71 = arith.constant 0 : index
    %148 = vector.load %arg11[%c256, %c0_71] : memref<352x32xf32, #tpu.memory_space<vmem>>, vector<32x32xf32>
    %cst_72 = arith.constant dense<0.000000e+00> : vector<256x32xf32>
    %149 = tpu.matmul %147, %148, %cst_72 {dimension_numbers = #tpu.dot_dimension_numbers<[1], [0], [0], [1], [0, 0, 1, 1], [], []>} : vector<256x32xf32>, vector<32x32xf32>, vector<256x32xf32> -> vector<256x32xf32>
    %c0_73 = arith.constant 0 : index
    %c0_74 = arith.constant 0 : index
    %150 = vector.load %arg6[%c0_73, %c0_74] : memref<8x16xf32, #tpu.memory_space<vmem>>, vector<8x16xf32>
    %c288 = arith.constant 288 : index
    %c0_75 = arith.constant 0 : index
    %151 = vector.load %arg11[%c288, %c0_75] : memref<352x32xf32, #tpu.memory_space<vmem>>, vector<16x32xf32>
    %cst_76 = arith.constant dense<0.000000e+00> : vector<8x32xf32>
    %152 = tpu.matmul %150, %151, %cst_76 {dimension_numbers = #tpu.dot_dimension_numbers<[1], [0], [0], [1], [0, 0, 1, 1], [], []>} : vector<8x16xf32>, vector<16x32xf32>, vector<8x32xf32> -> vector<8x32xf32>
    %153 = vector.shape_cast %152 : vector<8x32xf32> to vector<8x1x32xf32>
    %154 = vector.shape_cast %153 : vector<8x1x32xf32> to vector<8x1x32xf32>
    %155 = vector.broadcast %154 : vector<8x1x32xf32> to vector<8x32x32xf32>
    %156 = vector.shape_cast %155 : vector<8x32x32xf32> to vector<256x32xf32>
    %157 = arith.addf %149, %156 : vector<256x32xf32>
    %c304 = arith.constant 304 : index
    %c0_77 = arith.constant 0 : index
    %158 = vector.load %arg11[%c304, %c0_77] : memref<352x32xf32, #tpu.memory_space<vmem>>, vector<1x32xf32>
    %159 = vector.broadcast %158 : vector<1x32xf32> to vector<256x32xf32>
    %160 = arith.addf %157, %159 : vector<256x32xf32>
    %cst_78 = arith.constant 0.000000e+00 : f32
    %161 = vector.broadcast %cst_78 : f32 to vector<256x32xf32>
    %162 = arith.maximumf %160, %161 : vector<256x32xf32>
    %c312 = arith.constant 312 : index
    %c0_79 = arith.constant 0 : index
    %163 = vector.load %arg11[%c312, %c0_79] : memref<352x32xf32, #tpu.memory_space<vmem>>, vector<32x3xf32>
    %cst_80 = arith.constant dense<0.000000e+00> : vector<256x3xf32>
    %164 = tpu.matmul %162, %163, %cst_80 {dimension_numbers = #tpu.dot_dimension_numbers<[1], [0], [0], [1], [0, 0, 1, 1], [], []>} : vector<256x32xf32>, vector<32x3xf32>, vector<256x3xf32> -> vector<256x3xf32>
    %c344 = arith.constant 344 : index
    %c0_81 = arith.constant 0 : index
    %165 = vector.load %arg11[%c344, %c0_81] : memref<352x32xf32, #tpu.memory_space<vmem>>, vector<1x3xf32>
    %166 = vector.broadcast %165 : vector<1x3xf32> to vector<256x3xf32>
    %167 = arith.addf %164, %166 : vector<256x3xf32>
    %168 = tpu.iota {dimensions = array<i32: 1>} : vector<256x3xi32>
    %c0_i32_82 = arith.constant 0 : i32
    %169 = vector.broadcast %c0_i32_82 : i32 to vector<256x3xi32>
    %170 = arith.cmpi eq, %168, %169 : vector<256x3xi32>
    %171 = arith.negf %167 : vector<256x3xf32>
    %172 = math.exp %171 : vector<256x3xf32>
    %cst_83 = arith.constant 1.000000e+00 : f32
    %173 = vector.broadcast %cst_83 : f32 to vector<256x3xf32>
    %174 = arith.addf %173, %172 : vector<256x3xf32>
    %175 = arith.divf %173, %174 : vector<256x3xf32>
    %176 = arith.select %170, %175, %167 : vector<256x3xi1>, vector<256x3xf32>
    %c0_84 = arith.constant 0 : index
    %c0_85 = arith.constant 0 : index
    %177 = vector.load %arg9[%c0_84, %c0_85] : memref<256x3xf32, #tpu.memory_space<vmem>>, vector<256x3xf32>
    %c0_86 = arith.constant 0 : index
    %c0_87 = arith.constant 0 : index
    %178 = vector.load %arg10[%c0_86, %c0_87] : memref<256x3xf32, #tpu.memory_space<vmem>>, vector<256x3xf32>
    %179 = arith.mulf %177, %178 : vector<256x3xf32>
    %180 = arith.mulf %176, %178 : vector<256x3xf32>
    %181 = arith.subf %179, %180 : vector<256x3xf32>
    %182 = math.absf %181 : vector<256x3xf32>
    %cst_88 = arith.constant 1.000000e+00 : f32
    %183 = vector.broadcast %cst_88 : f32 to vector<256x3xf32>
    %184 = arith.cmpf olt, %182, %183 : vector<256x3xf32>
    %cst_89 = arith.constant 5.000000e-01 : f32
    %185 = vector.broadcast %cst_89 : f32 to vector<256x3xf32>
    %186 = arith.mulf %185, %181 : vector<256x3xf32>
    %187 = arith.mulf %186, %181 : vector<256x3xf32>
    %cst_90 = arith.constant 5.000000e-01 : f32
    %188 = vector.broadcast %cst_90 : f32 to vector<256x3xf32>
    %189 = arith.subf %182, %188 : vector<256x3xf32>
    %190 = arith.select %184, %187, %189 : vector<256x3xi1>, vector<256x3xf32>
    %191 = tpu.iota {dimensions = array<i32: 1>} : vector<256x3xi32>
    %c0_i32_91 = arith.constant 0 : i32
    %192 = vector.broadcast %c0_i32_91 : i32 to vector<256x3xi32>
    %193 = arith.cmpi eq, %191, %192 : vector<256x3xi32>
    %cst_92 = arith.constant 0.000000e+00 : f32
    %194 = vector.broadcast %cst_92 : f32 to vector<256x3xf32>
    %195 = arith.select %193, %190, %194 : vector<256x3xi1>, vector<256x3xf32>
    %196 = vector.shape_cast %195 : vector<256x3xf32> to vector<1x256x3xf32>
    %cst_93 = arith.constant dense<0.000000e+00> : vector<1xf32>
    %197 = vector.multi_reduction <add>, %196, %cst_93 [1, 2] : vector<1x256x3xf32> to vector<1xf32>
    %198 = vector.shape_cast %197 : vector<1xf32> to vector<1x1x1xf32>
    %199 = vector.extract %198[0, 0, 0] : f32 from vector<1x1x1xf32>
    %c0_i32_94 = arith.constant 0 : i32
    %200 = vector.broadcast %c0_i32_94 : i32 to vector<256x3xi32>
    %201 = arith.cmpi eq, %191, %200 : vector<256x3xi32>
    %cst_95 = arith.constant 0.000000e+00 : f32
    %202 = vector.broadcast %cst_95 : f32 to vector<256x3xf32>
    %203 = arith.select %201, %202, %190 : vector<256x3xi1>, vector<256x3xf32>
    %204 = vector.shape_cast %203 : vector<256x3xf32> to vector<1x256x3xf32>
    %cst_96 = arith.constant dense<0.000000e+00> : vector<1xf32>
    %205 = vector.multi_reduction <add>, %204, %cst_96 [1, 2] : vector<1x256x3xf32> to vector<1xf32>
    %206 = vector.shape_cast %205 : vector<1xf32> to vector<1x1x1xf32>
    %207 = vector.extract %206[0, 0, 0] : f32 from vector<1x1x1xf32>
    %cst_97 = arith.constant 6.400000e+01 : f32
    %208 = arith.divf %89, %cst_97 : f32
    %cst_98 = arith.constant 1.280000e+02 : f32
    %209 = arith.divf %97, %cst_98 : f32
    %cst_99 = arith.constant 6.400000e+01 : f32
    %210 = arith.divf %108, %cst_99 : f32
    %cst_100 = arith.constant 1.000000e-01 : f32
    %211 = arith.mulf %cst_100, %210 : f32
    %cst_101 = arith.constant 2.560000e+02 : f32
    %212 = arith.divf %199, %cst_101 : f32
    %cst_102 = arith.constant 5.120000e+02 : f32
    %213 = arith.divf %207, %cst_102 : f32
    %214 = arith.addf %208, %209 : f32
    %215 = arith.addf %214, %211 : f32
    %216 = arith.addf %215, %212 : f32
    %217 = arith.addf %216, %213 : f32
    %c0_103 = arith.constant 0 : index
    %c0_104 = arith.constant 0 : index
    %218 = memref.load %arg12[%c0_103, %c0_104] : memref<1x6xf32, #tpu.memory_space<smem>>
    memref.store %217, %arg12[%c0_103, %c0_104] : memref<1x6xf32, #tpu.memory_space<smem>>
    %c0_105 = arith.constant 0 : index
    %c1 = arith.constant 1 : index
    %219 = memref.load %arg12[%c0_105, %c1] : memref<1x6xf32, #tpu.memory_space<smem>>
    memref.store %208, %arg12[%c0_105, %c1] : memref<1x6xf32, #tpu.memory_space<smem>>
    %c0_106 = arith.constant 0 : index
    %c2 = arith.constant 2 : index
    %220 = memref.load %arg12[%c0_106, %c2] : memref<1x6xf32, #tpu.memory_space<smem>>
    memref.store %209, %arg12[%c0_106, %c2] : memref<1x6xf32, #tpu.memory_space<smem>>
    %c0_107 = arith.constant 0 : index
    %c3_108 = arith.constant 3 : index
    %221 = memref.load %arg12[%c0_107, %c3_108] : memref<1x6xf32, #tpu.memory_space<smem>>
    memref.store %211, %arg12[%c0_107, %c3_108] : memref<1x6xf32, #tpu.memory_space<smem>>
    %c0_109 = arith.constant 0 : index
    %c4 = arith.constant 4 : index
    %222 = memref.load %arg12[%c0_109, %c4] : memref<1x6xf32, #tpu.memory_space<smem>>
    memref.store %212, %arg12[%c0_109, %c4] : memref<1x6xf32, #tpu.memory_space<smem>>
    %c0_110 = arith.constant 0 : index
    %c5 = arith.constant 5 : index
    %223 = memref.load %arg12[%c0_110, %c5] : memref<1x6xf32, #tpu.memory_space<smem>>
    memref.store %213, %arg12[%c0_110, %c5] : memref<1x6xf32, #tpu.memory_space<smem>>
    return
  }
}

</mosaic_0001>

<llo_original>
// kernel: tscnet_train_by_gt.1
$region0: #{tscnet_train_by_gt.1}
  #allocation0 [shape = 'u32[]', space=smem, size = 0x4, offset = 0x4, fixed_abs, tag = 'smem constant byte address 0x4 - core index']
  #allocation1 [shape = 'u32[144,128]{1,0:T(1,128)}', space=vmem, size = 0x12000, scoped, tag = 'internal scratch']
  %s0 = inlined_call_operand.vmem [shape: f32[64,3], index: 0, kind: input, shape index: {}]
  %s1 = inlined_call_operand.vmem [shape: f32[64,32], index: 1, kind: input, shape index: {}]
  %s2 = inlined_call_operand.vmem [shape: f32[64,8], index: 2, kind: input, shape index: {}]
  %s3 = inlined_call_operand.vmem [shape: f32[64,3], index: 3, kind: input, shape index: {}]
  %s4 = inlined_call_operand.vmem [shape: f32[8,32,32], index: 4, kind: input, shape index: {}]
  %s5 = inlined_call_operand.vmem [shape: f32[8,11,32], index: 5, kind: input, shape index: {}]
  %s6 = inlined_call_operand.vmem [shape: f32[8,16], index: 6, kind: input, shape index: {}]
  %s7 = inlined_call_operand.vmem [shape: f32[32,32], index: 7, kind: input, shape index: {}]
  %s8 = inlined_call_operand.vmem [shape: f32[32,11], index: 8, kind: input, shape index: {}]
  %s9 = inlined_call_operand.vmem [shape: f32[256,3], index: 9, kind: input, shape index: {}]
  %s10 = inlined_call_operand.vmem [shape: f32[256,3], index: 10, kind: input, shape index: {}]
  %s11 = inlined_call_operand.vmem [shape: f32[352,32], index: 11, kind: input, shape index: {}]
  %s12 = inlined_call_operand.vmem [shape: f32[1,6], index: 12, kind: output, shape index: {}]
  %s13 = sld [smem:[#allocation0]]
  $region58: #{tscnet_train_by_gt.1} parent=0
    _
  %s15 = ssub.s32 1, %s13
  %s16 = scalar_select 0, %s15, %s13
  $region1: #{tscnet_train_by_gt.1} parent=0
    #allocation2 [shape = 'u8[512]{0}', space=smem, size = 0x200, scoped, tag = 'output window, operand 0, single buffered']
    #allocation3 [shape = 's32[1]{0}', space=sflag, size = 0x4, scoped, tag = 'scoped memory for tscnet_train_by_gt.1']
    %17 = vsyncpa [#allocation3], 0
    // Predicated region
    $region2: #{tscnet_train_by_gt.1} parent=1 // pred_check
      _
    $region3: #{tscnet_train_by_gt.1} parent=1 // pred_check_branch
      %19 = sbr.rel (0) target = $region5
    $region4: #{tscnet_train_by_gt.1} parent=1 // pred_region
      _
    $region5: #{tscnet_train_by_gt.1} parent=1 // pred_fallthru
      _
    // Predicated region
    $region6: #{tscnet_train_by_gt.1} parent=1 // pred_check
      _
    $region7: #{tscnet_train_by_gt.1} parent=1 // pred_check_branch
      %21 = sbr.rel (0) target = $region9
    $region8: #{tscnet_train_by_gt.1} parent=1 // pred_region
      _
    $region9: #{tscnet_train_by_gt.1} parent=1 // pred_fallthru
      _
    // Predicated region
    $region10: #{tscnet_train_by_gt.1} parent=1 // pred_check
      _
    $region11: #{tscnet_train_by_gt.1} parent=1 // pred_check_branch
      %23 = sbr.rel (0) target = $region13
    $region12: #{tscnet_train_by_gt.1} parent=1 // pred_region
      _
    $region13: #{tscnet_train_by_gt.1} parent=1 // pred_fallthru
      _
    // Predicated region
    $region14: #{tscnet_train_by_gt.1} parent=1 // pred_check
      _
    $region15: #{tscnet_train_by_gt.1} parent=1 // pred_check_branch
      %25 = sbr.rel (0) target = $region17
    $region16: #{tscnet_train_by_gt.1} parent=1 // pred_region
      _
    $region17: #{tscnet_train_by_gt.1} parent=1 // pred_fallthru
      _
    // Predicated region
    $region18: #{tscnet_train_by_gt.1} parent=1 // pred_check
      _
    $region19: #{tscnet_train_by_gt.1} parent=1 // pred_check_branch
      %27 = sbr.rel (0) target = $region21
    $region20: #{tscnet_train_by_gt.1} parent=1 // pred_region
      _
    $region21: #{tscnet_train_by_gt.1} parent=1 // pred_fallthru
      _
    // Predicated region
    $region22: #{tscnet_train_by_gt.1} parent=1 // pred_check
      _
    $region23: #{tscnet_train_by_gt.1} parent=1 // pred_check_branch
      %29 = sbr.rel (0) target = $region25
    $region24: #{tscnet_train_by_gt.1} parent=1 // pred_region
      _
    $region25: #{tscnet_train_by_gt.1} parent=1 // pred_fallthru
      _
    // Predicated region
    $region26: #{tscnet_train_by_gt.1} parent=1 // pred_check
      _
    $region27: #{tscnet_train_by_gt.1} parent=1 // pred_check_branch
      %31 = sbr.rel (0) target = $region29
    $region28: #{tscnet_train_by_gt.1} parent=1 // pred_region
      _
    $region29: #{tscnet_train_by_gt.1} parent=1 // pred_fallthru
      _
    // Predicated region
    $region30: #{tscnet_train_by_gt.1} parent=1 // pred_check
      _
    $region31: #{tscnet_train_by_gt.1} parent=1 // pred_check_branch
      %33 = sbr.rel (0) target = $region33
    $region32: #{tscnet_train_by_gt.1} parent=1 // pred_region
      _
    $region33: #{tscnet_train_by_gt.1} parent=1 // pred_fallthru
      _
    // Predicated region
    $region34: #{tscnet_train_by_gt.1} parent=1 // pred_check
      _
    $region35: #{tscnet_train_by_gt.1} parent=1 // pred_check_branch
      %35 = sbr.rel (0) target = $region37
    $region36: #{tscnet_train_by_gt.1} parent=1 // pred_region
      _
    $region37: #{tscnet_train_by_gt.1} parent=1 // pred_fallthru
      _
    // Predicated region
    $region38: #{tscnet_train_by_gt.1} parent=1 // pred_check
      _
    $region39: #{tscnet_train_by_gt.1} parent=1 // pred_check_branch
      %37 = sbr.rel (0) target = $region41
    $region40: #{tscnet_train_by_gt.1} parent=1 // pred_region
      _
    $region41: #{tscnet_train_by_gt.1} parent=1 // pred_fallthru
      _
    // Predicated region
    $region42: #{tscnet_train_by_gt.1} parent=1 // pred_check
      _
    $region43: #{tscnet_train_by_gt.1} parent=1 // pred_check_branch
      %39 = sbr.rel (0) target = $region45
    $region44: #{tscnet_train_by_gt.1} parent=1 // pred_region
      _
    $region45: #{tscnet_train_by_gt.1} parent=1 // pred_fallthru
      _
    // Predicated region
    $region46: #{tscnet_train_by_gt.1} parent=1 // pred_check
      _
    $region47: #{tscnet_train_by_gt.1} parent=1 // pred_check_branch
      %41 = sbr.rel (0) target = $region49
    $region48: #{tscnet_train_by_gt.1} parent=1 // pred_region
      _
    $region49: #{tscnet_train_by_gt.1} parent=1 // pred_fallthru
      _
    %v42 = vld [vmem:[%s0] sm:$0xff]
    %v43 = vld [vmem:[%s0 + $0x8] sm:$0xff]
    %v44 = vld [vmem:[%s0 + $0x10] sm:$0xff]
    %v45 = vld [vmem:[%s0 + $0x18] sm:$0xff]
    %v46 = vld [vmem:[%s0 + $0x20] sm:$0xff]
    %v47 = vld [vmem:[%s0 + $0x28] sm:$0xff]
    %v48 = vld [vmem:[%s0 + $0x30] sm:$0xff]
    %v49 = vld [vmem:[%s0 + $0x38] sm:$0xff]
    %v50 = vld [vmem:[%s1] sm:$0xff]
    %v51 = vld [vmem:[%s1 + $0x8] sm:$0xff]
    %v52 = vld [vmem:[%s1 + $0x10] sm:$0xff]
    %v53 = vld [vmem:[%s1 + $0x18] sm:$0xff]
    %v54 = vld [vmem:[%s1 + $0x20] sm:$0xff]
    %v55 = vld [vmem:[%s1 + $0x28] sm:$0xff]
    %v56 = vld [vmem:[%s1 + $0x30] sm:$0xff]
    %v57 = vld [vmem:[%s1 + $0x38] sm:$0xff]
    %v58 = vld [vmem:[%s11] sm:$0x7]
    %v59 = vld [vmem:[%s11 + $0x3] sm:$0x1]
    %v60 = vlaneseq
    %v61 = vshrl.u32 %v60, 7
    %v62 = vsub.s32 0, %v61
    %v63 = vrot.slane %v59, %v62
    %vm64 = vcmask 23552
    %v66 = vsel %vm64, %v42, 0
    %v69 = vsel %vm64, %v43, 0
    %v72 = vsel %vm64, %v44, 0
    %v75 = vsel %vm64, %v45, 0
    %v78 = vsel %vm64, %v46, 0
    %v81 = vsel %vm64, %v47, 0
    %v84 = vsel %vm64, %v48, 0
    %v87 = vsel %vm64, %v49, 0
    %vm89 = vcmask 1042432
    %v91 = vsel %vm89, %v58, 0
    %93 = vmatprep.subr.mxu0 0.0
    %94 = vmatpush1.msra.mxu0 %v91
    %95 = vmatprep.subr.mxu0 0.0
    %96 = vmatpush1.msra.mxu0 0.0
    %97 = vmatprep.subr.mxu0 0.0
    %98 = vmatpush1.msra.mxu0 0.0
    %99 = vmatprep.subr.mxu0 0.0
    %100 = vmatpush1.msra.mxu0 0.0
    %101 = vmatprep.subr.mxu0 0.0
    %102 = vmatpush1.msra.mxu0 0.0
    %103 = vmatprep.subr.mxu0 0.0
    %104 = vmatpush1.msra.mxu0 0.0
    %105 = vmatprep.subr.mxu0 0.0
    %106 = vmatpush1.msra.mxu0 0.0
    %107 = vmatprep.subr.mxu0 0.0
    %108 = vmatpush1.msra.mxu0 0.0
    %109 = vmatprep.subr.mxu0 0.0
    %110 = vmatpush1.msra.mxu0 0.0
    %111 = vmatprep.subr.mxu0 0.0
    %112 = vmatpush1.msra.mxu0 0.0
    %113 = vmatprep.subr.mxu0 0.0
    %114 = vmatpush1.msra.mxu0 0.0
    %115 = vmatprep.subr.mxu0 0.0
    %116 = vmatpush1.msra.mxu0 0.0
    %117 = vmatprep.subr.mxu0 0.0
    %118 = vmatpush1.msra.mxu0 0.0
    %119 = vmatprep.subr.mxu0 0.0
    %120 = vmatpush1.msra.mxu0 0.0
    %121 = vmatprep.subr.mxu0 0.0
    %122 = vmatpush1.msra.mxu0 0.0
    %123 = vmatprep.subr.mxu0 0.0
    %124 = vmatpush1.msra.mxu0 0.0
    %125 = vmatprep.subr.mxu0 0.0
    %126 = vmatpush1.msra.mxu0 0.0
    %127 = vmatprep.subr.mxu0 0.0
    %128 = vmatpush1.msra.mxu0 0.0
    %129 = vmatprep.subr.mxu0 0.0
    %130 = vmatpush1.msra.mxu0 0.0
    %131 = vmatprep.subr.mxu0 0.0
    %132 = vmatpush1.msra.mxu0 0.0
    %133 = vmatprep.subr.mxu0 0.0
    %134 = vmatpush1.msra.mxu0 0.0
    %135 = vmatprep.subr.mxu0 0.0
    %136 = vmatpush1.msra.mxu0 0.0
    %137 = vmatprep.subr.mxu0 0.0
    %138 = vmatpush1.msra.mxu0 0.0
    %139 = vmatprep.subr.mxu0 0.0
    %140 = vmatpush1.msra.mxu0 0.0
    %141 = vmatprep.subr.mxu0 0.0
    %142 = vmatpush1.msra.mxu0 0.0
    %143 = vmatprep.subr.mxu0 0.0
    %144 = vmatpush1.msra.mxu0 0.0
    %145 = vmatprep.subr.mxu0 0.0
    %146 = vmatpush1.msra.mxu0 0.0
    %147 = vmatprep.subr.mxu0 0.0
    %148 = vmatpush1.msra.mxu0 0.0
    %149 = vmatprep.subr.mxu0 0.0
    %150 = vmatpush1.msra.mxu0 0.0
    %151 = vmatprep.subr.mxu0 0.0
    %152 = vmatpush1.msra.mxu0 0.0
    %153 = vmatprep.subr.mxu0 0.0
    %154 = vmatpush1.msra.mxu0 0.0
    %155 = vmatprep.subr.mxu0 0.0
    %156 = vmatpush1.msra.mxu0 0.0
    %157 = vmatprep.mubr.f32.mxu0 0.0
    %158 = vmatmul.mubr.f32.gmra.mrb[0].mxu0 %v66
    %v159 = vpop.f32.mrb[0].mxu0
    %v160 = vadd.f32 %v63, %v159
    %v161 = vpop.f32.mrb[0].mxu0
    %162 = vmatprep.mubr.f32.mxu0 0.0
    %163 = vmatmul.mubr.f32.gmra.mrb[0].mxu0 %v69
    %v164 = vpop.f32.mrb[0].mxu0
    %v165 = vadd.f32 %v63, %v164
    %v166 = vpop.f32.mrb[0].mxu0
    %167 = vmatprep.mubr.f32.mxu0 0.0
    %168 = vmatmul.mubr.f32.gmra.mrb[0].mxu0 %v72
    %v169 = vpop.f32.mrb[0].mxu0
    %v170 = vadd.f32 %v63, %v169
    %v171 = vpop.f32.mrb[0].mxu0
    %172 = vmatprep.mubr.f32.mxu0 0.0
    %173 = vmatmul.mubr.f32.gmra.mrb[0].mxu0 %v75
    %v174 = vpop.f32.mrb[0].mxu0
    %v175 = vadd.f32 %v63, %v174
    %v176 = vpop.f32.mrb[0].mxu0
    %177 = vmatprep.mubr.f32.mxu0 0.0
    %178 = vmatmul.mubr.f32.gmra.mrb[0].mxu0 %v78
    %v179 = vpop.f32.mrb[0].mxu0
    %v180 = vadd.f32 %v63, %v179
    %v181 = vpop.f32.mrb[0].mxu0
    %182 = vmatprep.mubr.f32.mxu0 0.0
    %183 = vmatmul.mubr.f32.gmra.mrb[0].mxu0 %v81
    %v184 = vpop.f32.mrb[0].mxu0
    %v185 = vadd.f32 %v63, %v184
    %v186 = vpop.f32.mrb[0].mxu0
    %187 = vmatprep.mubr.f32.mxu0 0.0
    %188 = vmatmul.mubr.f32.gmra.mrb[0].mxu0 %v84
    %v189 = vpop.f32.mrb[0].mxu0
    %v190 = vadd.f32 %v63, %v189
    %v191 = vpop.f32.mrb[0].mxu0
    %192 = vmatprep.mubr.f32.mxu0 0.0
    %193 = vmatmul.mubr.f32.gmra.mrb[0].mxu0 %v87
    %v194 = vpop.f32.mrb[0].mxu0
    %v195 = vadd.f32 %v63, %v194
    %v196 = vpop.f32.mrb[0].mxu0
    %197 = vdwg.mxu0
    %v198 = vmax.f32 %v160, 0.0
    %v199 = vmax.f32 %v165, 0.0
    %v200 = vmax.f32 %v170, 0.0
    %v201 = vmax.f32 %v175, 0.0
    %v202 = vmax.f32 %v180, 0.0
    %v203 = vmax.f32 %v185, 0.0
    %v204 = vmax.f32 %v190, 0.0
    %v205 = vmax.f32 %v195, 0.0
    %v206 = vld [vmem:[%s11 + $0x8] sm:$0xff]
    %v207 = vld [vmem:[%s11 + $0x10] sm:$0xff]
    %v208 = vld [vmem:[%s11 + $0x18] sm:$0x1]
    %v209 = vlaneseq
    %v210 = vshrl.u32 %v209, 7
    %v211 = vsub.s32 0, %v210
    %v212 = vrot.slane %v208, %v211
    %vm213 = vcmask 130048
    %v215 = vsel %vm213, %v198, 0
    %v218 = vsel %vm213, %v199, 0
    %v221 = vsel %vm213, %v200, 0
    %v224 = vsel %vm213, %v201, 0
    %v227 = vsel %vm213, %v202, 0
    %v230 = vsel %vm213, %v203, 0
    %v233 = vsel %vm213, %v204, 0
    %v236 = vsel %vm213, %v205, 0
    %238 = vmatprep.subr.mxu0 0.0
    %239 = vmatpush1.msra.mxu0 %v206
    %240 = vmatprep.subr.mxu0 0.0
    %241 = vmatpush1.msra.mxu0 %v207
    %242 = vmatprep.subr.mxu0 0.0
    %243 = vmatpush1.msra.mxu0 0.0
    %244 = vmatprep.subr.mxu0 0.0
    %245 = vmatpush1.msra.mxu0 0.0
    %246 = vmatprep.subr.mxu0 0.0
    %247 = vmatpush1.msra.mxu0 0.0
    %248 = vmatprep.subr.mxu0 0.0
    %249 = vmatpush1.msra.mxu0 0.0
    %250 = vmatprep.subr.mxu0 0.0
    %251 = vmatpush1.msra.mxu0 0.0
    %252 = vmatprep.subr.mxu0 0.0
    %253 = vmatpush1.msra.mxu0 0.0
    %254 = vmatprep.subr.mxu0 0.0
    %255 = vmatpush1.msra.mxu0 0.0
    %256 = vmatprep.subr.mxu0 0.0
    %257 = vmatpush1.msra.mxu0 0.0
    %258 = vmatprep.subr.mxu0 0.0
    %259 = vmatpush1.msra.mxu0 0.0
    %260 = vmatprep.subr.mxu0 0.0
    %261 = vmatpush1.msra.mxu0 0.0
    %262 = vmatprep.subr.mxu0 0.0
    %263 = vmatpush1.msra.mxu0 0.0
    %264 = vmatprep.subr.mxu0 0.0
    %265 = vmatpush1.msra.mxu0 0.0
    %266 = vmatprep.subr.mxu0 0.0
    %267 = vmatpush1.msra.mxu0 0.0
    %268 = vmatprep.subr.mxu0 0.0
    %269 = vmatpush1.msra.mxu0 0.0
    %270 = vmatprep.subr.mxu0 0.0
    %271 = vmatpush1.msra.mxu0 0.0
    %272 = vmatprep.subr.mxu0 0.0
    %273 = vmatpush1.msra.mxu0 0.0
    %274 = vmatprep.subr.mxu0 0.0
    %275 = vmatpush1.msra.mxu0 0.0
    %276 = vmatprep.subr.mxu0 0.0
    %277 = vmatpush1.msra.mxu0 0.0
    %278 = vmatprep.subr.mxu0 0.0
    %279 = vmatpush1.msra.mxu0 0.0
    %280 = vmatprep.subr.mxu0 0.0
    %281 = vmatpush1.msra.mxu0 0.0
    %282 = vmatprep.subr.mxu0 0.0
    %283 = vmatpush1.msra.mxu0 0.0
    %284 = vmatprep.subr.mxu0 0.0
    %285 = vmatpush1.msra.mxu0 0.0
    %286 = vmatprep.subr.mxu0 0.0
    %287 = vmatpush1.msra.mxu0 0.0
    %288 = vmatprep.subr.mxu0 0.0
    %289 = vmatpush1.msra.mxu0 0.0
    %290 = vmatprep.subr.mxu0 0.0
    %291 = vmatpush1.msra.mxu0 0.0
    %292 = vmatprep.subr.mxu0 0.0
    %293 = vmatpush1.msra.mxu0 0.0
    %294 = vmatprep.subr.mxu0 0.0
    %295 = vmatpush1.msra.mxu0 0.0
    %296 = vmatprep.subr.mxu0 0.0
    %297 = vmatpush1.msra.mxu0 0.0
    %298 = vmatprep.subr.mxu0 0.0
    %299 = vmatpush1.msra.mxu0 0.0
    %300 = vmatprep.subr.mxu0 0.0
    %301 = vmatpush1.msra.mxu0 0.0
    %302 = vmatprep.mubr.f32.mxu0 0.0
    %303 = vmatmul.mubr.f32.gmra.mrb[0].mxu0 %v215
    %v304 = vpop.f32.mrb[0].mxu0
    %v305 = vadd.f32 %v212, %v304
    %v306 = vpop.f32.mrb[0].mxu0
    %307 = vmatprep.mubr.f32.mxu0 0.0
    %308 = vmatmul.mubr.f32.gmra.mrb[0].mxu0 %v218
    %v309 = vpop.f32.mrb[0].mxu0
    %v310 = vadd.f32 %v212, %v309
    %v311 = vpop.f32.mrb[0].mxu0
    %312 = vmatprep.mubr.f32.mxu0 0.0
    %313 = vmatmul.mubr.f32.gmra.mrb[0].mxu0 %v221
    %v314 = vpop.f32.mrb[0].mxu0
    %v315 = vadd.f32 %v212, %v314
    %v316 = vpop.f32.mrb[0].mxu0
    %317 = vmatprep.mubr.f32.mxu0 0.0
    %318 = vmatmul.mubr.f32.gmra.mrb[0].mxu0 %v224
    %v319 = vpop.f32.mrb[0].mxu0
    %v320 = vadd.f32 %v212, %v319
    %v321 = vpop.f32.mrb[0].mxu0
    %322 = vmatprep.mubr.f32.mxu0 0.0
    %323 = vmatmul.mubr.f32.gmra.mrb[0].mxu0 %v227
    %v324 = vpop.f32.mrb[0].mxu0
    %v325 = vadd.f32 %v212, %v324
    %v326 = vpop.f32.mrb[0].mxu0
    %327 = vmatprep.mubr.f32.mxu0 0.0
    %328 = vmatmul.mubr.f32.gmra.mrb[0].mxu0 %v230
    %v329 = vpop.f32.mrb[0].mxu0
    %v330 = vadd.f32 %v212, %v329
    %v331 = vpop.f32.mrb[0].mxu0
    %332 = vmatprep.mubr.f32.mxu0 0.0
    %333 = vmatmul.mubr.f32.gmra.mrb[0].mxu0 %v233
    %v334 = vpop.f32.mrb[0].mxu0
    %v335 = vadd.f32 %v212, %v334
    %v336 = vpop.f32.mrb[0].mxu0
    %337 = vmatprep.mubr.f32.mxu0 0.0
    %338 = vmatmul.mubr.f32.gmra.mrb[0].mxu0 %v236
    %v339 = vpop.f32.mrb[0].mxu0
    %v340 = vadd.f32 %v212, %v339
    %v341 = vpop.f32.mrb[0].mxu0
    %342 = vdwg.mxu0
    %v343 = vld [vmem:[%s11 + $0x20] sm:$0xff]
    %v344 = vld [vmem:[%s11 + $0x28] sm:$0xff]
    %v345 = vld [vmem:[%s11 + $0x30] sm:$0xff]
    %v346 = vld [vmem:[%s11 + $0x38] sm:$0xff]
    %v347 = vld [vmem:[%s11 + $0x40] sm:$0xff]
    %v348 = vld [vmem:[%s11 + $0x48] sm:$0xff]
    %vm349 = vcmask 261120
    %v351 = vsel %vm349, %v50, 0
    %v354 = vsel %vm349, %v51, 0
    %v357 = vsel %vm349, %v52, 0
    %v360 = vsel %vm349, %v53, 0
    %v363 = vsel %vm349, %v54, 0
    %v366 = vsel %vm349, %v55, 0
    %v369 = vsel %vm349, %v56, 0
    %v372 = vsel %vm349, %v57, 0
    %374 = vmatprep.subr.mxu0 0.0
    %375 = vmatpush1.msra.mxu0 %v345
    %376 = vmatprep.subr.mxu0 0.0
    %377 = vmatpush1.msra.mxu0 %v346
    %378 = vmatprep.subr.mxu0 0.0
    %379 = vmatpush1.msra.mxu0 %v347
    %380 = vmatprep.subr.mxu0 0.0
    %381 = vmatpush1.msra.mxu0 %v348
    %382 = vmatprep.subr.mxu0 0.0
    %383 = vmatpush1.msra.mxu0 0.0
    %384 = vmatprep.subr.mxu0 0.0
    %385 = vmatpush1.msra.mxu0 0.0
    %386 = vmatprep.subr.mxu0 0.0
    %387 = vmatpush1.msra.mxu0 0.0
    %388 = vmatprep.subr.mxu0 0.0
    %389 = vmatpush1.msra.mxu0 0.0
    %390 = vmatprep.subr.mxu0 0.0
    %391 = vmatpush1.msra.mxu0 0.0
    %392 = vmatprep.subr.mxu0 0.0
    %393 = vmatpush1.msra.mxu0 0.0
    %394 = vmatprep.subr.mxu0 0.0
    %395 = vmatpush1.msra.mxu0 0.0
    %396 = vmatprep.subr.mxu0 0.0
    %397 = vmatpush1.msra.mxu0 0.0
    %398 = vmatprep.subr.mxu0 0.0
    %399 = vmatpush1.msra.mxu0 0.0
    %400 = vmatprep.subr.mxu0 0.0
    %401 = vmatpush1.msra.mxu0 0.0
    %402 = vmatprep.subr.mxu0 0.0
    %403 = vmatpush1.msra.mxu0 0.0
    %404 = vmatprep.subr.mxu0 0.0
    %405 = vmatpush1.msra.mxu0 0.0
    %406 = vmatprep.subr.mxu0 0.0
    %407 = vmatpush1.msra.mxu0 0.0
    %408 = vmatprep.subr.mxu0 0.0
    %409 = vmatpush1.msra.mxu0 0.0
    %410 = vmatprep.subr.mxu0 0.0
    %411 = vmatpush1.msra.mxu0 0.0
    %412 = vmatprep.subr.mxu0 0.0
    %413 = vmatpush1.msra.mxu0 0.0
    %414 = vmatprep.subr.mxu0 0.0
    %415 = vmatpush1.msra.mxu0 0.0
    %416 = vmatprep.subr.mxu0 0.0
    %417 = vmatpush1.msra.mxu0 0.0
    %418 = vmatprep.subr.mxu0 0.0
    %419 = vmatpush1.msra.mxu0 0.0
    %420 = vmatprep.subr.mxu0 0.0
    %421 = vmatpush1.msra.mxu0 0.0
    %422 = vmatprep.subr.mxu0 0.0
    %423 = vmatpush1.msra.mxu0 0.0
    %424 = vmatprep.subr.mxu0 0.0
    %425 = vmatpush1.msra.mxu0 0.0
    %426 = vmatprep.subr.mxu0 0.0
    %427 = vmatpush1.msra.mxu0 0.0
    %428 = vmatprep.subr.mxu0 0.0
    %429 = vmatpush1.msra.mxu0 0.0
    %430 = vmatprep.subr.mxu0 0.0
    %431 = vmatpush1.msra.mxu0 0.0
    %432 = vmatprep.subr.mxu0 0.0
    %433 = vmatpush1.msra.mxu0 0.0
    %434 = vmatprep.subr.mxu0 0.0
    %435 = vmatpush1.msra.mxu0 0.0
    %436 = vmatprep.subr.mxu0 0.0
    %437 = vmatpush1.msra.mxu0 0.0
    %438 = vmatprep.mubr.f32.mxu0 0.0
    %439 = vmatmul.mubr.f32.gmra.mrb[0].mxu0 %v351
    %v440 = vpop.f32.mrb[0].mxu0
    %v441 = vadd.f32 0.0, %v440
    %v442 = vpop.f32.mrb[0].mxu0
    %443 = vmatprep.mubr.f32.mxu0 0.0
    %444 = vmatmul.mubr.f32.gmra.mrb[0].mxu0 %v354
    %v445 = vpop.f32.mrb[0].mxu0
    %v446 = vadd.f32 0.0, %v445
    %v447 = vpop.f32.mrb[0].mxu0
    %448 = vmatprep.mubr.f32.mxu0 0.0
    %449 = vmatmul.mubr.f32.gmra.mrb[0].mxu0 %v357
    %v450 = vpop.f32.mrb[0].mxu0
    %v451 = vadd.f32 0.0, %v450
    %v452 = vpop.f32.mrb[0].mxu0
    %453 = vmatprep.mubr.f32.mxu0 0.0
    %454 = vmatmul.mubr.f32.gmra.mrb[0].mxu0 %v360
    %v455 = vpop.f32.mrb[0].mxu0
    %v456 = vadd.f32 0.0, %v455
    %v457 = vpop.f32.mrb[0].mxu0
    %458 = vmatprep.mubr.f32.mxu0 0.0
    %459 = vmatmul.mubr.f32.gmra.mrb[0].mxu0 %v363
    %v460 = vpop.f32.mrb[0].mxu0
    %v461 = vadd.f32 0.0, %v460
    %v462 = vpop.f32.mrb[0].mxu0
    %463 = vmatprep.mubr.f32.mxu0 0.0
    %464 = vmatmul.mubr.f32.gmra.mrb[0].mxu0 %v366
    %v465 = vpop.f32.mrb[0].mxu0
    %v466 = vadd.f32 0.0, %v465
    %v467 = vpop.f32.mrb[0].mxu0
    %468 = vmatprep.mubr.f32.mxu0 0.0
    %469 = vmatmul.mubr.f32.gmra.mrb[0].mxu0 %v369
    %v470 = vpop.f32.mrb[0].mxu0
    %v471 = vadd.f32 0.0, %v470
    %v472 = vpop.f32.mrb[0].mxu0
    %473 = vmatprep.mubr.f32.mxu0 0.0
    %474 = vmatmul.mubr.f32.gmra.mrb[0].mxu0 %v372
    %v475 = vpop.f32.mrb[0].mxu0
    %v476 = vadd.f32 0.0, %v475
    %v477 = vpop.f32.mrb[0].mxu0
    %478 = vdwg.mxu0
    %v480 = vsel %vm213, %v305, 0
    %v483 = vsel %vm213, %v310, 0
    %v486 = vsel %vm213, %v315, 0
    %v489 = vsel %vm213, %v320, 0
    %v492 = vsel %vm213, %v325, 0
    %v495 = vsel %vm213, %v330, 0
    %v498 = vsel %vm213, %v335, 0
    %v501 = vsel %vm213, %v340, 0
    %503 = vmatprep.subr.mxu0 0.0
    %504 = vmatpush1.msra.mxu0 %v343
    %505 = vmatprep.subr.mxu0 0.0
    %506 = vmatpush1.msra.mxu0 %v344
    %507 = vmatprep.subr.mxu0 0.0
    %508 = vmatpush1.msra.mxu0 0.0
    %509 = vmatprep.subr.mxu0 0.0
    %510 = vmatpush1.msra.mxu0 0.0
    %511 = vmatprep.subr.mxu0 0.0
    %512 = vmatpush1.msra.mxu0 0.0
    %513 = vmatprep.subr.mxu0 0.0
    %514 = vmatpush1.msra.mxu0 0.0
    %515 = vmatprep.subr.mxu0 0.0
    %516 = vmatpush1.msra.mxu0 0.0
    %517 = vmatprep.subr.mxu0 0.0
    %518 = vmatpush1.msra.mxu0 0.0
    %519 = vmatprep.subr.mxu0 0.0
    %520 = vmatpush1.msra.mxu0 0.0
    %521 = vmatprep.subr.mxu0 0.0
    %522 = vmatpush1.msra.mxu0 0.0
    %523 = vmatprep.subr.mxu0 0.0
    %524 = vmatpush1.msra.mxu0 0.0
    %525 = vmatprep.subr.mxu0 0.0
    %526 = vmatpush1.msra.mxu0 0.0
    %527 = vmatprep.subr.mxu0 0.0
    %528 = vmatpush1.msra.mxu0 0.0
    %529 = vmatprep.subr.mxu0 0.0
    %530 = vmatpush1.msra.mxu0 0.0
    %531 = vmatprep.subr.mxu0 0.0
    %532 = vmatpush1.msra.mxu0 0.0
    %533 = vmatprep.subr.mxu0 0.0
    %534 = vmatpush1.msra.mxu0 0.0
    %535 = vmatprep.subr.mxu0 0.0
    %536 = vmatpush1.msra.mxu0 0.0
    %537 = vmatprep.subr.mxu0 0.0
    %538 = vmatpush1.msra.mxu0 0.0
    %539 = vmatprep.subr.mxu0 0.0
    %540 = vmatpush1.msra.mxu0 0.0
    %541 = vmatprep.subr.mxu0 0.0
    %542 = vmatpush1.msra.mxu0 0.0
    %543 = vmatprep.subr.mxu0 0.0
    %544 = vmatpush1.msra.mxu0 0.0
    %545 = vmatprep.subr.mxu0 0.0
    %546 = vmatpush1.msra.mxu0 0.0
    %547 = vmatprep.subr.mxu0 0.0
    %548 = vmatpush1.msra.mxu0 0.0
    %549 = vmatprep.subr.mxu0 0.0
    %550 = vmatpush1.msra.mxu0 0.0
    %551 = vmatprep.subr.mxu0 0.0
    %552 = vmatpush1.msra.mxu0 0.0
    %553 = vmatprep.subr.mxu0 0.0
    %554 = vmatpush1.msra.mxu0 0.0
    %555 = vmatprep.subr.mxu0 0.0
    %556 = vmatpush1.msra.mxu0 0.0
    %557 = vmatprep.subr.mxu0 0.0
    %558 = vmatpush1.msra.mxu0 0.0
    %559 = vmatprep.subr.mxu0 0.0
    %560 = vmatpush1.msra.mxu0 0.0
    %561 = vmatprep.subr.mxu0 0.0
    %562 = vmatpush1.msra.mxu0 0.0
    %563 = vmatprep.subr.mxu0 0.0
    %564 = vmatpush1.msra.mxu0 0.0
    %565 = vmatprep.subr.mxu0 0.0
    %566 = vmatpush1.msra.mxu0 0.0
    %567 = vmatprep.mubr.f32.mxu0 0.0
    %568 = vmatmul.mubr.f32.gmra.mrb[0].mxu0 %v480
    %v569 = vpop.f32.mrb[0].mxu0
    %v570 = vadd.f32 %v441, %v569
    %v571 = vpop.f32.mrb[0].mxu0
    %572 = vmatprep.mubr.f32.mxu0 0.0
    %573 = vmatmul.mubr.f32.gmra.mrb[0].mxu0 %v483
    %v574 = vpop.f32.mrb[0].mxu0
    %v575 = vadd.f32 %v446, %v574
    %v576 = vpop.f32.mrb[0].mxu0
    %577 = vmatprep.mubr.f32.mxu0 0.0
    %578 = vmatmul.mubr.f32.gmra.mrb[0].mxu0 %v486
    %v579 = vpop.f32.mrb[0].mxu0
    %v580 = vadd.f32 %v451, %v579
    %v581 = vpop.f32.mrb[0].mxu0
    %582 = vmatprep.mubr.f32.mxu0 0.0
    %583 = vmatmul.mubr.f32.gmra.mrb[0].mxu0 %v489
    %v584 = vpop.f32.mrb[0].mxu0
    %v585 = vadd.f32 %v456, %v584
    %v586 = vpop.f32.mrb[0].mxu0
    %587 = vmatprep.mubr.f32.mxu0 0.0
    %588 = vmatmul.mubr.f32.gmra.mrb[0].mxu0 %v492
    %v589 = vpop.f32.mrb[0].mxu0
    %v590 = vadd.f32 %v461, %v589
    %v591 = vpop.f32.mrb[0].mxu0
    %592 = vmatprep.mubr.f32.mxu0 0.0
    %593 = vmatmul.mubr.f32.gmra.mrb[0].mxu0 %v495
    %v594 = vpop.f32.mrb[0].mxu0
    %v595 = vadd.f32 %v466, %v594
    %v596 = vpop.f32.mrb[0].mxu0
    %597 = vmatprep.mubr.f32.mxu0 0.0
    %598 = vmatmul.mubr.f32.gmra.mrb[0].mxu0 %v498
    %v599 = vpop.f32.mrb[0].mxu0
    %v600 = vadd.f32 %v471, %v599
    %v601 = vpop.f32.mrb[0].mxu0
    %602 = vmatprep.mubr.f32.mxu0 0.0
    %603 = vmatmul.mubr.f32.gmra.mrb[0].mxu0 %v501
    %v604 = vpop.f32.mrb[0].mxu0
    %v605 = vadd.f32 %v476, %v604
    %v606 = vpop.f32.mrb[0].mxu0
    %607 = vdwg.mxu0
    %v608 = vld [vmem:[%s11 + $0x50] sm:$0x1]
    %v609 = vlaneseq
    %v610 = vshrl.u32 %v609, 7
    %v611 = vsub.s32 0, %v610
    %v612 = vrot.slane %v608, %v611
    %v613 = vadd.f32 %v570, %v612
    %v614 = vadd.f32 %v575, %v612
    %v615 = vadd.f32 %v580, %v612
    %v616 = vadd.f32 %v585, %v612
    %v617 = vadd.f32 %v590, %v612
    %v618 = vadd.f32 %v595, %v612
    %v619 = vadd.f32 %v600, %v612
    %v620 = vadd.f32 %v605, %v612
    %v621 = vmax.f32 %v613, 0.0
    %v622 = vmax.f32 %v614, 0.0
    %v623 = vmax.f32 %v615, 0.0
    %v624 = vmax.f32 %v616, 0.0
    %v625 = vmax.f32 %v617, 0.0
    %v626 = vmax.f32 %v618, 0.0
    %v627 = vmax.f32 %v619, 0.0
    %v628 = vmax.f32 %v620, 0.0
    %v629 = vld [vmem:[%s11 + $0x58] sm:$0xff]
    %v630 = vld [vmem:[%s11 + $0x60] sm:$0xff]
    %v631 = vld [vmem:[%s11 + $0x68] sm:$0xff]
    %v632 = vld [vmem:[%s11 + $0x70] sm:$0xff]
    %v633 = vld [vmem:[%s11 + $0x78] sm:$0x1]
    %v634 = vlaneseq
    %v635 = vshrl.u32 %v634, 7
    %v636 = vsub.s32 0, %v635
    %v637 = vrot.slane %v633, %v636
    %v639 = vsel %vm349, %v621, 0
    %v642 = vsel %vm349, %v622, 0
    %v645 = vsel %vm349, %v623, 0
    %v648 = vsel %vm349, %v624, 0
    %v651 = vsel %vm349, %v625, 0
    %v654 = vsel %vm349, %v626, 0
    %v657 = vsel %vm349, %v627, 0
    %v660 = vsel %vm349, %v628, 0
    %662 = vmatprep.subr.mxu0 0.0
    %663 = vmatpush1.msra.mxu0 %v629
    %664 = vmatprep.subr.mxu0 0.0
    %665 = vmatpush1.msra.mxu0 %v630
    %666 = vmatprep.subr.mxu0 0.0
    %667 = vmatpush1.msra.mxu0 %v631
    %668 = vmatprep.subr.mxu0 0.0
    %669 = vmatpush1.msra.mxu0 %v632
    %670 = vmatprep.subr.mxu0 0.0
    %671 = vmatpush1.msra.mxu0 0.0
    %672 = vmatprep.subr.mxu0 0.0
    %673 = vmatpush1.msra.mxu0 0.0
    %674 = vmatprep.subr.mxu0 0.0
    %675 = vmatpush1.msra.mxu0 0.0
    %676 = vmatprep.subr.mxu0 0.0
    %677 = vmatpush1.msra.mxu0 0.0
    %678 = vmatprep.subr.mxu0 0.0
    %679 = vmatpush1.msra.mxu0 0.0
    %680 = vmatprep.subr.mxu0 0.0
    %681 = vmatpush1.msra.mxu0 0.0
    %682 = vmatprep.subr.mxu0 0.0
    %683 = vmatpush1.msra.mxu0 0.0
    %684 = vmatprep.subr.mxu0 0.0
    %685 = vmatpush1.msra.mxu0 0.0
    %686 = vmatprep.subr.mxu0 0.0
    %687 = vmatpush1.msra.mxu0 0.0
    %688 = vmatprep.subr.mxu0 0.0
    %689 = vmatpush1.msra.mxu0 0.0
    %690 = vmatprep.subr.mxu0 0.0
    %691 = vmatpush1.msra.mxu0 0.0
    %692 = vmatprep.subr.mxu0 0.0
    %693 = vmatpush1.msra.mxu0 0.0
    %694 = vmatprep.subr.mxu0 0.0
    %695 = vmatpush1.msra.mxu0 0.0
    %696 = vmatprep.subr.mxu0 0.0
    %697 = vmatpush1.msra.mxu0 0.0
    %698 = vmatprep.subr.mxu0 0.0
    %699 = vmatpush1.msra.mxu0 0.0
    %700 = vmatprep.subr.mxu0 0.0
    %701 = vmatpush1.msra.mxu0 0.0
    %702 = vmatprep.subr.mxu0 0.0
    %703 = vmatpush1.msra.mxu0 0.0
    %704 = vmatprep.subr.mxu0 0.0
    %705 = vmatpush1.msra.mxu0 0.0
    %706 = vmatprep.subr.mxu0 0.0
    %707 = vmatpush1.msra.mxu0 0.0
    %708 = vmatprep.subr.mxu0 0.0
    %709 = vmatpush1.msra.mxu0 0.0
    %710 = vmatprep.subr.mxu0 0.0
    %711 = vmatpush1.msra.mxu0 0.0
    %712 = vmatprep.subr.mxu0 0.0
    %713 = vmatpush1.msra.mxu0 0.0
    %714 = vmatprep.subr.mxu0 0.0
    %715 = vmatpush1.msra.mxu0 0.0
    %716 = vmatprep.subr.mxu0 0.0
    %717 = vmatpush1.msra.mxu0 0.0
    %718 = vmatprep.subr.mxu0 0.0
    %719 = vmatpush1.msra.mxu0 0.0
    %720 = vmatprep.subr.mxu0 0.0
    %721 = vmatpush1.msra.mxu0 0.0
    %722 = vmatprep.subr.mxu0 0.0
    %723 = vmatpush1.msra.mxu0 0.0
    %724 = vmatprep.subr.mxu0 0.0
    %725 = vmatpush1.msra.mxu0 0.0
    %726 = vmatprep.mubr.f32.mxu0 0.0
    %727 = vmatmul.mubr.f32.gmra.mrb[0].mxu0 %v639
    %v728 = vpop.f32.mrb[0].mxu0
    %v729 = vadd.f32 %v637, %v728
    %v730 = vpop.f32.mrb[0].mxu0
    %731 = vmatprep.mubr.f32.mxu0 0.0
    %732 = vmatmul.mubr.f32.gmra.mrb[0].mxu0 %v642
    %v733 = vpop.f32.mrb[0].mxu0
    %v734 = vadd.f32 %v637, %v733
    %v735 = vpop.f32.mrb[0].mxu0
    %736 = vmatprep.mubr.f32.mxu0 0.0
    %737 = vmatmul.mubr.f32.gmra.mrb[0].mxu0 %v645
    %v738 = vpop.f32.mrb[0].mxu0
    %v739 = vadd.f32 %v637, %v738
    %v740 = vpop.f32.mrb[0].mxu0
    %741 = vmatprep.mubr.f32.mxu0 0.0
    %742 = vmatmul.mubr.f32.gmra.mrb[0].mxu0 %v648
    %v743 = vpop.f32.mrb[0].mxu0
    %v744 = vadd.f32 %v637, %v743
    %v745 = vpop.f32.mrb[0].mxu0
    %746 = vmatprep.mubr.f32.mxu0 0.0
    %747 = vmatmul.mubr.f32.gmra.mrb[0].mxu0 %v651
    %v748 = vpop.f32.mrb[0].mxu0
    %v749 = vadd.f32 %v637, %v748
    %v750 = vpop.f32.mrb[0].mxu0
    %751 = vmatprep.mubr.f32.mxu0 0.0
    %752 = vmatmul.mubr.f32.gmra.mrb[0].mxu0 %v654
    %v753 = vpop.f32.mrb[0].mxu0
    %v754 = vadd.f32 %v637, %v753
    %v755 = vpop.f32.mrb[0].mxu0
    %756 = vmatprep.mubr.f32.mxu0 0.0
    %757 = vmatmul.mubr.f32.gmra.mrb[0].mxu0 %v657
    %v758 = vpop.f32.mrb[0].mxu0
    %v759 = vadd.f32 %v637, %v758
    %v760 = vpop.f32.mrb[0].mxu0
    %761 = vmatprep.mubr.f32.mxu0 0.0
    %762 = vmatmul.mubr.f32.gmra.mrb[0].mxu0 %v660
    %v763 = vpop.f32.mrb[0].mxu0
    %v764 = vadd.f32 %v637, %v763
    %v765 = vpop.f32.mrb[0].mxu0
    %766 = vdwg.mxu0
    %v767 = vld [vmem:[%s11 + $0x80] sm:$0xff]
    %v768 = vld [vmem:[%s11 + $0x88] sm:$0xff]
    %v769 = vld [vmem:[%s11 + $0x90] sm:$0xff]
    %v770 = vld [vmem:[%s11 + $0x98] sm:$0xff]
    %v771 = vld [vmem:[%s11 + $0xa0] sm:$0x1]
    %v772 = vlaneseq
    %v773 = vshrl.u32 %v772, 7
    %v774 = vsub.s32 0, %v773
    %v775 = vrot.slane %v771, %v774
    %776 = vmatprep.subr.mxu0 0.0
    %777 = vmatpush1.msra.mxu0 %v767
    %778 = vmatprep.subr.mxu0 0.0
    %779 = vmatpush1.msra.mxu0 %v768
    %780 = vmatprep.subr.mxu0 0.0
    %781 = vmatpush1.msra.mxu0 %v769
    %782 = vmatprep.subr.mxu0 0.0
    %783 = vmatpush1.msra.mxu0 %v770
    %784 = vmatprep.subr.mxu0 0.0
    %785 = vmatpush1.msra.mxu0 0.0
    %786 = vmatprep.subr.mxu0 0.0
    %787 = vmatpush1.msra.mxu0 0.0
    %788 = vmatprep.subr.mxu0 0.0
    %789 = vmatpush1.msra.mxu0 0.0
    %790 = vmatprep.subr.mxu0 0.0
    %791 = vmatpush1.msra.mxu0 0.0
    %792 = vmatprep.subr.mxu0 0.0
    %793 = vmatpush1.msra.mxu0 0.0
    %794 = vmatprep.subr.mxu0 0.0
    %795 = vmatpush1.msra.mxu0 0.0
    %796 = vmatprep.subr.mxu0 0.0
    %797 = vmatpush1.msra.mxu0 0.0
    %798 = vmatprep.subr.mxu0 0.0
    %799 = vmatpush1.msra.mxu0 0.0
    %800 = vmatprep.subr.mxu0 0.0
    %801 = vmatpush1.msra.mxu0 0.0
    %802 = vmatprep.subr.mxu0 0.0
    %803 = vmatpush1.msra.mxu0 0.0
    %804 = vmatprep.subr.mxu0 0.0
    %805 = vmatpush1.msra.mxu0 0.0
    %806 = vmatprep.subr.mxu0 0.0
    %807 = vmatpush1.msra.mxu0 0.0
    %808 = vmatprep.subr.mxu0 0.0
    %809 = vmatpush1.msra.mxu0 0.0
    %810 = vmatprep.subr.mxu0 0.0
    %811 = vmatpush1.msra.mxu0 0.0
    %812 = vmatprep.subr.mxu0 0.0
    %813 = vmatpush1.msra.mxu0 0.0
    %814 = vmatprep.subr.mxu0 0.0
    %815 = vmatpush1.msra.mxu0 0.0
    %816 = vmatprep.subr.mxu0 0.0
    %817 = vmatpush1.msra.mxu0 0.0
    %818 = vmatprep.subr.mxu0 0.0
    %819 = vmatpush1.msra.mxu0 0.0
    %820 = vmatprep.subr.mxu0 0.0
    %821 = vmatpush1.msra.mxu0 0.0
    %822 = vmatprep.subr.mxu0 0.0
    %823 = vmatpush1.msra.mxu0 0.0
    %824 = vmatprep.subr.mxu0 0.0
    %825 = vmatpush1.msra.mxu0 0.0
    %826 = vmatprep.subr.mxu0 0.0
    %827 = vmatpush1.msra.mxu0 0.0
    %828 = vmatprep.subr.mxu0 0.0
    %829 = vmatpush1.msra.mxu0 0.0
    %830 = vmatprep.subr.mxu0 0.0
    %831 = vmatpush1.msra.mxu0 0.0
    %832 = vmatprep.subr.mxu0 0.0
    %833 = vmatpush1.msra.mxu0 0.0
    %834 = vmatprep.subr.mxu0 0.0
    %835 = vmatpush1.msra.mxu0 0.0
    %836 = vmatprep.subr.mxu0 0.0
    %837 = vmatpush1.msra.mxu0 0.0
    %838 = vmatprep.subr.mxu0 0.0
    %839 = vmatpush1.msra.mxu0 0.0
    %840 = vmatprep.mubr.f32.mxu0 0.0
    %841 = vmatmul.mubr.f32.gmra.mrb[0].mxu0 %v639
    %v842 = vpop.f32.mrb[0].mxu0
    %v843 = vadd.f32 %v775, %v842
    %v844 = vpop.f32.mrb[0].mxu0
    %845 = vmatprep.mubr.f32.mxu0 0.0
    %846 = vmatmul.mubr.f32.gmra.mrb[0].mxu0 %v642
    %v847 = vpop.f32.mrb[0].mxu0
    %v848 = vadd.f32 %v775, %v847
    %v849 = vpop.f32.mrb[0].mxu0
    %850 = vmatprep.mubr.f32.mxu0 0.0
    %851 = vmatmul.mubr.f32.gmra.mrb[0].mxu0 %v645
    %v852 = vpop.f32.mrb[0].mxu0
    %v853 = vadd.f32 %v775, %v852
    %v854 = vpop.f32.mrb[0].mxu0
    %855 = vmatprep.mubr.f32.mxu0 0.0
    %856 = vmatmul.mubr.f32.gmra.mrb[0].mxu0 %v648
    %v857 = vpop.f32.mrb[0].mxu0
    %v858 = vadd.f32 %v775, %v857
    %v859 = vpop.f32.mrb[0].mxu0
    %860 = vmatprep.mubr.f32.mxu0 0.0
    %861 = vmatmul.mubr.f32.gmra.mrb[0].mxu0 %v651
    %v862 = vpop.f32.mrb[0].mxu0
    %v863 = vadd.f32 %v775, %v862
    %v864 = vpop.f32.mrb[0].mxu0
    %865 = vmatprep.mubr.f32.mxu0 0.0
    %866 = vmatmul.mubr.f32.gmra.mrb[0].mxu0 %v654
    %v867 = vpop.f32.mrb[0].mxu0
    %v868 = vadd.f32 %v775, %v867
    %v869 = vpop.f32.mrb[0].mxu0
    %870 = vmatprep.mubr.f32.mxu0 0.0
    %871 = vmatmul.mubr.f32.gmra.mrb[0].mxu0 %v657
    %v872 = vpop.f32.mrb[0].mxu0
    %v873 = vadd.f32 %v775, %v872
    %v874 = vpop.f32.mrb[0].mxu0
    %875 = vmatprep.mubr.f32.mxu0 0.0
    %876 = vmatmul.mubr.f32.gmra.mrb[0].mxu0 %v660
    %v877 = vpop.f32.mrb[0].mxu0
    %v878 = vadd.f32 %v775, %v877
    %v879 = vpop.f32.mrb[0].mxu0
    %880 = vdwg.mxu0
    %v881 = vld [vmem:[%s2] sm:$0xff]
    %v882 = vld [vmem:[%s2 + $0x8] sm:$0xff]
    %v883 = vld [vmem:[%s2 + $0x10] sm:$0xff]
    %v884 = vld [vmem:[%s2 + $0x18] sm:$0xff]
    %v885 = vld [vmem:[%s2 + $0x20] sm:$0xff]
    %v886 = vld [vmem:[%s2 + $0x28] sm:$0xff]
    %v887 = vld [vmem:[%s2 + $0x30] sm:$0xff]
    %v888 = vld [vmem:[%s2 + $0x38] sm:$0xff]
    %v889 = vmul.f32 %v843, 0.5
    %v890 = vmul.f32 %v848, 0.5
    %v891 = vmul.f32 %v853, 0.5
    %v892 = vmul.f32 %v858, 0.5
    %v893 = vmul.f32 %v863, 0.5
    %v894 = vmul.f32 %v868, 0.5
    %v895 = vmul.f32 %v873, 0.5
    %v896 = vmul.f32 %v878, 0.5
    %v897 = vmul.f32 %v889, 1.442695
    %v898 = vpow.pop %v897
    %v899 = vmul.f32 %v890, 1.442695
    %v900 = vpow.pop %v899
    %v901 = vmul.f32 %v891, 1.442695
    %v902 = vpow.pop %v901
    %v903 = vmul.f32 %v892, 1.442695
    %v904 = vpow.pop %v903
    %v905 = vmul.f32 %v893, 1.442695
    %v906 = vpow.pop %v905
    %v907 = vmul.f32 %v894, 1.442695
    %v908 = vpow.pop %v907
    %v909 = vmul.f32 %v895, 1.442695
    %v910 = vpow.pop %v909
    %v911 = vmul.f32 %v896, 1.442695
    %v912 = vpow.pop %v911
    %v913 = vmul.f32 %v881, %v898
    %v914 = vmul.f32 %v882, %v900
    %v915 = vmul.f32 %v883, %v902
    %v916 = vmul.f32 %v884, %v904
    %v917 = vmul.f32 %v885, %v906
    %v918 = vmul.f32 %v886, %v908
    %v919 = vmul.f32 %v887, %v910
    %v920 = vmul.f32 %v888, %v912
    %v921 = vadd.f32 %v913, %v729
    %v922 = vadd.f32 %v914, %v734
    %v923 = vadd.f32 %v915, %v739
    %v924 = vadd.f32 %v916, %v744
    %v925 = vadd.f32 %v917, %v749
    %v926 = vadd.f32 %v918, %v754
    %v927 = vadd.f32 %v919, %v759
    %v928 = vadd.f32 %v920, %v764
    %v929 = vld [vmem:[%s11 + $0xa8] sm:$0xff]
    %v930 = vld [vmem:[%s11 + $0xb0] sm:$0xff]
    %v931 = vld [vmem:[%s11 + $0xb8] sm:$0xff]
    %v932 = vld [vmem:[%s11 + $0xc0] sm:$0xff]
    %v933 = vld [vmem:[%s11 + $0xc8] sm:$0xff]
    %934 = vmatprep.subr.mxu0 0.0
    %935 = vmatpush1.msra.mxu0 %v930
    %936 = vmatprep.subr.mxu0 0.0
    %937 = vmatpush1.msra.mxu0 %v931
    %938 = vmatprep.subr.mxu0 0.0
    %939 = vmatpush1.msra.mxu0 %v932
    %940 = vmatprep.subr.mxu0 0.0
    %941 = vmatpush1.msra.mxu0 %v933
    %942 = vmatprep.subr.mxu0 0.0
    %943 = vmatpush1.msra.mxu0 0.0
    %944 = vmatprep.subr.mxu0 0.0
    %945 = vmatpush1.msra.mxu0 0.0
    %946 = vmatprep.subr.mxu0 0.0
    %947 = vmatpush1.msra.mxu0 0.0
    %948 = vmatprep.subr.mxu0 0.0
    %949 = vmatpush1.msra.mxu0 0.0
    %950 = vmatprep.subr.mxu0 0.0
    %951 = vmatpush1.msra.mxu0 0.0
    %952 = vmatprep.subr.mxu0 0.0
    %953 = vmatpush1.msra.mxu0 0.0
    %954 = vmatprep.subr.mxu0 0.0
    %955 = vmatpush1.msra.mxu0 0.0
    %956 = vmatprep.subr.mxu0 0.0
    %957 = vmatpush1.msra.mxu0 0.0
    %958 = vmatprep.subr.mxu0 0.0
    %959 = vmatpush1.msra.mxu0 0.0
    %960 = vmatprep.subr.mxu0 0.0
    %961 = vmatpush1.msra.mxu0 0.0
    %962 = vmatprep.subr.mxu0 0.0
    %963 = vmatpush1.msra.mxu0 0.0
    %964 = vmatprep.subr.mxu0 0.0
    %965 = vmatpush1.msra.mxu0 0.0
    %966 = vmatprep.subr.mxu0 0.0
    %967 = vmatpush1.msra.mxu0 0.0
    %968 = vmatprep.subr.mxu0 0.0
    %969 = vmatpush1.msra.mxu0 0.0
    %970 = vmatprep.subr.mxu0 0.0
    %971 = vmatpush1.msra.mxu0 0.0
    %972 = vmatprep.subr.mxu0 0.0
    %973 = vmatpush1.msra.mxu0 0.0
    %974 = vmatprep.subr.mxu0 0.0
    %975 = vmatpush1.msra.mxu0 0.0
    %976 = vmatprep.subr.mxu0 0.0
    %977 = vmatpush1.msra.mxu0 0.0
    %978 = vmatprep.subr.mxu0 0.0
    %979 = vmatpush1.msra.mxu0 0.0
    %980 = vmatprep.subr.mxu0 0.0
    %981 = vmatpush1.msra.mxu0 0.0
    %982 = vmatprep.subr.mxu0 0.0
    %983 = vmatpush1.msra.mxu0 0.0
    %984 = vmatprep.subr.mxu0 0.0
    %985 = vmatpush1.msra.mxu0 0.0
    %986 = vmatprep.subr.mxu0 0.0
    %987 = vmatpush1.msra.mxu0 0.0
    %988 = vmatprep.subr.mxu0 0.0
    %989 = vmatpush1.msra.mxu0 0.0
    %990 = vmatprep.subr.mxu0 0.0
    %991 = vmatpush1.msra.mxu0 0.0
    %992 = vmatprep.subr.mxu0 0.0
    %993 = vmatpush1.msra.mxu0 0.0
    %994 = vmatprep.subr.mxu0 0.0
    %995 = vmatpush1.msra.mxu0 0.0
    %996 = vmatprep.subr.mxu0 0.0
    %997 = vmatpush1.msra.mxu0 0.0
    %998 = vmatprep.mubr.f32.mxu0 0.0
    %999 = vmatmul.mubr.f32.gmra.mrb[0].mxu0 %v351
    %v1000 = vpop.f32.mrb[0].mxu0
    %v1001 = vadd.f32 0.0, %v1000
    %v1002 = vpop.f32.mrb[0].mxu0
    %1003 = vmatprep.mubr.f32.mxu0 0.0
    %1004 = vmatmul.mubr.f32.gmra.mrb[0].mxu0 %v354
    %v1005 = vpop.f32.mrb[0].mxu0
    %v1006 = vadd.f32 0.0, %v1005
    %v1007 = vpop.f32.mrb[0].mxu0
    %1008 = vmatprep.mubr.f32.mxu0 0.0
    %1009 = vmatmul.mubr.f32.gmra.mrb[0].mxu0 %v357
    %v1010 = vpop.f32.mrb[0].mxu0
    %v1011 = vadd.f32 0.0, %v1010
    %v1012 = vpop.f32.mrb[0].mxu0
    %1013 = vmatprep.mubr.f32.mxu0 0.0
    %1014 = vmatmul.mubr.f32.gmra.mrb[0].mxu0 %v360
    %v1015 = vpop.f32.mrb[0].mxu0
    %v1016 = vadd.f32 0.0, %v1015
    %v1017 = vpop.f32.mrb[0].mxu0
    %1018 = vmatprep.mubr.f32.mxu0 0.0
    %1019 = vmatmul.mubr.f32.gmra.mrb[0].mxu0 %v363
    %v1020 = vpop.f32.mrb[0].mxu0
    %v1021 = vadd.f32 0.0, %v1020
    %v1022 = vpop.f32.mrb[0].mxu0
    %1023 = vmatprep.mubr.f32.mxu0 0.0
    %1024 = vmatmul.mubr.f32.gmra.mrb[0].mxu0 %v366
    %v1025 = vpop.f32.mrb[0].mxu0
    %v1026 = vadd.f32 0.0, %v1025
    %v1027 = vpop.f32.mrb[0].mxu0
    %1028 = vmatprep.mubr.f32.mxu0 0.0
    %1029 = vmatmul.mubr.f32.gmra.mrb[0].mxu0 %v369
    %v1030 = vpop.f32.mrb[0].mxu0
    %v1031 = vadd.f32 0.0, %v1030
    %v1032 = vpop.f32.mrb[0].mxu0
    %1033 = vmatprep.mubr.f32.mxu0 0.0
    %1034 = vmatmul.mubr.f32.gmra.mrb[0].mxu0 %v372
    %v1035 = vpop.f32.mrb[0].mxu0
    %v1036 = vadd.f32 0.0, %v1035
    %v1037 = vpop.f32.mrb[0].mxu0
    %1038 = vdwg.mxu0
    %vm1039 = vcmask 64512
    %v1041 = vsel %vm1039, %v921, 0
    %v1044 = vsel %vm1039, %v922, 0
    %v1047 = vsel %vm1039, %v923, 0
    %v1050 = vsel %vm1039, %v924, 0
    %v1053 = vsel %vm1039, %v925, 0
    %v1056 = vsel %vm1039, %v926, 0
    %v1059 = vsel %vm1039, %v927, 0
    %v1062 = vsel %vm1039, %v928, 0
    %1064 = vmatprep.subr.mxu0 0.0
    %1065 = vmatpush1.msra.mxu0 %v929
    %1066 = vmatprep.subr.mxu0 0.0
    %1067 = vmatpush1.msra.mxu0 0.0
    %1068 = vmatprep.subr.mxu0 0.0
    %1069 = vmatpush1.msra.mxu0 0.0
    %1070 = vmatprep.subr.mxu0 0.0
    %1071 = vmatpush1.msra.mxu0 0.0
    %1072 = vmatprep.subr.mxu0 0.0
    %1073 = vmatpush1.msra.mxu0 0.0
    %1074 = vmatprep.subr.mxu0 0.0
    %1075 = vmatpush1.msra.mxu0 0.0
    %1076 = vmatprep.subr.mxu0 0.0
    %1077 = vmatpush1.msra.mxu0 0.0
    %1078 = vmatprep.subr.mxu0 0.0
    %1079 = vmatpush1.msra.mxu0 0.0
    %1080 = vmatprep.subr.mxu0 0.0
    %1081 = vmatpush1.msra.mxu0 0.0
    %1082 = vmatprep.subr.mxu0 0.0
    %1083 = vmatpush1.msra.mxu0 0.0
    %1084 = vmatprep.subr.mxu0 0.0
    %1085 = vmatpush1.msra.mxu0 0.0
    %1086 = vmatprep.subr.mxu0 0.0
    %1087 = vmatpush1.msra.mxu0 0.0
    %1088 = vmatprep.subr.mxu0 0.0
    %1089 = vmatpush1.msra.mxu0 0.0
    %1090 = vmatprep.subr.mxu0 0.0
    %1091 = vmatpush1.msra.mxu0 0.0
    %1092 = vmatprep.subr.mxu0 0.0
    %1093 = vmatpush1.msra.mxu0 0.0
    %1094 = vmatprep.subr.mxu0 0.0
    %1095 = vmatpush1.msra.mxu0 0.0
    %1096 = vmatprep.subr.mxu0 0.0
    %1097 = vmatpush1.msra.mxu0 0.0
    %1098 = vmatprep.subr.mxu0 0.0
    %1099 = vmatpush1.msra.mxu0 0.0
    %1100 = vmatprep.subr.mxu0 0.0
    %1101 = vmatpush1.msra.mxu0 0.0
    %1102 = vmatprep.subr.mxu0 0.0
    %1103 = vmatpush1.msra.mxu0 0.0
    %1104 = vmatprep.subr.mxu0 0.0
    %1105 = vmatpush1.msra.mxu0 0.0
    %1106 = vmatprep.subr.mxu0 0.0
    %1107 = vmatpush1.msra.mxu0 0.0
    %1108 = vmatprep.subr.mxu0 0.0
    %1109 = vmatpush1.msra.mxu0 0.0
    %1110 = vmatprep.subr.mxu0 0.0
    %1111 = vmatpush1.msra.mxu0 0.0
    %1112 = vmatprep.subr.mxu0 0.0
    %1113 = vmatpush1.msra.mxu0 0.0
    %1114 = vmatprep.subr.mxu0 0.0
    %1115 = vmatpush1.msra.mxu0 0.0
    %1116 = vmatprep.subr.mxu0 0.0
    %1117 = vmatpush1.msra.mxu0 0.0
    %1118 = vmatprep.subr.mxu0 0.0
    %1119 = vmatpush1.msra.mxu0 0.0
    %1120 = vmatprep.subr.mxu0 0.0
    %1121 = vmatpush1.msra.mxu0 0.0
    %1122 = vmatprep.subr.mxu0 0.0
    %1123 = vmatpush1.msra.mxu0 0.0
    %1124 = vmatprep.subr.mxu0 0.0
    %1125 = vmatpush1.msra.mxu0 0.0
    %1126 = vmatprep.subr.mxu0 0.0
    %1127 = vmatpush1.msra.mxu0 0.0
    %1128 = vmatprep.mubr.f32.mxu0 0.0
    %1129 = vmatmul.mubr.f32.gmra.mrb[0].mxu0 %v1041
    %v1130 = vpop.f32.mrb[0].mxu0
    %v1131 = vadd.f32 %v1001, %v1130
    %v1132 = vpop.f32.mrb[0].mxu0
    %1133 = vmatprep.mubr.f32.mxu0 0.0
    %1134 = vmatmul.mubr.f32.gmra.mrb[0].mxu0 %v1044
    %v1135 = vpop.f32.mrb[0].mxu0
    %v1136 = vadd.f32 %v1006, %v1135
    %v1137 = vpop.f32.mrb[0].mxu0
    %1138 = vmatprep.mubr.f32.mxu0 0.0
    %1139 = vmatmul.mubr.f32.gmra.mrb[0].mxu0 %v1047
    %v1140 = vpop.f32.mrb[0].mxu0
    %v1141 = vadd.f32 %v1011, %v1140
    %v1142 = vpop.f32.mrb[0].mxu0
    %1143 = vmatprep.mubr.f32.mxu0 0.0
    %1144 = vmatmul.mubr.f32.gmra.mrb[0].mxu0 %v1050
    %v1145 = vpop.f32.mrb[0].mxu0
    %v1146 = vadd.f32 %v1016, %v1145
    %v1147 = vpop.f32.mrb[0].mxu0
    %1148 = vmatprep.mubr.f32.mxu0 0.0
    %1149 = vmatmul.mubr.f32.gmra.mrb[0].mxu0 %v1053
    %v1150 = vpop.f32.mrb[0].mxu0
    %v1151 = vadd.f32 %v1021, %v1150
    %v1152 = vpop.f32.mrb[0].mxu0
    %1153 = vmatprep.mubr.f32.mxu0 0.0
    %1154 = vmatmul.mubr.f32.gmra.mrb[0].mxu0 %v1056
    %v1155 = vpop.f32.mrb[0].mxu0
    %v1156 = vadd.f32 %v1026, %v1155
    %v1157 = vpop.f32.mrb[0].mxu0
    %1158 = vmatprep.mubr.f32.mxu0 0.0
    %1159 = vmatmul.mubr.f32.gmra.mrb[0].mxu0 %v1059
    %v1160 = vpop.f32.mrb[0].mxu0
    %v1161 = vadd.f32 %v1031, %v1160
    %v1162 = vpop.f32.mrb[0].mxu0
    %1163 = vmatprep.mubr.f32.mxu0 0.0
    %1164 = vmatmul.mubr.f32.gmra.mrb[0].mxu0 %v1062
    %v1165 = vpop.f32.mrb[0].mxu0
    %v1166 = vadd.f32 %v1036, %v1165
    %v1167 = vpop.f32.mrb[0].mxu0
    %1168 = vdwg.mxu0
    %v1169 = vld [vmem:[%s11 + $0xd0] sm:$0x1]
    %v1170 = vlaneseq
    %v1171 = vshrl.u32 %v1170, 7
    %v1172 = vsub.s32 0, %v1171
    %v1173 = vrot.slane %v1169, %v1172
    %v1174 = vadd.f32 %v1131, %v1173
    %v1175 = vadd.f32 %v1136, %v1173
    %v1176 = vadd.f32 %v1141, %v1173
    %v1177 = vadd.f32 %v1146, %v1173
    %v1178 = vadd.f32 %v1151, %v1173
    %v1179 = vadd.f32 %v1156, %v1173
    %v1180 = vadd.f32 %v1161, %v1173
    %v1181 = vadd.f32 %v1166, %v1173
    %v1182 = vmax.f32 %v1174, 0.0
    %v1183 = vmax.f32 %v1175, 0.0
    %v1184 = vmax.f32 %v1176, 0.0
    %v1185 = vmax.f32 %v1177, 0.0
    %v1186 = vmax.f32 %v1178, 0.0
    %v1187 = vmax.f32 %v1179, 0.0
    %v1188 = vmax.f32 %v1180, 0.0
    %v1189 = vmax.f32 %v1181, 0.0
    %v1190 = vld [vmem:[%s11 + $0xd8] sm:$0xff]
    %v1191 = vld [vmem:[%s11 + $0xe0] sm:$0xff]
    %v1192 = vld [vmem:[%s11 + $0xe8] sm:$0xff]
    %v1193 = vld [vmem:[%s11 + $0xf0] sm:$0xff]
    %v1194 = vld [vmem:[%s11 + $0xf8] sm:$0x1]
    %v1195 = vlaneseq
    %v1196 = vshrl.u32 %v1195, 7
    %v1197 = vsub.s32 0, %v1196
    %v1198 = vrot.slane %v1194, %v1197
    %v1200 = vsel %vm349, %v1182, 0
    %v1203 = vsel %vm349, %v1183, 0
    %v1206 = vsel %vm349, %v1184, 0
    %v1209 = vsel %vm349, %v1185, 0
    %v1212 = vsel %vm349, %v1186, 0
    %v1215 = vsel %vm349, %v1187, 0
    %v1218 = vsel %vm349, %v1188, 0
    %v1221 = vsel %vm349, %v1189, 0
    %1223 = vmatprep.subr.mxu0 0.0
    %1224 = vmatpush1.msra.mxu0 %v1190
    %1225 = vmatprep.subr.mxu0 0.0
    %1226 = vmatpush1.msra.mxu0 %v1191
    %1227 = vmatprep.subr.mxu0 0.0
    %1228 = vmatpush1.msra.mxu0 %v1192
    %1229 = vmatprep.subr.mxu0 0.0
    %1230 = vmatpush1.msra.mxu0 %v1193
    %1231 = vmatprep.subr.mxu0 0.0
    %1232 = vmatpush1.msra.mxu0 0.0
    %1233 = vmatprep.subr.mxu0 0.0
    %1234 = vmatpush1.msra.mxu0 0.0
    %1235 = vmatprep.subr.mxu0 0.0
    %1236 = vmatpush1.msra.mxu0 0.0
    %1237 = vmatprep.subr.mxu0 0.0
    %1238 = vmatpush1.msra.mxu0 0.0
    %1239 = vmatprep.subr.mxu0 0.0
    %1240 = vmatpush1.msra.mxu0 0.0
    %1241 = vmatprep.subr.mxu0 0.0
    %1242 = vmatpush1.msra.mxu0 0.0
    %1243 = vmatprep.subr.mxu0 0.0
    %1244 = vmatpush1.msra.mxu0 0.0
    %1245 = vmatprep.subr.mxu0 0.0
    %1246 = vmatpush1.msra.mxu0 0.0
    %1247 = vmatprep.subr.mxu0 0.0
    %1248 = vmatpush1.msra.mxu0 0.0
    %1249 = vmatprep.subr.mxu0 0.0
    %1250 = vmatpush1.msra.mxu0 0.0
    %1251 = vmatprep.subr.mxu0 0.0
    %1252 = vmatpush1.msra.mxu0 0.0
    %1253 = vmatprep.subr.mxu0 0.0
    %1254 = vmatpush1.msra.mxu0 0.0
    %1255 = vmatprep.subr.mxu0 0.0
    %1256 = vmatpush1.msra.mxu0 0.0
    %1257 = vmatprep.subr.mxu0 0.0
    %1258 = vmatpush1.msra.mxu0 0.0
    %1259 = vmatprep.subr.mxu0 0.0
    %1260 = vmatpush1.msra.mxu0 0.0
    %1261 = vmatprep.subr.mxu0 0.0
    %1262 = vmatpush1.msra.mxu0 0.0
    %1263 = vmatprep.subr.mxu0 0.0
    %1264 = vmatpush1.msra.mxu0 0.0
    %1265 = vmatprep.subr.mxu0 0.0
    %1266 = vmatpush1.msra.mxu0 0.0
    %1267 = vmatprep.subr.mxu0 0.0
    %1268 = vmatpush1.msra.mxu0 0.0
    %1269 = vmatprep.subr.mxu0 0.0
    %1270 = vmatpush1.msra.mxu0 0.0
    %1271 = vmatprep.subr.mxu0 0.0
    %1272 = vmatpush1.msra.mxu0 0.0
    %1273 = vmatprep.subr.mxu0 0.0
    %1274 = vmatpush1.msra.mxu0 0.0
    %1275 = vmatprep.subr.mxu0 0.0
    %1276 = vmatpush1.msra.mxu0 0.0
    %1277 = vmatprep.subr.mxu0 0.0
    %1278 = vmatpush1.msra.mxu0 0.0
    %1279 = vmatprep.subr.mxu0 0.0
    %1280 = vmatpush1.msra.mxu0 0.0
    %1281 = vmatprep.subr.mxu0 0.0
    %1282 = vmatpush1.msra.mxu0 0.0
    %1283 = vmatprep.subr.mxu0 0.0
    %1284 = vmatpush1.msra.mxu0 0.0
    %1285 = vmatprep.subr.mxu0 0.0
    %1286 = vmatpush1.msra.mxu0 0.0
    %1287 = vmatprep.mubr.f32.mxu0 0.0
    %1288 = vmatmul.mubr.f32.gmra.mrb[0].mxu0 %v1200
    %v1289 = vpop.f32.mrb[0].mxu0
    %v1290 = vadd.f32 %v1198, %v1289
    %v1291 = vpop.f32.mrb[0].mxu0
    %1292 = vmatprep.mubr.f32.mxu0 0.0
    %1293 = vmatmul.mubr.f32.gmra.mrb[0].mxu0 %v1203
    %v1294 = vpop.f32.mrb[0].mxu0
    %v1295 = vadd.f32 %v1198, %v1294
    %v1296 = vpop.f32.mrb[0].mxu0
    %1297 = vmatprep.mubr.f32.mxu0 0.0
    %1298 = vmatmul.mubr.f32.gmra.mrb[0].mxu0 %v1206
    %v1299 = vpop.f32.mrb[0].mxu0
    %v1300 = vadd.f32 %v1198, %v1299
    %v1301 = vpop.f32.mrb[0].mxu0
    %1302 = vmatprep.mubr.f32.mxu0 0.0
    %1303 = vmatmul.mubr.f32.gmra.mrb[0].mxu0 %v1209
    %v1304 = vpop.f32.mrb[0].mxu0
    %v1305 = vadd.f32 %v1198, %v1304
    %v1306 = vpop.f32.mrb[0].mxu0
    %1307 = vmatprep.mubr.f32.mxu0 0.0
    %1308 = vmatmul.mubr.f32.gmra.mrb[0].mxu0 %v1212
    %v1309 = vpop.f32.mrb[0].mxu0
    %v1310 = vadd.f32 %v1198, %v1309
    %v1311 = vpop.f32.mrb[0].mxu0
    %1312 = vmatprep.mubr.f32.mxu0 0.0
    %1313 = vmatmul.mubr.f32.gmra.mrb[0].mxu0 %v1215
    %v1314 = vpop.f32.mrb[0].mxu0
    %v1315 = vadd.f32 %v1198, %v1314
    %v1316 = vpop.f32.mrb[0].mxu0
    %1317 = vmatprep.mubr.f32.mxu0 0.0
    %1318 = vmatmul.mubr.f32.gmra.mrb[0].mxu0 %v1218
    %v1319 = vpop.f32.mrb[0].mxu0
    %v1320 = vadd.f32 %v1198, %v1319
    %v1321 = vpop.f32.mrb[0].mxu0
    %1322 = vmatprep.mubr.f32.mxu0 0.0
    %1323 = vmatmul.mubr.f32.gmra.mrb[0].mxu0 %v1221
    %v1324 = vpop.f32.mrb[0].mxu0
    %v1325 = vadd.f32 %v1198, %v1324
    %v1326 = vpop.f32.mrb[0].mxu0
    %1327 = vdwg.mxu0
    %v1328 = vlaneseq
    %v1329 = vand.u32 %v1328, 127
    %vm1330 = vcmp.eq.s32.totalorder %v1329, 0
    %v1331 = vxor.u32 %v1290, 2147483648
    %v1332 = vxor.u32 %v1295, 2147483648
    %v1333 = vxor.u32 %v1300, 2147483648
    %v1334 = vxor.u32 %v1305, 2147483648
    %v1335 = vxor.u32 %v1310, 2147483648
    %v1336 = vxor.u32 %v1315, 2147483648
    %v1337 = vxor.u32 %v1320, 2147483648
    %v1338 = vxor.u32 %v1325, 2147483648
    %v1339 = vmul.f32 %v1331, 1.442695
    %v1340 = vpow.pop %v1339
    %v1341 = vmul.f32 %v1332, 1.442695
    %v1342 = vpow.pop %v1341
    %v1343 = vmul.f32 %v1333, 1.442695
    %v1344 = vpow.pop %v1343
    %v1345 = vmul.f32 %v1334, 1.442695
    %v1346 = vpow.pop %v1345
    %v1347 = vmul.f32 %v1335, 1.442695
    %v1348 = vpow.pop %v1347
    %v1349 = vmul.f32 %v1336, 1.442695
    %v1350 = vpow.pop %v1349
    %v1351 = vmul.f32 %v1337, 1.442695
    %v1352 = vpow.pop %v1351
    %v1353 = vmul.f32 %v1338, 1.442695
    %v1354 = vpow.pop %v1353
    %v1355 = vadd.f32 %v1340, 1.0
    %v1356 = vadd.f32 %v1342, 1.0
    %v1357 = vadd.f32 %v1344, 1.0
    %v1358 = vadd.f32 %v1346, 1.0
    %v1359 = vadd.f32 %v1348, 1.0
    %v1360 = vadd.f32 %v1350, 1.0
    %v1361 = vadd.f32 %v1352, 1.0
    %v1362 = vadd.f32 %v1354, 1.0
    %v1363 = vrcp.pop %v1355
    %v1364 = vmul.f32 1.0, %v1363
    %v1365 = vrcp.pop %v1356
    %v1366 = vmul.f32 1.0, %v1365
    %v1367 = vrcp.pop %v1357
    %v1368 = vmul.f32 1.0, %v1367
    %v1369 = vrcp.pop %v1358
    %v1370 = vmul.f32 1.0, %v1369
    %v1371 = vrcp.pop %v1359
    %v1372 = vmul.f32 1.0, %v1371
    %v1373 = vrcp.pop %v1360
    %v1374 = vmul.f32 1.0, %v1373
    %v1375 = vrcp.pop %v1361
    %v1376 = vmul.f32 1.0, %v1375
    %v1377 = vrcp.pop %v1362
    %v1378 = vmul.f32 1.0, %v1377
    %v1379 = vmax.f32 %v1290, -40.0
    %v1380 = vmax.f32 %v1295, -40.0
    %v1381 = vmax.f32 %v1300, -40.0
    %v1382 = vmax.f32 %v1305, -40.0
    %v1383 = vmax.f32 %v1310, -40.0
    %v1384 = vmax.f32 %v1315, -40.0
    %v1385 = vmax.f32 %v1320, -40.0
    %v1386 = vmax.f32 %v1325, -40.0
    %v1387 = vmin.f32 %v1379, 40.0
    %v1388 = vmin.f32 %v1380, 40.0
    %v1389 = vmin.f32 %v1381, 40.0
    %v1390 = vmin.f32 %v1382, 40.0
    %v1391 = vmin.f32 %v1383, 40.0
    %v1392 = vmin.f32 %v1384, 40.0
    %v1393 = vmin.f32 %v1385, 40.0
    %v1394 = vmin.f32 %v1386, 40.0
    %v1395 = vsel %vm1330, %v1364, %v1387
    %v1396 = vsel %vm1330, %v1366, %v1388
    %v1397 = vsel %vm1330, %v1368, %v1389
    %v1398 = vsel %vm1330, %v1370, %v1390
    %v1399 = vsel %vm1330, %v1372, %v1391
    %v1400 = vsel %vm1330, %v1374, %v1392
    %v1401 = vsel %vm1330, %v1376, %v1393
    %v1402 = vsel %vm1330, %v1378, %v1394
    %v1403 = vld [vmem:[%s3] sm:$0xff]
    %v1404 = vld [vmem:[%s3 + $0x8] sm:$0xff]
    %v1405 = vld [vmem:[%s3 + $0x10] sm:$0xff]
    %v1406 = vld [vmem:[%s3 + $0x18] sm:$0xff]
    %v1407 = vld [vmem:[%s3 + $0x20] sm:$0xff]
    %v1408 = vld [vmem:[%s3 + $0x28] sm:$0xff]
    %v1409 = vld [vmem:[%s3 + $0x30] sm:$0xff]
    %v1410 = vld [vmem:[%s3 + $0x38] sm:$0xff]
    %v1411 = vmul.f32 %v42, %v1403
    %v1412 = vmul.f32 %v43, %v1404
    %v1413 = vmul.f32 %v44, %v1405
    %v1414 = vmul.f32 %v45, %v1406
    %v1415 = vmul.f32 %v46, %v1407
    %v1416 = vmul.f32 %v47, %v1408
    %v1417 = vmul.f32 %v48, %v1409
    %v1418 = vmul.f32 %v49, %v1410
    %v1419 = vmul.f32 %v1395, %v1403
    %v1420 = vmul.f32 %v1396, %v1404
    %v1421 = vmul.f32 %v1397, %v1405
    %v1422 = vmul.f32 %v1398, %v1406
    %v1423 = vmul.f32 %v1399, %v1407
    %v1424 = vmul.f32 %v1400, %v1408
    %v1425 = vmul.f32 %v1401, %v1409
    %v1426 = vmul.f32 %v1402, %v1410
    %v1427 = vsub.f32 %v1411, %v1419
    %v1428 = vsub.f32 %v1412, %v1420
    %v1429 = vsub.f32 %v1413, %v1421
    %v1430 = vsub.f32 %v1414, %v1422
    %v1431 = vsub.f32 %v1415, %v1423
    %v1432 = vsub.f32 %v1416, %v1424
    %v1433 = vsub.f32 %v1417, %v1425
    %v1434 = vsub.f32 %v1418, %v1426
    %v1435 = vand.u32 2147483647, %v1427
    %v1436 = vand.u32 2147483647, %v1428
    %v1437 = vand.u32 2147483647, %v1429
    %v1438 = vand.u32 2147483647, %v1430
    %v1439 = vand.u32 2147483647, %v1431
    %v1440 = vand.u32 2147483647, %v1432
    %v1441 = vand.u32 2147483647, %v1433
    %v1442 = vand.u32 2147483647, %v1434
    %vm1443 = vcmp.lt.f32.partialorder %v1435, 1.0
    %vm1444 = vcmp.lt.f32.partialorder %v1436, 1.0
    %vm1445 = vcmp.lt.f32.partialorder %v1437, 1.0
    %vm1446 = vcmp.lt.f32.partialorder %v1438, 1.0
    %vm1447 = vcmp.lt.f32.partialorder %v1439, 1.0
    %vm1448 = vcmp.lt.f32.partialorder %v1440, 1.0
    %vm1449 = vcmp.lt.f32.partialorder %v1441, 1.0
    %vm1450 = vcmp.lt.f32.partialorder %v1442, 1.0
    %v1451 = vmul.f32 %v1427, 0.5
    %v1452 = vmul.f32 %v1428, 0.5
    %v1453 = vmul.f32 %v1429, 0.5
    %v1454 = vmul.f32 %v1430, 0.5
    %v1455 = vmul.f32 %v1431, 0.5
    %v1456 = vmul.f32 %v1432, 0.5
    %v1457 = vmul.f32 %v1433, 0.5
    %v1458 = vmul.f32 %v1434, 0.5
    %v1459 = vmul.f32 %v1451, %v1427
    %v1460 = vmul.f32 %v1452, %v1428
    %v1461 = vmul.f32 %v1453, %v1429
    %v1462 = vmul.f32 %v1454, %v1430
    %v1463 = vmul.f32 %v1455, %v1431
    %v1464 = vmul.f32 %v1456, %v1432
    %v1465 = vmul.f32 %v1457, %v1433
    %v1466 = vmul.f32 %v1458, %v1434
    %v1467 = vsub.f32 %v1435, 0.5
    %v1468 = vsub.f32 %v1436, 0.5
    %v1469 = vsub.f32 %v1437, 0.5
    %v1470 = vsub.f32 %v1438, 0.5
    %v1471 = vsub.f32 %v1439, 0.5
    %v1472 = vsub.f32 %v1440, 0.5
    %v1473 = vsub.f32 %v1441, 0.5
    %v1474 = vsub.f32 %v1442, 0.5
    %v1475 = vsel %vm1443, %v1459, %v1467
    %v1476 = vsel %vm1444, %v1460, %v1468
    %v1477 = vsel %vm1445, %v1461, %v1469
    %v1478 = vsel %vm1446, %v1462, %v1470
    %v1479 = vsel %vm1447, %v1463, %v1471
    %v1480 = vsel %vm1448, %v1464, %v1472
    %v1481 = vsel %vm1449, %v1465, %v1473
    %v1482 = vsel %vm1450, %v1466, %v1474
    %v1483 = vsel %vm1330, %v1475, 0.0
    %v1484 = vsel %vm1330, %v1476, 0.0
    %v1485 = vsel %vm1330, %v1477, 0.0
    %v1486 = vsel %vm1330, %v1478, 0.0
    %v1487 = vsel %vm1330, %v1479, 0.0
    %v1488 = vsel %vm1330, %v1480, 0.0
    %v1489 = vsel %vm1330, %v1481, 0.0
    %v1490 = vsel %vm1330, %v1482, 0.0
    %v1491 = vsel %vm64, %v1483, 0.0
    %v1492 = vsel %vm64, %v1484, 0.0
    %v1493 = vadd.f32 %v1491, %v1492
    %v1494 = vsel %vm64, %v1485, 0.0
    %v1495 = vadd.f32 %v1493, %v1494
    %v1496 = vsel %vm64, %v1486, 0.0
    %v1497 = vadd.f32 %v1495, %v1496
    %v1498 = vsel %vm64, %v1487, 0.0
    %v1499 = vadd.f32 %v1497, %v1498
    %v1500 = vsel %vm64, %v1488, 0.0
    %v1501 = vadd.f32 %v1499, %v1500
    %v1502 = vsel %vm64, %v1489, 0.0
    %v1503 = vadd.f32 %v1501, %v1502
    %v1504 = vsel %vm64, %v1490, 0.0
    %v1505 = vadd.f32 %v1503, %v1504
    %1506 = vadd.xlane.f32.xlu0 %v1505
    %v1507 = vpop.xlane.xlu0 %1506
    %v1508 = vrot.slane %v1507, 4
    %v1509 = vadd.f32 %v1507, %v1508
    %v1510 = vrot.slane %v1509, 2
    %v1511 = vadd.f32 %v1509, %v1510
    %v1512 = vrot.slane %v1511, 1
    %v1513 = vadd.f32 %v1511, %v1512
    %s1514 = vtos %v1513
    %v1515 = vsel %vm1330, 0.0, %v1475
    %v1516 = vsel %vm1330, 0.0, %v1476
    %v1517 = vsel %vm1330, 0.0, %v1477
    %v1518 = vsel %vm1330, 0.0, %v1478
    %v1519 = vsel %vm1330, 0.0, %v1479
    %v1520 = vsel %vm1330, 0.0, %v1480
    %v1521 = vsel %vm1330, 0.0, %v1481
    %v1522 = vsel %vm1330, 0.0, %v1482
    %v1523 = vsel %vm64, %v1515, 0.0
    %v1524 = vsel %vm64, %v1516, 0.0
    %v1525 = vadd.f32 %v1523, %v1524
    %v1526 = vsel %vm64, %v1517, 0.0
    %v1527 = vadd.f32 %v1525, %v1526
    %v1528 = vsel %vm64, %v1518, 0.0
    %v1529 = vadd.f32 %v1527, %v1528
    %v1530 = vsel %vm64, %v1519, 0.0
    %v1531 = vadd.f32 %v1529, %v1530
    %v1532 = vsel %vm64, %v1520, 0.0
    %v1533 = vadd.f32 %v1531, %v1532
    %v1534 = vsel %vm64, %v1521, 0.0
    %v1535 = vadd.f32 %v1533, %v1534
    %v1536 = vsel %vm64, %v1522, 0.0
    %v1537 = vadd.f32 %v1535, %v1536
    %1538 = vadd.xlane.f32.xlu0 %v1537
    %v1539 = vpop.xlane.xlu0 %1538
    %v1540 = vrot.slane %v1539, 4
    %v1541 = vadd.f32 %v1539, %v1540
    %v1542 = vrot.slane %v1541, 2
    %v1543 = vadd.f32 %v1541, %v1542
    %v1544 = vrot.slane %v1543, 1
    %v1545 = vadd.f32 %v1543, %v1544
    %s1546 = vtos %v1545
    %v1547 = vadd.f32 %v843, 1.0
    %v1548 = vadd.f32 %v848, 1.0
    %v1549 = vadd.f32 %v853, 1.0
    %v1550 = vadd.f32 %v858, 1.0
    %v1551 = vadd.f32 %v863, 1.0
    %v1552 = vadd.f32 %v868, 1.0
    %v1553 = vadd.f32 %v873, 1.0
    %v1554 = vadd.f32 %v878, 1.0
    %v1555 = vmul.f32 %v729, %v729
    %v1556 = vmul.f32 %v734, %v734
    %v1557 = vmul.f32 %v739, %v739
    %v1558 = vmul.f32 %v744, %v744
    %v1559 = vmul.f32 %v749, %v749
    %v1560 = vmul.f32 %v754, %v754
    %v1561 = vmul.f32 %v759, %v759
    %v1562 = vmul.f32 %v764, %v764
    %v1563 = vsub.f32 %v1547, %v1555
    %v1564 = vsub.f32 %v1548, %v1556
    %v1565 = vsub.f32 %v1549, %v1557
    %v1566 = vsub.f32 %v1550, %v1558
    %v1567 = vsub.f32 %v1551, %v1559
    %v1568 = vsub.f32 %v1552, %v1560
    %v1569 = vsub.f32 %v1553, %v1561
    %v1570 = vsub.f32 %v1554, %v1562
    %v1571 = vmul.f32 %v843, 1.442695
    %v1572 = vpow.pop %v1571
    %v1573 = vmul.f32 %v848, 1.442695
    %v1574 = vpow.pop %v1573
    %v1575 = vmul.f32 %v853, 1.442695
    %v1576 = vpow.pop %v1575
    %v1577 = vmul.f32 %v858, 1.442695
    %v1578 = vpow.pop %v1577
    %v1579 = vmul.f32 %v863, 1.442695
    %v1580 = vpow.pop %v1579
    %v1581 = vmul.f32 %v868, 1.442695
    %v1582 = vpow.pop %v1581
    %v1583 = vmul.f32 %v873, 1.442695
    %v1584 = vpow.pop %v1583
    %v1585 = vmul.f32 %v878, 1.442695
    %v1586 = vpow.pop %v1585
    %v1587 = vsub.f32 %v1563, %v1572
    %v1588 = vsub.f32 %v1564, %v1574
    %v1589 = vsub.f32 %v1565, %v1576
    %v1590 = vsub.f32 %v1566, %v1578
    %v1591 = vsub.f32 %v1567, %v1580
    %v1592 = vsub.f32 %v1568, %v1582
    %v1593 = vsub.f32 %v1569, %v1584
    %v1594 = vsub.f32 %v1570, %v1586
    %v1595 = vsel %vm1039, %v1587, 0.0
    %v1596 = vsel %vm1039, %v1588, 0.0
    %v1597 = vadd.f32 %v1595, %v1596
    %v1598 = vsel %vm1039, %v1589, 0.0
    %v1599 = vadd.f32 %v1597, %v1598
    %v1600 = vsel %vm1039, %v1590, 0.0
    %v1601 = vadd.f32 %v1599, %v1600
    %v1602 = vsel %vm1039, %v1591, 0.0
    %v1603 = vadd.f32 %v1601, %v1602
    %v1604 = vsel %vm1039, %v1592, 0.0
    %v1605 = vadd.f32 %v1603, %v1604
    %v1606 = vsel %vm1039, %v1593, 0.0
    %v1607 = vadd.f32 %v1605, %v1606
    %v1608 = vsel %vm1039, %v1594, 0.0
    %v1609 = vadd.f32 %v1607, %v1608
    %1610 = vadd.xlane.f32.xlu0 %v1609
    %v1611 = vpop.xlane.xlu0 %1610
    %v1612 = vrot.slane %v1611, 4
    %v1613 = vadd.f32 %v1611, %v1612
    %v1614 = vrot.slane %v1613, 2
    %v1615 = vadd.f32 %v1613, %v1614
    %v1616 = vrot.slane %v1615, 1
    %v1617 = vadd.f32 %v1615, %v1616
    %s1618 = vtos %v1617
    %s1619 = smul.f32 %s1618, -0.5
    %v1620 = vld [vmem:[%s4] sm:$0xff]
    %v1621 = vld [vmem:[%s4 + $0x8] sm:$0xff]
    %v1622 = vld [vmem:[%s4 + $0x10] sm:$0xff]
    %v1623 = vld [vmem:[%s4 + $0x18] sm:$0xff]
    %v1624 = vld [vmem:[%s4 + $0x20] sm:$0xff]
    %v1625 = vld [vmem:[%s4 + $0x28] sm:$0xff]
    %v1626 = vld [vmem:[%s4 + $0x30] sm:$0xff]
    %v1627 = vld [vmem:[%s4 + $0x38] sm:$0xff]
    %v1628 = vld [vmem:[%s4 + $0x40] sm:$0xff]
    %v1629 = vld [vmem:[%s4 + $0x48] sm:$0xff]
    %v1630 = vld [vmem:[%s4 + $0x50] sm:$0xff]
    %v1631 = vld [vmem:[%s4 + $0x58] sm:$0xff]
    %v1632 = vld [vmem:[%s4 + $0x60] sm:$0xff]
    %v1633 = vld [vmem:[%s4 + $0x68] sm:$0xff]
    %v1634 = vld [vmem:[%s4 + $0x70] sm:$0xff]
    %v1635 = vld [vmem:[%s4 + $0x78] sm:$0xff]
    %v1636 = vld [vmem:[%s4 + $0x80] sm:$0xff]
    %v1637 = vld [vmem:[%s4 + $0x88] sm:$0xff]
    %v1638 = vld [vmem:[%s4 + $0x90] sm:$0xff]
    %v1639 = vld [vmem:[%s4 + $0x98] sm:$0xff]
    %v1640 = vld [vmem:[%s4 + $0xa0] sm:$0xff]
    %v1641 = vld [vmem:[%s4 + $0xa8] sm:$0xff]
    %v1642 = vld [vmem:[%s4 + $0xb0] sm:$0xff]
    %v1643 = vld [vmem:[%s4 + $0xb8] sm:$0xff]
    %v1644 = vld [vmem:[%s4 + $0xc0] sm:$0xff]
    %v1645 = vld [vmem:[%s4 + $0xc8] sm:$0xff]
    %v1646 = vld [vmem:[%s4 + $0xd0] sm:$0xff]
    %v1647 = vld [vmem:[%s4 + $0xd8] sm:$0xff]
    %v1648 = vld [vmem:[%s4 + $0xe0] sm:$0xff]
    %v1649 = vld [vmem:[%s4 + $0xe8] sm:$0xff]
    %v1650 = vld [vmem:[%s4 + $0xf0] sm:$0xff]
    %v1651 = vld [vmem:[%s4 + $0xf8] sm:$0xff]
    %v1652 = vld [vmem:[%s5] sm:$0xff]
    %v1653 = vld [vmem:[%s5 + $0x8] sm:$0x7]
    %v1654 = vld [vmem:[%s5 + $0x10] sm:$0xff]
    %v1655 = vld [vmem:[%s5 + $0x18] sm:$0x7]
    %v1656 = vld [vmem:[%s5 + $0x20] sm:$0xff]
    %v1657 = vld [vmem:[%s5 + $0x28] sm:$0x7]
    %v1658 = vld [vmem:[%s5 + $0x30] sm:$0xff]
    %v1659 = vld [vmem:[%s5 + $0x38] sm:$0x7]
    %v1660 = vld [vmem:[%s5 + $0x40] sm:$0xff]
    %v1661 = vld [vmem:[%s5 + $0x48] sm:$0x7]
    %v1662 = vld [vmem:[%s5 + $0x50] sm:$0xff]
    %v1663 = vld [vmem:[%s5 + $0x58] sm:$0x7]
    %v1664 = vld [vmem:[%s5 + $0x60] sm:$0xff]
    %v1665 = vld [vmem:[%s5 + $0x68] sm:$0x7]
    %v1666 = vld [vmem:[%s5 + $0x70] sm:$0xff]
    %v1667 = vld [vmem:[%s5 + $0x78] sm:$0x7]
    %v1668 = vld [vmem:[%s7] sm:$0xff]
    %v1669 = vld [vmem:[%s7 + $0x8] sm:$0xff]
    %v1670 = vld [vmem:[%s7 + $0x10] sm:$0xff]
    %v1671 = vld [vmem:[%s7 + $0x18] sm:$0xff]
    %v1673 = vsel %vm349, %v1620, 0
    %v1676 = vsel %vm349, %v1621, 0
    %v1679 = vsel %vm349, %v1622, 0
    %v1682 = vsel %vm349, %v1623, 0
    %1684 = vmatprep.subr.mxu0 0.0
    %1685 = vmatpush1.xpose.msra.mxu0 %v1673
    %1686 = vmatprep.subr.mxu0 0.0
    %1687 = vmatpush1.xpose.msra.mxu0 %v1676
    %1688 = vmatprep.subr.mxu0 0.0
    %1689 = vmatpush1.xpose.msra.mxu0 %v1679
    %1690 = vmatprep.subr.mxu0 0.0
    %1691 = vmatpush1.xpose.msra.mxu0 %v1682
    %1692 = vmatprep.subr.mxu0 0.0
    %1693 = vmatpush1.xpose.msra.mxu0 0.0
    %1694 = vmatprep.subr.mxu0 0.0
    %1695 = vmatpush1.xpose.msra.mxu0 0.0
    %1696 = vmatprep.subr.mxu0 0.0
    %1697 = vmatpush1.xpose.msra.mxu0 0.0
    %1698 = vmatprep.subr.mxu0 0.0
    %1699 = vmatpush1.xpose.msra.mxu0 0.0
    %1700 = vmatprep.subr.mxu0 0.0
    %1701 = vmatpush1.xpose.msra.mxu0 0.0
    %1702 = vmatprep.subr.mxu0 0.0
    %1703 = vmatpush1.xpose.msra.mxu0 0.0
    %1704 = vmatprep.subr.mxu0 0.0
    %1705 = vmatpush1.xpose.msra.mxu0 0.0
    %1706 = vmatprep.subr.mxu0 0.0
    %1707 = vmatpush1.xpose.msra.mxu0 0.0
    %1708 = vmatprep.subr.mxu0 0.0
    %1709 = vmatpush1.xpose.msra.mxu0 0.0
    %1710 = vmatprep.subr.mxu0 0.0
    %1711 = vmatpush1.xpose.msra.mxu0 0.0
    %1712 = vmatprep.subr.mxu0 0.0
    %1713 = vmatpush1.xpose.msra.mxu0 0.0
    %1714 = vmatprep.subr.mxu0 0.0
    %1715 = vmatpush1.xpose.msra.mxu0 0.0
    %1716 = vmatprep.subr.mxu0 0.0
    %1717 = vmatpush1.xpose.msra.mxu0 0.0
    %1718 = vmatprep.subr.mxu0 0.0
    %1719 = vmatpush1.xpose.msra.mxu0 0.0
    %1720 = vmatprep.subr.mxu0 0.0
    %1721 = vmatpush1.xpose.msra.mxu0 0.0
    %1722 = vmatprep.subr.mxu0 0.0
    %1723 = vmatpush1.xpose.msra.mxu0 0.0
    %1724 = vmatprep.subr.mxu0 0.0
    %1725 = vmatpush1.xpose.msra.mxu0 0.0
    %1726 = vmatprep.subr.mxu0 0.0
    %1727 = vmatpush1.xpose.msra.mxu0 0.0
    %1728 = vmatprep.subr.mxu0 0.0
    %1729 = vmatpush1.xpose.msra.mxu0 0.0
    %1730 = vmatprep.subr.mxu0 0.0
    %1731 = vmatpush1.xpose.msra.mxu0 0.0
    %1732 = vmatprep.subr.mxu0 0.0
    %1733 = vmatpush1.xpose.msra.mxu0 0.0
    %1734 = vmatprep.subr.mxu0 0.0
    %1735 = vmatpush1.xpose.msra.mxu0 0.0
    %1736 = vmatprep.subr.mxu0 0.0
    %1737 = vmatpush1.xpose.msra.mxu0 0.0
    %1738 = vmatprep.subr.mxu0 0.0
    %1739 = vmatpush1.xpose.msra.mxu0 0.0
    %1740 = vmatprep.subr.mxu0 0.0
    %1741 = vmatpush1.xpose.msra.mxu0 0.0
    %1742 = vmatprep.subr.mxu0 0.0
    %1743 = vmatpush1.xpose.msra.mxu0 0.0
    %1744 = vmatprep.subr.mxu0 0.0
    %1745 = vmatpush1.xpose.msra.mxu0 0.0
    %1746 = vmatprep.subr.mxu0 0.0
    %1747 = vmatpush1.xpose.msra.mxu0 0.0
    %1748 = vmatprep.mubr.f32.mxu0 0.0
    %1749 = vmatmul.mubr.f32.gmra.mrb[0].mxu0 %v1673
    %v1750 = vpop.f32.mrb[0].mxu0
    %v1751 = vadd.f32 0.0, %v1750
    %v1752 = vpop.f32.mrb[0].mxu0
    %1753 = vmatprep.mubr.f32.mxu0 0.0
    %1754 = vmatmul.mubr.f32.gmra.mrb[0].mxu0 %v1676
    %v1755 = vpop.f32.mrb[0].mxu0
    %v1756 = vadd.f32 0.0, %v1755
    %v1757 = vpop.f32.mrb[0].mxu0
    %1758 = vmatprep.mubr.f32.mxu0 0.0
    %1759 = vmatmul.mubr.f32.gmra.mrb[0].mxu0 %v1679
    %v1760 = vpop.f32.mrb[0].mxu0
    %v1761 = vadd.f32 0.0, %v1760
    %v1762 = vpop.f32.mrb[0].mxu0
    %1763 = vmatprep.mubr.f32.mxu0 0.0
    %1764 = vmatmul.mubr.f32.gmra.mrb[0].mxu0 %v1682
    %v1765 = vpop.f32.mrb[0].mxu0
    %v1766 = vadd.f32 0.0, %v1765
    %v1767 = vpop.f32.mrb[0].mxu0
    %1768 = vdwg.mxu0
    %v1770 = vsel %vm349, %v1624, 0
    %v1773 = vsel %vm349, %v1625, 0
    %v1776 = vsel %vm349, %v1626, 0
    %v1779 = vsel %vm349, %v1627, 0
    %1781 = vmatprep.subr.mxu0 0.0
    %1782 = vmatpush1.xpose.msra.mxu0 %v1770
    %1783 = vmatprep.subr.mxu0 0.0
    %1784 = vmatpush1.xpose.msra.mxu0 %v1773
    %1785 = vmatprep.subr.mxu0 0.0
    %1786 = vmatpush1.xpose.msra.mxu0 %v1776
    %1787 = vmatprep.subr.mxu0 0.0
    %1788 = vmatpush1.xpose.msra.mxu0 %v1779
    %1789 = vmatprep.subr.mxu0 0.0
    %1790 = vmatpush1.xpose.msra.mxu0 0.0
    %1791 = vmatprep.subr.mxu0 0.0
    %1792 = vmatpush1.xpose.msra.mxu0 0.0
    %1793 = vmatprep.subr.mxu0 0.0
    %1794 = vmatpush1.xpose.msra.mxu0 0.0
    %1795 = vmatprep.subr.mxu0 0.0
    %1796 = vmatpush1.xpose.msra.mxu0 0.0
    %1797 = vmatprep.subr.mxu0 0.0
    %1798 = vmatpush1.xpose.msra.mxu0 0.0
    %1799 = vmatprep.subr.mxu0 0.0
    %1800 = vmatpush1.xpose.msra.mxu0 0.0
    %1801 = vmatprep.subr.mxu0 0.0
    %1802 = vmatpush1.xpose.msra.mxu0 0.0
    %1803 = vmatprep.subr.mxu0 0.0
    %1804 = vmatpush1.xpose.msra.mxu0 0.0
    %1805 = vmatprep.subr.mxu0 0.0
    %1806 = vmatpush1.xpose.msra.mxu0 0.0
    %1807 = vmatprep.subr.mxu0 0.0
    %1808 = vmatpush1.xpose.msra.mxu0 0.0
    %1809 = vmatprep.subr.mxu0 0.0
    %1810 = vmatpush1.xpose.msra.mxu0 0.0
    %1811 = vmatprep.subr.mxu0 0.0
    %1812 = vmatpush1.xpose.msra.mxu0 0.0
    %1813 = vmatprep.subr.mxu0 0.0
    %1814 = vmatpush1.xpose.msra.mxu0 0.0
    %1815 = vmatprep.subr.mxu0 0.0
    %1816 = vmatpush1.xpose.msra.mxu0 0.0
    %1817 = vmatprep.subr.mxu0 0.0
    %1818 = vmatpush1.xpose.msra.mxu0 0.0
    %1819 = vmatprep.subr.mxu0 0.0
    %1820 = vmatpush1.xpose.msra.mxu0 0.0
    %1821 = vmatprep.subr.mxu0 0.0
    %1822 = vmatpush1.xpose.msra.mxu0 0.0
    %1823 = vmatprep.subr.mxu0 0.0
    %1824 = vmatpush1.xpose.msra.mxu0 0.0
    %1825 = vmatprep.subr.mxu0 0.0
    %1826 = vmatpush1.xpose.msra.mxu0 0.0
    %1827 = vmatprep.subr.mxu0 0.0
    %1828 = vmatpush1.xpose.msra.mxu0 0.0
    %1829 = vmatprep.subr.mxu0 0.0
    %1830 = vmatpush1.xpose.msra.mxu0 0.0
    %1831 = vmatprep.subr.mxu0 0.0
    %1832 = vmatpush1.xpose.msra.mxu0 0.0
    %1833 = vmatprep.subr.mxu0 0.0
    %1834 = vmatpush1.xpose.msra.mxu0 0.0
    %1835 = vmatprep.subr.mxu0 0.0
    %1836 = vmatpush1.xpose.msra.mxu0 0.0
    %1837 = vmatprep.subr.mxu0 0.0
    %1838 = vmatpush1.xpose.msra.mxu0 0.0
    %1839 = vmatprep.subr.mxu0 0.0
    %1840 = vmatpush1.xpose.msra.mxu0 0.0
    %1841 = vmatprep.subr.mxu0 0.0
    %1842 = vmatpush1.xpose.msra.mxu0 0.0
    %1843 = vmatprep.subr.mxu0 0.0
    %1844 = vmatpush1.xpose.msra.mxu0 0.0
    %1845 = vmatprep.mubr.f32.mxu0 0.0
    %1846 = vmatmul.mubr.f32.gmra.mrb[0].mxu0 %v1770
    %v1847 = vpop.f32.mrb[0].mxu0
    %v1848 = vadd.f32 0.0, %v1847
    %v1849 = vpop.f32.mrb[0].mxu0
    %1850 = vmatprep.mubr.f32.mxu0 0.0
    %1851 = vmatmul.mubr.f32.gmra.mrb[0].mxu0 %v1773
    %v1852 = vpop.f32.mrb[0].mxu0
    %v1853 = vadd.f32 0.0, %v1852
    %v1854 = vpop.f32.mrb[0].mxu0
    %1855 = vmatprep.mubr.f32.mxu0 0.0
    %1856 = vmatmul.mubr.f32.gmra.mrb[0].mxu0 %v1776
    %v1857 = vpop.f32.mrb[0].mxu0
    %v1858 = vadd.f32 0.0, %v1857
    %v1859 = vpop.f32.mrb[0].mxu0
    %1860 = vmatprep.mubr.f32.mxu0 0.0
    %1861 = vmatmul.mubr.f32.gmra.mrb[0].mxu0 %v1779
    %v1862 = vpop.f32.mrb[0].mxu0
    %v1863 = vadd.f32 0.0, %v1862
    %v1864 = vpop.f32.mrb[0].mxu0
    %1865 = vdwg.mxu0
    %v1867 = vsel %vm349, %v1628, 0
    %v1870 = vsel %vm349, %v1629, 0
    %v1873 = vsel %vm349, %v1630, 0
    %v1876 = vsel %vm349, %v1631, 0
    %1878 = vmatprep.subr.mxu0 0.0
    %1879 = vmatpush1.xpose.msra.mxu0 %v1867
    %1880 = vmatprep.subr.mxu0 0.0
    %1881 = vmatpush1.xpose.msra.mxu0 %v1870
    %1882 = vmatprep.subr.mxu0 0.0
    %1883 = vmatpush1.xpose.msra.mxu0 %v1873
    %1884 = vmatprep.subr.mxu0 0.0
    %1885 = vmatpush1.xpose.msra.mxu0 %v1876
    %1886 = vmatprep.subr.mxu0 0.0
    %1887 = vmatpush1.xpose.msra.mxu0 0.0
    %1888 = vmatprep.subr.mxu0 0.0
    %1889 = vmatpush1.xpose.msra.mxu0 0.0
    %1890 = vmatprep.subr.mxu0 0.0
    %1891 = vmatpush1.xpose.msra.mxu0 0.0
    %1892 = vmatprep.subr.mxu0 0.0
    %1893 = vmatpush1.xpose.msra.mxu0 0.0
    %1894 = vmatprep.subr.mxu0 0.0
    %1895 = vmatpush1.xpose.msra.mxu0 0.0
    %1896 = vmatprep.subr.mxu0 0.0
    %1897 = vmatpush1.xpose.msra.mxu0 0.0
    %1898 = vmatprep.subr.mxu0 0.0
    %1899 = vmatpush1.xpose.msra.mxu0 0.0
    %1900 = vmatprep.subr.mxu0 0.0
    %1901 = vmatpush1.xpose.msra.mxu0 0.0
    %1902 = vmatprep.subr.mxu0 0.0
    %1903 = vmatpush1.xpose.msra.mxu0 0.0
    %1904 = vmatprep.subr.mxu0 0.0
    %1905 = vmatpush1.xpose.msra.mxu0 0.0
    %1906 = vmatprep.subr.mxu0 0.0
    %1907 = vmatpush1.xpose.msra.mxu0 0.0
    %1908 = vmatprep.subr.mxu0 0.0
    %1909 = vmatpush1.xpose.msra.mxu0 0.0
    %1910 = vmatprep.subr.mxu0 0.0
    %1911 = vmatpush1.xpose.msra.mxu0 0.0
    %1912 = vmatprep.subr.mxu0 0.0
    %1913 = vmatpush1.xpose.msra.mxu0 0.0
    %1914 = vmatprep.subr.mxu0 0.0
    %1915 = vmatpush1.xpose.msra.mxu0 0.0
    %1916 = vmatprep.subr.mxu0 0.0
    %1917 = vmatpush1.xpose.msra.mxu0 0.0
    %1918 = vmatprep.subr.mxu0 0.0
    %1919 = vmatpush1.xpose.msra.mxu0 0.0
    %1920 = vmatprep.subr.mxu0 0.0
    %1921 = vmatpush1.xpose.msra.mxu0 0.0
    %1922 = vmatprep.subr.mxu0 0.0
    %1923 = vmatpush1.xpose.msra.mxu0 0.0
    %1924 = vmatprep.subr.mxu0 0.0
    %1925 = vmatpush1.xpose.msra.mxu0 0.0
    %1926 = vmatprep.subr.mxu0 0.0
    %1927 = vmatpush1.xpose.msra.mxu0 0.0
    %1928 = vmatprep.subr.mxu0 0.0
    %1929 = vmatpush1.xpose.msra.mxu0 0.0
    %1930 = vmatprep.subr.mxu0 0.0
    %1931 = vmatpush1.xpose.msra.mxu0 0.0
    %1932 = vmatprep.subr.mxu0 0.0
    %1933 = vmatpush1.xpose.msra.mxu0 0.0
    %1934 = vmatprep.subr.mxu0 0.0
    %1935 = vmatpush1.xpose.msra.mxu0 0.0
    %1936 = vmatprep.subr.mxu0 0.0
    %1937 = vmatpush1.xpose.msra.mxu0 0.0
    %1938 = vmatprep.subr.mxu0 0.0
    %1939 = vmatpush1.xpose.msra.mxu0 0.0
    %1940 = vmatprep.subr.mxu0 0.0
    %1941 = vmatpush1.xpose.msra.mxu0 0.0
    %1942 = vmatprep.mubr.f32.mxu0 0.0
    %1943 = vmatmul.mubr.f32.gmra.mrb[0].mxu0 %v1867
    %v1944 = vpop.f32.mrb[0].mxu0
    %v1945 = vadd.f32 0.0, %v1944
    %v1946 = vpop.f32.mrb[0].mxu0
    %1947 = vmatprep.mubr.f32.mxu0 0.0
    %1948 = vmatmul.mubr.f32.gmra.mrb[0].mxu0 %v1870
    %v1949 = vpop.f32.mrb[0].mxu0
    %v1950 = vadd.f32 0.0, %v1949
    %v1951 = vpop.f32.mrb[0].mxu0
    %1952 = vmatprep.mubr.f32.mxu0 0.0
    %1953 = vmatmul.mubr.f32.gmra.mrb[0].mxu0 %v1873
    %v1954 = vpop.f32.mrb[0].mxu0
    %v1955 = vadd.f32 0.0, %v1954
    %v1956 = vpop.f32.mrb[0].mxu0
    %1957 = vmatprep.mubr.f32.mxu0 0.0
    %1958 = vmatmul.mubr.f32.gmra.mrb[0].mxu0 %v1876
    %v1959 = vpop.f32.mrb[0].mxu0
    %v1960 = vadd.f32 0.0, %v1959
    %v1961 = vpop.f32.mrb[0].mxu0
    %1962 = vdwg.mxu0
    %v1964 = vsel %vm349, %v1632, 0
    %v1967 = vsel %vm349, %v1633, 0
    %v1970 = vsel %vm349, %v1634, 0
    %v1973 = vsel %vm349, %v1635, 0
    %1975 = vmatprep.subr.mxu0 0.0
    %1976 = vmatpush1.xpose.msra.mxu0 %v1964
    %1977 = vmatprep.subr.mxu0 0.0
    %1978 = vmatpush1.xpose.msra.mxu0 %v1967
    %1979 = vmatprep.subr.mxu0 0.0
    %1980 = vmatpush1.xpose.msra.mxu0 %v1970
    %1981 = vmatprep.subr.mxu0 0.0
    %1982 = vmatpush1.xpose.msra.mxu0 %v1973
    %1983 = vmatprep.subr.mxu0 0.0
    %1984 = vmatpush1.xpose.msra.mxu0 0.0
    %1985 = vmatprep.subr.mxu0 0.0
    %1986 = vmatpush1.xpose.msra.mxu0 0.0
    %1987 = vmatprep.subr.mxu0 0.0
    %1988 = vmatpush1.xpose.msra.mxu0 0.0
    %1989 = vmatprep.subr.mxu0 0.0
    %1990 = vmatpush1.xpose.msra.mxu0 0.0
    %1991 = vmatprep.subr.mxu0 0.0
    %1992 = vmatpush1.xpose.msra.mxu0 0.0
    %1993 = vmatprep.subr.mxu0 0.0
    %1994 = vmatpush1.xpose.msra.mxu0 0.0
    %1995 = vmatprep.subr.mxu0 0.0
    %1996 = vmatpush1.xpose.msra.mxu0 0.0
    %1997 = vmatprep.subr.mxu0 0.0
    %1998 = vmatpush1.xpose.msra.mxu0 0.0
    %1999 = vmatprep.subr.mxu0 0.0
    %2000 = vmatpush1.xpose.msra.mxu0 0.0
    %2001 = vmatprep.subr.mxu0 0.0
    %2002 = vmatpush1.xpose.msra.mxu0 0.0
    %2003 = vmatprep.subr.mxu0 0.0
    %2004 = vmatpush1.xpose.msra.mxu0 0.0
    %2005 = vmatprep.subr.mxu0 0.0
    %2006 = vmatpush1.xpose.msra.mxu0 0.0
    %2007 = vmatprep.subr.mxu0 0.0
    %2008 = vmatpush1.xpose.msra.mxu0 0.0
    %2009 = vmatprep.subr.mxu0 0.0
    %2010 = vmatpush1.xpose.msra.mxu0 0.0
    %2011 = vmatprep.subr.mxu0 0.0
    %2012 = vmatpush1.xpose.msra.mxu0 0.0
    %2013 = vmatprep.subr.mxu0 0.0
    %2014 = vmatpush1.xpose.msra.mxu0 0.0
    %2015 = vmatprep.subr.mxu0 0.0
    %2016 = vmatpush1.xpose.msra.mxu0 0.0
    %2017 = vmatprep.subr.mxu0 0.0
    %2018 = vmatpush1.xpose.msra.mxu0 0.0
    %2019 = vmatprep.subr.mxu0 0.0
    %2020 = vmatpush1.xpose.msra.mxu0 0.0
    %2021 = vmatprep.subr.mxu0 0.0
    %2022 = vmatpush1.xpose.msra.mxu0 0.0
    %2023 = vmatprep.subr.mxu0 0.0
    %2024 = vmatpush1.xpose.msra.mxu0 0.0
    %2025 = vmatprep.subr.mxu0 0.0
    %2026 = vmatpush1.xpose.msra.mxu0 0.0
    %2027 = vmatprep.subr.mxu0 0.0
    %2028 = vmatpush1.xpose.msra.mxu0 0.0
    %2029 = vmatprep.subr.mxu0 0.0
    %2030 = vmatpush1.xpose.msra.mxu0 0.0
    %2031 = vmatprep.subr.mxu0 0.0
    %2032 = vmatpush1.xpose.msra.mxu0 0.0
    %2033 = vmatprep.subr.mxu0 0.0
    %2034 = vmatpush1.xpose.msra.mxu0 0.0
    %2035 = vmatprep.subr.mxu0 0.0
    %2036 = vmatpush1.xpose.msra.mxu0 0.0
    %2037 = vmatprep.subr.mxu0 0.0
    %2038 = vmatpush1.xpose.msra.mxu0 0.0
    %2039 = vmatprep.mubr.f32.mxu0 0.0
    %2040 = vmatmul.mubr.f32.gmra.mrb[0].mxu0 %v1964
    %v2041 = vpop.f32.mrb[0].mxu0
    %v2042 = vadd.f32 0.0, %v2041
    %v2043 = vpop.f32.mrb[0].mxu0
    %2044 = vmatprep.mubr.f32.mxu0 0.0
    %2045 = vmatmul.mubr.f32.gmra.mrb[0].mxu0 %v1967
    %v2046 = vpop.f32.mrb[0].mxu0
    %v2047 = vadd.f32 0.0, %v2046
    %v2048 = vpop.f32.mrb[0].mxu0
    %2049 = vmatprep.mubr.f32.mxu0 0.0
    %2050 = vmatmul.mubr.f32.gmra.mrb[0].mxu0 %v1970
    %v2051 = vpop.f32.mrb[0].mxu0
    %v2052 = vadd.f32 0.0, %v2051
    %v2053 = vpop.f32.mrb[0].mxu0
    %2054 = vmatprep.mubr.f32.mxu0 0.0
    %2055 = vmatmul.mubr.f32.gmra.mrb[0].mxu0 %v1973
    %v2056 = vpop.f32.mrb[0].mxu0
    %v2057 = vadd.f32 0.0, %v2056
    %v2058 = vpop.f32.mrb[0].mxu0
    %2059 = vdwg.mxu0
    %v2061 = vsel %vm349, %v1636, 0
    %v2064 = vsel %vm349, %v1637, 0
    %v2067 = vsel %vm349, %v1638, 0
    %v2070 = vsel %vm349, %v1639, 0
    %2072 = vmatprep.subr.mxu0 0.0
    %2073 = vmatpush1.xpose.msra.mxu0 %v2061
    %2074 = vmatprep.subr.mxu0 0.0
    %2075 = vmatpush1.xpose.msra.mxu0 %v2064
    %2076 = vmatprep.subr.mxu0 0.0
    %2077 = vmatpush1.xpose.msra.mxu0 %v2067
    %2078 = vmatprep.subr.mxu0 0.0
    %2079 = vmatpush1.xpose.msra.mxu0 %v2070
    %2080 = vmatprep.subr.mxu0 0.0
    %2081 = vmatpush1.xpose.msra.mxu0 0.0
    %2082 = vmatprep.subr.mxu0 0.0
    %2083 = vmatpush1.xpose.msra.mxu0 0.0
    %2084 = vmatprep.subr.mxu0 0.0
    %2085 = vmatpush1.xpose.msra.mxu0 0.0
    %2086 = vmatprep.subr.mxu0 0.0
    %2087 = vmatpush1.xpose.msra.mxu0 0.0
    %2088 = vmatprep.subr.mxu0 0.0
    %2089 = vmatpush1.xpose.msra.mxu0 0.0
    %2090 = vmatprep.subr.mxu0 0.0
    %2091 = vmatpush1.xpose.msra.mxu0 0.0
    %2092 = vmatprep.subr.mxu0 0.0
    %2093 = vmatpush1.xpose.msra.mxu0 0.0
    %2094 = vmatprep.subr.mxu0 0.0
    %2095 = vmatpush1.xpose.msra.mxu0 0.0
    %2096 = vmatprep.subr.mxu0 0.0
    %2097 = vmatpush1.xpose.msra.mxu0 0.0
    %2098 = vmatprep.subr.mxu0 0.0
    %2099 = vmatpush1.xpose.msra.mxu0 0.0
    %2100 = vmatprep.subr.mxu0 0.0
    %2101 = vmatpush1.xpose.msra.mxu0 0.0
    %2102 = vmatprep.subr.mxu0 0.0
    %2103 = vmatpush1.xpose.msra.mxu0 0.0
    %2104 = vmatprep.subr.mxu0 0.0
    %2105 = vmatpush1.xpose.msra.mxu0 0.0
    %2106 = vmatprep.subr.mxu0 0.0
    %2107 = vmatpush1.xpose.msra.mxu0 0.0
    %2108 = vmatprep.subr.mxu0 0.0
    %2109 = vmatpush1.xpose.msra.mxu0 0.0
    %2110 = vmatprep.subr.mxu0 0.0
    %2111 = vmatpush1.xpose.msra.mxu0 0.0
    %2112 = vmatprep.subr.mxu0 0.0
    %2113 = vmatpush1.xpose.msra.mxu0 0.0
    %2114 = vmatprep.subr.mxu0 0.0
    %2115 = vmatpush1.xpose.msra.mxu0 0.0
    %2116 = vmatprep.subr.mxu0 0.0
    %2117 = vmatpush1.xpose.msra.mxu0 0.0
    %2118 = vmatprep.subr.mxu0 0.0
    %2119 = vmatpush1.xpose.msra.mxu0 0.0
    %2120 = vmatprep.subr.mxu0 0.0
    %2121 = vmatpush1.xpose.msra.mxu0 0.0
    %2122 = vmatprep.subr.mxu0 0.0
    %2123 = vmatpush1.xpose.msra.mxu0 0.0
    %2124 = vmatprep.subr.mxu0 0.0
    %2125 = vmatpush1.xpose.msra.mxu0 0.0
    %2126 = vmatprep.subr.mxu0 0.0
    %2127 = vmatpush1.xpose.msra.mxu0 0.0
    %2128 = vmatprep.subr.mxu0 0.0
    %2129 = vmatpush1.xpose.msra.mxu0 0.0
    %2130 = vmatprep.subr.mxu0 0.0
    %2131 = vmatpush1.xpose.msra.mxu0 0.0
    %2132 = vmatprep.subr.mxu0 0.0
    %2133 = vmatpush1.xpose.msra.mxu0 0.0
    %2134 = vmatprep.subr.mxu0 0.0
    %2135 = vmatpush1.xpose.msra.mxu0 0.0
    %2136 = vmatprep.mubr.f32.mxu0 0.0
    %2137 = vmatmul.mubr.f32.gmra.mrb[0].mxu0 %v2061
    %v2138 = vpop.f32.mrb[0].mxu0
    %v2139 = vadd.f32 0.0, %v2138
    %v2140 = vpop.f32.mrb[0].mxu0
    %2141 = vmatprep.mubr.f32.mxu0 0.0
    %2142 = vmatmul.mubr.f32.gmra.mrb[0].mxu0 %v2064
    %v2143 = vpop.f32.mrb[0].mxu0
    %v2144 = vadd.f32 0.0, %v2143
    %v2145 = vpop.f32.mrb[0].mxu0
    %2146 = vmatprep.mubr.f32.mxu0 0.0
    %2147 = vmatmul.mubr.f32.gmra.mrb[0].mxu0 %v2067
    %v2148 = vpop.f32.mrb[0].mxu0
    %v2149 = vadd.f32 0.0, %v2148
    %v2150 = vpop.f32.mrb[0].mxu0
    %2151 = vmatprep.mubr.f32.mxu0 0.0
    %2152 = vmatmul.mubr.f32.gmra.mrb[0].mxu0 %v2070
    %v2153 = vpop.f32.mrb[0].mxu0
    %v2154 = vadd.f32 0.0, %v2153
    %v2155 = vpop.f32.mrb[0].mxu0
    %2156 = vdwg.mxu0
    %v2158 = vsel %vm349, %v1640, 0
    %v2161 = vsel %vm349, %v1641, 0
    %v2164 = vsel %vm349, %v1642, 0
    %v2167 = vsel %vm349, %v1643, 0
    %2169 = vmatprep.subr.mxu0 0.0
    %2170 = vmatpush1.xpose.msra.mxu0 %v2158
    %2171 = vmatprep.subr.mxu0 0.0
    %2172 = vmatpush1.xpose.msra.mxu0 %v2161
    %2173 = vmatprep.subr.mxu0 0.0
    %2174 = vmatpush1.xpose.msra.mxu0 %v2164
    %2175 = vmatprep.subr.mxu0 0.0
    %2176 = vmatpush1.xpose.msra.mxu0 %v2167
    %2177 = vmatprep.subr.mxu0 0.0
    %2178 = vmatpush1.xpose.msra.mxu0 0.0
    %2179 = vmatprep.subr.mxu0 0.0
    %2180 = vmatpush1.xpose.msra.mxu0 0.0
    %2181 = vmatprep.subr.mxu0 0.0
    %2182 = vmatpush1.xpose.msra.mxu0 0.0
    %2183 = vmatprep.subr.mxu0 0.0
    %2184 = vmatpush1.xpose.msra.mxu0 0.0
    %2185 = vmatprep.subr.mxu0 0.0
    %2186 = vmatpush1.xpose.msra.mxu0 0.0
    %2187 = vmatprep.subr.mxu0 0.0
    %2188 = vmatpush1.xpose.msra.mxu0 0.0
    %2189 = vmatprep.subr.mxu0 0.0
    %2190 = vmatpush1.xpose.msra.mxu0 0.0
    %2191 = vmatprep.subr.mxu0 0.0
    %2192 = vmatpush1.xpose.msra.mxu0 0.0
    %2193 = vmatprep.subr.mxu0 0.0
    %2194 = vmatpush1.xpose.msra.mxu0 0.0
    %2195 = vmatprep.subr.mxu0 0.0
    %2196 = vmatpush1.xpose.msra.mxu0 0.0
    %2197 = vmatprep.subr.mxu0 0.0
    %2198 = vmatpush1.xpose.msra.mxu0 0.0
    %2199 = vmatprep.subr.mxu0 0.0
    %2200 = vmatpush1.xpose.msra.mxu0 0.0
    %2201 = vmatprep.subr.mxu0 0.0
    %2202 = vmatpush1.xpose.msra.mxu0 0.0
    %2203 = vmatprep.subr.mxu0 0.0
    %2204 = vmatpush1.xpose.msra.mxu0 0.0
    %2205 = vmatprep.subr.mxu0 0.0
    %2206 = vmatpush1.xpose.msra.mxu0 0.0
    %2207 = vmatprep.subr.mxu0 0.0
    %2208 = vmatpush1.xpose.msra.mxu0 0.0
    %2209 = vmatprep.subr.mxu0 0.0
    %2210 = vmatpush1.xpose.msra.mxu0 0.0
    %2211 = vmatprep.subr.mxu0 0.0
    %2212 = vmatpush1.xpose.msra.mxu0 0.0
    %2213 = vmatprep.subr.mxu0 0.0
    %2214 = vmatpush1.xpose.msra.mxu0 0.0
    %2215 = vmatprep.subr.mxu0 0.0
    %2216 = vmatpush1.xpose.msra.mxu0 0.0
    %2217 = vmatprep.subr.mxu0 0.0
    %2218 = vmatpush1.xpose.msra.mxu0 0.0
    %2219 = vmatprep.subr.mxu0 0.0
    %2220 = vmatpush1.xpose.msra.mxu0 0.0
    %2221 = vmatprep.subr.mxu0 0.0
    %2222 = vmatpush1.xpose.msra.mxu0 0.0
    %2223 = vmatprep.subr.mxu0 0.0
    %2224 = vmatpush1.xpose.msra.mxu0 0.0
    %2225 = vmatprep.subr.mxu0 0.0
    %2226 = vmatpush1.xpose.msra.mxu0 0.0
    %2227 = vmatprep.subr.mxu0 0.0
    %2228 = vmatpush1.xpose.msra.mxu0 0.0
    %2229 = vmatprep.subr.mxu0 0.0
    %2230 = vmatpush1.xpose.msra.mxu0 0.0
    %2231 = vmatprep.subr.mxu0 0.0
    %2232 = vmatpush1.xpose.msra.mxu0 0.0
    %2233 = vmatprep.mubr.f32.mxu0 0.0
    %2234 = vmatmul.mubr.f32.gmra.mrb[0].mxu0 %v2158
    %v2235 = vpop.f32.mrb[0].mxu0
    %v2236 = vadd.f32 0.0, %v2235
    %v2237 = vpop.f32.mrb[0].mxu0
    %2238 = vmatprep.mubr.f32.mxu0 0.0
    %2239 = vmatmul.mubr.f32.gmra.mrb[0].mxu0 %v2161
    %v2240 = vpop.f32.mrb[0].mxu0
    %v2241 = vadd.f32 0.0, %v2240
    %v2242 = vpop.f32.mrb[0].mxu0
    %2243 = vmatprep.mubr.f32.mxu0 0.0
    %2244 = vmatmul.mubr.f32.gmra.mrb[0].mxu0 %v2164
    %v2245 = vpop.f32.mrb[0].mxu0
    %v2246 = vadd.f32 0.0, %v2245
    %v2247 = vpop.f32.mrb[0].mxu0
    %2248 = vmatprep.mubr.f32.mxu0 0.0
    %2249 = vmatmul.mubr.f32.gmra.mrb[0].mxu0 %v2167
    %v2250 = vpop.f32.mrb[0].mxu0
    %v2251 = vadd.f32 0.0, %v2250
    %v2252 = vpop.f32.mrb[0].mxu0
    %2253 = vdwg.mxu0
    %v2255 = vsel %vm349, %v1644, 0
    %v2258 = vsel %vm349, %v1645, 0
    %v2261 = vsel %vm349, %v1646, 0
    %v2264 = vsel %vm349, %v1647, 0
    %2266 = vmatprep.subr.mxu0 0.0
    %2267 = vmatpush1.xpose.msra.mxu0 %v2255
    %2268 = vmatprep.subr.mxu0 0.0
    %2269 = vmatpush1.xpose.msra.mxu0 %v2258
    %2270 = vmatprep.subr.mxu0 0.0
    %2271 = vmatpush1.xpose.msra.mxu0 %v2261
    %2272 = vmatprep.subr.mxu0 0.0
    %2273 = vmatpush1.xpose.msra.mxu0 %v2264
    %2274 = vmatprep.subr.mxu0 0.0
    %2275 = vmatpush1.xpose.msra.mxu0 0.0
    %2276 = vmatprep.subr.mxu0 0.0
    %2277 = vmatpush1.xpose.msra.mxu0 0.0
    %2278 = vmatprep.subr.mxu0 0.0
    %2279 = vmatpush1.xpose.msra.mxu0 0.0
    %2280 = vmatprep.subr.mxu0 0.0
    %2281 = vmatpush1.xpose.msra.mxu0 0.0
    %2282 = vmatprep.subr.mxu0 0.0
    %2283 = vmatpush1.xpose.msra.mxu0 0.0
    %2284 = vmatprep.subr.mxu0 0.0
    %2285 = vmatpush1.xpose.msra.mxu0 0.0
    %2286 = vmatprep.subr.mxu0 0.0
    %2287 = vmatpush1.xpose.msra.mxu0 0.0
    %2288 = vmatprep.subr.mxu0 0.0
    %2289 = vmatpush1.xpose.msra.mxu0 0.0
    %2290 = vmatprep.subr.mxu0 0.0
    %2291 = vmatpush1.xpose.msra.mxu0 0.0
    %2292 = vmatprep.subr.mxu0 0.0
    %2293 = vmatpush1.xpose.msra.mxu0 0.0
    %2294 = vmatprep.subr.mxu0 0.0
    %2295 = vmatpush1.xpose.msra.mxu0 0.0
    %2296 = vmatprep.subr.mxu0 0.0
    %2297 = vmatpush1.xpose.msra.mxu0 0.0
    %2298 = vmatprep.subr.mxu0 0.0
    %2299 = vmatpush1.xpose.msra.mxu0 0.0
    %2300 = vmatprep.subr.mxu0 0.0
    %2301 = vmatpush1.xpose.msra.mxu0 0.0
    %2302 = vmatprep.subr.mxu0 0.0
    %2303 = vmatpush1.xpose.msra.mxu0 0.0
    %2304 = vmatprep.subr.mxu0 0.0
    %2305 = vmatpush1.xpose.msra.mxu0 0.0
    %2306 = vmatprep.subr.mxu0 0.0
    %2307 = vmatpush1.xpose.msra.mxu0 0.0
    %2308 = vmatprep.subr.mxu0 0.0
    %2309 = vmatpush1.xpose.msra.mxu0 0.0
    %2310 = vmatprep.subr.mxu0 0.0
    %2311 = vmatpush1.xpose.msra.mxu0 0.0
    %2312 = vmatprep.subr.mxu0 0.0
    %2313 = vmatpush1.xpose.msra.mxu0 0.0
    %2314 = vmatprep.subr.mxu0 0.0
    %2315 = vmatpush1.xpose.msra.mxu0 0.0
    %2316 = vmatprep.subr.mxu0 0.0
    %2317 = vmatpush1.xpose.msra.mxu0 0.0
    %2318 = vmatprep.subr.mxu0 0.0
    %2319 = vmatpush1.xpose.msra.mxu0 0.0
    %2320 = vmatprep.subr.mxu0 0.0
    %2321 = vmatpush1.xpose.msra.mxu0 0.0
    %2322 = vmatprep.subr.mxu0 0.0
    %2323 = vmatpush1.xpose.msra.mxu0 0.0
    %2324 = vmatprep.subr.mxu0 0.0
    %2325 = vmatpush1.xpose.msra.mxu0 0.0
    %2326 = vmatprep.subr.mxu0 0.0
    %2327 = vmatpush1.xpose.msra.mxu0 0.0
    %2328 = vmatprep.subr.mxu0 0.0
    %2329 = vmatpush1.xpose.msra.mxu0 0.0
    %2330 = vmatprep.mubr.f32.mxu0 0.0
    %2331 = vmatmul.mubr.f32.gmra.mrb[0].mxu0 %v2255
    %v2332 = vpop.f32.mrb[0].mxu0
    %v2333 = vadd.f32 0.0, %v2332
    %v2334 = vpop.f32.mrb[0].mxu0
    %2335 = vmatprep.mubr.f32.mxu0 0.0
    %2336 = vmatmul.mubr.f32.gmra.mrb[0].mxu0 %v2258
    %v2337 = vpop.f32.mrb[0].mxu0
    %v2338 = vadd.f32 0.0, %v2337
    %v2339 = vpop.f32.mrb[0].mxu0
    %2340 = vmatprep.mubr.f32.mxu0 0.0
    %2341 = vmatmul.mubr.f32.gmra.mrb[0].mxu0 %v2261
    %v2342 = vpop.f32.mrb[0].mxu0
    %v2343 = vadd.f32 0.0, %v2342
    %v2344 = vpop.f32.mrb[0].mxu0
    %2345 = vmatprep.mubr.f32.mxu0 0.0
    %2346 = vmatmul.mubr.f32.gmra.mrb[0].mxu0 %v2264
    %v2347 = vpop.f32.mrb[0].mxu0
    %v2348 = vadd.f32 0.0, %v2347
    %v2349 = vpop.f32.mrb[0].mxu0
    %2350 = vdwg.mxu0
    %v2352 = vsel %vm349, %v1648, 0
    %v2355 = vsel %vm349, %v1649, 0
    %v2358 = vsel %vm349, %v1650, 0
    %v2361 = vsel %vm349, %v1651, 0
    %2363 = vmatprep.subr.mxu0 0.0
    %2364 = vmatpush1.xpose.msra.mxu0 %v2352
    %2365 = vmatprep.subr.mxu0 0.0
    %2366 = vmatpush1.xpose.msra.mxu0 %v2355
    %2367 = vmatprep.subr.mxu0 0.0
    %2368 = vmatpush1.xpose.msra.mxu0 %v2358
    %2369 = vmatprep.subr.mxu0 0.0
    %2370 = vmatpush1.xpose.msra.mxu0 %v2361
    %2371 = vmatprep.subr.mxu0 0.0
    %2372 = vmatpush1.xpose.msra.mxu0 0.0
    %2373 = vmatprep.subr.mxu0 0.0
    %2374 = vmatpush1.xpose.msra.mxu0 0.0
    %2375 = vmatprep.subr.mxu0 0.0
    %2376 = vmatpush1.xpose.msra.mxu0 0.0
    %2377 = vmatprep.subr.mxu0 0.0
    %2378 = vmatpush1.xpose.msra.mxu0 0.0
    %2379 = vmatprep.subr.mxu0 0.0
    %2380 = vmatpush1.xpose.msra.mxu0 0.0
    %2381 = vmatprep.subr.mxu0 0.0
    %2382 = vmatpush1.xpose.msra.mxu0 0.0
    %2383 = vmatprep.subr.mxu0 0.0
    %2384 = vmatpush1.xpose.msra.mxu0 0.0
    %2385 = vmatprep.subr.mxu0 0.0
    %2386 = vmatpush1.xpose.msra.mxu0 0.0
    %2387 = vmatprep.subr.mxu0 0.0
    %2388 = vmatpush1.xpose.msra.mxu0 0.0
    %2389 = vmatprep.subr.mxu0 0.0
    %2390 = vmatpush1.xpose.msra.mxu0 0.0
    %2391 = vmatprep.subr.mxu0 0.0
    %2392 = vmatpush1.xpose.msra.mxu0 0.0
    %2393 = vmatprep.subr.mxu0 0.0
    %2394 = vmatpush1.xpose.msra.mxu0 0.0
    %2395 = vmatprep.subr.mxu0 0.0
    %2396 = vmatpush1.xpose.msra.mxu0 0.0
    %2397 = vmatprep.subr.mxu0 0.0
    %2398 = vmatpush1.xpose.msra.mxu0 0.0
    %2399 = vmatprep.subr.mxu0 0.0
    %2400 = vmatpush1.xpose.msra.mxu0 0.0
    %2401 = vmatprep.subr.mxu0 0.0
    %2402 = vmatpush1.xpose.msra.mxu0 0.0
    %2403 = vmatprep.subr.mxu0 0.0
    %2404 = vmatpush1.xpose.msra.mxu0 0.0
    %2405 = vmatprep.subr.mxu0 0.0
    %2406 = vmatpush1.xpose.msra.mxu0 0.0
    %2407 = vmatprep.subr.mxu0 0.0
    %2408 = vmatpush1.xpose.msra.mxu0 0.0
    %2409 = vmatprep.subr.mxu0 0.0
    %2410 = vmatpush1.xpose.msra.mxu0 0.0
    %2411 = vmatprep.subr.mxu0 0.0
    %2412 = vmatpush1.xpose.msra.mxu0 0.0
    %2413 = vmatprep.subr.mxu0 0.0
    %2414 = vmatpush1.xpose.msra.mxu0 0.0
    %2415 = vmatprep.subr.mxu0 0.0
    %2416 = vmatpush1.xpose.msra.mxu0 0.0
    %2417 = vmatprep.subr.mxu0 0.0
    %2418 = vmatpush1.xpose.msra.mxu0 0.0
    %2419 = vmatprep.subr.mxu0 0.0
    %2420 = vmatpush1.xpose.msra.mxu0 0.0
    %2421 = vmatprep.subr.mxu0 0.0
    %2422 = vmatpush1.xpose.msra.mxu0 0.0
    %2423 = vmatprep.subr.mxu0 0.0
    %2424 = vmatpush1.xpose.msra.mxu0 0.0
    %2425 = vmatprep.subr.mxu0 0.0
    %2426 = vmatpush1.xpose.msra.mxu0 0.0
    %2427 = vmatprep.mubr.f32.mxu0 0.0
    %2428 = vmatmul.mubr.f32.gmra.mrb[0].mxu0 %v2352
    %v2429 = vpop.f32.mrb[0].mxu0
    %v2430 = vadd.f32 0.0, %v2429
    %v2431 = vpop.f32.mrb[0].mxu0
    %2432 = vmatprep.mubr.f32.mxu0 0.0
    %2433 = vmatmul.mubr.f32.gmra.mrb[0].mxu0 %v2355
    %v2434 = vpop.f32.mrb[0].mxu0
    %v2435 = vadd.f32 0.0, %v2434
    %v2436 = vpop.f32.mrb[0].mxu0
    %2437 = vmatprep.mubr.f32.mxu0 0.0
    %2438 = vmatmul.mubr.f32.gmra.mrb[0].mxu0 %v2358
    %v2439 = vpop.f32.mrb[0].mxu0
    %v2440 = vadd.f32 0.0, %v2439
    %v2441 = vpop.f32.mrb[0].mxu0
    %2442 = vmatprep.mubr.f32.mxu0 0.0
    %2443 = vmatmul.mubr.f32.gmra.mrb[0].mxu0 %v2361
    %v2444 = vpop.f32.mrb[0].mxu0
    %v2445 = vadd.f32 0.0, %v2444
    %v2446 = vpop.f32.mrb[0].mxu0
    %2447 = vdwg.mxu0
    %v2448 = vmul.f32 %v1751, 0.17677669
    %v2449 = vmul.f32 %v1756, 0.17677669
    %v2450 = vmul.f32 %v1761, 0.17677669
    %v2451 = vmul.f32 %v1766, 0.17677669
    %v2452 = vmul.f32 %v1848, 0.17677669
    %v2453 = vmul.f32 %v1853, 0.17677669
    %v2454 = vmul.f32 %v1858, 0.17677669
    %v2455 = vmul.f32 %v1863, 0.17677669
    %v2456 = vmul.f32 %v1945, 0.17677669
    %v2457 = vmul.f32 %v1950, 0.17677669
    %v2458 = vmul.f32 %v1955, 0.17677669
    %v2459 = vmul.f32 %v1960, 0.17677669
    %v2460 = vmul.f32 %v2042, 0.17677669
    %v2461 = vmul.f32 %v2047, 0.17677669
    %v2462 = vmul.f32 %v2052, 0.17677669
    %v2463 = vmul.f32 %v2057, 0.17677669
    %v2464 = vmul.f32 %v2139, 0.17677669
    %v2465 = vmul.f32 %v2144, 0.17677669
    %v2466 = vmul.f32 %v2149, 0.17677669
    %v2467 = vmul.f32 %v2154, 0.17677669
    %v2468 = vmul.f32 %v2236, 0.17677669
    %v2469 = vmul.f32 %v2241, 0.17677669
    %v2470 = vmul.f32 %v2246, 0.17677669
    %v2471 = vmul.f32 %v2251, 0.17677669
    %v2472 = vmul.f32 %v2333, 0.17677669
    %v2473 = vmul.f32 %v2338, 0.17677669
    %v2474 = vmul.f32 %v2343, 0.17677669
    %v2475 = vmul.f32 %v2348, 0.17677669
    %v2476 = vmul.f32 %v2430, 0.17677669
    %v2477 = vmul.f32 %v2435, 0.17677669
    %v2478 = vmul.f32 %v2440, 0.17677669
    %v2479 = vmul.f32 %v2445, 0.17677669
    %v2480 = vadd.f32 %v2448, %v1668
    %v2481 = vadd.f32 %v2449, %v1669
    %v2482 = vadd.f32 %v2450, %v1670
    %v2483 = vadd.f32 %v2451, %v1671
    %v2484 = vadd.f32 %v2452, %v1668
    %v2485 = vadd.f32 %v2453, %v1669
    %v2486 = vadd.f32 %v2454, %v1670
    %v2487 = vadd.f32 %v2455, %v1671
    %v2488 = vadd.f32 %v2456, %v1668
    %v2489 = vadd.f32 %v2457, %v1669
    %v2490 = vadd.f32 %v2458, %v1670
    %v2491 = vadd.f32 %v2459, %v1671
    %v2492 = vadd.f32 %v2460, %v1668
    %v2493 = vadd.f32 %v2461, %v1669
    %v2494 = vadd.f32 %v2462, %v1670
    %v2495 = vadd.f32 %v2463, %v1671
    %v2496 = vadd.f32 %v2464, %v1668
    %v2497 = vadd.f32 %v2465, %v1669
    %v2498 = vadd.f32 %v2466, %v1670
    %v2499 = vadd.f32 %v2467, %v1671
    %v2500 = vadd.f32 %v2468, %v1668
    %v2501 = vadd.f32 %v2469, %v1669
    %v2502 = vadd.f32 %v2470, %v1670
    %v2503 = vadd.f32 %v2471, %v1671
    %v2504 = vadd.f32 %v2472, %v1668
    %v2505 = vadd.f32 %v2473, %v1669
    %v2506 = vadd.f32 %v2474, %v1670
    %v2507 = vadd.f32 %v2475, %v1671
    %v2508 = vadd.f32 %v2476, %v1668
    %v2509 = vadd.f32 %v2477, %v1669
    %v2510 = vadd.f32 %v2478, %v1670
    %v2511 = vadd.f32 %v2479, %v1671
    %v2512 = vsel %vm349, %v2480, -inf
    %2513 = vmax.xlane.f32.xlu0 %v2512
    %v2514 = vpop.xlane.xlu0 %2513
    %v2515 = vsel %vm349, %v2481, -inf
    %2516 = vmax.xlane.f32.xlu0 %v2515
    %v2517 = vpop.xlane.xlu0 %2516
    %v2518 = vsel %vm349, %v2482, -inf
    %2519 = vmax.xlane.f32.xlu0 %v2518
    %v2520 = vpop.xlane.xlu0 %2519
    %v2521 = vsel %vm349, %v2483, -inf
    %2522 = vmax.xlane.f32.xlu0 %v2521
    %v2523 = vpop.xlane.xlu0 %2522
    %v2524 = vsel %vm349, %v2484, -inf
    %2525 = vmax.xlane.f32.xlu0 %v2524
    %v2526 = vpop.xlane.xlu0 %2525
    %v2527 = vsel %vm349, %v2485, -inf
    %2528 = vmax.xlane.f32.xlu0 %v2527
    %v2529 = vpop.xlane.xlu0 %2528
    %v2530 = vsel %vm349, %v2486, -inf
    %2531 = vmax.xlane.f32.xlu0 %v2530
    %v2532 = vpop.xlane.xlu0 %2531
    %v2533 = vsel %vm349, %v2487, -inf
    %2534 = vmax.xlane.f32.xlu0 %v2533
    %v2535 = vpop.xlane.xlu0 %2534
    %v2536 = vsel %vm349, %v2488, -inf
    %2537 = vmax.xlane.f32.xlu0 %v2536
    %v2538 = vpop.xlane.xlu0 %2537
    %v2539 = vsel %vm349, %v2489, -inf
    %2540 = vmax.xlane.f32.xlu0 %v2539
    %v2541 = vpop.xlane.xlu0 %2540
    %v2542 = vsel %vm349, %v2490, -inf
    %2543 = vmax.xlane.f32.xlu0 %v2542
    %v2544 = vpop.xlane.xlu0 %2543
    %v2545 = vsel %vm349, %v2491, -inf
    %2546 = vmax.xlane.f32.xlu0 %v2545
    %v2547 = vpop.xlane.xlu0 %2546
    %v2548 = vsel %vm349, %v2492, -inf
    %2549 = vmax.xlane.f32.xlu0 %v2548
    %v2550 = vpop.xlane.xlu0 %2549
    %v2551 = vsel %vm349, %v2493, -inf
    %2552 = vmax.xlane.f32.xlu0 %v2551
    %v2553 = vpop.xlane.xlu0 %2552
    %v2554 = vsel %vm349, %v2494, -inf
    %2555 = vmax.xlane.f32.xlu0 %v2554
    %v2556 = vpop.xlane.xlu0 %2555
    %v2557 = vsel %vm349, %v2495, -inf
    %2558 = vmax.xlane.f32.xlu0 %v2557
    %v2559 = vpop.xlane.xlu0 %2558
    %v2560 = vsel %vm349, %v2496, -inf
    %2561 = vmax.xlane.f32.xlu0 %v2560
    %v2562 = vpop.xlane.xlu0 %2561
    %v2563 = vsel %vm349, %v2497, -inf
    %2564 = vmax.xlane.f32.xlu0 %v2563
    %v2565 = vpop.xlane.xlu0 %2564
    %v2566 = vsel %vm349, %v2498, -inf
    %2567 = vmax.xlane.f32.xlu0 %v2566
    %v2568 = vpop.xlane.xlu0 %2567
    %v2569 = vsel %vm349, %v2499, -inf
    %2570 = vmax.xlane.f32.xlu0 %v2569
    %v2571 = vpop.xlane.xlu0 %2570
    %v2572 = vsel %vm349, %v2500, -inf
    %2573 = vmax.xlane.f32.xlu0 %v2572
    %v2574 = vpop.xlane.xlu0 %2573
    %v2575 = vsel %vm349, %v2501, -inf
    %2576 = vmax.xlane.f32.xlu0 %v2575
    %v2577 = vpop.xlane.xlu0 %2576
    %v2578 = vsel %vm349, %v2502, -inf
    %2579 = vmax.xlane.f32.xlu0 %v2578
    %v2580 = vpop.xlane.xlu0 %2579
    %v2581 = vsel %vm349, %v2503, -inf
    %2582 = vmax.xlane.f32.xlu0 %v2581
    %v2583 = vpop.xlane.xlu0 %2582
    %v2584 = vsel %vm349, %v2504, -inf
    %2585 = vmax.xlane.f32.xlu0 %v2584
    %v2586 = vpop.xlane.xlu0 %2585
    %v2587 = vsel %vm349, %v2505, -inf
    %2588 = vmax.xlane.f32.xlu0 %v2587
    %v2589 = vpop.xlane.xlu0 %2588
    %v2590 = vsel %vm349, %v2506, -inf
    %2591 = vmax.xlane.f32.xlu0 %v2590
    %v2592 = vpop.xlane.xlu0 %2591
    %v2593 = vsel %vm349, %v2507, -inf
    %2594 = vmax.xlane.f32.xlu0 %v2593
    %v2595 = vpop.xlane.xlu0 %2594
    %v2596 = vsel %vm349, %v2508, -inf
    %2597 = vmax.xlane.f32.xlu0 %v2596
    %v2598 = vpop.xlane.xlu0 %2597
    %v2599 = vsel %vm349, %v2509, -inf
    %2600 = vmax.xlane.f32.xlu0 %v2599
    %v2601 = vpop.xlane.xlu0 %2600
    %v2602 = vsel %vm349, %v2510, -inf
    %2603 = vmax.xlane.f32.xlu0 %v2602
    %v2604 = vpop.xlane.xlu0 %2603
    %v2605 = vsel %vm349, %v2511, -inf
    %2606 = vmax.xlane.f32.xlu0 %v2605
    %v2607 = vpop.xlane.xlu0 %2606
    %v2608 = vsub.f32 %v2480, %v2514
    %v2609 = vsub.f32 %v2481, %v2517
    %v2610 = vsub.f32 %v2482, %v2520
    %v2611 = vsub.f32 %v2483, %v2523
    %v2612 = vsub.f32 %v2484, %v2526
    %v2613 = vsub.f32 %v2485, %v2529
    %v2614 = vsub.f32 %v2486, %v2532
    %v2615 = vsub.f32 %v2487, %v2535
    %v2616 = vsub.f32 %v2488, %v2538
    %v2617 = vsub.f32 %v2489, %v2541
    %v2618 = vsub.f32 %v2490, %v2544
    %v2619 = vsub.f32 %v2491, %v2547
    %v2620 = vsub.f32 %v2492, %v2550
    %v2621 = vsub.f32 %v2493, %v2553
    %v2622 = vsub.f32 %v2494, %v2556
    %v2623 = vsub.f32 %v2495, %v2559
    %v2624 = vsub.f32 %v2496, %v2562
    %v2625 = vsub.f32 %v2497, %v2565
    %v2626 = vsub.f32 %v2498, %v2568
    %v2627 = vsub.f32 %v2499, %v2571
    %v2628 = vsub.f32 %v2500, %v2574
    %v2629 = vsub.f32 %v2501, %v2577
    %v2630 = vsub.f32 %v2502, %v2580
    %v2631 = vsub.f32 %v2503, %v2583
    %v2632 = vsub.f32 %v2504, %v2586
    %v2633 = vsub.f32 %v2505, %v2589
    %v2634 = vsub.f32 %v2506, %v2592
    %v2635 = vsub.f32 %v2507, %v2595
    %v2636 = vsub.f32 %v2508, %v2598
    %v2637 = vsub.f32 %v2509, %v2601
    %v2638 = vsub.f32 %v2510, %v2604
    %v2639 = vsub.f32 %v2511, %v2607
    %v2640 = vmul.f32 %v2608, 1.442695
    %v2641 = vpow.pop %v2640
    %v2642 = vmul.f32 %v2609, 1.442695
    %v2643 = vpow.pop %v2642
    %v2644 = vmul.f32 %v2610, 1.442695
    %v2645 = vpow.pop %v2644
    %v2646 = vmul.f32 %v2611, 1.442695
    %v2647 = vpow.pop %v2646
    %v2648 = vmul.f32 %v2612, 1.442695
    %v2649 = vpow.pop %v2648
    %v2650 = vmul.f32 %v2613, 1.442695
    %v2651 = vpow.pop %v2650
    %v2652 = vmul.f32 %v2614, 1.442695
    %v2653 = vpow.pop %v2652
    %v2654 = vmul.f32 %v2615, 1.442695
    %v2655 = vpow.pop %v2654
    %v2656 = vmul.f32 %v2616, 1.442695
    %v2657 = vpow.pop %v2656
    %v2658 = vmul.f32 %v2617, 1.442695
    %v2659 = vpow.pop %v2658
    %v2660 = vmul.f32 %v2618, 1.442695
    %v2661 = vpow.pop %v2660
    %v2662 = vmul.f32 %v2619, 1.442695
    %v2663 = vpow.pop %v2662
    %v2664 = vmul.f32 %v2620, 1.442695
    %v2665 = vpow.pop %v2664
    %v2666 = vmul.f32 %v2621, 1.442695
    %v2667 = vpow.pop %v2666
    %v2668 = vmul.f32 %v2622, 1.442695
    %v2669 = vpow.pop %v2668
    %v2670 = vmul.f32 %v2623, 1.442695
    %v2671 = vpow.pop %v2670
    %v2672 = vmul.f32 %v2624, 1.442695
    %v2673 = vpow.pop %v2672
    %v2674 = vmul.f32 %v2625, 1.442695
    %v2675 = vpow.pop %v2674
    %v2676 = vmul.f32 %v2626, 1.442695
    %v2677 = vpow.pop %v2676
    %v2678 = vmul.f32 %v2627, 1.442695
    %v2679 = vpow.pop %v2678
    %v2680 = vmul.f32 %v2628, 1.442695
    %v2681 = vpow.pop %v2680
    %v2682 = vmul.f32 %v2629, 1.442695
    %v2683 = vpow.pop %v2682
    %v2684 = vmul.f32 %v2630, 1.442695
    %v2685 = vpow.pop %v2684
    %v2686 = vmul.f32 %v2631, 1.442695
    %v2687 = vpow.pop %v2686
    %v2688 = vmul.f32 %v2632, 1.442695
    %v2689 = vpow.pop %v2688
    %v2690 = vmul.f32 %v2633, 1.442695
    %v2691 = vpow.pop %v2690
    %v2692 = vmul.f32 %v2634, 1.442695
    %v2693 = vpow.pop %v2692
    %v2694 = vmul.f32 %v2635, 1.442695
    %v2695 = vpow.pop %v2694
    %v2696 = vmul.f32 %v2636, 1.442695
    %v2697 = vpow.pop %v2696
    %v2698 = vmul.f32 %v2637, 1.442695
    %v2699 = vpow.pop %v2698
    %v2700 = vmul.f32 %v2638, 1.442695
    %v2701 = vpow.pop %v2700
    %v2702 = vmul.f32 %v2639, 1.442695
    %v2703 = vpow.pop %v2702
    %v2704 = vsel %vm349, %v2641, 0.0
    %2705 = vadd.xlane.f32.xlu0 %v2704
    %v2706 = vpop.xlane.xlu0 %2705
    %v2707 = vsel %vm349, %v2643, 0.0
    %2708 = vadd.xlane.f32.xlu0 %v2707
    %v2709 = vpop.xlane.xlu0 %2708
    %v2710 = vsel %vm349, %v2645, 0.0
    %2711 = vadd.xlane.f32.xlu0 %v2710
    %v2712 = vpop.xlane.xlu0 %2711
    %v2713 = vsel %vm349, %v2647, 0.0
    %2714 = vadd.xlane.f32.xlu0 %v2713
    %v2715 = vpop.xlane.xlu0 %2714
    %v2716 = vsel %vm349, %v2649, 0.0
    %2717 = vadd.xlane.f32.xlu0 %v2716
    %v2718 = vpop.xlane.xlu0 %2717
    %v2719 = vsel %vm349, %v2651, 0.0
    %2720 = vadd.xlane.f32.xlu0 %v2719
    %v2721 = vpop.xlane.xlu0 %2720
    %v2722 = vsel %vm349, %v2653, 0.0
    %2723 = vadd.xlane.f32.xlu0 %v2722
    %v2724 = vpop.xlane.xlu0 %2723
    %v2725 = vsel %vm349, %v2655, 0.0
    %2726 = vadd.xlane.f32.xlu0 %v2725
    %v2727 = vpop.xlane.xlu0 %2726
    %v2728 = vsel %vm349, %v2657, 0.0
    %2729 = vadd.xlane.f32.xlu0 %v2728
    %v2730 = vpop.xlane.xlu0 %2729
    %v2731 = vsel %vm349, %v2659, 0.0
    %2732 = vadd.xlane.f32.xlu0 %v2731
    %v2733 = vpop.xlane.xlu0 %2732
    %v2734 = vsel %vm349, %v2661, 0.0
    %2735 = vadd.xlane.f32.xlu0 %v2734
    %v2736 = vpop.xlane.xlu0 %2735
    %v2737 = vsel %vm349, %v2663, 0.0
    %2738 = vadd.xlane.f32.xlu0 %v2737
    %v2739 = vpop.xlane.xlu0 %2738
    %v2740 = vsel %vm349, %v2665, 0.0
    %2741 = vadd.xlane.f32.xlu0 %v2740
    %v2742 = vpop.xlane.xlu0 %2741
    %v2743 = vsel %vm349, %v2667, 0.0
    %2744 = vadd.xlane.f32.xlu0 %v2743
    %v2745 = vpop.xlane.xlu0 %2744
    %v2746 = vsel %vm349, %v2669, 0.0
    %2747 = vadd.xlane.f32.xlu0 %v2746
    %v2748 = vpop.xlane.xlu0 %2747
    %v2749 = vsel %vm349, %v2671, 0.0
    %2750 = vadd.xlane.f32.xlu0 %v2749
    %v2751 = vpop.xlane.xlu0 %2750
    %v2752 = vsel %vm349, %v2673, 0.0
    %2753 = vadd.xlane.f32.xlu0 %v2752
    %v2754 = vpop.xlane.xlu0 %2753
    %v2755 = vsel %vm349, %v2675, 0.0
    %2756 = vadd.xlane.f32.xlu0 %v2755
    %v2757 = vpop.xlane.xlu0 %2756
    %v2758 = vsel %vm349, %v2677, 0.0
    %2759 = vadd.xlane.f32.xlu0 %v2758
    %v2760 = vpop.xlane.xlu0 %2759
    %v2761 = vsel %vm349, %v2679, 0.0
    %2762 = vadd.xlane.f32.xlu0 %v2761
    %v2763 = vpop.xlane.xlu0 %2762
    %v2764 = vsel %vm349, %v2681, 0.0
    %2765 = vadd.xlane.f32.xlu0 %v2764
    %v2766 = vpop.xlane.xlu0 %2765
    %v2767 = vsel %vm349, %v2683, 0.0
    %2768 = vadd.xlane.f32.xlu0 %v2767
    %v2769 = vpop.xlane.xlu0 %2768
    %v2770 = vsel %vm349, %v2685, 0.0
    %2771 = vadd.xlane.f32.xlu0 %v2770
    %v2772 = vpop.xlane.xlu0 %2771
    %v2773 = vsel %vm349, %v2687, 0.0
    %2774 = vadd.xlane.f32.xlu0 %v2773
    %v2775 = vpop.xlane.xlu0 %2774
    %v2776 = vsel %vm349, %v2689, 0.0
    %2777 = vadd.xlane.f32.xlu0 %v2776
    %v2778 = vpop.xlane.xlu0 %2777
    %v2779 = vsel %vm349, %v2691, 0.0
    %2780 = vadd.xlane.f32.xlu0 %v2779
    %v2781 = vpop.xlane.xlu0 %2780
    %v2782 = vsel %vm349, %v2693, 0.0
    %2783 = vadd.xlane.f32.xlu0 %v2782
    %v2784 = vpop.xlane.xlu0 %2783
    %v2785 = vsel %vm349, %v2695, 0.0
    %2786 = vadd.xlane.f32.xlu0 %v2785
    %v2787 = vpop.xlane.xlu0 %2786
    %v2788 = vsel %vm349, %v2697, 0.0
    %2789 = vadd.xlane.f32.xlu0 %v2788
    %v2790 = vpop.xlane.xlu0 %2789
    %v2791 = vsel %vm349, %v2699, 0.0
    %2792 = vadd.xlane.f32.xlu0 %v2791
    %v2793 = vpop.xlane.xlu0 %2792
    %v2794 = vsel %vm349, %v2701, 0.0
    %2795 = vadd.xlane.f32.xlu0 %v2794
    %v2796 = vpop.xlane.xlu0 %2795
    %v2797 = vsel %vm349, %v2703, 0.0
    %2798 = vadd.xlane.f32.xlu0 %v2797
    %v2799 = vpop.xlane.xlu0 %2798
    %v2800 = vrcp.pop %v2706
    %v2801 = vmul.f32 %v2641, %v2800
    %v2802 = vrcp.pop %v2709
    %v2803 = vmul.f32 %v2643, %v2802
    %v2804 = vrcp.pop %v2712
    %v2805 = vmul.f32 %v2645, %v2804
    %v2806 = vrcp.pop %v2715
    %v2807 = vmul.f32 %v2647, %v2806
    %v2808 = vrcp.pop %v2718
    %v2809 = vmul.f32 %v2649, %v2808
    %v2810 = vrcp.pop %v2721
    %v2811 = vmul.f32 %v2651, %v2810
    %v2812 = vrcp.pop %v2724
    %v2813 = vmul.f32 %v2653, %v2812
    %v2814 = vrcp.pop %v2727
    %v2815 = vmul.f32 %v2655, %v2814
    %v2816 = vrcp.pop %v2730
    %v2817 = vmul.f32 %v2657, %v2816
    %v2818 = vrcp.pop %v2733
    %v2819 = vmul.f32 %v2659, %v2818
    %v2820 = vrcp.pop %v2736
    %v2821 = vmul.f32 %v2661, %v2820
    %v2822 = vrcp.pop %v2739
    %v2823 = vmul.f32 %v2663, %v2822
    %v2824 = vrcp.pop %v2742
    %v2825 = vmul.f32 %v2665, %v2824
    %v2826 = vrcp.pop %v2745
    %v2827 = vmul.f32 %v2667, %v2826
    %v2828 = vrcp.pop %v2748
    %v2829 = vmul.f32 %v2669, %v2828
    %v2830 = vrcp.pop %v2751
    %v2831 = vmul.f32 %v2671, %v2830
    %v2832 = vrcp.pop %v2754
    %v2833 = vmul.f32 %v2673, %v2832
    %v2834 = vrcp.pop %v2757
    %v2835 = vmul.f32 %v2675, %v2834
    %v2836 = vrcp.pop %v2760
    %v2837 = vmul.f32 %v2677, %v2836
    %v2838 = vrcp.pop %v2763
    %v2839 = vmul.f32 %v2679, %v2838
    %v2840 = vrcp.pop %v2766
    %v2841 = vmul.f32 %v2681, %v2840
    %v2842 = vrcp.pop %v2769
    %v2843 = vmul.f32 %v2683, %v2842
    %v2844 = vrcp.pop %v2772
    %v2845 = vmul.f32 %v2685, %v2844
    %v2846 = vrcp.pop %v2775
    %v2847 = vmul.f32 %v2687, %v2846
    %v2848 = vrcp.pop %v2778
    %v2849 = vmul.f32 %v2689, %v2848
    %v2850 = vrcp.pop %v2781
    %v2851 = vmul.f32 %v2691, %v2850
    %v2852 = vrcp.pop %v2784
    %v2853 = vmul.f32 %v2693, %v2852
    %v2854 = vrcp.pop %v2787
    %v2855 = vmul.f32 %v2695, %v2854
    %v2856 = vrcp.pop %v2790
    %v2857 = vmul.f32 %v2697, %v2856
    %v2858 = vrcp.pop %v2793
    %v2859 = vmul.f32 %v2699, %v2858
    %v2860 = vrcp.pop %v2796
    %v2861 = vmul.f32 %v2701, %v2860
    %v2862 = vrcp.pop %v2799
    %v2863 = vmul.f32 %v2703, %v2862
    %v2865 = vsel %vm349, %v2801, 0
    %v2868 = vsel %vm349, %v2803, 0
    %v2871 = vsel %vm349, %v2805, 0
    %v2874 = vsel %vm349, %v2807, 0
    %2876 = vmatprep.subr.mxu0 0.0
    %2877 = vmatpush1.msra.mxu0 %v1620
    %2878 = vmatprep.subr.mxu0 0.0
    %2879 = vmatpush1.msra.mxu0 %v1621
    %2880 = vmatprep.subr.mxu0 0.0
    %2881 = vmatpush1.msra.mxu0 %v1622
    %2882 = vmatprep.subr.mxu0 0.0
    %2883 = vmatpush1.msra.mxu0 %v1623
    %2884 = vmatprep.subr.mxu0 0.0
    %2885 = vmatpush1.msra.mxu0 0.0
    %2886 = vmatprep.subr.mxu0 0.0
    %2887 = vmatpush1.msra.mxu0 0.0
    %2888 = vmatprep.subr.mxu0 0.0
    %2889 = vmatpush1.msra.mxu0 0.0
    %2890 = vmatprep.subr.mxu0 0.0
    %2891 = vmatpush1.msra.mxu0 0.0
    %2892 = vmatprep.subr.mxu0 0.0
    %2893 = vmatpush1.msra.mxu0 0.0
    %2894 = vmatprep.subr.mxu0 0.0
    %2895 = vmatpush1.msra.mxu0 0.0
    %2896 = vmatprep.subr.mxu0 0.0
    %2897 = vmatpush1.msra.mxu0 0.0
    %2898 = vmatprep.subr.mxu0 0.0
    %2899 = vmatpush1.msra.mxu0 0.0
    %2900 = vmatprep.subr.mxu0 0.0
    %2901 = vmatpush1.msra.mxu0 0.0
    %2902 = vmatprep.subr.mxu0 0.0
    %2903 = vmatpush1.msra.mxu0 0.0
    %2904 = vmatprep.subr.mxu0 0.0
    %2905 = vmatpush1.msra.mxu0 0.0
    %2906 = vmatprep.subr.mxu0 0.0
    %2907 = vmatpush1.msra.mxu0 0.0
    %2908 = vmatprep.subr.mxu0 0.0
    %2909 = vmatpush1.msra.mxu0 0.0
    %2910 = vmatprep.subr.mxu0 0.0
    %2911 = vmatpush1.msra.mxu0 0.0
    %2912 = vmatprep.subr.mxu0 0.0
    %2913 = vmatpush1.msra.mxu0 0.0
    %2914 = vmatprep.subr.mxu0 0.0
    %2915 = vmatpush1.msra.mxu0 0.0
    %2916 = vmatprep.subr.mxu0 0.0
    %2917 = vmatpush1.msra.mxu0 0.0
    %2918 = vmatprep.subr.mxu0 0.0
    %2919 = vmatpush1.msra.mxu0 0.0
    %2920 = vmatprep.subr.mxu0 0.0
    %2921 = vmatpush1.msra.mxu0 0.0
    %2922 = vmatprep.subr.mxu0 0.0
    %2923 = vmatpush1.msra.mxu0 0.0
    %2924 = vmatprep.subr.mxu0 0.0
    %2925 = vmatpush1.msra.mxu0 0.0
    %2926 = vmatprep.subr.mxu0 0.0
    %2927 = vmatpush1.msra.mxu0 0.0
    %2928 = vmatprep.subr.mxu0 0.0
    %2929 = vmatpush1.msra.mxu0 0.0
    %2930 = vmatprep.subr.mxu0 0.0
    %2931 = vmatpush1.msra.mxu0 0.0
    %2932 = vmatprep.subr.mxu0 0.0
    %2933 = vmatpush1.msra.mxu0 0.0
    %2934 = vmatprep.subr.mxu0 0.0
    %2935 = vmatpush1.msra.mxu0 0.0
    %2936 = vmatprep.subr.mxu0 0.0
    %2937 = vmatpush1.msra.mxu0 0.0
    %2938 = vmatprep.subr.mxu0 0.0
    %2939 = vmatpush1.msra.mxu0 0.0
    %2940 = vmatprep.mubr.f32.mxu0 0.0
    %2941 = vmatmul.mubr.f32.gmra.mrb[0].mxu0 %v2865
    %v2942 = vpop.f32.mrb[0].mxu0
    %v2943 = vadd.f32 0.0, %v2942
    %v2944 = vpop.f32.mrb[0].mxu0
    %2945 = vmatprep.mubr.f32.mxu0 0.0
    %2946 = vmatmul.mubr.f32.gmra.mrb[0].mxu0 %v2868
    %v2947 = vpop.f32.mrb[0].mxu0
    %v2948 = vadd.f32 0.0, %v2947
    %v2949 = vpop.f32.mrb[0].mxu0
    %2950 = vmatprep.mubr.f32.mxu0 0.0
    %2951 = vmatmul.mubr.f32.gmra.mrb[0].mxu0 %v2871
    %v2952 = vpop.f32.mrb[0].mxu0
    %v2953 = vadd.f32 0.0, %v2952
    %v2954 = vpop.f32.mrb[0].mxu0
    %2955 = vmatprep.mubr.f32.mxu0 0.0
    %2956 = vmatmul.mubr.f32.gmra.mrb[0].mxu0 %v2874
    %v2957 = vpop.f32.mrb[0].mxu0
    %v2958 = vadd.f32 0.0, %v2957
    %v2959 = vpop.f32.mrb[0].mxu0
    %2960 = vdwg.mxu0
    %v2962 = vsel %vm349, %v2809, 0
    %v2965 = vsel %vm349, %v2811, 0
    %v2968 = vsel %vm349, %v2813, 0
    %v2971 = vsel %vm349, %v2815, 0
    %2973 = vmatprep.subr.mxu0 0.0
    %2974 = vmatpush1.msra.mxu0 %v1624
    %2975 = vmatprep.subr.mxu0 0.0
    %2976 = vmatpush1.msra.mxu0 %v1625
    %2977 = vmatprep.subr.mxu0 0.0
    %2978 = vmatpush1.msra.mxu0 %v1626
    %2979 = vmatprep.subr.mxu0 0.0
    %2980 = vmatpush1.msra.mxu0 %v1627
    %2981 = vmatprep.subr.mxu0 0.0
    %2982 = vmatpush1.msra.mxu0 0.0
    %2983 = vmatprep.subr.mxu0 0.0
    %2984 = vmatpush1.msra.mxu0 0.0
    %2985 = vmatprep.subr.mxu0 0.0
    %2986 = vmatpush1.msra.mxu0 0.0
    %2987 = vmatprep.subr.mxu0 0.0
    %2988 = vmatpush1.msra.mxu0 0.0
    %2989 = vmatprep.subr.mxu0 0.0
    %2990 = vmatpush1.msra.mxu0 0.0
    %2991 = vmatprep.subr.mxu0 0.0
    %2992 = vmatpush1.msra.mxu0 0.0
    %2993 = vmatprep.subr.mxu0 0.0
    %2994 = vmatpush1.msra.mxu0 0.0
    %2995 = vmatprep.subr.mxu0 0.0
    %2996 = vmatpush1.msra.mxu0 0.0
    %2997 = vmatprep.subr.mxu0 0.0
    %2998 = vmatpush1.msra.mxu0 0.0
    %2999 = vmatprep.subr.mxu0 0.0
    %3000 = vmatpush1.msra.mxu0 0.0
    %3001 = vmatprep.subr.mxu0 0.0
    %3002 = vmatpush1.msra.mxu0 0.0
    %3003 = vmatprep.subr.mxu0 0.0
    %3004 = vmatpush1.msra.mxu0 0.0
    %3005 = vmatprep.subr.mxu0 0.0
    %3006 = vmatpush1.msra.mxu0 0.0
    %3007 = vmatprep.subr.mxu0 0.0
    %3008 = vmatpush1.msra.mxu0 0.0
    %3009 = vmatprep.subr.mxu0 0.0
    %3010 = vmatpush1.msra.mxu0 0.0
    %3011 = vmatprep.subr.mxu0 0.0
    %3012 = vmatpush1.msra.mxu0 0.0
    %3013 = vmatprep.subr.mxu0 0.0
    %3014 = vmatpush1.msra.mxu0 0.0
    %3015 = vmatprep.subr.mxu0 0.0
    %3016 = vmatpush1.msra.mxu0 0.0
    %3017 = vmatprep.subr.mxu0 0.0
    %3018 = vmatpush1.msra.mxu0 0.0
    %3019 = vmatprep.subr.mxu0 0.0
    %3020 = vmatpush1.msra.mxu0 0.0
    %3021 = vmatprep.subr.mxu0 0.0
    %3022 = vmatpush1.msra.mxu0 0.0
    %3023 = vmatprep.subr.mxu0 0.0
    %3024 = vmatpush1.msra.mxu0 0.0
    %3025 = vmatprep.subr.mxu0 0.0
    %3026 = vmatpush1.msra.mxu0 0.0
    %3027 = vmatprep.subr.mxu0 0.0
    %3028 = vmatpush1.msra.mxu0 0.0
    %3029 = vmatprep.subr.mxu0 0.0
    %3030 = vmatpush1.msra.mxu0 0.0
    %3031 = vmatprep.subr.mxu0 0.0
    %3032 = vmatpush1.msra.mxu0 0.0
    %3033 = vmatprep.subr.mxu0 0.0
    %3034 = vmatpush1.msra.mxu0 0.0
    %3035 = vmatprep.subr.mxu0 0.0
    %3036 = vmatpush1.msra.mxu0 0.0
    %3037 = vmatprep.mubr.f32.mxu0 0.0
    %3038 = vmatmul.mubr.f32.gmra.mrb[0].mxu0 %v2962
    %v3039 = vpop.f32.mrb[0].mxu0
    %v3040 = vadd.f32 0.0, %v3039
    %v3041 = vpop.f32.mrb[0].mxu0
    %3042 = vmatprep.mubr.f32.mxu0 0.0
    %3043 = vmatmul.mubr.f32.gmra.mrb[0].mxu0 %v2965
    %v3044 = vpop.f32.mrb[0].mxu0
    %v3045 = vadd.f32 0.0, %v3044
    %v3046 = vpop.f32.mrb[0].mxu0
    %3047 = vmatprep.mubr.f32.mxu0 0.0
    %3048 = vmatmul.mubr.f32.gmra.mrb[0].mxu0 %v2968
    %v3049 = vpop.f32.mrb[0].mxu0
    %v3050 = vadd.f32 0.0, %v3049
    %v3051 = vpop.f32.mrb[0].mxu0
    %3052 = vmatprep.mubr.f32.mxu0 0.0
    %3053 = vmatmul.mubr.f32.gmra.mrb[0].mxu0 %v2971
    %v3054 = vpop.f32.mrb[0].mxu0
    %v3055 = vadd.f32 0.0, %v3054
    %v3056 = vpop.f32.mrb[0].mxu0
    %3057 = vdwg.mxu0
    %v3059 = vsel %vm349, %v2817, 0
    %v3062 = vsel %vm349, %v2819, 0
    %v3065 = vsel %vm349, %v2821, 0
    %v3068 = vsel %vm349, %v2823, 0
    %3070 = vmatprep.subr.mxu0 0.0
    %3071 = vmatpush1.msra.mxu0 %v1628
    %3072 = vmatprep.subr.mxu0 0.0
    %3073 = vmatpush1.msra.mxu0 %v1629
    %3074 = vmatprep.subr.mxu0 0.0
    %3075 = vmatpush1.msra.mxu0 %v1630
    %3076 = vmatprep.subr.mxu0 0.0
    %3077 = vmatpush1.msra.mxu0 %v1631
    %3078 = vmatprep.subr.mxu0 0.0
    %3079 = vmatpush1.msra.mxu0 0.0
    %3080 = vmatprep.subr.mxu0 0.0
    %3081 = vmatpush1.msra.mxu0 0.0
    %3082 = vmatprep.subr.mxu0 0.0
    %3083 = vmatpush1.msra.mxu0 0.0
    %3084 = vmatprep.subr.mxu0 0.0
    %3085 = vmatpush1.msra.mxu0 0.0
    %3086 = vmatprep.subr.mxu0 0.0
    %3087 = vmatpush1.msra.mxu0 0.0
    %3088 = vmatprep.subr.mxu0 0.0
    %3089 = vmatpush1.msra.mxu0 0.0
    %3090 = vmatprep.subr.mxu0 0.0
    %3091 = vmatpush1.msra.mxu0 0.0
    %3092 = vmatprep.subr.mxu0 0.0
    %3093 = vmatpush1.msra.mxu0 0.0
    %3094 = vmatprep.subr.mxu0 0.0
    %3095 = vmatpush1.msra.mxu0 0.0
    %3096 = vmatprep.subr.mxu0 0.0
    %3097 = vmatpush1.msra.mxu0 0.0
    %3098 = vmatprep.subr.mxu0 0.0
    %3099 = vmatpush1.msra.mxu0 0.0
    %3100 = vmatprep.subr.mxu0 0.0
    %3101 = vmatpush1.msra.mxu0 0.0
    %3102 = vmatprep.subr.mxu0 0.0
    %3103 = vmatpush1.msra.mxu0 0.0
    %3104 = vmatprep.subr.mxu0 0.0
    %3105 = vmatpush1.msra.mxu0 0.0
    %3106 = vmatprep.subr.mxu0 0.0
    %3107 = vmatpush1.msra.mxu0 0.0
    %3108 = vmatprep.subr.mxu0 0.0
    %3109 = vmatpush1.msra.mxu0 0.0
    %3110 = vmatprep.subr.mxu0 0.0
    %3111 = vmatpush1.msra.mxu0 0.0
    %3112 = vmatprep.subr.mxu0 0.0
    %3113 = vmatpush1.msra.mxu0 0.0
    %3114 = vmatprep.subr.mxu0 0.0
    %3115 = vmatpush1.msra.mxu0 0.0
    %3116 = vmatprep.subr.mxu0 0.0
    %3117 = vmatpush1.msra.mxu0 0.0
    %3118 = vmatprep.subr.mxu0 0.0
    %3119 = vmatpush1.msra.mxu0 0.0
    %3120 = vmatprep.subr.mxu0 0.0
    %3121 = vmatpush1.msra.mxu0 0.0
    %3122 = vmatprep.subr.mxu0 0.0
    %3123 = vmatpush1.msra.mxu0 0.0
    %3124 = vmatprep.subr.mxu0 0.0
    %3125 = vmatpush1.msra.mxu0 0.0
    %3126 = vmatprep.subr.mxu0 0.0
    %3127 = vmatpush1.msra.mxu0 0.0
    %3128 = vmatprep.subr.mxu0 0.0
    %3129 = vmatpush1.msra.mxu0 0.0
    %3130 = vmatprep.subr.mxu0 0.0
    %3131 = vmatpush1.msra.mxu0 0.0
    %3132 = vmatprep.subr.mxu0 0.0
    %3133 = vmatpush1.msra.mxu0 0.0
    %3134 = vmatprep.mubr.f32.mxu0 0.0
    %3135 = vmatmul.mubr.f32.gmra.mrb[0].mxu0 %v3059
    %v3136 = vpop.f32.mrb[0].mxu0
    %v3137 = vadd.f32 0.0, %v3136
    %v3138 = vpop.f32.mrb[0].mxu0
    %3139 = vmatprep.mubr.f32.mxu0 0.0
    %3140 = vmatmul.mubr.f32.gmra.mrb[0].mxu0 %v3062
    %v3141 = vpop.f32.mrb[0].mxu0
    %v3142 = vadd.f32 0.0, %v3141
    %v3143 = vpop.f32.mrb[0].mxu0
    %3144 = vmatprep.mubr.f32.mxu0 0.0
    %3145 = vmatmul.mubr.f32.gmra.mrb[0].mxu0 %v3065
    %v3146 = vpop.f32.mrb[0].mxu0
    %v3147 = vadd.f32 0.0, %v3146
    %v3148 = vpop.f32.mrb[0].mxu0
    %3149 = vmatprep.mubr.f32.mxu0 0.0
    %3150 = vmatmul.mubr.f32.gmra.mrb[0].mxu0 %v3068
    %v3151 = vpop.f32.mrb[0].mxu0
    %v3152 = vadd.f32 0.0, %v3151
    %v3153 = vpop.f32.mrb[0].mxu0
    %3154 = vdwg.mxu0
    %v3156 = vsel %vm349, %v2825, 0
    %v3159 = vsel %vm349, %v2827, 0
    %v3162 = vsel %vm349, %v2829, 0
    %v3165 = vsel %vm349, %v2831, 0
    %3167 = vmatprep.subr.mxu0 0.0
    %3168 = vmatpush1.msra.mxu0 %v1632
    %3169 = vmatprep.subr.mxu0 0.0
    %3170 = vmatpush1.msra.mxu0 %v1633
    %3171 = vmatprep.subr.mxu0 0.0
    %3172 = vmatpush1.msra.mxu0 %v1634
    %3173 = vmatprep.subr.mxu0 0.0
    %3174 = vmatpush1.msra.mxu0 %v1635
    %3175 = vmatprep.subr.mxu0 0.0
    %3176 = vmatpush1.msra.mxu0 0.0
    %3177 = vmatprep.subr.mxu0 0.0
    %3178 = vmatpush1.msra.mxu0 0.0
    %3179 = vmatprep.subr.mxu0 0.0
    %3180 = vmatpush1.msra.mxu0 0.0
    %3181 = vmatprep.subr.mxu0 0.0
    %3182 = vmatpush1.msra.mxu0 0.0
    %3183 = vmatprep.subr.mxu0 0.0
    %3184 = vmatpush1.msra.mxu0 0.0
    %3185 = vmatprep.subr.mxu0 0.0
    %3186 = vmatpush1.msra.mxu0 0.0
    %3187 = vmatprep.subr.mxu0 0.0
    %3188 = vmatpush1.msra.mxu0 0.0
    %3189 = vmatprep.subr.mxu0 0.0
    %3190 = vmatpush1.msra.mxu0 0.0
    %3191 = vmatprep.subr.mxu0 0.0
    %3192 = vmatpush1.msra.mxu0 0.0
    %3193 = vmatprep.subr.mxu0 0.0
    %3194 = vmatpush1.msra.mxu0 0.0
    %3195 = vmatprep.subr.mxu0 0.0
    %3196 = vmatpush1.msra.mxu0 0.0
    %3197 = vmatprep.subr.mxu0 0.0
    %3198 = vmatpush1.msra.mxu0 0.0
    %3199 = vmatprep.subr.mxu0 0.0
    %3200 = vmatpush1.msra.mxu0 0.0
    %3201 = vmatprep.subr.mxu0 0.0
    %3202 = vmatpush1.msra.mxu0 0.0
    %3203 = vmatprep.subr.mxu0 0.0
    %3204 = vmatpush1.msra.mxu0 0.0
    %3205 = vmatprep.subr.mxu0 0.0
    %3206 = vmatpush1.msra.mxu0 0.0
    %3207 = vmatprep.subr.mxu0 0.0
    %3208 = vmatpush1.msra.mxu0 0.0
    %3209 = vmatprep.subr.mxu0 0.0
    %3210 = vmatpush1.msra.mxu0 0.0
    %3211 = vmatprep.subr.mxu0 0.0
    %3212 = vmatpush1.msra.mxu0 0.0
    %3213 = vmatprep.subr.mxu0 0.0
    %3214 = vmatpush1.msra.mxu0 0.0
    %3215 = vmatprep.subr.mxu0 0.0
    %3216 = vmatpush1.msra.mxu0 0.0
    %3217 = vmatprep.subr.mxu0 0.0
    %3218 = vmatpush1.msra.mxu0 0.0
    %3219 = vmatprep.subr.mxu0 0.0
    %3220 = vmatpush1.msra.mxu0 0.0
    %3221 = vmatprep.subr.mxu0 0.0
    %3222 = vmatpush1.msra.mxu0 0.0
    %3223 = vmatprep.subr.mxu0 0.0
    %3224 = vmatpush1.msra.mxu0 0.0
    %3225 = vmatprep.subr.mxu0 0.0
    %3226 = vmatpush1.msra.mxu0 0.0
    %3227 = vmatprep.subr.mxu0 0.0
    %3228 = vmatpush1.msra.mxu0 0.0
    %3229 = vmatprep.subr.mxu0 0.0
    %3230 = vmatpush1.msra.mxu0 0.0
    %3231 = vmatprep.mubr.f32.mxu0 0.0
    %3232 = vmatmul.mubr.f32.gmra.mrb[0].mxu0 %v3156
    %v3233 = vpop.f32.mrb[0].mxu0
    %v3234 = vadd.f32 0.0, %v3233
    %v3235 = vpop.f32.mrb[0].mxu0
    %3236 = vmatprep.mubr.f32.mxu0 0.0
    %3237 = vmatmul.mubr.f32.gmra.mrb[0].mxu0 %v3159
    %v3238 = vpop.f32.mrb[0].mxu0
    %v3239 = vadd.f32 0.0, %v3238
    %v3240 = vpop.f32.mrb[0].mxu0
    %3241 = vmatprep.mubr.f32.mxu0 0.0
    %3242 = vmatmul.mubr.f32.gmra.mrb[0].mxu0 %v3162
    %v3243 = vpop.f32.mrb[0].mxu0
    %v3244 = vadd.f32 0.0, %v3243
    %v3245 = vpop.f32.mrb[0].mxu0
    %3246 = vmatprep.mubr.f32.mxu0 0.0
    %3247 = vmatmul.mubr.f32.gmra.mrb[0].mxu0 %v3165
    %v3248 = vpop.f32.mrb[0].mxu0
    %v3249 = vadd.f32 0.0, %v3248
    %v3250 = vpop.f32.mrb[0].mxu0
    %3251 = vdwg.mxu0
    %v3253 = vsel %vm349, %v2833, 0
    %v3256 = vsel %vm349, %v2835, 0
    %v3259 = vsel %vm349, %v2837, 0
    %v3262 = vsel %vm349, %v2839, 0
    %3264 = vmatprep.subr.mxu0 0.0
    %3265 = vmatpush1.msra.mxu0 %v1636
    %3266 = vmatprep.subr.mxu0 0.0
    %3267 = vmatpush1.msra.mxu0 %v1637
    %3268 = vmatprep.subr.mxu0 0.0
    %3269 = vmatpush1.msra.mxu0 %v1638
    %3270 = vmatprep.subr.mxu0 0.0
    %3271 = vmatpush1.msra.mxu0 %v1639
    %3272 = vmatprep.subr.mxu0 0.0
    %3273 = vmatpush1.msra.mxu0 0.0
    %3274 = vmatprep.subr.mxu0 0.0
    %3275 = vmatpush1.msra.mxu0 0.0
    %3276 = vmatprep.subr.mxu0 0.0
    %3277 = vmatpush1.msra.mxu0 0.0
    %3278 = vmatprep.subr.mxu0 0.0
    %3279 = vmatpush1.msra.mxu0 0.0
    %3280 = vmatprep.subr.mxu0 0.0
    %3281 = vmatpush1.msra.mxu0 0.0
    %3282 = vmatprep.subr.mxu0 0.0
    %3283 = vmatpush1.msra.mxu0 0.0
    %3284 = vmatprep.subr.mxu0 0.0
    %3285 = vmatpush1.msra.mxu0 0.0
    %3286 = vmatprep.subr.mxu0 0.0
    %3287 = vmatpush1.msra.mxu0 0.0
    %3288 = vmatprep.subr.mxu0 0.0
    %3289 = vmatpush1.msra.mxu0 0.0
    %3290 = vmatprep.subr.mxu0 0.0
    %3291 = vmatpush1.msra.mxu0 0.0
    %3292 = vmatprep.subr.mxu0 0.0
    %3293 = vmatpush1.msra.mxu0 0.0
    %3294 = vmatprep.subr.mxu0 0.0
    %3295 = vmatpush1.msra.mxu0 0.0
    %3296 = vmatprep.subr.mxu0 0.0
    %3297 = vmatpush1.msra.mxu0 0.0
    %3298 = vmatprep.subr.mxu0 0.0
    %3299 = vmatpush1.msra.mxu0 0.0
    %3300 = vmatprep.subr.mxu0 0.0
    %3301 = vmatpush1.msra.mxu0 0.0
    %3302 = vmatprep.subr.mxu0 0.0
    %3303 = vmatpush1.msra.mxu0 0.0
    %3304 = vmatprep.subr.mxu0 0.0
    %3305 = vmatpush1.msra.mxu0 0.0
    %3306 = vmatprep.subr.mxu0 0.0
    %3307 = vmatpush1.msra.mxu0 0.0
    %3308 = vmatprep.subr.mxu0 0.0
    %3309 = vmatpush1.msra.mxu0 0.0
    %3310 = vmatprep.subr.mxu0 0.0
    %3311 = vmatpush1.msra.mxu0 0.0
    %3312 = vmatprep.subr.mxu0 0.0
    %3313 = vmatpush1.msra.mxu0 0.0
    %3314 = vmatprep.subr.mxu0 0.0
    %3315 = vmatpush1.msra.mxu0 0.0
    %3316 = vmatprep.subr.mxu0 0.0
    %3317 = vmatpush1.msra.mxu0 0.0
    %3318 = vmatprep.subr.mxu0 0.0
    %3319 = vmatpush1.msra.mxu0 0.0
    %3320 = vmatprep.subr.mxu0 0.0
    %3321 = vmatpush1.msra.mxu0 0.0
    %3322 = vmatprep.subr.mxu0 0.0
    %3323 = vmatpush1.msra.mxu0 0.0
    %3324 = vmatprep.subr.mxu0 0.0
    %3325 = vmatpush1.msra.mxu0 0.0
    %3326 = vmatprep.subr.mxu0 0.0
    %3327 = vmatpush1.msra.mxu0 0.0
    %3328 = vmatprep.mubr.f32.mxu0 0.0
    %3329 = vmatmul.mubr.f32.gmra.mrb[0].mxu0 %v3253
    %v3330 = vpop.f32.mrb[0].mxu0
    %v3331 = vadd.f32 0.0, %v3330
    %v3332 = vpop.f32.mrb[0].mxu0
    %3333 = vmatprep.mubr.f32.mxu0 0.0
    %3334 = vmatmul.mubr.f32.gmra.mrb[0].mxu0 %v3256
    %v3335 = vpop.f32.mrb[0].mxu0
    %v3336 = vadd.f32 0.0, %v3335
    %v3337 = vpop.f32.mrb[0].mxu0
    %3338 = vmatprep.mubr.f32.mxu0 0.0
    %3339 = vmatmul.mubr.f32.gmra.mrb[0].mxu0 %v3259
    %v3340 = vpop.f32.mrb[0].mxu0
    %v3341 = vadd.f32 0.0, %v3340
    %v3342 = vpop.f32.mrb[0].mxu0
    %3343 = vmatprep.mubr.f32.mxu0 0.0
    %3344 = vmatmul.mubr.f32.gmra.mrb[0].mxu0 %v3262
    %v3345 = vpop.f32.mrb[0].mxu0
    %v3346 = vadd.f32 0.0, %v3345
    %v3347 = vpop.f32.mrb[0].mxu0
    %3348 = vdwg.mxu0
    %v3350 = vsel %vm349, %v2841, 0
    %v3353 = vsel %vm349, %v2843, 0
    %v3356 = vsel %vm349, %v2845, 0
    %v3359 = vsel %vm349, %v2847, 0
    %3361 = vmatprep.subr.mxu0 0.0
    %3362 = vmatpush1.msra.mxu0 %v1640
    %3363 = vmatprep.subr.mxu0 0.0
    %3364 = vmatpush1.msra.mxu0 %v1641
    %3365 = vmatprep.subr.mxu0 0.0
    %3366 = vmatpush1.msra.mxu0 %v1642
    %3367 = vmatprep.subr.mxu0 0.0
    %3368 = vmatpush1.msra.mxu0 %v1643
    %3369 = vmatprep.subr.mxu0 0.0
    %3370 = vmatpush1.msra.mxu0 0.0
    %3371 = vmatprep.subr.mxu0 0.0
    %3372 = vmatpush1.msra.mxu0 0.0
    %3373 = vmatprep.subr.mxu0 0.0
    %3374 = vmatpush1.msra.mxu0 0.0
    %3375 = vmatprep.subr.mxu0 0.0
    %3376 = vmatpush1.msra.mxu0 0.0
    %3377 = vmatprep.subr.mxu0 0.0
    %3378 = vmatpush1.msra.mxu0 0.0
    %3379 = vmatprep.subr.mxu0 0.0
    %3380 = vmatpush1.msra.mxu0 0.0
    %3381 = vmatprep.subr.mxu0 0.0
    %3382 = vmatpush1.msra.mxu0 0.0
    %3383 = vmatprep.subr.mxu0 0.0
    %3384 = vmatpush1.msra.mxu0 0.0
    %3385 = vmatprep.subr.mxu0 0.0
    %3386 = vmatpush1.msra.mxu0 0.0
    %3387 = vmatprep.subr.mxu0 0.0
    %3388 = vmatpush1.msra.mxu0 0.0
    %3389 = vmatprep.subr.mxu0 0.0
    %3390 = vmatpush1.msra.mxu0 0.0
    %3391 = vmatprep.subr.mxu0 0.0
    %3392 = vmatpush1.msra.mxu0 0.0
    %3393 = vmatprep.subr.mxu0 0.0
    %3394 = vmatpush1.msra.mxu0 0.0
    %3395 = vmatprep.subr.mxu0 0.0
    %3396 = vmatpush1.msra.mxu0 0.0
    %3397 = vmatprep.subr.mxu0 0.0
    %3398 = vmatpush1.msra.mxu0 0.0
    %3399 = vmatprep.subr.mxu0 0.0
    %3400 = vmatpush1.msra.mxu0 0.0
    %3401 = vmatprep.subr.mxu0 0.0
    %3402 = vmatpush1.msra.mxu0 0.0
    %3403 = vmatprep.subr.mxu0 0.0
    %3404 = vmatpush1.msra.mxu0 0.0
    %3405 = vmatprep.subr.mxu0 0.0
    %3406 = vmatpush1.msra.mxu0 0.0
    %3407 = vmatprep.subr.mxu0 0.0
    %3408 = vmatpush1.msra.mxu0 0.0
    %3409 = vmatprep.subr.mxu0 0.0
    %3410 = vmatpush1.msra.mxu0 0.0
    %3411 = vmatprep.subr.mxu0 0.0
    %3412 = vmatpush1.msra.mxu0 0.0
    %3413 = vmatprep.subr.mxu0 0.0
    %3414 = vmatpush1.msra.mxu0 0.0
    %3415 = vmatprep.subr.mxu0 0.0
    %3416 = vmatpush1.msra.mxu0 0.0
    %3417 = vmatprep.subr.mxu0 0.0
    %3418 = vmatpush1.msra.mxu0 0.0
    %3419 = vmatprep.subr.mxu0 0.0
    %3420 = vmatpush1.msra.mxu0 0.0
    %3421 = vmatprep.subr.mxu0 0.0
    %3422 = vmatpush1.msra.mxu0 0.0
    %3423 = vmatprep.subr.mxu0 0.0
    %3424 = vmatpush1.msra.mxu0 0.0
    %3425 = vmatprep.mubr.f32.mxu0 0.0
    %3426 = vmatmul.mubr.f32.gmra.mrb[0].mxu0 %v3350
    %v3427 = vpop.f32.mrb[0].mxu0
    %v3428 = vadd.f32 0.0, %v3427
    %v3429 = vpop.f32.mrb[0].mxu0
    %3430 = vmatprep.mubr.f32.mxu0 0.0
    %3431 = vmatmul.mubr.f32.gmra.mrb[0].mxu0 %v3353
    %v3432 = vpop.f32.mrb[0].mxu0
    %v3433 = vadd.f32 0.0, %v3432
    %v3434 = vpop.f32.mrb[0].mxu0
    %3435 = vmatprep.mubr.f32.mxu0 0.0
    %3436 = vmatmul.mubr.f32.gmra.mrb[0].mxu0 %v3356
    %v3437 = vpop.f32.mrb[0].mxu0
    %v3438 = vadd.f32 0.0, %v3437
    %v3439 = vpop.f32.mrb[0].mxu0
    %3440 = vmatprep.mubr.f32.mxu0 0.0
    %3441 = vmatmul.mubr.f32.gmra.mrb[0].mxu0 %v3359
    %v3442 = vpop.f32.mrb[0].mxu0
    %v3443 = vadd.f32 0.0, %v3442
    %v3444 = vpop.f32.mrb[0].mxu0
    %3445 = vdwg.mxu0
    %v3447 = vsel %vm349, %v2849, 0
    %v3450 = vsel %vm349, %v2851, 0
    %v3453 = vsel %vm349, %v2853, 0
    %v3456 = vsel %vm349, %v2855, 0
    %3458 = vmatprep.subr.mxu0 0.0
    %3459 = vmatpush1.msra.mxu0 %v1644
    %3460 = vmatprep.subr.mxu0 0.0
    %3461 = vmatpush1.msra.mxu0 %v1645
    %3462 = vmatprep.subr.mxu0 0.0
    %3463 = vmatpush1.msra.mxu0 %v1646
    %3464 = vmatprep.subr.mxu0 0.0
    %3465 = vmatpush1.msra.mxu0 %v1647
    %3466 = vmatprep.subr.mxu0 0.0
    %3467 = vmatpush1.msra.mxu0 0.0
    %3468 = vmatprep.subr.mxu0 0.0
    %3469 = vmatpush1.msra.mxu0 0.0
    %3470 = vmatprep.subr.mxu0 0.0
    %3471 = vmatpush1.msra.mxu0 0.0
    %3472 = vmatprep.subr.mxu0 0.0
    %3473 = vmatpush1.msra.mxu0 0.0
    %3474 = vmatprep.subr.mxu0 0.0
    %3475 = vmatpush1.msra.mxu0 0.0
    %3476 = vmatprep.subr.mxu0 0.0
    %3477 = vmatpush1.msra.mxu0 0.0
    %3478 = vmatprep.subr.mxu0 0.0
    %3479 = vmatpush1.msra.mxu0 0.0
    %3480 = vmatprep.subr.mxu0 0.0
    %3481 = vmatpush1.msra.mxu0 0.0
    %3482 = vmatprep.subr.mxu0 0.0
    %3483 = vmatpush1.msra.mxu0 0.0
    %3484 = vmatprep.subr.mxu0 0.0
    %3485 = vmatpush1.msra.mxu0 0.0
    %3486 = vmatprep.subr.mxu0 0.0
    %3487 = vmatpush1.msra.mxu0 0.0
    %3488 = vmatprep.subr.mxu0 0.0
    %3489 = vmatpush1.msra.mxu0 0.0
    %3490 = vmatprep.subr.mxu0 0.0
    %3491 = vmatpush1.msra.mxu0 0.0
    %3492 = vmatprep.subr.mxu0 0.0
    %3493 = vmatpush1.msra.mxu0 0.0
    %3494 = vmatprep.subr.mxu0 0.0
    %3495 = vmatpush1.msra.mxu0 0.0
    %3496 = vmatprep.subr.mxu0 0.0
    %3497 = vmatpush1.msra.mxu0 0.0
    %3498 = vmatprep.subr.mxu0 0.0
    %3499 = vmatpush1.msra.mxu0 0.0
    %3500 = vmatprep.subr.mxu0 0.0
    %3501 = vmatpush1.msra.mxu0 0.0
    %3502 = vmatprep.subr.mxu0 0.0
    %3503 = vmatpush1.msra.mxu0 0.0
    %3504 = vmatprep.subr.mxu0 0.0
    %3505 = vmatpush1.msra.mxu0 0.0
    %3506 = vmatprep.subr.mxu0 0.0
    %3507 = vmatpush1.msra.mxu0 0.0
    %3508 = vmatprep.subr.mxu0 0.0
    %3509 = vmatpush1.msra.mxu0 0.0
    %3510 = vmatprep.subr.mxu0 0.0
    %3511 = vmatpush1.msra.mxu0 0.0
    %3512 = vmatprep.subr.mxu0 0.0
    %3513 = vmatpush1.msra.mxu0 0.0
    %3514 = vmatprep.subr.mxu0 0.0
    %3515 = vmatpush1.msra.mxu0 0.0
    %3516 = vmatprep.subr.mxu0 0.0
    %3517 = vmatpush1.msra.mxu0 0.0
    %3518 = vmatprep.subr.mxu0 0.0
    %3519 = vmatpush1.msra.mxu0 0.0
    %3520 = vmatprep.subr.mxu0 0.0
    %3521 = vmatpush1.msra.mxu0 0.0
    %3522 = vmatprep.mubr.f32.mxu0 0.0
    %3523 = vmatmul.mubr.f32.gmra.mrb[0].mxu0 %v3447
    %v3524 = vpop.f32.mrb[0].mxu0
    %v3525 = vadd.f32 0.0, %v3524
    %v3526 = vpop.f32.mrb[0].mxu0
    %3527 = vmatprep.mubr.f32.mxu0 0.0
    %3528 = vmatmul.mubr.f32.gmra.mrb[0].mxu0 %v3450
    %v3529 = vpop.f32.mrb[0].mxu0
    %v3530 = vadd.f32 0.0, %v3529
    %v3531 = vpop.f32.mrb[0].mxu0
    %3532 = vmatprep.mubr.f32.mxu0 0.0
    %3533 = vmatmul.mubr.f32.gmra.mrb[0].mxu0 %v3453
    %v3534 = vpop.f32.mrb[0].mxu0
    %v3535 = vadd.f32 0.0, %v3534
    %v3536 = vpop.f32.mrb[0].mxu0
    %3537 = vmatprep.mubr.f32.mxu0 0.0
    %3538 = vmatmul.mubr.f32.gmra.mrb[0].mxu0 %v3456
    %v3539 = vpop.f32.mrb[0].mxu0
    %v3540 = vadd.f32 0.0, %v3539
    %v3541 = vpop.f32.mrb[0].mxu0
    %3542 = vdwg.mxu0
    %v3544 = vsel %vm349, %v2857, 0
    %v3547 = vsel %vm349, %v2859, 0
    %v3550 = vsel %vm349, %v2861, 0
    %v3553 = vsel %vm349, %v2863, 0
    %3555 = vmatprep.subr.mxu0 0.0
    %3556 = vmatpush1.msra.mxu0 %v1648
    %3557 = vmatprep.subr.mxu0 0.0
    %3558 = vmatpush1.msra.mxu0 %v1649
    %3559 = vmatprep.subr.mxu0 0.0
    %3560 = vmatpush1.msra.mxu0 %v1650
    %3561 = vmatprep.subr.mxu0 0.0
    %3562 = vmatpush1.msra.mxu0 %v1651
    %3563 = vmatprep.subr.mxu0 0.0
    %3564 = vmatpush1.msra.mxu0 0.0
    %3565 = vmatprep.subr.mxu0 0.0
    %3566 = vmatpush1.msra.mxu0 0.0
    %3567 = vmatprep.subr.mxu0 0.0
    %3568 = vmatpush1.msra.mxu0 0.0
    %3569 = vmatprep.subr.mxu0 0.0
    %3570 = vmatpush1.msra.mxu0 0.0
    %3571 = vmatprep.subr.mxu0 0.0
    %3572 = vmatpush1.msra.mxu0 0.0
    %3573 = vmatprep.subr.mxu0 0.0
    %3574 = vmatpush1.msra.mxu0 0.0
    %3575 = vmatprep.subr.mxu0 0.0
    %3576 = vmatpush1.msra.mxu0 0.0
    %3577 = vmatprep.subr.mxu0 0.0
    %3578 = vmatpush1.msra.mxu0 0.0
    %3579 = vmatprep.subr.mxu0 0.0
    %3580 = vmatpush1.msra.mxu0 0.0
    %3581 = vmatprep.subr.mxu0 0.0
    %3582 = vmatpush1.msra.mxu0 0.0
    %3583 = vmatprep.subr.mxu0 0.0
    %3584 = vmatpush1.msra.mxu0 0.0
    %3585 = vmatprep.subr.mxu0 0.0
    %3586 = vmatpush1.msra.mxu0 0.0
    %3587 = vmatprep.subr.mxu0 0.0
    %3588 = vmatpush1.msra.mxu0 0.0
    %3589 = vmatprep.subr.mxu0 0.0
    %3590 = vmatpush1.msra.mxu0 0.0
    %3591 = vmatprep.subr.mxu0 0.0
    %3592 = vmatpush1.msra.mxu0 0.0
    %3593 = vmatprep.subr.mxu0 0.0
    %3594 = vmatpush1.msra.mxu0 0.0
    %3595 = vmatprep.subr.mxu0 0.0
    %3596 = vmatpush1.msra.mxu0 0.0
    %3597 = vmatprep.subr.mxu0 0.0
    %3598 = vmatpush1.msra.mxu0 0.0
    %3599 = vmatprep.subr.mxu0 0.0
    %3600 = vmatpush1.msra.mxu0 0.0
    %3601 = vmatprep.subr.mxu0 0.0
    %3602 = vmatpush1.msra.mxu0 0.0
    %3603 = vmatprep.subr.mxu0 0.0
    %3604 = vmatpush1.msra.mxu0 0.0
    %3605 = vmatprep.subr.mxu0 0.0
    %3606 = vmatpush1.msra.mxu0 0.0
    %3607 = vmatprep.subr.mxu0 0.0
    %3608 = vmatpush1.msra.mxu0 0.0
    %3609 = vmatprep.subr.mxu0 0.0
    %3610 = vmatpush1.msra.mxu0 0.0
    %3611 = vmatprep.subr.mxu0 0.0
    %3612 = vmatpush1.msra.mxu0 0.0
    %3613 = vmatprep.subr.mxu0 0.0
    %3614 = vmatpush1.msra.mxu0 0.0
    %3615 = vmatprep.subr.mxu0 0.0
    %3616 = vmatpush1.msra.mxu0 0.0
    %3617 = vmatprep.subr.mxu0 0.0
    %3618 = vmatpush1.msra.mxu0 0.0
    %3619 = vmatprep.mubr.f32.mxu0 0.0
    %3620 = vmatmul.mubr.f32.gmra.mrb[0].mxu0 %v3544
    %v3621 = vpop.f32.mrb[0].mxu0
    %v3622 = vadd.f32 0.0, %v3621
    %v3623 = vpop.f32.mrb[0].mxu0
    %3624 = vmatprep.mubr.f32.mxu0 0.0
    %3625 = vmatmul.mubr.f32.gmra.mrb[0].mxu0 %v3547
    %v3626 = vpop.f32.mrb[0].mxu0
    %v3627 = vadd.f32 0.0, %v3626
    %v3628 = vpop.f32.mrb[0].mxu0
    %3629 = vmatprep.mubr.f32.mxu0 0.0
    %3630 = vmatmul.mubr.f32.gmra.mrb[0].mxu0 %v3550
    %v3631 = vpop.f32.mrb[0].mxu0
    %v3632 = vadd.f32 0.0, %v3631
    %v3633 = vpop.f32.mrb[0].mxu0
    %3634 = vmatprep.mubr.f32.mxu0 0.0
    %3635 = vmatmul.mubr.f32.gmra.mrb[0].mxu0 %v3553
    %v3636 = vpop.f32.mrb[0].mxu0
    %v3637 = vadd.f32 0.0, %v3636
    %v3638 = vpop.f32.mrb[0].mxu0
    %3639 = vdwg.mxu0
    %v3640 = vadd.f32 %v1620, %v2943
    %v3641 = vadd.f32 %v1621, %v2948
    %v3642 = vadd.f32 %v1622, %v2953
    %v3643 = vadd.f32 %v1623, %v2958
    %v3644 = vadd.f32 %v1624, %v3040
    %v3645 = vadd.f32 %v1625, %v3045
    %v3646 = vadd.f32 %v1626, %v3050
    %v3647 = vadd.f32 %v1627, %v3055
    %v3648 = vadd.f32 %v1628, %v3137
    %v3649 = vadd.f32 %v1629, %v3142
    %v3650 = vadd.f32 %v1630, %v3147
    %v3651 = vadd.f32 %v1631, %v3152
    %v3652 = vadd.f32 %v1632, %v3234
    %v3653 = vadd.f32 %v1633, %v3239
    %v3654 = vadd.f32 %v1634, %v3244
    %v3655 = vadd.f32 %v1635, %v3249
    %v3656 = vadd.f32 %v1636, %v3331
    %v3657 = vadd.f32 %v1637, %v3336
    %v3658 = vadd.f32 %v1638, %v3341
    %v3659 = vadd.f32 %v1639, %v3346
    %v3660 = vadd.f32 %v1640, %v3428
    %v3661 = vadd.f32 %v1641, %v3433
    %v3662 = vadd.f32 %v1642, %v3438
    %v3663 = vadd.f32 %v1643, %v3443
    %v3664 = vadd.f32 %v1644, %v3525
    %v3665 = vadd.f32 %v1645, %v3530
    %v3666 = vadd.f32 %v1646, %v3535
    %v3667 = vadd.f32 %v1647, %v3540
    %v3668 = vadd.f32 %v1648, %v3622
    %v3669 = vadd.f32 %v1649, %v3627
    %v3670 = vadd.f32 %v1650, %v3632
    %v3671 = vadd.f32 %v1651, %v3637
    %v3672 = vld [vmem:[%s8] sm:$0xff]
    %v3673 = vld [vmem:[%s8 + $0x8] sm:$0xff]
    %v3674 = vld [vmem:[%s8 + $0x10] sm:$0xff]
    %v3675 = vld [vmem:[%s8 + $0x18] sm:$0xff]
    %v3677 = vsel %vm349, %v3640, 0
    %v3680 = vsel %vm349, %v3641, 0
    %v3683 = vsel %vm349, %v3642, 0
    %v3686 = vsel %vm349, %v3643, 0
    %v3689 = vsel %vm349, %v1652, 0
    %v3692 = vsel %vm349, %v1653, 0
    %3694 = vmatprep.subr.mxu0 0.0
    %3695 = vmatpush1.xpose.msra.mxu0 %v3689
    %3696 = vmatprep.subr.mxu0 0.0
    %3697 = vmatpush1.xpose.msra.mxu0 %v3692
    %3698 = vmatprep.subr.mxu0 0.0
    %3699 = vmatpush1.xpose.msra.mxu0 0.0
    %3700 = vmatprep.subr.mxu0 0.0
    %3701 = vmatpush1.xpose.msra.mxu0 0.0
    %3702 = vmatprep.subr.mxu0 0.0
    %3703 = vmatpush1.xpose.msra.mxu0 0.0
    %3704 = vmatprep.subr.mxu0 0.0
    %3705 = vmatpush1.xpose.msra.mxu0 0.0
    %3706 = vmatprep.subr.mxu0 0.0
    %3707 = vmatpush1.xpose.msra.mxu0 0.0
    %3708 = vmatprep.subr.mxu0 0.0
    %3709 = vmatpush1.xpose.msra.mxu0 0.0
    %3710 = vmatprep.subr.mxu0 0.0
    %3711 = vmatpush1.xpose.msra.mxu0 0.0
    %3712 = vmatprep.subr.mxu0 0.0
    %3713 = vmatpush1.xpose.msra.mxu0 0.0
    %3714 = vmatprep.subr.mxu0 0.0
    %3715 = vmatpush1.xpose.msra.mxu0 0.0
    %3716 = vmatprep.subr.mxu0 0.0
    %3717 = vmatpush1.xpose.msra.mxu0 0.0
    %3718 = vmatprep.subr.mxu0 0.0
    %3719 = vmatpush1.xpose.msra.mxu0 0.0
    %3720 = vmatprep.subr.mxu0 0.0
    %3721 = vmatpush1.xpose.msra.mxu0 0.0
    %3722 = vmatprep.subr.mxu0 0.0
    %3723 = vmatpush1.xpose.msra.mxu0 0.0
    %3724 = vmatprep.subr.mxu0 0.0
    %3725 = vmatpush1.xpose.msra.mxu0 0.0
    %3726 = vmatprep.subr.mxu0 0.0
    %3727 = vmatpush1.xpose.msra.mxu0 0.0
    %3728 = vmatprep.subr.mxu0 0.0
    %3729 = vmatpush1.xpose.msra.mxu0 0.0
    %3730 = vmatprep.subr.mxu0 0.0
    %3731 = vmatpush1.xpose.msra.mxu0 0.0
    %3732 = vmatprep.subr.mxu0 0.0
    %3733 = vmatpush1.xpose.msra.mxu0 0.0
    %3734 = vmatprep.subr.mxu0 0.0
    %3735 = vmatpush1.xpose.msra.mxu0 0.0
    %3736 = vmatprep.subr.mxu0 0.0
    %3737 = vmatpush1.xpose.msra.mxu0 0.0
    %3738 = vmatprep.subr.mxu0 0.0
    %3739 = vmatpush1.xpose.msra.mxu0 0.0
    %3740 = vmatprep.subr.mxu0 0.0
    %3741 = vmatpush1.xpose.msra.mxu0 0.0
    %3742 = vmatprep.subr.mxu0 0.0
    %3743 = vmatpush1.xpose.msra.mxu0 0.0
    %3744 = vmatprep.subr.mxu0 0.0
    %3745 = vmatpush1.xpose.msra.mxu0 0.0
    %3746 = vmatprep.subr.mxu0 0.0
    %3747 = vmatpush1.xpose.msra.mxu0 0.0
    %3748 = vmatprep.subr.mxu0 0.0
    %3749 = vmatpush1.xpose.msra.mxu0 0.0
    %3750 = vmatprep.subr.mxu0 0.0
    %3751 = vmatpush1.xpose.msra.mxu0 0.0
    %3752 = vmatprep.subr.mxu0 0.0
    %3753 = vmatpush1.xpose.msra.mxu0 0.0
    %3754 = vmatprep.subr.mxu0 0.0
    %3755 = vmatpush1.xpose.msra.mxu0 0.0
    %3756 = vmatprep.subr.mxu0 0.0
    %3757 = vmatpush1.xpose.msra.mxu0 0.0
    %3758 = vmatprep.mubr.f32.mxu0 0.0
    %3759 = vmatmul.mubr.f32.gmra.mrb[0].mxu0 %v3677
    %v3760 = vpop.f32.mrb[0].mxu0
    %v3761 = vadd.f32 0.0, %v3760
    %v3762 = vpop.f32.mrb[0].mxu0
    %3763 = vmatprep.mubr.f32.mxu0 0.0
    %3764 = vmatmul.mubr.f32.gmra.mrb[0].mxu0 %v3680
    %v3765 = vpop.f32.mrb[0].mxu0
    %v3766 = vadd.f32 0.0, %v3765
    %v3767 = vpop.f32.mrb[0].mxu0
    %3768 = vmatprep.mubr.f32.mxu0 0.0
    %3769 = vmatmul.mubr.f32.gmra.mrb[0].mxu0 %v3683
    %v3770 = vpop.f32.mrb[0].mxu0
    %v3771 = vadd.f32 0.0, %v3770
    %v3772 = vpop.f32.mrb[0].mxu0
    %3773 = vmatprep.mubr.f32.mxu0 0.0
    %3774 = vmatmul.mubr.f32.gmra.mrb[0].mxu0 %v3686
    %v3775 = vpop.f32.mrb[0].mxu0
    %v3776 = vadd.f32 0.0, %v3775
    %v3777 = vpop.f32.mrb[0].mxu0
    %3778 = vdwg.mxu0
    %v3780 = vsel %vm349, %v3644, 0
    %v3783 = vsel %vm349, %v3645, 0
    %v3786 = vsel %vm349, %v3646, 0
    %v3789 = vsel %vm349, %v3647, 0
    %v3792 = vsel %vm349, %v1654, 0
    %v3795 = vsel %vm349, %v1655, 0
    %3797 = vmatprep.subr.mxu0 0.0
    %3798 = vmatpush1.xpose.msra.mxu0 %v3792
    %3799 = vmatprep.subr.mxu0 0.0
    %3800 = vmatpush1.xpose.msra.mxu0 %v3795
    %3801 = vmatprep.subr.mxu0 0.0
    %3802 = vmatpush1.xpose.msra.mxu0 0.0
    %3803 = vmatprep.subr.mxu0 0.0
    %3804 = vmatpush1.xpose.msra.mxu0 0.0
    %3805 = vmatprep.subr.mxu0 0.0
    %3806 = vmatpush1.xpose.msra.mxu0 0.0
    %3807 = vmatprep.subr.mxu0 0.0
    %3808 = vmatpush1.xpose.msra.mxu0 0.0
    %3809 = vmatprep.subr.mxu0 0.0
    %3810 = vmatpush1.xpose.msra.mxu0 0.0
    %3811 = vmatprep.subr.mxu0 0.0
    %3812 = vmatpush1.xpose.msra.mxu0 0.0
    %3813 = vmatprep.subr.mxu0 0.0
    %3814 = vmatpush1.xpose.msra.mxu0 0.0
    %3815 = vmatprep.subr.mxu0 0.0
    %3816 = vmatpush1.xpose.msra.mxu0 0.0
    %3817 = vmatprep.subr.mxu0 0.0
    %3818 = vmatpush1.xpose.msra.mxu0 0.0
    %3819 = vmatprep.subr.mxu0 0.0
    %3820 = vmatpush1.xpose.msra.mxu0 0.0
    %3821 = vmatprep.subr.mxu0 0.0
    %3822 = vmatpush1.xpose.msra.mxu0 0.0
    %3823 = vmatprep.subr.mxu0 0.0
    %3824 = vmatpush1.xpose.msra.mxu0 0.0
    %3825 = vmatprep.subr.mxu0 0.0
    %3826 = vmatpush1.xpose.msra.mxu0 0.0
    %3827 = vmatprep.subr.mxu0 0.0
    %3828 = vmatpush1.xpose.msra.mxu0 0.0
    %3829 = vmatprep.subr.mxu0 0.0
    %3830 = vmatpush1.xpose.msra.mxu0 0.0
    %3831 = vmatprep.subr.mxu0 0.0
    %3832 = vmatpush1.xpose.msra.mxu0 0.0
    %3833 = vmatprep.subr.mxu0 0.0
    %3834 = vmatpush1.xpose.msra.mxu0 0.0
    %3835 = vmatprep.subr.mxu0 0.0
    %3836 = vmatpush1.xpose.msra.mxu0 0.0
    %3837 = vmatprep.subr.mxu0 0.0
    %3838 = vmatpush1.xpose.msra.mxu0 0.0
    %3839 = vmatprep.subr.mxu0 0.0
    %3840 = vmatpush1.xpose.msra.mxu0 0.0
    %3841 = vmatprep.subr.mxu0 0.0
    %3842 = vmatpush1.xpose.msra.mxu0 0.0
    %3843 = vmatprep.subr.mxu0 0.0
    %3844 = vmatpush1.xpose.msra.mxu0 0.0
    %3845 = vmatprep.subr.mxu0 0.0
    %3846 = vmatpush1.xpose.msra.mxu0 0.0
    %3847 = vmatprep.subr.mxu0 0.0
    %3848 = vmatpush1.xpose.msra.mxu0 0.0
    %3849 = vmatprep.subr.mxu0 0.0
    %3850 = vmatpush1.xpose.msra.mxu0 0.0
    %3851 = vmatprep.subr.mxu0 0.0
    %3852 = vmatpush1.xpose.msra.mxu0 0.0
    %3853 = vmatprep.subr.mxu0 0.0
    %3854 = vmatpush1.xpose.msra.mxu0 0.0
    %3855 = vmatprep.subr.mxu0 0.0
    %3856 = vmatpush1.xpose.msra.mxu0 0.0
    %3857 = vmatprep.subr.mxu0 0.0
    %3858 = vmatpush1.xpose.msra.mxu0 0.0
    %3859 = vmatprep.subr.mxu0 0.0
    %3860 = vmatpush1.xpose.msra.mxu0 0.0
    %3861 = vmatprep.mubr.f32.mxu0 0.0
    %3862 = vmatmul.mubr.f32.gmra.mrb[0].mxu0 %v3780
    %v3863 = vpop.f32.mrb[0].mxu0
    %v3864 = vadd.f32 0.0, %v3863
    %v3865 = vpop.f32.mrb[0].mxu0
    %3866 = vmatprep.mubr.f32.mxu0 0.0
    %3867 = vmatmul.mubr.f32.gmra.mrb[0].mxu0 %v3783
    %v3868 = vpop.f32.mrb[0].mxu0
    %v3869 = vadd.f32 0.0, %v3868
    %v3870 = vpop.f32.mrb[0].mxu0
    %3871 = vmatprep.mubr.f32.mxu0 0.0
    %3872 = vmatmul.mubr.f32.gmra.mrb[0].mxu0 %v3786
    %v3873 = vpop.f32.mrb[0].mxu0
    %v3874 = vadd.f32 0.0, %v3873
    %v3875 = vpop.f32.mrb[0].mxu0
    %3876 = vmatprep.mubr.f32.mxu0 0.0
    %3877 = vmatmul.mubr.f32.gmra.mrb[0].mxu0 %v3789
    %v3878 = vpop.f32.mrb[0].mxu0
    %v3879 = vadd.f32 0.0, %v3878
    %v3880 = vpop.f32.mrb[0].mxu0
    %3881 = vdwg.mxu0
    %v3883 = vsel %vm349, %v3648, 0
    %v3886 = vsel %vm349, %v3649, 0
    %v3889 = vsel %vm349, %v3650, 0
    %v3892 = vsel %vm349, %v3651, 0
    %v3895 = vsel %vm349, %v1656, 0
    %v3898 = vsel %vm349, %v1657, 0
    %3900 = vmatprep.subr.mxu0 0.0
    %3901 = vmatpush1.xpose.msra.mxu0 %v3895
    %3902 = vmatprep.subr.mxu0 0.0
    %3903 = vmatpush1.xpose.msra.mxu0 %v3898
    %3904 = vmatprep.subr.mxu0 0.0
    %3905 = vmatpush1.xpose.msra.mxu0 0.0
    %3906 = vmatprep.subr.mxu0 0.0
    %3907 = vmatpush1.xpose.msra.mxu0 0.0
    %3908 = vmatprep.subr.mxu0 0.0
    %3909 = vmatpush1.xpose.msra.mxu0 0.0
    %3910 = vmatprep.subr.mxu0 0.0
    %3911 = vmatpush1.xpose.msra.mxu0 0.0
    %3912 = vmatprep.subr.mxu0 0.0
    %3913 = vmatpush1.xpose.msra.mxu0 0.0
    %3914 = vmatprep.subr.mxu0 0.0
    %3915 = vmatpush1.xpose.msra.mxu0 0.0
    %3916 = vmatprep.subr.mxu0 0.0
    %3917 = vmatpush1.xpose.msra.mxu0 0.0
    %3918 = vmatprep.subr.mxu0 0.0
    %3919 = vmatpush1.xpose.msra.mxu0 0.0
    %3920 = vmatprep.subr.mxu0 0.0
    %3921 = vmatpush1.xpose.msra.mxu0 0.0
    %3922 = vmatprep.subr.mxu0 0.0
    %3923 = vmatpush1.xpose.msra.mxu0 0.0
    %3924 = vmatprep.subr.mxu0 0.0
    %3925 = vmatpush1.xpose.msra.mxu0 0.0
    %3926 = vmatprep.subr.mxu0 0.0
    %3927 = vmatpush1.xpose.msra.mxu0 0.0
    %3928 = vmatprep.subr.mxu0 0.0
    %3929 = vmatpush1.xpose.msra.mxu0 0.0
    %3930 = vmatprep.subr.mxu0 0.0
    %3931 = vmatpush1.xpose.msra.mxu0 0.0
    %3932 = vmatprep.subr.mxu0 0.0
    %3933 = vmatpush1.xpose.msra.mxu0 0.0
    %3934 = vmatprep.subr.mxu0 0.0
    %3935 = vmatpush1.xpose.msra.mxu0 0.0
    %3936 = vmatprep.subr.mxu0 0.0
    %3937 = vmatpush1.xpose.msra.mxu0 0.0
    %3938 = vmatprep.subr.mxu0 0.0
    %3939 = vmatpush1.xpose.msra.mxu0 0.0
    %3940 = vmatprep.subr.mxu0 0.0
    %3941 = vmatpush1.xpose.msra.mxu0 0.0
    %3942 = vmatprep.subr.mxu0 0.0
    %3943 = vmatpush1.xpose.msra.mxu0 0.0
    %3944 = vmatprep.subr.mxu0 0.0
    %3945 = vmatpush1.xpose.msra.mxu0 0.0
    %3946 = vmatprep.subr.mxu0 0.0
    %3947 = vmatpush1.xpose.msra.mxu0 0.0
    %3948 = vmatprep.subr.mxu0 0.0
    %3949 = vmatpush1.xpose.msra.mxu0 0.0
    %3950 = vmatprep.subr.mxu0 0.0
    %3951 = vmatpush1.xpose.msra.mxu0 0.0
    %3952 = vmatprep.subr.mxu0 0.0
    %3953 = vmatpush1.xpose.msra.mxu0 0.0
    %3954 = vmatprep.subr.mxu0 0.0
    %3955 = vmatpush1.xpose.msra.mxu0 0.0
    %3956 = vmatprep.subr.mxu0 0.0
    %3957 = vmatpush1.xpose.msra.mxu0 0.0
    %3958 = vmatprep.subr.mxu0 0.0
    %3959 = vmatpush1.xpose.msra.mxu0 0.0
    %3960 = vmatprep.subr.mxu0 0.0
    %3961 = vmatpush1.xpose.msra.mxu0 0.0
    %3962 = vmatprep.subr.mxu0 0.0
    %3963 = vmatpush1.xpose.msra.mxu0 0.0
    %3964 = vmatprep.mubr.f32.mxu0 0.0
    %3965 = vmatmul.mubr.f32.gmra.mrb[0].mxu0 %v3883
    %v3966 = vpop.f32.mrb[0].mxu0
    %v3967 = vadd.f32 0.0, %v3966
    %v3968 = vpop.f32.mrb[0].mxu0
    %3969 = vmatprep.mubr.f32.mxu0 0.0
    %3970 = vmatmul.mubr.f32.gmra.mrb[0].mxu0 %v3886
    %v3971 = vpop.f32.mrb[0].mxu0
    %v3972 = vadd.f32 0.0, %v3971
    %v3973 = vpop.f32.mrb[0].mxu0
    %3974 = vmatprep.mubr.f32.mxu0 0.0
    %3975 = vmatmul.mubr.f32.gmra.mrb[0].mxu0 %v3889
    %v3976 = vpop.f32.mrb[0].mxu0
    %v3977 = vadd.f32 0.0, %v3976
    %v3978 = vpop.f32.mrb[0].mxu0
    %3979 = vmatprep.mubr.f32.mxu0 0.0
    %3980 = vmatmul.mubr.f32.gmra.mrb[0].mxu0 %v3892
    %v3981 = vpop.f32.mrb[0].mxu0
    %v3982 = vadd.f32 0.0, %v3981
    %v3983 = vpop.f32.mrb[0].mxu0
    %3984 = vdwg.mxu0
    %v3986 = vsel %vm349, %v3652, 0
    %v3989 = vsel %vm349, %v3653, 0
    %v3992 = vsel %vm349, %v3654, 0
    %v3995 = vsel %vm349, %v3655, 0
    %v3998 = vsel %vm349, %v1658, 0
    %v4001 = vsel %vm349, %v1659, 0
    %4003 = vmatprep.subr.mxu0 0.0
    %4004 = vmatpush1.xpose.msra.mxu0 %v3998
    %4005 = vmatprep.subr.mxu0 0.0
    %4006 = vmatpush1.xpose.msra.mxu0 %v4001
    %4007 = vmatprep.subr.mxu0 0.0
    %4008 = vmatpush1.xpose.msra.mxu0 0.0
    %4009 = vmatprep.subr.mxu0 0.0
    %4010 = vmatpush1.xpose.msra.mxu0 0.0
    %4011 = vmatprep.subr.mxu0 0.0
    %4012 = vmatpush1.xpose.msra.mxu0 0.0
    %4013 = vmatprep.subr.mxu0 0.0
    %4014 = vmatpush1.xpose.msra.mxu0 0.0
    %4015 = vmatprep.subr.mxu0 0.0
    %4016 = vmatpush1.xpose.msra.mxu0 0.0
    %4017 = vmatprep.subr.mxu0 0.0
    %4018 = vmatpush1.xpose.msra.mxu0 0.0
    %4019 = vmatprep.subr.mxu0 0.0
    %4020 = vmatpush1.xpose.msra.mxu0 0.0
    %4021 = vmatprep.subr.mxu0 0.0
    %4022 = vmatpush1.xpose.msra.mxu0 0.0
    %4023 = vmatprep.subr.mxu0 0.0
    %4024 = vmatpush1.xpose.msra.mxu0 0.0
    %4025 = vmatprep.subr.mxu0 0.0
    %4026 = vmatpush1.xpose.msra.mxu0 0.0
    %4027 = vmatprep.subr.mxu0 0.0
    %4028 = vmatpush1.xpose.msra.mxu0 0.0
    %4029 = vmatprep.subr.mxu0 0.0
    %4030 = vmatpush1.xpose.msra.mxu0 0.0
    %4031 = vmatprep.subr.mxu0 0.0
    %4032 = vmatpush1.xpose.msra.mxu0 0.0
    %4033 = vmatprep.subr.mxu0 0.0
    %4034 = vmatpush1.xpose.msra.mxu0 0.0
    %4035 = vmatprep.subr.mxu0 0.0
    %4036 = vmatpush1.xpose.msra.mxu0 0.0
    %4037 = vmatprep.subr.mxu0 0.0
    %4038 = vmatpush1.xpose.msra.mxu0 0.0
    %4039 = vmatprep.subr.mxu0 0.0
    %4040 = vmatpush1.xpose.msra.mxu0 0.0
    %4041 = vmatprep.subr.mxu0 0.0
    %4042 = vmatpush1.xpose.msra.mxu0 0.0
    %4043 = vmatprep.subr.mxu0 0.0
    %4044 = vmatpush1.xpose.msra.mxu0 0.0
    %4045 = vmatprep.subr.mxu0 0.0
    %4046 = vmatpush1.xpose.msra.mxu0 0.0
    %4047 = vmatprep.subr.mxu0 0.0
    %4048 = vmatpush1.xpose.msra.mxu0 0.0
    %4049 = vmatprep.subr.mxu0 0.0
    %4050 = vmatpush1.xpose.msra.mxu0 0.0
    %4051 = vmatprep.subr.mxu0 0.0
    %4052 = vmatpush1.xpose.msra.mxu0 0.0
    %4053 = vmatprep.subr.mxu0 0.0
    %4054 = vmatpush1.xpose.msra.mxu0 0.0
    %4055 = vmatprep.subr.mxu0 0.0
    %4056 = vmatpush1.xpose.msra.mxu0 0.0
    %4057 = vmatprep.subr.mxu0 0.0
    %4058 = vmatpush1.xpose.msra.mxu0 0.0
    %4059 = vmatprep.subr.mxu0 0.0
    %4060 = vmatpush1.xpose.msra.mxu0 0.0
    %4061 = vmatprep.subr.mxu0 0.0
    %4062 = vmatpush1.xpose.msra.mxu0 0.0
    %4063 = vmatprep.subr.mxu0 0.0
    %4064 = vmatpush1.xpose.msra.mxu0 0.0
    %4065 = vmatprep.subr.mxu0 0.0
    %4066 = vmatpush1.xpose.msra.mxu0 0.0
    %4067 = vmatprep.mubr.f32.mxu0 0.0
    %4068 = vmatmul.mubr.f32.gmra.mrb[0].mxu0 %v3986
    %v4069 = vpop.f32.mrb[0].mxu0
    %v4070 = vadd.f32 0.0, %v4069
    %v4071 = vpop.f32.mrb[0].mxu0
    %4072 = vmatprep.mubr.f32.mxu0 0.0
    %4073 = vmatmul.mubr.f32.gmra.mrb[0].mxu0 %v3989
    %v4074 = vpop.f32.mrb[0].mxu0
    %v4075 = vadd.f32 0.0, %v4074
    %v4076 = vpop.f32.mrb[0].mxu0
    %4077 = vmatprep.mubr.f32.mxu0 0.0
    %4078 = vmatmul.mubr.f32.gmra.mrb[0].mxu0 %v3992
    %v4079 = vpop.f32.mrb[0].mxu0
    %v4080 = vadd.f32 0.0, %v4079
    %v4081 = vpop.f32.mrb[0].mxu0
    %4082 = vmatprep.mubr.f32.mxu0 0.0
    %4083 = vmatmul.mubr.f32.gmra.mrb[0].mxu0 %v3995
    %v4084 = vpop.f32.mrb[0].mxu0
    %v4085 = vadd.f32 0.0, %v4084
    %v4086 = vpop.f32.mrb[0].mxu0
    %4087 = vdwg.mxu0
    %v4089 = vsel %vm349, %v3656, 0
    %v4092 = vsel %vm349, %v3657, 0
    %v4095 = vsel %vm349, %v3658, 0
    %v4098 = vsel %vm349, %v3659, 0
    %v4101 = vsel %vm349, %v1660, 0
    %v4104 = vsel %vm349, %v1661, 0
    %4106 = vmatprep.subr.mxu0 0.0
    %4107 = vmatpush1.xpose.msra.mxu0 %v4101
    %4108 = vmatprep.subr.mxu0 0.0
    %4109 = vmatpush1.xpose.msra.mxu0 %v4104
    %4110 = vmatprep.subr.mxu0 0.0
    %4111 = vmatpush1.xpose.msra.mxu0 0.0
    %4112 = vmatprep.subr.mxu0 0.0
    %4113 = vmatpush1.xpose.msra.mxu0 0.0
    %4114 = vmatprep.subr.mxu0 0.0
    %4115 = vmatpush1.xpose.msra.mxu0 0.0
    %4116 = vmatprep.subr.mxu0 0.0
    %4117 = vmatpush1.xpose.msra.mxu0 0.0
    %4118 = vmatprep.subr.mxu0 0.0
    %4119 = vmatpush1.xpose.msra.mxu0 0.0
    %4120 = vmatprep.subr.mxu0 0.0
    %4121 = vmatpush1.xpose.msra.mxu0 0.0
    %4122 = vmatprep.subr.mxu0 0.0
    %4123 = vmatpush1.xpose.msra.mxu0 0.0
    %4124 = vmatprep.subr.mxu0 0.0
    %4125 = vmatpush1.xpose.msra.mxu0 0.0
    %4126 = vmatprep.subr.mxu0 0.0
    %4127 = vmatpush1.xpose.msra.mxu0 0.0
    %4128 = vmatprep.subr.mxu0 0.0
    %4129 = vmatpush1.xpose.msra.mxu0 0.0
    %4130 = vmatprep.subr.mxu0 0.0
    %4131 = vmatpush1.xpose.msra.mxu0 0.0
    %4132 = vmatprep.subr.mxu0 0.0
    %4133 = vmatpush1.xpose.msra.mxu0 0.0
    %4134 = vmatprep.subr.mxu0 0.0
    %4135 = vmatpush1.xpose.msra.mxu0 0.0
    %4136 = vmatprep.subr.mxu0 0.0
    %4137 = vmatpush1.xpose.msra.mxu0 0.0
    %4138 = vmatprep.subr.mxu0 0.0
    %4139 = vmatpush1.xpose.msra.mxu0 0.0
    %4140 = vmatprep.subr.mxu0 0.0
    %4141 = vmatpush1.xpose.msra.mxu0 0.0
    %4142 = vmatprep.subr.mxu0 0.0
    %4143 = vmatpush1.xpose.msra.mxu0 0.0
    %4144 = vmatprep.subr.mxu0 0.0
    %4145 = vmatpush1.xpose.msra.mxu0 0.0
    %4146 = vmatprep.subr.mxu0 0.0
    %4147 = vmatpush1.xpose.msra.mxu0 0.0
    %4148 = vmatprep.subr.mxu0 0.0
    %4149 = vmatpush1.xpose.msra.mxu0 0.0
    %4150 = vmatprep.subr.mxu0 0.0
    %4151 = vmatpush1.xpose.msra.mxu0 0.0
    %4152 = vmatprep.subr.mxu0 0.0
    %4153 = vmatpush1.xpose.msra.mxu0 0.0
    %4154 = vmatprep.subr.mxu0 0.0
    %4155 = vmatpush1.xpose.msra.mxu0 0.0
    %4156 = vmatprep.subr.mxu0 0.0
    %4157 = vmatpush1.xpose.msra.mxu0 0.0
    %4158 = vmatprep.subr.mxu0 0.0
    %4159 = vmatpush1.xpose.msra.mxu0 0.0
    %4160 = vmatprep.subr.mxu0 0.0
    %4161 = vmatpush1.xpose.msra.mxu0 0.0
    %4162 = vmatprep.subr.mxu0 0.0
    %4163 = vmatpush1.xpose.msra.mxu0 0.0
    %4164 = vmatprep.subr.mxu0 0.0
    %4165 = vmatpush1.xpose.msra.mxu0 0.0
    %4166 = vmatprep.subr.mxu0 0.0
    %4167 = vmatpush1.xpose.msra.mxu0 0.0
    %4168 = vmatprep.subr.mxu0 0.0
    %4169 = vmatpush1.xpose.msra.mxu0 0.0
    %4170 = vmatprep.mubr.f32.mxu0 0.0
    %4171 = vmatmul.mubr.f32.gmra.mrb[0].mxu0 %v4089
    %v4172 = vpop.f32.mrb[0].mxu0
    %v4173 = vadd.f32 0.0, %v4172
    %v4174 = vpop.f32.mrb[0].mxu0
    %4175 = vmatprep.mubr.f32.mxu0 0.0
    %4176 = vmatmul.mubr.f32.gmra.mrb[0].mxu0 %v4092
    %v4177 = vpop.f32.mrb[0].mxu0
    %v4178 = vadd.f32 0.0, %v4177
    %v4179 = vpop.f32.mrb[0].mxu0
    %4180 = vmatprep.mubr.f32.mxu0 0.0
    %4181 = vmatmul.mubr.f32.gmra.mrb[0].mxu0 %v4095
    %v4182 = vpop.f32.mrb[0].mxu0
    %v4183 = vadd.f32 0.0, %v4182
    %v4184 = vpop.f32.mrb[0].mxu0
    %4185 = vmatprep.mubr.f32.mxu0 0.0
    %4186 = vmatmul.mubr.f32.gmra.mrb[0].mxu0 %v4098
    %v4187 = vpop.f32.mrb[0].mxu0
    %v4188 = vadd.f32 0.0, %v4187
    %v4189 = vpop.f32.mrb[0].mxu0
    %4190 = vdwg.mxu0
    %v4192 = vsel %vm349, %v3660, 0
    %v4195 = vsel %vm349, %v3661, 0
    %v4198 = vsel %vm349, %v3662, 0
    %v4201 = vsel %vm349, %v3663, 0
    %v4204 = vsel %vm349, %v1662, 0
    %v4207 = vsel %vm349, %v1663, 0
    %4209 = vmatprep.subr.mxu0 0.0
    %4210 = vmatpush1.xpose.msra.mxu0 %v4204
    %4211 = vmatprep.subr.mxu0 0.0
    %4212 = vmatpush1.xpose.msra.mxu0 %v4207
    %4213 = vmatprep.subr.mxu0 0.0
    %4214 = vmatpush1.xpose.msra.mxu0 0.0
    %4215 = vmatprep.subr.mxu0 0.0
    %4216 = vmatpush1.xpose.msra.mxu0 0.0
    %4217 = vmatprep.subr.mxu0 0.0
    %4218 = vmatpush1.xpose.msra.mxu0 0.0
    %4219 = vmatprep.subr.mxu0 0.0
    %4220 = vmatpush1.xpose.msra.mxu0 0.0
    %4221 = vmatprep.subr.mxu0 0.0
    %4222 = vmatpush1.xpose.msra.mxu0 0.0
    %4223 = vmatprep.subr.mxu0 0.0
    %4224 = vmatpush1.xpose.msra.mxu0 0.0
    %4225 = vmatprep.subr.mxu0 0.0
    %4226 = vmatpush1.xpose.msra.mxu0 0.0
    %4227 = vmatprep.subr.mxu0 0.0
    %4228 = vmatpush1.xpose.msra.mxu0 0.0
    %4229 = vmatprep.subr.mxu0 0.0
    %4230 = vmatpush1.xpose.msra.mxu0 0.0
    %4231 = vmatprep.subr.mxu0 0.0
    %4232 = vmatpush1.xpose.msra.mxu0 0.0
    %4233 = vmatprep.subr.mxu0 0.0
    %4234 = vmatpush1.xpose.msra.mxu0 0.0
    %4235 = vmatprep.subr.mxu0 0.0
    %4236 = vmatpush1.xpose.msra.mxu0 0.0
    %4237 = vmatprep.subr.mxu0 0.0
    %4238 = vmatpush1.xpose.msra.mxu0 0.0
    %4239 = vmatprep.subr.mxu0 0.0
    %4240 = vmatpush1.xpose.msra.mxu0 0.0
    %4241 = vmatprep.subr.mxu0 0.0
    %4242 = vmatpush1.xpose.msra.mxu0 0.0
    %4243 = vmatprep.subr.mxu0 0.0
    %4244 = vmatpush1.xpose.msra.mxu0 0.0
    %4245 = vmatprep.subr.mxu0 0.0
    %4246 = vmatpush1.xpose.msra.mxu0 0.0
    %4247 = vmatprep.subr.mxu0 0.0
    %4248 = vmatpush1.xpose.msra.mxu0 0.0
    %4249 = vmatprep.subr.mxu0 0.0
    %4250 = vmatpush1.xpose.msra.mxu0 0.0
    %4251 = vmatprep.subr.mxu0 0.0
    %4252 = vmatpush1.xpose.msra.mxu0 0.0
    %4253 = vmatprep.subr.mxu0 0.0
    %4254 = vmatpush1.xpose.msra.mxu0 0.0
    %4255 = vmatprep.subr.mxu0 0.0
    %4256 = vmatpush1.xpose.msra.mxu0 0.0
    %4257 = vmatprep.subr.mxu0 0.0
    %4258 = vmatpush1.xpose.msra.mxu0 0.0
    %4259 = vmatprep.subr.mxu0 0.0
    %4260 = vmatpush1.xpose.msra.mxu0 0.0
    %4261 = vmatprep.subr.mxu0 0.0
    %4262 = vmatpush1.xpose.msra.mxu0 0.0
    %4263 = vmatprep.subr.mxu0 0.0
    %4264 = vmatpush1.xpose.msra.mxu0 0.0
    %4265 = vmatprep.subr.mxu0 0.0
    %4266 = vmatpush1.xpose.msra.mxu0 0.0
    %4267 = vmatprep.subr.mxu0 0.0
    %4268 = vmatpush1.xpose.msra.mxu0 0.0
    %4269 = vmatprep.subr.mxu0 0.0
    %4270 = vmatpush1.xpose.msra.mxu0 0.0
    %4271 = vmatprep.subr.mxu0 0.0
    %4272 = vmatpush1.xpose.msra.mxu0 0.0
    %4273 = vmatprep.mubr.f32.mxu0 0.0
    %4274 = vmatmul.mubr.f32.gmra.mrb[0].mxu0 %v4192
    %v4275 = vpop.f32.mrb[0].mxu0
    %v4276 = vadd.f32 0.0, %v4275
    %v4277 = vpop.f32.mrb[0].mxu0
    %4278 = vmatprep.mubr.f32.mxu0 0.0
    %4279 = vmatmul.mubr.f32.gmra.mrb[0].mxu0 %v4195
    %v4280 = vpop.f32.mrb[0].mxu0
    %v4281 = vadd.f32 0.0, %v4280
    %v4282 = vpop.f32.mrb[0].mxu0
    %4283 = vmatprep.mubr.f32.mxu0 0.0
    %4284 = vmatmul.mubr.f32.gmra.mrb[0].mxu0 %v4198
    %v4285 = vpop.f32.mrb[0].mxu0
    %v4286 = vadd.f32 0.0, %v4285
    %v4287 = vpop.f32.mrb[0].mxu0
    %4288 = vmatprep.mubr.f32.mxu0 0.0
    %4289 = vmatmul.mubr.f32.gmra.mrb[0].mxu0 %v4201
    %v4290 = vpop.f32.mrb[0].mxu0
    %v4291 = vadd.f32 0.0, %v4290
    %v4292 = vpop.f32.mrb[0].mxu0
    %4293 = vdwg.mxu0
    %v4295 = vsel %vm349, %v3664, 0
    %v4298 = vsel %vm349, %v3665, 0
    %v4301 = vsel %vm349, %v3666, 0
    %v4304 = vsel %vm349, %v3667, 0
    %v4307 = vsel %vm349, %v1664, 0
    %v4310 = vsel %vm349, %v1665, 0
    %4312 = vmatprep.subr.mxu0 0.0
    %4313 = vmatpush1.xpose.msra.mxu0 %v4307
    %4314 = vmatprep.subr.mxu0 0.0
    %4315 = vmatpush1.xpose.msra.mxu0 %v4310
    %4316 = vmatprep.subr.mxu0 0.0
    %4317 = vmatpush1.xpose.msra.mxu0 0.0
    %4318 = vmatprep.subr.mxu0 0.0
    %4319 = vmatpush1.xpose.msra.mxu0 0.0
    %4320 = vmatprep.subr.mxu0 0.0
    %4321 = vmatpush1.xpose.msra.mxu0 0.0
    %4322 = vmatprep.subr.mxu0 0.0
    %4323 = vmatpush1.xpose.msra.mxu0 0.0
    %4324 = vmatprep.subr.mxu0 0.0
    %4325 = vmatpush1.xpose.msra.mxu0 0.0
    %4326 = vmatprep.subr.mxu0 0.0
    %4327 = vmatpush1.xpose.msra.mxu0 0.0
    %4328 = vmatprep.subr.mxu0 0.0
    %4329 = vmatpush1.xpose.msra.mxu0 0.0
    %4330 = vmatprep.subr.mxu0 0.0
    %4331 = vmatpush1.xpose.msra.mxu0 0.0
    %4332 = vmatprep.subr.mxu0 0.0
    %4333 = vmatpush1.xpose.msra.mxu0 0.0
    %4334 = vmatprep.subr.mxu0 0.0
    %4335 = vmatpush1.xpose.msra.mxu0 0.0
    %4336 = vmatprep.subr.mxu0 0.0
    %4337 = vmatpush1.xpose.msra.mxu0 0.0
    %4338 = vmatprep.subr.mxu0 0.0
    %4339 = vmatpush1.xpose.msra.mxu0 0.0
    %4340 = vmatprep.subr.mxu0 0.0
    %4341 = vmatpush1.xpose.msra.mxu0 0.0
    %4342 = vmatprep.subr.mxu0 0.0
    %4343 = vmatpush1.xpose.msra.mxu0 0.0
    %4344 = vmatprep.subr.mxu0 0.0
    %4345 = vmatpush1.xpose.msra.mxu0 0.0
    %4346 = vmatprep.subr.mxu0 0.0
    %4347 = vmatpush1.xpose.msra.mxu0 0.0
    %4348 = vmatprep.subr.mxu0 0.0
    %4349 = vmatpush1.xpose.msra.mxu0 0.0
    %4350 = vmatprep.subr.mxu0 0.0
    %4351 = vmatpush1.xpose.msra.mxu0 0.0
    %4352 = vmatprep.subr.mxu0 0.0
    %4353 = vmatpush1.xpose.msra.mxu0 0.0
    %4354 = vmatprep.subr.mxu0 0.0
    %4355 = vmatpush1.xpose.msra.mxu0 0.0
    %4356 = vmatprep.subr.mxu0 0.0
    %4357 = vmatpush1.xpose.msra.mxu0 0.0
    %4358 = vmatprep.subr.mxu0 0.0
    %4359 = vmatpush1.xpose.msra.mxu0 0.0
    %4360 = vmatprep.subr.mxu0 0.0
    %4361 = vmatpush1.xpose.msra.mxu0 0.0
    %4362 = vmatprep.subr.mxu0 0.0
    %4363 = vmatpush1.xpose.msra.mxu0 0.0
    %4364 = vmatprep.subr.mxu0 0.0
    %4365 = vmatpush1.xpose.msra.mxu0 0.0
    %4366 = vmatprep.subr.mxu0 0.0
    %4367 = vmatpush1.xpose.msra.mxu0 0.0
    %4368 = vmatprep.subr.mxu0 0.0
    %4369 = vmatpush1.xpose.msra.mxu0 0.0
    %4370 = vmatprep.subr.mxu0 0.0
    %4371 = vmatpush1.xpose.msra.mxu0 0.0
    %4372 = vmatprep.subr.mxu0 0.0
    %4373 = vmatpush1.xpose.msra.mxu0 0.0
    %4374 = vmatprep.subr.mxu0 0.0
    %4375 = vmatpush1.xpose.msra.mxu0 0.0
    %4376 = vmatprep.mubr.f32.mxu0 0.0
    %4377 = vmatmul.mubr.f32.gmra.mrb[0].mxu0 %v4295
    %v4378 = vpop.f32.mrb[0].mxu0
    %v4379 = vadd.f32 0.0, %v4378
    %v4380 = vpop.f32.mrb[0].mxu0
    %4381 = vmatprep.mubr.f32.mxu0 0.0
    %4382 = vmatmul.mubr.f32.gmra.mrb[0].mxu0 %v4298
    %v4383 = vpop.f32.mrb[0].mxu0
    %v4384 = vadd.f32 0.0, %v4383
    %v4385 = vpop.f32.mrb[0].mxu0
    %4386 = vmatprep.mubr.f32.mxu0 0.0
    %4387 = vmatmul.mubr.f32.gmra.mrb[0].mxu0 %v4301
    %v4388 = vpop.f32.mrb[0].mxu0
    %v4389 = vadd.f32 0.0, %v4388
    %v4390 = vpop.f32.mrb[0].mxu0
    %4391 = vmatprep.mubr.f32.mxu0 0.0
    %4392 = vmatmul.mubr.f32.gmra.mrb[0].mxu0 %v4304
    %v4393 = vpop.f32.mrb[0].mxu0
    %v4394 = vadd.f32 0.0, %v4393
    %v4395 = vpop.f32.mrb[0].mxu0
    %4396 = vdwg.mxu0
    %v4398 = vsel %vm349, %v3668, 0
    %v4401 = vsel %vm349, %v3669, 0
    %v4404 = vsel %vm349, %v3670, 0
    %v4407 = vsel %vm349, %v3671, 0
    %v4410 = vsel %vm349, %v1666, 0
    %v4413 = vsel %vm349, %v1667, 0
    %4415 = vmatprep.subr.mxu0 0.0
    %4416 = vmatpush1.xpose.msra.mxu0 %v4410
    %4417 = vmatprep.subr.mxu0 0.0
    %4418 = vmatpush1.xpose.msra.mxu0 %v4413
    %4419 = vmatprep.subr.mxu0 0.0
    %4420 = vmatpush1.xpose.msra.mxu0 0.0
    %4421 = vmatprep.subr.mxu0 0.0
    %4422 = vmatpush1.xpose.msra.mxu0 0.0
    %4423 = vmatprep.subr.mxu0 0.0
    %4424 = vmatpush1.xpose.msra.mxu0 0.0
    %4425 = vmatprep.subr.mxu0 0.0
    %4426 = vmatpush1.xpose.msra.mxu0 0.0
    %4427 = vmatprep.subr.mxu0 0.0
    %4428 = vmatpush1.xpose.msra.mxu0 0.0
    %4429 = vmatprep.subr.mxu0 0.0
    %4430 = vmatpush1.xpose.msra.mxu0 0.0
    %4431 = vmatprep.subr.mxu0 0.0
    %4432 = vmatpush1.xpose.msra.mxu0 0.0
    %4433 = vmatprep.subr.mxu0 0.0
    %4434 = vmatpush1.xpose.msra.mxu0 0.0
    %4435 = vmatprep.subr.mxu0 0.0
    %4436 = vmatpush1.xpose.msra.mxu0 0.0
    %4437 = vmatprep.subr.mxu0 0.0
    %4438 = vmatpush1.xpose.msra.mxu0 0.0
    %4439 = vmatprep.subr.mxu0 0.0
    %4440 = vmatpush1.xpose.msra.mxu0 0.0
    %4441 = vmatprep.subr.mxu0 0.0
    %4442 = vmatpush1.xpose.msra.mxu0 0.0
    %4443 = vmatprep.subr.mxu0 0.0
    %4444 = vmatpush1.xpose.msra.mxu0 0.0
    %4445 = vmatprep.subr.mxu0 0.0
    %4446 = vmatpush1.xpose.msra.mxu0 0.0
    %4447 = vmatprep.subr.mxu0 0.0
    %4448 = vmatpush1.xpose.msra.mxu0 0.0
    %4449 = vmatprep.subr.mxu0 0.0
    %4450 = vmatpush1.xpose.msra.mxu0 0.0
    %4451 = vmatprep.subr.mxu0 0.0
    %4452 = vmatpush1.xpose.msra.mxu0 0.0
    %4453 = vmatprep.subr.mxu0 0.0
    %4454 = vmatpush1.xpose.msra.mxu0 0.0
    %4455 = vmatprep.subr.mxu0 0.0
    %4456 = vmatpush1.xpose.msra.mxu0 0.0
    %4457 = vmatprep.subr.mxu0 0.0
    %4458 = vmatpush1.xpose.msra.mxu0 0.0
    %4459 = vmatprep.subr.mxu0 0.0
    %4460 = vmatpush1.xpose.msra.mxu0 0.0
    %4461 = vmatprep.subr.mxu0 0.0
    %4462 = vmatpush1.xpose.msra.mxu0 0.0
    %4463 = vmatprep.subr.mxu0 0.0
    %4464 = vmatpush1.xpose.msra.mxu0 0.0
    %4465 = vmatprep.subr.mxu0 0.0
    %4466 = vmatpush1.xpose.msra.mxu0 0.0
    %4467 = vmatprep.subr.mxu0 0.0
    %4468 = vmatpush1.xpose.msra.mxu0 0.0
    %4469 = vmatprep.subr.mxu0 0.0
    %4470 = vmatpush1.xpose.msra.mxu0 0.0
    %4471 = vmatprep.subr.mxu0 0.0
    %4472 = vmatpush1.xpose.msra.mxu0 0.0
    %4473 = vmatprep.subr.mxu0 0.0
    %4474 = vmatpush1.xpose.msra.mxu0 0.0
    %4475 = vmatprep.subr.mxu0 0.0
    %4476 = vmatpush1.xpose.msra.mxu0 0.0
    %4477 = vmatprep.subr.mxu0 0.0
    %4478 = vmatpush1.xpose.msra.mxu0 0.0
    %4479 = vmatprep.mubr.f32.mxu0 0.0
    %4480 = vmatmul.mubr.f32.gmra.mrb[0].mxu0 %v4398
    %v4481 = vpop.f32.mrb[0].mxu0
    %v4482 = vadd.f32 0.0, %v4481
    %v4483 = vpop.f32.mrb[0].mxu0
    %4484 = vmatprep.mubr.f32.mxu0 0.0
    %4485 = vmatmul.mubr.f32.gmra.mrb[0].mxu0 %v4401
    %v4486 = vpop.f32.mrb[0].mxu0
    %v4487 = vadd.f32 0.0, %v4486
    %v4488 = vpop.f32.mrb[0].mxu0
    %4489 = vmatprep.mubr.f32.mxu0 0.0
    %4490 = vmatmul.mubr.f32.gmra.mrb[0].mxu0 %v4404
    %v4491 = vpop.f32.mrb[0].mxu0
    %v4492 = vadd.f32 0.0, %v4491
    %v4493 = vpop.f32.mrb[0].mxu0
    %4494 = vmatprep.mubr.f32.mxu0 0.0
    %4495 = vmatmul.mubr.f32.gmra.mrb[0].mxu0 %v4407
    %v4496 = vpop.f32.mrb[0].mxu0
    %v4497 = vadd.f32 0.0, %v4496
    %v4498 = vpop.f32.mrb[0].mxu0
    %4499 = vdwg.mxu0
    %v4500 = vmul.f32 %v3761, 0.17677669
    %v4501 = vmul.f32 %v3766, 0.17677669
    %v4502 = vmul.f32 %v3771, 0.17677669
    %v4503 = vmul.f32 %v3776, 0.17677669
    %v4504 = vmul.f32 %v3864, 0.17677669
    %v4505 = vmul.f32 %v3869, 0.17677669
    %v4506 = vmul.f32 %v3874, 0.17677669
    %v4507 = vmul.f32 %v3879, 0.17677669
    %v4508 = vmul.f32 %v3967, 0.17677669
    %v4509 = vmul.f32 %v3972, 0.17677669
    %v4510 = vmul.f32 %v3977, 0.17677669
    %v4511 = vmul.f32 %v3982, 0.17677669
    %v4512 = vmul.f32 %v4070, 0.17677669
    %v4513 = vmul.f32 %v4075, 0.17677669
    %v4514 = vmul.f32 %v4080, 0.17677669
    %v4515 = vmul.f32 %v4085, 0.17677669
    %v4516 = vmul.f32 %v4173, 0.17677669
    %v4517 = vmul.f32 %v4178, 0.17677669
    %v4518 = vmul.f32 %v4183, 0.17677669
    %v4519 = vmul.f32 %v4188, 0.17677669
    %v4520 = vmul.f32 %v4276, 0.17677669
    %v4521 = vmul.f32 %v4281, 0.17677669
    %v4522 = vmul.f32 %v4286, 0.17677669
    %v4523 = vmul.f32 %v4291, 0.17677669
    %v4524 = vmul.f32 %v4379, 0.17677669
    %v4525 = vmul.f32 %v4384, 0.17677669
    %v4526 = vmul.f32 %v4389, 0.17677669
    %v4527 = vmul.f32 %v4394, 0.17677669
    %v4528 = vmul.f32 %v4482, 0.17677669
    %v4529 = vmul.f32 %v4487, 0.17677669
    %v4530 = vmul.f32 %v4492, 0.17677669
    %v4531 = vmul.f32 %v4497, 0.17677669
    %v4532 = vadd.f32 %v4500, %v3672
    %v4533 = vadd.f32 %v4501, %v3673
    %v4534 = vadd.f32 %v4502, %v3674
    %v4535 = vadd.f32 %v4503, %v3675
    %v4536 = vadd.f32 %v4504, %v3672
    %v4537 = vadd.f32 %v4505, %v3673
    %v4538 = vadd.f32 %v4506, %v3674
    %v4539 = vadd.f32 %v4507, %v3675
    %v4540 = vadd.f32 %v4508, %v3672
    %v4541 = vadd.f32 %v4509, %v3673
    %v4542 = vadd.f32 %v4510, %v3674
    %v4543 = vadd.f32 %v4511, %v3675
    %v4544 = vadd.f32 %v4512, %v3672
    %v4545 = vadd.f32 %v4513, %v3673
    %v4546 = vadd.f32 %v4514, %v3674
    %v4547 = vadd.f32 %v4515, %v3675
    %v4548 = vadd.f32 %v4516, %v3672
    %v4549 = vadd.f32 %v4517, %v3673
    %v4550 = vadd.f32 %v4518, %v3674
    %v4551 = vadd.f32 %v4519, %v3675
    %v4552 = vadd.f32 %v4520, %v3672
    %v4553 = vadd.f32 %v4521, %v3673
    %v4554 = vadd.f32 %v4522, %v3674
    %v4555 = vadd.f32 %v4523, %v3675
    %v4556 = vadd.f32 %v4524, %v3672
    %v4557 = vadd.f32 %v4525, %v3673
    %v4558 = vadd.f32 %v4526, %v3674
    %v4559 = vadd.f32 %v4527, %v3675
    %v4560 = vadd.f32 %v4528, %v3672
    %v4561 = vadd.f32 %v4529, %v3673
    %v4562 = vadd.f32 %v4530, %v3674
    %v4563 = vadd.f32 %v4531, %v3675
    %vm4564 = vcmask 89088
    %v4565 = vsel %vm4564, %v4532, -inf
    %4566 = vmax.xlane.f32.xlu0 %v4565
    %v4567 = vpop.xlane.xlu0 %4566
    %v4568 = vsel %vm4564, %v4533, -inf
    %4569 = vmax.xlane.f32.xlu0 %v4568
    %v4570 = vpop.xlane.xlu0 %4569
    %v4571 = vsel %vm4564, %v4534, -inf
    %4572 = vmax.xlane.f32.xlu0 %v4571
    %v4573 = vpop.xlane.xlu0 %4572
    %v4574 = vsel %vm4564, %v4535, -inf
    %4575 = vmax.xlane.f32.xlu0 %v4574
    %v4576 = vpop.xlane.xlu0 %4575
    %v4577 = vsel %vm4564, %v4536, -inf
    %4578 = vmax.xlane.f32.xlu0 %v4577
    %v4579 = vpop.xlane.xlu0 %4578
    %v4580 = vsel %vm4564, %v4537, -inf
    %4581 = vmax.xlane.f32.xlu0 %v4580
    %v4582 = vpop.xlane.xlu0 %4581
    %v4583 = vsel %vm4564, %v4538, -inf
    %4584 = vmax.xlane.f32.xlu0 %v4583
    %v4585 = vpop.xlane.xlu0 %4584
    %v4586 = vsel %vm4564, %v4539, -inf
    %4587 = vmax.xlane.f32.xlu0 %v4586
    %v4588 = vpop.xlane.xlu0 %4587
    %v4589 = vsel %vm4564, %v4540, -inf
    %4590 = vmax.xlane.f32.xlu0 %v4589
    %v4591 = vpop.xlane.xlu0 %4590
    %v4592 = vsel %vm4564, %v4541, -inf
    %4593 = vmax.xlane.f32.xlu0 %v4592
    %v4594 = vpop.xlane.xlu0 %4593
    %v4595 = vsel %vm4564, %v4542, -inf
    %4596 = vmax.xlane.f32.xlu0 %v4595
    %v4597 = vpop.xlane.xlu0 %4596
    %v4598 = vsel %vm4564, %v4543, -inf
    %4599 = vmax.xlane.f32.xlu0 %v4598
    %v4600 = vpop.xlane.xlu0 %4599
    %v4601 = vsel %vm4564, %v4544, -inf
    %4602 = vmax.xlane.f32.xlu0 %v4601
    %v4603 = vpop.xlane.xlu0 %4602
    %v4604 = vsel %vm4564, %v4545, -inf
    %4605 = vmax.xlane.f32.xlu0 %v4604
    %v4606 = vpop.xlane.xlu0 %4605
    %v4607 = vsel %vm4564, %v4546, -inf
    %4608 = vmax.xlane.f32.xlu0 %v4607
    %v4609 = vpop.xlane.xlu0 %4608
    %v4610 = vsel %vm4564, %v4547, -inf
    %4611 = vmax.xlane.f32.xlu0 %v4610
    %v4612 = vpop.xlane.xlu0 %4611
    %v4613 = vsel %vm4564, %v4548, -inf
    %4614 = vmax.xlane.f32.xlu0 %v4613
    %v4615 = vpop.xlane.xlu0 %4614
    %v4616 = vsel %vm4564, %v4549, -inf
    %4617 = vmax.xlane.f32.xlu0 %v4616
    %v4618 = vpop.xlane.xlu0 %4617
    %v4619 = vsel %vm4564, %v4550, -inf
    %4620 = vmax.xlane.f32.xlu0 %v4619
    %v4621 = vpop.xlane.xlu0 %4620
    %v4622 = vsel %vm4564, %v4551, -inf
    %4623 = vmax.xlane.f32.xlu0 %v4622
    %v4624 = vpop.xlane.xlu0 %4623
    %v4625 = vsel %vm4564, %v4552, -inf
    %4626 = vmax.xlane.f32.xlu0 %v4625
    %v4627 = vpop.xlane.xlu0 %4626
    %v4628 = vsel %vm4564, %v4553, -inf
    %4629 = vmax.xlane.f32.xlu0 %v4628
    %v4630 = vpop.xlane.xlu0 %4629
    %v4631 = vsel %vm4564, %v4554, -inf
    %4632 = vmax.xlane.f32.xlu0 %v4631
    %v4633 = vpop.xlane.xlu0 %4632
    %v4634 = vsel %vm4564, %v4555, -inf
    %4635 = vmax.xlane.f32.xlu0 %v4634
    %v4636 = vpop.xlane.xlu0 %4635
    %v4637 = vsel %vm4564, %v4556, -inf
    %4638 = vmax.xlane.f32.xlu0 %v4637
    %v4639 = vpop.xlane.xlu0 %4638
    %v4640 = vsel %vm4564, %v4557, -inf
    %4641 = vmax.xlane.f32.xlu0 %v4640
    %v4642 = vpop.xlane.xlu0 %4641
    %v4643 = vsel %vm4564, %v4558, -inf
    %4644 = vmax.xlane.f32.xlu0 %v4643
    %v4645 = vpop.xlane.xlu0 %4644
    %v4646 = vsel %vm4564, %v4559, -inf
    %4647 = vmax.xlane.f32.xlu0 %v4646
    %v4648 = vpop.xlane.xlu0 %4647
    %v4649 = vsel %vm4564, %v4560, -inf
    %4650 = vmax.xlane.f32.xlu0 %v4649
    %v4651 = vpop.xlane.xlu0 %4650
    %v4652 = vsel %vm4564, %v4561, -inf
    %4653 = vmax.xlane.f32.xlu0 %v4652
    %v4654 = vpop.xlane.xlu0 %4653
    %v4655 = vsel %vm4564, %v4562, -inf
    %4656 = vmax.xlane.f32.xlu0 %v4655
    %v4657 = vpop.xlane.xlu0 %4656
    %v4658 = vsel %vm4564, %v4563, -inf
    %4659 = vmax.xlane.f32.xlu0 %v4658
    %v4660 = vpop.xlane.xlu0 %4659
    %v4661 = vsub.f32 %v4532, %v4567
    %v4662 = vsub.f32 %v4533, %v4570
    %v4663 = vsub.f32 %v4534, %v4573
    %v4664 = vsub.f32 %v4535, %v4576
    %v4665 = vsub.f32 %v4536, %v4579
    %v4666 = vsub.f32 %v4537, %v4582
    %v4667 = vsub.f32 %v4538, %v4585
    %v4668 = vsub.f32 %v4539, %v4588
    %v4669 = vsub.f32 %v4540, %v4591
    %v4670 = vsub.f32 %v4541, %v4594
    %v4671 = vsub.f32 %v4542, %v4597
    %v4672 = vsub.f32 %v4543, %v4600
    %v4673 = vsub.f32 %v4544, %v4603
    %v4674 = vsub.f32 %v4545, %v4606
    %v4675 = vsub.f32 %v4546, %v4609
    %v4676 = vsub.f32 %v4547, %v4612
    %v4677 = vsub.f32 %v4548, %v4615
    %v4678 = vsub.f32 %v4549, %v4618
    %v4679 = vsub.f32 %v4550, %v4621
    %v4680 = vsub.f32 %v4551, %v4624
    %v4681 = vsub.f32 %v4552, %v4627
    %v4682 = vsub.f32 %v4553, %v4630
    %v4683 = vsub.f32 %v4554, %v4633
    %v4684 = vsub.f32 %v4555, %v4636
    %v4685 = vsub.f32 %v4556, %v4639
    %v4686 = vsub.f32 %v4557, %v4642
    %v4687 = vsub.f32 %v4558, %v4645
    %v4688 = vsub.f32 %v4559, %v4648
    %v4689 = vsub.f32 %v4560, %v4651
    %v4690 = vsub.f32 %v4561, %v4654
    %v4691 = vsub.f32 %v4562, %v4657
    %v4692 = vsub.f32 %v4563, %v4660
    %v4693 = vmul.f32 %v4661, 1.442695
    %v4694 = vpow.pop %v4693
    %v4695 = vmul.f32 %v4662, 1.442695
    %v4696 = vpow.pop %v4695
    %v4697 = vmul.f32 %v4663, 1.442695
    %v4698 = vpow.pop %v4697
    %v4699 = vmul.f32 %v4664, 1.442695
    %v4700 = vpow.pop %v4699
    %v4701 = vmul.f32 %v4665, 1.442695
    %v4702 = vpow.pop %v4701
    %v4703 = vmul.f32 %v4666, 1.442695
    %v4704 = vpow.pop %v4703
    %v4705 = vmul.f32 %v4667, 1.442695
    %v4706 = vpow.pop %v4705
    %v4707 = vmul.f32 %v4668, 1.442695
    %v4708 = vpow.pop %v4707
    %v4709 = vmul.f32 %v4669, 1.442695
    %v4710 = vpow.pop %v4709
    %v4711 = vmul.f32 %v4670, 1.442695
    %v4712 = vpow.pop %v4711
    %v4713 = vmul.f32 %v4671, 1.442695
    %v4714 = vpow.pop %v4713
    %v4715 = vmul.f32 %v4672, 1.442695
    %v4716 = vpow.pop %v4715
    %v4717 = vmul.f32 %v4673, 1.442695
    %v4718 = vpow.pop %v4717
    %v4719 = vmul.f32 %v4674, 1.442695
    %v4720 = vpow.pop %v4719
    %v4721 = vmul.f32 %v4675, 1.442695
    %v4722 = vpow.pop %v4721
    %v4723 = vmul.f32 %v4676, 1.442695
    %v4724 = vpow.pop %v4723
    %v4725 = vmul.f32 %v4677, 1.442695
    %v4726 = vpow.pop %v4725
    %v4727 = vmul.f32 %v4678, 1.442695
    %v4728 = vpow.pop %v4727
    %v4729 = vmul.f32 %v4679, 1.442695
    %v4730 = vpow.pop %v4729
    %v4731 = vmul.f32 %v4680, 1.442695
    %v4732 = vpow.pop %v4731
    %v4733 = vmul.f32 %v4681, 1.442695
    %v4734 = vpow.pop %v4733
    %v4735 = vmul.f32 %v4682, 1.442695
    %v4736 = vpow.pop %v4735
    %v4737 = vmul.f32 %v4683, 1.442695
    %v4738 = vpow.pop %v4737
    %v4739 = vmul.f32 %v4684, 1.442695
    %v4740 = vpow.pop %v4739
    %v4741 = vmul.f32 %v4685, 1.442695
    %v4742 = vpow.pop %v4741
    %v4743 = vmul.f32 %v4686, 1.442695
    %v4744 = vpow.pop %v4743
    %v4745 = vmul.f32 %v4687, 1.442695
    %v4746 = vpow.pop %v4745
    %v4747 = vmul.f32 %v4688, 1.442695
    %v4748 = vpow.pop %v4747
    %v4749 = vmul.f32 %v4689, 1.442695
    %v4750 = vpow.pop %v4749
    %v4751 = vmul.f32 %v4690, 1.442695
    %v4752 = vpow.pop %v4751
    %v4753 = vmul.f32 %v4691, 1.442695
    %v4754 = vpow.pop %v4753
    %v4755 = vmul.f32 %v4692, 1.442695
    %v4756 = vpow.pop %v4755
    %v4757 = vsel %vm4564, %v4694, 0.0
    %4758 = vadd.xlane.f32.xlu0 %v4757
    %v4759 = vpop.xlane.xlu0 %4758
    %v4760 = vsel %vm4564, %v4696, 0.0
    %4761 = vadd.xlane.f32.xlu0 %v4760
    %v4762 = vpop.xlane.xlu0 %4761
    %v4763 = vsel %vm4564, %v4698, 0.0
    %4764 = vadd.xlane.f32.xlu0 %v4763
    %v4765 = vpop.xlane.xlu0 %4764
    %v4766 = vsel %vm4564, %v4700, 0.0
    %4767 = vadd.xlane.f32.xlu0 %v4766
    %v4768 = vpop.xlane.xlu0 %4767
    %v4769 = vsel %vm4564, %v4702, 0.0
    %4770 = vadd.xlane.f32.xlu0 %v4769
    %v4771 = vpop.xlane.xlu0 %4770
    %v4772 = vsel %vm4564, %v4704, 0.0
    %4773 = vadd.xlane.f32.xlu0 %v4772
    %v4774 = vpop.xlane.xlu0 %4773
    %v4775 = vsel %vm4564, %v4706, 0.0
    %4776 = vadd.xlane.f32.xlu0 %v4775
    %v4777 = vpop.xlane.xlu0 %4776
    %v4778 = vsel %vm4564, %v4708, 0.0
    %4779 = vadd.xlane.f32.xlu0 %v4778
    %v4780 = vpop.xlane.xlu0 %4779
    %v4781 = vsel %vm4564, %v4710, 0.0
    %4782 = vadd.xlane.f32.xlu0 %v4781
    %v4783 = vpop.xlane.xlu0 %4782
    %v4784 = vsel %vm4564, %v4712, 0.0
    %4785 = vadd.xlane.f32.xlu0 %v4784
    %v4786 = vpop.xlane.xlu0 %4785
    %v4787 = vsel %vm4564, %v4714, 0.0
    %4788 = vadd.xlane.f32.xlu0 %v4787
    %v4789 = vpop.xlane.xlu0 %4788
    %v4790 = vsel %vm4564, %v4716, 0.0
    %4791 = vadd.xlane.f32.xlu0 %v4790
    %v4792 = vpop.xlane.xlu0 %4791
    %v4793 = vsel %vm4564, %v4718, 0.0
    %4794 = vadd.xlane.f32.xlu0 %v4793
    %v4795 = vpop.xlane.xlu0 %4794
    %v4796 = vsel %vm4564, %v4720, 0.0
    %4797 = vadd.xlane.f32.xlu0 %v4796
    %v4798 = vpop.xlane.xlu0 %4797
    %v4799 = vsel %vm4564, %v4722, 0.0
    %4800 = vadd.xlane.f32.xlu0 %v4799
    %v4801 = vpop.xlane.xlu0 %4800
    %v4802 = vsel %vm4564, %v4724, 0.0
    %4803 = vadd.xlane.f32.xlu0 %v4802
    %v4804 = vpop.xlane.xlu0 %4803
    %v4805 = vsel %vm4564, %v4726, 0.0
    %4806 = vadd.xlane.f32.xlu0 %v4805
    %v4807 = vpop.xlane.xlu0 %4806
    %v4808 = vsel %vm4564, %v4728, 0.0
    %4809 = vadd.xlane.f32.xlu0 %v4808
    %v4810 = vpop.xlane.xlu0 %4809
    %v4811 = vsel %vm4564, %v4730, 0.0
    %4812 = vadd.xlane.f32.xlu0 %v4811
    %v4813 = vpop.xlane.xlu0 %4812
    %v4814 = vsel %vm4564, %v4732, 0.0
    %4815 = vadd.xlane.f32.xlu0 %v4814
    %v4816 = vpop.xlane.xlu0 %4815
    %v4817 = vsel %vm4564, %v4734, 0.0
    %4818 = vadd.xlane.f32.xlu0 %v4817
    %v4819 = vpop.xlane.xlu0 %4818
    %v4820 = vsel %vm4564, %v4736, 0.0
    %4821 = vadd.xlane.f32.xlu0 %v4820
    %v4822 = vpop.xlane.xlu0 %4821
    %v4823 = vsel %vm4564, %v4738, 0.0
    %4824 = vadd.xlane.f32.xlu0 %v4823
    %v4825 = vpop.xlane.xlu0 %4824
    %v4826 = vsel %vm4564, %v4740, 0.0
    %4827 = vadd.xlane.f32.xlu0 %v4826
    %v4828 = vpop.xlane.xlu0 %4827
    %v4829 = vsel %vm4564, %v4742, 0.0
    %4830 = vadd.xlane.f32.xlu0 %v4829
    %v4831 = vpop.xlane.xlu0 %4830
    %v4832 = vsel %vm4564, %v4744, 0.0
    %4833 = vadd.xlane.f32.xlu0 %v4832
    %v4834 = vpop.xlane.xlu0 %4833
    %v4835 = vsel %vm4564, %v4746, 0.0
    %4836 = vadd.xlane.f32.xlu0 %v4835
    %v4837 = vpop.xlane.xlu0 %4836
    %v4838 = vsel %vm4564, %v4748, 0.0
    %4839 = vadd.xlane.f32.xlu0 %v4838
    %v4840 = vpop.xlane.xlu0 %4839
    %v4841 = vsel %vm4564, %v4750, 0.0
    %4842 = vadd.xlane.f32.xlu0 %v4841
    %v4843 = vpop.xlane.xlu0 %4842
    %v4844 = vsel %vm4564, %v4752, 0.0
    %4845 = vadd.xlane.f32.xlu0 %v4844
    %v4846 = vpop.xlane.xlu0 %4845
    %v4847 = vsel %vm4564, %v4754, 0.0
    %4848 = vadd.xlane.f32.xlu0 %v4847
    %v4849 = vpop.xlane.xlu0 %4848
    %v4850 = vsel %vm4564, %v4756, 0.0
    %4851 = vadd.xlane.f32.xlu0 %v4850
    %v4852 = vpop.xlane.xlu0 %4851
    %v4853 = vrcp.pop %v4759
    %v4854 = vmul.f32 %v4694, %v4853
    %v4855 = vrcp.pop %v4762
    %v4856 = vmul.f32 %v4696, %v4855
    %v4857 = vrcp.pop %v4765
    %v4858 = vmul.f32 %v4698, %v4857
    %v4859 = vrcp.pop %v4768
    %v4860 = vmul.f32 %v4700, %v4859
    %v4861 = vrcp.pop %v4771
    %v4862 = vmul.f32 %v4702, %v4861
    %v4863 = vrcp.pop %v4774
    %v4864 = vmul.f32 %v4704, %v4863
    %v4865 = vrcp.pop %v4777
    %v4866 = vmul.f32 %v4706, %v4865
    %v4867 = vrcp.pop %v4780
    %v4868 = vmul.f32 %v4708, %v4867
    %v4869 = vrcp.pop %v4783
    %v4870 = vmul.f32 %v4710, %v4869
    %v4871 = vrcp.pop %v4786
    %v4872 = vmul.f32 %v4712, %v4871
    %v4873 = vrcp.pop %v4789
    %v4874 = vmul.f32 %v4714, %v4873
    %v4875 = vrcp.pop %v4792
    %v4876 = vmul.f32 %v4716, %v4875
    %v4877 = vrcp.pop %v4795
    %v4878 = vmul.f32 %v4718, %v4877
    %v4879 = vrcp.pop %v4798
    %v4880 = vmul.f32 %v4720, %v4879
    %v4881 = vrcp.pop %v4801
    %v4882 = vmul.f32 %v4722, %v4881
    %v4883 = vrcp.pop %v4804
    %v4884 = vmul.f32 %v4724, %v4883
    %v4885 = vrcp.pop %v4807
    %v4886 = vmul.f32 %v4726, %v4885
    %v4887 = vrcp.pop %v4810
    %v4888 = vmul.f32 %v4728, %v4887
    %v4889 = vrcp.pop %v4813
    %v4890 = vmul.f32 %v4730, %v4889
    %v4891 = vrcp.pop %v4816
    %v4892 = vmul.f32 %v4732, %v4891
    %v4893 = vrcp.pop %v4819
    %v4894 = vmul.f32 %v4734, %v4893
    %v4895 = vrcp.pop %v4822
    %v4896 = vmul.f32 %v4736, %v4895
    %v4897 = vrcp.pop %v4825
    %v4898 = vmul.f32 %v4738, %v4897
    %v4899 = vrcp.pop %v4828
    %v4900 = vmul.f32 %v4740, %v4899
    %v4901 = vrcp.pop %v4831
    %v4902 = vmul.f32 %v4742, %v4901
    %v4903 = vrcp.pop %v4834
    %v4904 = vmul.f32 %v4744, %v4903
    %v4905 = vrcp.pop %v4837
    %v4906 = vmul.f32 %v4746, %v4905
    %v4907 = vrcp.pop %v4840
    %v4908 = vmul.f32 %v4748, %v4907
    %v4909 = vrcp.pop %v4843
    %v4910 = vmul.f32 %v4750, %v4909
    %v4911 = vrcp.pop %v4846
    %v4912 = vmul.f32 %v4752, %v4911
    %v4913 = vrcp.pop %v4849
    %v4914 = vmul.f32 %v4754, %v4913
    %v4915 = vrcp.pop %v4852
    %v4916 = vmul.f32 %v4756, %v4915
    %v4918 = vsel %vm4564, %v4854, 0
    %v4921 = vsel %vm4564, %v4856, 0
    %v4924 = vsel %vm4564, %v4858, 0
    %v4927 = vsel %vm4564, %v4860, 0
    %v4929 = vsel %vm89, %v1653, 0
    %4931 = vmatprep.subr.mxu0 0.0
    %4932 = vmatpush1.msra.mxu0 %v1652
    %4933 = vmatprep.subr.mxu0 0.0
    %4934 = vmatpush1.msra.mxu0 %v4929
    %4935 = vmatprep.subr.mxu0 0.0
    %4936 = vmatpush1.msra.mxu0 0.0
    %4937 = vmatprep.subr.mxu0 0.0
    %4938 = vmatpush1.msra.mxu0 0.0
    %4939 = vmatprep.subr.mxu0 0.0
    %4940 = vmatpush1.msra.mxu0 0.0
    %4941 = vmatprep.subr.mxu0 0.0
    %4942 = vmatpush1.msra.mxu0 0.0
    %4943 = vmatprep.subr.mxu0 0.0
    %4944 = vmatpush1.msra.mxu0 0.0
    %4945 = vmatprep.subr.mxu0 0.0
    %4946 = vmatpush1.msra.mxu0 0.0
    %4947 = vmatprep.subr.mxu0 0.0
    %4948 = vmatpush1.msra.mxu0 0.0
    %4949 = vmatprep.subr.mxu0 0.0
    %4950 = vmatpush1.msra.mxu0 0.0
    %4951 = vmatprep.subr.mxu0 0.0
    %4952 = vmatpush1.msra.mxu0 0.0
    %4953 = vmatprep.subr.mxu0 0.0
    %4954 = vmatpush1.msra.mxu0 0.0
    %4955 = vmatprep.subr.mxu0 0.0
    %4956 = vmatpush1.msra.mxu0 0.0
    %4957 = vmatprep.subr.mxu0 0.0
    %4958 = vmatpush1.msra.mxu0 0.0
    %4959 = vmatprep.subr.mxu0 0.0
    %4960 = vmatpush1.msra.mxu0 0.0
    %4961 = vmatprep.subr.mxu0 0.0
    %4962 = vmatpush1.msra.mxu0 0.0
    %4963 = vmatprep.subr.mxu0 0.0
    %4964 = vmatpush1.msra.mxu0 0.0
    %4965 = vmatprep.subr.mxu0 0.0
    %4966 = vmatpush1.msra.mxu0 0.0
    %4967 = vmatprep.subr.mxu0 0.0
    %4968 = vmatpush1.msra.mxu0 0.0
    %4969 = vmatprep.subr.mxu0 0.0
    %4970 = vmatpush1.msra.mxu0 0.0
    %4971 = vmatprep.subr.mxu0 0.0
    %4972 = vmatpush1.msra.mxu0 0.0
    %4973 = vmatprep.subr.mxu0 0.0
    %4974 = vmatpush1.msra.mxu0 0.0
    %4975 = vmatprep.subr.mxu0 0.0
    %4976 = vmatpush1.msra.mxu0 0.0
    %4977 = vmatprep.subr.mxu0 0.0
    %4978 = vmatpush1.msra.mxu0 0.0
    %4979 = vmatprep.subr.mxu0 0.0
    %4980 = vmatpush1.msra.mxu0 0.0
    %4981 = vmatprep.subr.mxu0 0.0
    %4982 = vmatpush1.msra.mxu0 0.0
    %4983 = vmatprep.subr.mxu0 0.0
    %4984 = vmatpush1.msra.mxu0 0.0
    %4985 = vmatprep.subr.mxu0 0.0
    %4986 = vmatpush1.msra.mxu0 0.0
    %4987 = vmatprep.subr.mxu0 0.0
    %4988 = vmatpush1.msra.mxu0 0.0
    %4989 = vmatprep.subr.mxu0 0.0
    %4990 = vmatpush1.msra.mxu0 0.0
    %4991 = vmatprep.subr.mxu0 0.0
    %4992 = vmatpush1.msra.mxu0 0.0
    %4993 = vmatprep.subr.mxu0 0.0
    %4994 = vmatpush1.msra.mxu0 0.0
    %4995 = vmatprep.mubr.f32.mxu0 0.0
    %4996 = vmatmul.mubr.f32.gmra.mrb[0].mxu0 %v4918
    %v4997 = vpop.f32.mrb[0].mxu0
    %v4998 = vadd.f32 0.0, %v4997
    %v4999 = vpop.f32.mrb[0].mxu0
    %5000 = vmatprep.mubr.f32.mxu0 0.0
    %5001 = vmatmul.mubr.f32.gmra.mrb[0].mxu0 %v4921
    %v5002 = vpop.f32.mrb[0].mxu0
    %v5003 = vadd.f32 0.0, %v5002
    %v5004 = vpop.f32.mrb[0].mxu0
    %5005 = vmatprep.mubr.f32.mxu0 0.0
    %5006 = vmatmul.mubr.f32.gmra.mrb[0].mxu0 %v4924
    %v5007 = vpop.f32.mrb[0].mxu0
    %v5008 = vadd.f32 0.0, %v5007
    %v5009 = vpop.f32.mrb[0].mxu0
    %5010 = vmatprep.mubr.f32.mxu0 0.0
    %5011 = vmatmul.mubr.f32.gmra.mrb[0].mxu0 %v4927
    %v5012 = vpop.f32.mrb[0].mxu0
    %v5013 = vadd.f32 0.0, %v5012
    %v5014 = vpop.f32.mrb[0].mxu0
    %5015 = vdwg.mxu0
    %v5017 = vsel %vm4564, %v4862, 0
    %v5020 = vsel %vm4564, %v4864, 0
    %v5023 = vsel %vm4564, %v4866, 0
    %v5026 = vsel %vm4564, %v4868, 0
    %v5028 = vsel %vm89, %v1655, 0
    %5030 = vmatprep.subr.mxu0 0.0
    %5031 = vmatpush1.msra.mxu0 %v1654
    %5032 = vmatprep.subr.mxu0 0.0
    %5033 = vmatpush1.msra.mxu0 %v5028
    %5034 = vmatprep.subr.mxu0 0.0
    %5035 = vmatpush1.msra.mxu0 0.0
    %5036 = vmatprep.subr.mxu0 0.0
    %5037 = vmatpush1.msra.mxu0 0.0
    %5038 = vmatprep.subr.mxu0 0.0
    %5039 = vmatpush1.msra.mxu0 0.0
    %5040 = vmatprep.subr.mxu0 0.0
    %5041 = vmatpush1.msra.mxu0 0.0
    %5042 = vmatprep.subr.mxu0 0.0
    %5043 = vmatpush1.msra.mxu0 0.0
    %5044 = vmatprep.subr.mxu0 0.0
    %5045 = vmatpush1.msra.mxu0 0.0
    %5046 = vmatprep.subr.mxu0 0.0
    %5047 = vmatpush1.msra.mxu0 0.0
    %5048 = vmatprep.subr.mxu0 0.0
    %5049 = vmatpush1.msra.mxu0 0.0
    %5050 = vmatprep.subr.mxu0 0.0
    %5051 = vmatpush1.msra.mxu0 0.0
    %5052 = vmatprep.subr.mxu0 0.0
    %5053 = vmatpush1.msra.mxu0 0.0
    %5054 = vmatprep.subr.mxu0 0.0
    %5055 = vmatpush1.msra.mxu0 0.0
    %5056 = vmatprep.subr.mxu0 0.0
    %5057 = vmatpush1.msra.mxu0 0.0
    %5058 = vmatprep.subr.mxu0 0.0
    %5059 = vmatpush1.msra.mxu0 0.0
    %5060 = vmatprep.subr.mxu0 0.0
    %5061 = vmatpush1.msra.mxu0 0.0
    %5062 = vmatprep.subr.mxu0 0.0
    %5063 = vmatpush1.msra.mxu0 0.0
    %5064 = vmatprep.subr.mxu0 0.0
    %5065 = vmatpush1.msra.mxu0 0.0
    %5066 = vmatprep.subr.mxu0 0.0
    %5067 = vmatpush1.msra.mxu0 0.0
    %5068 = vmatprep.subr.mxu0 0.0
    %5069 = vmatpush1.msra.mxu0 0.0
    %5070 = vmatprep.subr.mxu0 0.0
    %5071 = vmatpush1.msra.mxu0 0.0
    %5072 = vmatprep.subr.mxu0 0.0
    %5073 = vmatpush1.msra.mxu0 0.0
    %5074 = vmatprep.subr.mxu0 0.0
    %5075 = vmatpush1.msra.mxu0 0.0
    %5076 = vmatprep.subr.mxu0 0.0
    %5077 = vmatpush1.msra.mxu0 0.0
    %5078 = vmatprep.subr.mxu0 0.0
    %5079 = vmatpush1.msra.mxu0 0.0
    %5080 = vmatprep.subr.mxu0 0.0
    %5081 = vmatpush1.msra.mxu0 0.0
    %5082 = vmatprep.subr.mxu0 0.0
    %5083 = vmatpush1.msra.mxu0 0.0
    %5084 = vmatprep.subr.mxu0 0.0
    %5085 = vmatpush1.msra.mxu0 0.0
    %5086 = vmatprep.subr.mxu0 0.0
    %5087 = vmatpush1.msra.mxu0 0.0
    %5088 = vmatprep.subr.mxu0 0.0
    %5089 = vmatpush1.msra.mxu0 0.0
    %5090 = vmatprep.subr.mxu0 0.0
    %5091 = vmatpush1.msra.mxu0 0.0
    %5092 = vmatprep.subr.mxu0 0.0
    %5093 = vmatpush1.msra.mxu0 0.0
    %5094 = vmatprep.mubr.f32.mxu0 0.0
    %5095 = vmatmul.mubr.f32.gmra.mrb[0].mxu0 %v5017
    %v5096 = vpop.f32.mrb[0].mxu0
    %v5097 = vadd.f32 0.0, %v5096
    %v5098 = vpop.f32.mrb[0].mxu0
    %5099 = vmatprep.mubr.f32.mxu0 0.0
    %5100 = vmatmul.mubr.f32.gmra.mrb[0].mxu0 %v5020
    %v5101 = vpop.f32.mrb[0].mxu0
    %v5102 = vadd.f32 0.0, %v5101
    %v5103 = vpop.f32.mrb[0].mxu0
    %5104 = vmatprep.mubr.f32.mxu0 0.0
    %5105 = vmatmul.mubr.f32.gmra.mrb[0].mxu0 %v5023
    %v5106 = vpop.f32.mrb[0].mxu0
    %v5107 = vadd.f32 0.0, %v5106
    %v5108 = vpop.f32.mrb[0].mxu0
    %5109 = vmatprep.mubr.f32.mxu0 0.0
    %5110 = vmatmul.mubr.f32.gmra.mrb[0].mxu0 %v5026
    %v5111 = vpop.f32.mrb[0].mxu0
    %v5112 = vadd.f32 0.0, %v5111
    %v5113 = vpop.f32.mrb[0].mxu0
    %5114 = vdwg.mxu0
    %v5116 = vsel %vm4564, %v4870, 0
    %v5119 = vsel %vm4564, %v4872, 0
    %v5122 = vsel %vm4564, %v4874, 0
    %v5125 = vsel %vm4564, %v4876, 0
    %v5127 = vsel %vm89, %v1657, 0
    %5129 = vmatprep.subr.mxu0 0.0
    %5130 = vmatpush1.msra.mxu0 %v1656
    %5131 = vmatprep.subr.mxu0 0.0
    %5132 = vmatpush1.msra.mxu0 %v5127
    %5133 = vmatprep.subr.mxu0 0.0
    %5134 = vmatpush1.msra.mxu0 0.0
    %5135 = vmatprep.subr.mxu0 0.0
    %5136 = vmatpush1.msra.mxu0 0.0
    %5137 = vmatprep.subr.mxu0 0.0
    %5138 = vmatpush1.msra.mxu0 0.0
    %5139 = vmatprep.subr.mxu0 0.0
    %5140 = vmatpush1.msra.mxu0 0.0
    %5141 = vmatprep.subr.mxu0 0.0
    %5142 = vmatpush1.msra.mxu0 0.0
    %5143 = vmatprep.subr.mxu0 0.0
    %5144 = vmatpush1.msra.mxu0 0.0
    %5145 = vmatprep.subr.mxu0 0.0
    %5146 = vmatpush1.msra.mxu0 0.0
    %5147 = vmatprep.subr.mxu0 0.0
    %5148 = vmatpush1.msra.mxu0 0.0
    %5149 = vmatprep.subr.mxu0 0.0
    %5150 = vmatpush1.msra.mxu0 0.0
    %5151 = vmatprep.subr.mxu0 0.0
    %5152 = vmatpush1.msra.mxu0 0.0
    %5153 = vmatprep.subr.mxu0 0.0
    %5154 = vmatpush1.msra.mxu0 0.0
    %5155 = vmatprep.subr.mxu0 0.0
    %5156 = vmatpush1.msra.mxu0 0.0
    %5157 = vmatprep.subr.mxu0 0.0
    %5158 = vmatpush1.msra.mxu0 0.0
    %5159 = vmatprep.subr.mxu0 0.0
    %5160 = vmatpush1.msra.mxu0 0.0
    %5161 = vmatprep.subr.mxu0 0.0
    %5162 = vmatpush1.msra.mxu0 0.0
    %5163 = vmatprep.subr.mxu0 0.0
    %5164 = vmatpush1.msra.mxu0 0.0
    %5165 = vmatprep.subr.mxu0 0.0
    %5166 = vmatpush1.msra.mxu0 0.0
    %5167 = vmatprep.subr.mxu0 0.0
    %5168 = vmatpush1.msra.mxu0 0.0
    %5169 = vmatprep.subr.mxu0 0.0
    %5170 = vmatpush1.msra.mxu0 0.0
    %5171 = vmatprep.subr.mxu0 0.0
    %5172 = vmatpush1.msra.mxu0 0.0
    %5173 = vmatprep.subr.mxu0 0.0
    %5174 = vmatpush1.msra.mxu0 0.0
    %5175 = vmatprep.subr.mxu0 0.0
    %5176 = vmatpush1.msra.mxu0 0.0
    %5177 = vmatprep.subr.mxu0 0.0
    %5178 = vmatpush1.msra.mxu0 0.0
    %5179 = vmatprep.subr.mxu0 0.0
    %5180 = vmatpush1.msra.mxu0 0.0
    %5181 = vmatprep.subr.mxu0 0.0
    %5182 = vmatpush1.msra.mxu0 0.0
    %5183 = vmatprep.subr.mxu0 0.0
    %5184 = vmatpush1.msra.mxu0 0.0
    %5185 = vmatprep.subr.mxu0 0.0
    %5186 = vmatpush1.msra.mxu0 0.0
    %5187 = vmatprep.subr.mxu0 0.0
    %5188 = vmatpush1.msra.mxu0 0.0
    %5189 = vmatprep.subr.mxu0 0.0
    %5190 = vmatpush1.msra.mxu0 0.0
    %5191 = vmatprep.subr.mxu0 0.0
    %5192 = vmatpush1.msra.mxu0 0.0
    %5193 = vmatprep.mubr.f32.mxu0 0.0
    %5194 = vmatmul.mubr.f32.gmra.mrb[0].mxu0 %v5116
    %v5195 = vpop.f32.mrb[0].mxu0
    %v5196 = vadd.f32 0.0, %v5195
    %v5197 = vpop.f32.mrb[0].mxu0
    %5198 = vmatprep.mubr.f32.mxu0 0.0
    %5199 = vmatmul.mubr.f32.gmra.mrb[0].mxu0 %v5119
    %v5200 = vpop.f32.mrb[0].mxu0
    %v5201 = vadd.f32 0.0, %v5200
    %v5202 = vpop.f32.mrb[0].mxu0
    %5203 = vmatprep.mubr.f32.mxu0 0.0
    %5204 = vmatmul.mubr.f32.gmra.mrb[0].mxu0 %v5122
    %v5205 = vpop.f32.mrb[0].mxu0
    %v5206 = vadd.f32 0.0, %v5205
    %v5207 = vpop.f32.mrb[0].mxu0
    %5208 = vmatprep.mubr.f32.mxu0 0.0
    %5209 = vmatmul.mubr.f32.gmra.mrb[0].mxu0 %v5125
    %v5210 = vpop.f32.mrb[0].mxu0
    %v5211 = vadd.f32 0.0, %v5210
    %v5212 = vpop.f32.mrb[0].mxu0
    %5213 = vdwg.mxu0
    %v5215 = vsel %vm4564, %v4878, 0
    %v5218 = vsel %vm4564, %v4880, 0
    %v5221 = vsel %vm4564, %v4882, 0
    %v5224 = vsel %vm4564, %v4884, 0
    %v5226 = vsel %vm89, %v1659, 0
    %5228 = vmatprep.subr.mxu0 0.0
    %5229 = vmatpush1.msra.mxu0 %v1658
    %5230 = vmatprep.subr.mxu0 0.0
    %5231 = vmatpush1.msra.mxu0 %v5226
    %5232 = vmatprep.subr.mxu0 0.0
    %5233 = vmatpush1.msra.mxu0 0.0
    %5234 = vmatprep.subr.mxu0 0.0
    %5235 = vmatpush1.msra.mxu0 0.0
    %5236 = vmatprep.subr.mxu0 0.0
    %5237 = vmatpush1.msra.mxu0 0.0
    %5238 = vmatprep.subr.mxu0 0.0
    %5239 = vmatpush1.msra.mxu0 0.0
    %5240 = vmatprep.subr.mxu0 0.0
    %5241 = vmatpush1.msra.mxu0 0.0
    %5242 = vmatprep.subr.mxu0 0.0
    %5243 = vmatpush1.msra.mxu0 0.0
    %5244 = vmatprep.subr.mxu0 0.0
    %5245 = vmatpush1.msra.mxu0 0.0
    %5246 = vmatprep.subr.mxu0 0.0
    %5247 = vmatpush1.msra.mxu0 0.0
    %5248 = vmatprep.subr.mxu0 0.0
    %5249 = vmatpush1.msra.mxu0 0.0
    %5250 = vmatprep.subr.mxu0 0.0
    %5251 = vmatpush1.msra.mxu0 0.0
    %5252 = vmatprep.subr.mxu0 0.0
    %5253 = vmatpush1.msra.mxu0 0.0
    %5254 = vmatprep.subr.mxu0 0.0
    %5255 = vmatpush1.msra.mxu0 0.0
    %5256 = vmatprep.subr.mxu0 0.0
    %5257 = vmatpush1.msra.mxu0 0.0
    %5258 = vmatprep.subr.mxu0 0.0
    %5259 = vmatpush1.msra.mxu0 0.0
    %5260 = vmatprep.subr.mxu0 0.0
    %5261 = vmatpush1.msra.mxu0 0.0
    %5262 = vmatprep.subr.mxu0 0.0
    %5263 = vmatpush1.msra.mxu0 0.0
    %5264 = vmatprep.subr.mxu0 0.0
    %5265 = vmatpush1.msra.mxu0 0.0
    %5266 = vmatprep.subr.mxu0 0.0
    %5267 = vmatpush1.msra.mxu0 0.0
    %5268 = vmatprep.subr.mxu0 0.0
    %5269 = vmatpush1.msra.mxu0 0.0
    %5270 = vmatprep.subr.mxu0 0.0
    %5271 = vmatpush1.msra.mxu0 0.0
    %5272 = vmatprep.subr.mxu0 0.0
    %5273 = vmatpush1.msra.mxu0 0.0
    %5274 = vmatprep.subr.mxu0 0.0
    %5275 = vmatpush1.msra.mxu0 0.0
    %5276 = vmatprep.subr.mxu0 0.0
    %5277 = vmatpush1.msra.mxu0 0.0
    %5278 = vmatprep.subr.mxu0 0.0
    %5279 = vmatpush1.msra.mxu0 0.0
    %5280 = vmatprep.subr.mxu0 0.0
    %5281 = vmatpush1.msra.mxu0 0.0
    %5282 = vmatprep.subr.mxu0 0.0
    %5283 = vmatpush1.msra.mxu0 0.0
    %5284 = vmatprep.subr.mxu0 0.0
    %5285 = vmatpush1.msra.mxu0 0.0
    %5286 = vmatprep.subr.mxu0 0.0
    %5287 = vmatpush1.msra.mxu0 0.0
    %5288 = vmatprep.subr.mxu0 0.0
    %5289 = vmatpush1.msra.mxu0 0.0
    %5290 = vmatprep.subr.mxu0 0.0
    %5291 = vmatpush1.msra.mxu0 0.0
    %5292 = vmatprep.mubr.f32.mxu0 0.0
    %5293 = vmatmul.mubr.f32.gmra.mrb[0].mxu0 %v5215
    %v5294 = vpop.f32.mrb[0].mxu0
    %v5295 = vadd.f32 0.0, %v5294
    %v5296 = vpop.f32.mrb[0].mxu0
    %5297 = vmatprep.mubr.f32.mxu0 0.0
    %5298 = vmatmul.mubr.f32.gmra.mrb[0].mxu0 %v5218
    %v5299 = vpop.f32.mrb[0].mxu0
    %v5300 = vadd.f32 0.0, %v5299
    %v5301 = vpop.f32.mrb[0].mxu0
    %5302 = vmatprep.mubr.f32.mxu0 0.0
    %5303 = vmatmul.mubr.f32.gmra.mrb[0].mxu0 %v5221
    %v5304 = vpop.f32.mrb[0].mxu0
    %v5305 = vadd.f32 0.0, %v5304
    %v5306 = vpop.f32.mrb[0].mxu0
    %5307 = vmatprep.mubr.f32.mxu0 0.0
    %5308 = vmatmul.mubr.f32.gmra.mrb[0].mxu0 %v5224
    %v5309 = vpop.f32.mrb[0].mxu0
    %v5310 = vadd.f32 0.0, %v5309
    %v5311 = vpop.f32.mrb[0].mxu0
    %5312 = vdwg.mxu0
    %v5314 = vsel %vm4564, %v4886, 0
    %v5317 = vsel %vm4564, %v4888, 0
    %v5320 = vsel %vm4564, %v4890, 0
    %v5323 = vsel %vm4564, %v4892, 0
    %v5325 = vsel %vm89, %v1661, 0
    %5327 = vmatprep.subr.mxu0 0.0
    %5328 = vmatpush1.msra.mxu0 %v1660
    %5329 = vmatprep.subr.mxu0 0.0
    %5330 = vmatpush1.msra.mxu0 %v5325
    %5331 = vmatprep.subr.mxu0 0.0
    %5332 = vmatpush1.msra.mxu0 0.0
    %5333 = vmatprep.subr.mxu0 0.0
    %5334 = vmatpush1.msra.mxu0 0.0
    %5335 = vmatprep.subr.mxu0 0.0
    %5336 = vmatpush1.msra.mxu0 0.0
    %5337 = vmatprep.subr.mxu0 0.0
    %5338 = vmatpush1.msra.mxu0 0.0
    %5339 = vmatprep.subr.mxu0 0.0
    %5340 = vmatpush1.msra.mxu0 0.0
    %5341 = vmatprep.subr.mxu0 0.0
    %5342 = vmatpush1.msra.mxu0 0.0
    %5343 = vmatprep.subr.mxu0 0.0
    %5344 = vmatpush1.msra.mxu0 0.0
    %5345 = vmatprep.subr.mxu0 0.0
    %5346 = vmatpush1.msra.mxu0 0.0
    %5347 = vmatprep.subr.mxu0 0.0
    %5348 = vmatpush1.msra.mxu0 0.0
    %5349 = vmatprep.subr.mxu0 0.0
    %5350 = vmatpush1.msra.mxu0 0.0
    %5351 = vmatprep.subr.mxu0 0.0
    %5352 = vmatpush1.msra.mxu0 0.0
    %5353 = vmatprep.subr.mxu0 0.0
    %5354 = vmatpush1.msra.mxu0 0.0
    %5355 = vmatprep.subr.mxu0 0.0
    %5356 = vmatpush1.msra.mxu0 0.0
    %5357 = vmatprep.subr.mxu0 0.0
    %5358 = vmatpush1.msra.mxu0 0.0
    %5359 = vmatprep.subr.mxu0 0.0
    %5360 = vmatpush1.msra.mxu0 0.0
    %5361 = vmatprep.subr.mxu0 0.0
    %5362 = vmatpush1.msra.mxu0 0.0
    %5363 = vmatprep.subr.mxu0 0.0
    %5364 = vmatpush1.msra.mxu0 0.0
    %5365 = vmatprep.subr.mxu0 0.0
    %5366 = vmatpush1.msra.mxu0 0.0
    %5367 = vmatprep.subr.mxu0 0.0
    %5368 = vmatpush1.msra.mxu0 0.0
    %5369 = vmatprep.subr.mxu0 0.0
    %5370 = vmatpush1.msra.mxu0 0.0
    %5371 = vmatprep.subr.mxu0 0.0
    %5372 = vmatpush1.msra.mxu0 0.0
    %5373 = vmatprep.subr.mxu0 0.0
    %5374 = vmatpush1.msra.mxu0 0.0
    %5375 = vmatprep.subr.mxu0 0.0
    %5376 = vmatpush1.msra.mxu0 0.0
    %5377 = vmatprep.subr.mxu0 0.0
    %5378 = vmatpush1.msra.mxu0 0.0
    %5379 = vmatprep.subr.mxu0 0.0
    %5380 = vmatpush1.msra.mxu0 0.0
    %5381 = vmatprep.subr.mxu0 0.0
    %5382 = vmatpush1.msra.mxu0 0.0
    %5383 = vmatprep.subr.mxu0 0.0
    %5384 = vmatpush1.msra.mxu0 0.0
    %5385 = vmatprep.subr.mxu0 0.0
    %5386 = vmatpush1.msra.mxu0 0.0
    %5387 = vmatprep.subr.mxu0 0.0
    %5388 = vmatpush1.msra.mxu0 0.0
    %5389 = vmatprep.subr.mxu0 0.0
    %5390 = vmatpush1.msra.mxu0 0.0
    %5391 = vmatprep.mubr.f32.mxu0 0.0
    %5392 = vmatmul.mubr.f32.gmra.mrb[0].mxu0 %v5314
    %v5393 = vpop.f32.mrb[0].mxu0
    %v5394 = vadd.f32 0.0, %v5393
    %v5395 = vpop.f32.mrb[0].mxu0
    %5396 = vmatprep.mubr.f32.mxu0 0.0
    %5397 = vmatmul.mubr.f32.gmra.mrb[0].mxu0 %v5317
    %v5398 = vpop.f32.mrb[0].mxu0
    %v5399 = vadd.f32 0.0, %v5398
    %v5400 = vpop.f32.mrb[0].mxu0
    %5401 = vmatprep.mubr.f32.mxu0 0.0
    %5402 = vmatmul.mubr.f32.gmra.mrb[0].mxu0 %v5320
    %v5403 = vpop.f32.mrb[0].mxu0
    %v5404 = vadd.f32 0.0, %v5403
    %v5405 = vpop.f32.mrb[0].mxu0
    %5406 = vmatprep.mubr.f32.mxu0 0.0
    %5407 = vmatmul.mubr.f32.gmra.mrb[0].mxu0 %v5323
    %v5408 = vpop.f32.mrb[0].mxu0
    %v5409 = vadd.f32 0.0, %v5408
    %v5410 = vpop.f32.mrb[0].mxu0
    %5411 = vdwg.mxu0
    %v5413 = vsel %vm4564, %v4894, 0
    %v5416 = vsel %vm4564, %v4896, 0
    %v5419 = vsel %vm4564, %v4898, 0
    %v5422 = vsel %vm4564, %v4900, 0
    %v5424 = vsel %vm89, %v1663, 0
    %5426 = vmatprep.subr.mxu0 0.0
    %5427 = vmatpush1.msra.mxu0 %v1662
    %5428 = vmatprep.subr.mxu0 0.0
    %5429 = vmatpush1.msra.mxu0 %v5424
    %5430 = vmatprep.subr.mxu0 0.0
    %5431 = vmatpush1.msra.mxu0 0.0
    %5432 = vmatprep.subr.mxu0 0.0
    %5433 = vmatpush1.msra.mxu0 0.0
    %5434 = vmatprep.subr.mxu0 0.0
    %5435 = vmatpush1.msra.mxu0 0.0
    %5436 = vmatprep.subr.mxu0 0.0
    %5437 = vmatpush1.msra.mxu0 0.0
    %5438 = vmatprep.subr.mxu0 0.0
    %5439 = vmatpush1.msra.mxu0 0.0
    %5440 = vmatprep.subr.mxu0 0.0
    %5441 = vmatpush1.msra.mxu0 0.0
    %5442 = vmatprep.subr.mxu0 0.0
    %5443 = vmatpush1.msra.mxu0 0.0
    %5444 = vmatprep.subr.mxu0 0.0
    %5445 = vmatpush1.msra.mxu0 0.0
    %5446 = vmatprep.subr.mxu0 0.0
    %5447 = vmatpush1.msra.mxu0 0.0
    %5448 = vmatprep.subr.mxu0 0.0
    %5449 = vmatpush1.msra.mxu0 0.0
    %5450 = vmatprep.subr.mxu0 0.0
    %5451 = vmatpush1.msra.mxu0 0.0
    %5452 = vmatprep.subr.mxu0 0.0
    %5453 = vmatpush1.msra.mxu0 0.0
    %5454 = vmatprep.subr.mxu0 0.0
    %5455 = vmatpush1.msra.mxu0 0.0
    %5456 = vmatprep.subr.mxu0 0.0
    %5457 = vmatpush1.msra.mxu0 0.0
    %5458 = vmatprep.subr.mxu0 0.0
    %5459 = vmatpush1.msra.mxu0 0.0
    %5460 = vmatprep.subr.mxu0 0.0
    %5461 = vmatpush1.msra.mxu0 0.0
    %5462 = vmatprep.subr.mxu0 0.0
    %5463 = vmatpush1.msra.mxu0 0.0
    %5464 = vmatprep.subr.mxu0 0.0
    %5465 = vmatpush1.msra.mxu0 0.0
    %5466 = vmatprep.subr.mxu0 0.0
    %5467 = vmatpush1.msra.mxu0 0.0
    %5468 = vmatprep.subr.mxu0 0.0
    %5469 = vmatpush1.msra.mxu0 0.0
    %5470 = vmatprep.subr.mxu0 0.0
    %5471 = vmatpush1.msra.mxu0 0.0
    %5472 = vmatprep.subr.mxu0 0.0
    %5473 = vmatpush1.msra.mxu0 0.0
    %5474 = vmatprep.subr.mxu0 0.0
    %5475 = vmatpush1.msra.mxu0 0.0
    %5476 = vmatprep.subr.mxu0 0.0
    %5477 = vmatpush1.msra.mxu0 0.0
    %5478 = vmatprep.subr.mxu0 0.0
    %5479 = vmatpush1.msra.mxu0 0.0
    %5480 = vmatprep.subr.mxu0 0.0
    %5481 = vmatpush1.msra.mxu0 0.0
    %5482 = vmatprep.subr.mxu0 0.0
    %5483 = vmatpush1.msra.mxu0 0.0
    %5484 = vmatprep.subr.mxu0 0.0
    %5485 = vmatpush1.msra.mxu0 0.0
    %5486 = vmatprep.subr.mxu0 0.0
    %5487 = vmatpush1.msra.mxu0 0.0
    %5488 = vmatprep.subr.mxu0 0.0
    %5489 = vmatpush1.msra.mxu0 0.0
    %5490 = vmatprep.mubr.f32.mxu0 0.0
    %5491 = vmatmul.mubr.f32.gmra.mrb[0].mxu0 %v5413
    %v5492 = vpop.f32.mrb[0].mxu0
    %v5493 = vadd.f32 0.0, %v5492
    %v5494 = vpop.f32.mrb[0].mxu0
    %5495 = vmatprep.mubr.f32.mxu0 0.0
    %5496 = vmatmul.mubr.f32.gmra.mrb[0].mxu0 %v5416
    %v5497 = vpop.f32.mrb[0].mxu0
    %v5498 = vadd.f32 0.0, %v5497
    %v5499 = vpop.f32.mrb[0].mxu0
    %5500 = vmatprep.mubr.f32.mxu0 0.0
    %5501 = vmatmul.mubr.f32.gmra.mrb[0].mxu0 %v5419
    %v5502 = vpop.f32.mrb[0].mxu0
    %v5503 = vadd.f32 0.0, %v5502
    %v5504 = vpop.f32.mrb[0].mxu0
    %5505 = vmatprep.mubr.f32.mxu0 0.0
    %5506 = vmatmul.mubr.f32.gmra.mrb[0].mxu0 %v5422
    %v5507 = vpop.f32.mrb[0].mxu0
    %v5508 = vadd.f32 0.0, %v5507
    %v5509 = vpop.f32.mrb[0].mxu0
    %5510 = vdwg.mxu0
    %v5512 = vsel %vm4564, %v4902, 0
    %v5515 = vsel %vm4564, %v4904, 0
    %v5518 = vsel %vm4564, %v4906, 0
    %v5521 = vsel %vm4564, %v4908, 0
    %v5523 = vsel %vm89, %v1665, 0
    %5525 = vmatprep.subr.mxu0 0.0
    %5526 = vmatpush1.msra.mxu0 %v1664
    %5527 = vmatprep.subr.mxu0 0.0
    %5528 = vmatpush1.msra.mxu0 %v5523
    %5529 = vmatprep.subr.mxu0 0.0
    %5530 = vmatpush1.msra.mxu0 0.0
    %5531 = vmatprep.subr.mxu0 0.0
    %5532 = vmatpush1.msra.mxu0 0.0
    %5533 = vmatprep.subr.mxu0 0.0
    %5534 = vmatpush1.msra.mxu0 0.0
    %5535 = vmatprep.subr.mxu0 0.0
    %5536 = vmatpush1.msra.mxu0 0.0
    %5537 = vmatprep.subr.mxu0 0.0
    %5538 = vmatpush1.msra.mxu0 0.0
    %5539 = vmatprep.subr.mxu0 0.0
    %5540 = vmatpush1.msra.mxu0 0.0
    %5541 = vmatprep.subr.mxu0 0.0
    %5542 = vmatpush1.msra.mxu0 0.0
    %5543 = vmatprep.subr.mxu0 0.0
    %5544 = vmatpush1.msra.mxu0 0.0
    %5545 = vmatprep.subr.mxu0 0.0
    %5546 = vmatpush1.msra.mxu0 0.0
    %5547 = vmatprep.subr.mxu0 0.0
    %5548 = vmatpush1.msra.mxu0 0.0
    %5549 = vmatprep.subr.mxu0 0.0
    %5550 = vmatpush1.msra.mxu0 0.0
    %5551 = vmatprep.subr.mxu0 0.0
    %5552 = vmatpush1.msra.mxu0 0.0
    %5553 = vmatprep.subr.mxu0 0.0
    %5554 = vmatpush1.msra.mxu0 0.0
    %5555 = vmatprep.subr.mxu0 0.0
    %5556 = vmatpush1.msra.mxu0 0.0
    %5557 = vmatprep.subr.mxu0 0.0
    %5558 = vmatpush1.msra.mxu0 0.0
    %5559 = vmatprep.subr.mxu0 0.0
    %5560 = vmatpush1.msra.mxu0 0.0
    %5561 = vmatprep.subr.mxu0 0.0
    %5562 = vmatpush1.msra.mxu0 0.0
    %5563 = vmatprep.subr.mxu0 0.0
    %5564 = vmatpush1.msra.mxu0 0.0
    %5565 = vmatprep.subr.mxu0 0.0
    %5566 = vmatpush1.msra.mxu0 0.0
    %5567 = vmatprep.subr.mxu0 0.0
    %5568 = vmatpush1.msra.mxu0 0.0
    %5569 = vmatprep.subr.mxu0 0.0
    %5570 = vmatpush1.msra.mxu0 0.0
    %5571 = vmatprep.subr.mxu0 0.0
    %5572 = vmatpush1.msra.mxu0 0.0
    %5573 = vmatprep.subr.mxu0 0.0
    %5574 = vmatpush1.msra.mxu0 0.0
    %5575 = vmatprep.subr.mxu0 0.0
    %5576 = vmatpush1.msra.mxu0 0.0
    %5577 = vmatprep.subr.mxu0 0.0
    %5578 = vmatpush1.msra.mxu0 0.0
    %5579 = vmatprep.subr.mxu0 0.0
    %5580 = vmatpush1.msra.mxu0 0.0
    %5581 = vmatprep.subr.mxu0 0.0
    %5582 = vmatpush1.msra.mxu0 0.0
    %5583 = vmatprep.subr.mxu0 0.0
    %5584 = vmatpush1.msra.mxu0 0.0
    %5585 = vmatprep.subr.mxu0 0.0
    %5586 = vmatpush1.msra.mxu0 0.0
    %5587 = vmatprep.subr.mxu0 0.0
    %5588 = vmatpush1.msra.mxu0 0.0
    %5589 = vmatprep.mubr.f32.mxu0 0.0
    %5590 = vmatmul.mubr.f32.gmra.mrb[0].mxu0 %v5512
    %v5591 = vpop.f32.mrb[0].mxu0
    %v5592 = vadd.f32 0.0, %v5591
    %v5593 = vpop.f32.mrb[0].mxu0
    %5594 = vmatprep.mubr.f32.mxu0 0.0
    %5595 = vmatmul.mubr.f32.gmra.mrb[0].mxu0 %v5515
    %v5596 = vpop.f32.mrb[0].mxu0
    %v5597 = vadd.f32 0.0, %v5596
    %v5598 = vpop.f32.mrb[0].mxu0
    %5599 = vmatprep.mubr.f32.mxu0 0.0
    %5600 = vmatmul.mubr.f32.gmra.mrb[0].mxu0 %v5518
    %v5601 = vpop.f32.mrb[0].mxu0
    %v5602 = vadd.f32 0.0, %v5601
    %v5603 = vpop.f32.mrb[0].mxu0
    %5604 = vmatprep.mubr.f32.mxu0 0.0
    %5605 = vmatmul.mubr.f32.gmra.mrb[0].mxu0 %v5521
    %v5606 = vpop.f32.mrb[0].mxu0
    %v5607 = vadd.f32 0.0, %v5606
    %v5608 = vpop.f32.mrb[0].mxu0
    %5609 = vdwg.mxu0
    %v5611 = vsel %vm4564, %v4910, 0
    %v5614 = vsel %vm4564, %v4912, 0
    %v5617 = vsel %vm4564, %v4914, 0
    %v5620 = vsel %vm4564, %v4916, 0
    %v5622 = vsel %vm89, %v1667, 0
    %5624 = vmatprep.subr.mxu0 0.0
    %5625 = vmatpush1.msra.mxu0 %v1666
    %5626 = vmatprep.subr.mxu0 0.0
    %5627 = vmatpush1.msra.mxu0 %v5622
    %5628 = vmatprep.subr.mxu0 0.0
    %5629 = vmatpush1.msra.mxu0 0.0
    %5630 = vmatprep.subr.mxu0 0.0
    %5631 = vmatpush1.msra.mxu0 0.0
    %5632 = vmatprep.subr.mxu0 0.0
    %5633 = vmatpush1.msra.mxu0 0.0
    %5634 = vmatprep.subr.mxu0 0.0
    %5635 = vmatpush1.msra.mxu0 0.0
    %5636 = vmatprep.subr.mxu0 0.0
    %5637 = vmatpush1.msra.mxu0 0.0
    %5638 = vmatprep.subr.mxu0 0.0
    %5639 = vmatpush1.msra.mxu0 0.0
    %5640 = vmatprep.subr.mxu0 0.0
    %5641 = vmatpush1.msra.mxu0 0.0
    %5642 = vmatprep.subr.mxu0 0.0
    %5643 = vmatpush1.msra.mxu0 0.0
    %5644 = vmatprep.subr.mxu0 0.0
    %5645 = vmatpush1.msra.mxu0 0.0
    %5646 = vmatprep.subr.mxu0 0.0
    %5647 = vmatpush1.msra.mxu0 0.0
    %5648 = vmatprep.subr.mxu0 0.0
    %5649 = vmatpush1.msra.mxu0 0.0
    %5650 = vmatprep.subr.mxu0 0.0
    %5651 = vmatpush1.msra.mxu0 0.0
    %5652 = vmatprep.subr.mxu0 0.0
    %5653 = vmatpush1.msra.mxu0 0.0
    %5654 = vmatprep.subr.mxu0 0.0
    %5655 = vmatpush1.msra.mxu0 0.0
    %5656 = vmatprep.subr.mxu0 0.0
    %5657 = vmatpush1.msra.mxu0 0.0
    %5658 = vmatprep.subr.mxu0 0.0
    %5659 = vmatpush1.msra.mxu0 0.0
    %5660 = vmatprep.subr.mxu0 0.0
    %5661 = vmatpush1.msra.mxu0 0.0
    %5662 = vmatprep.subr.mxu0 0.0
    %5663 = vmatpush1.msra.mxu0 0.0
    %5664 = vmatprep.subr.mxu0 0.0
    %5665 = vmatpush1.msra.mxu0 0.0
    %5666 = vmatprep.subr.mxu0 0.0
    %5667 = vmatpush1.msra.mxu0 0.0
    %5668 = vmatprep.subr.mxu0 0.0
    %5669 = vmatpush1.msra.mxu0 0.0
    %5670 = vmatprep.subr.mxu0 0.0
    %5671 = vmatpush1.msra.mxu0 0.0
    %5672 = vmatprep.subr.mxu0 0.0
    %5673 = vmatpush1.msra.mxu0 0.0
    %5674 = vmatprep.subr.mxu0 0.0
    %5675 = vmatpush1.msra.mxu0 0.0
    %5676 = vmatprep.subr.mxu0 0.0
    %5677 = vmatpush1.msra.mxu0 0.0
    %5678 = vmatprep.subr.mxu0 0.0
    %5679 = vmatpush1.msra.mxu0 0.0
    %5680 = vmatprep.subr.mxu0 0.0
    %5681 = vmatpush1.msra.mxu0 0.0
    %5682 = vmatprep.subr.mxu0 0.0
    %5683 = vmatpush1.msra.mxu0 0.0
    %5684 = vmatprep.subr.mxu0 0.0
    %5685 = vmatpush1.msra.mxu0 0.0
    %5686 = vmatprep.subr.mxu0 0.0
    %5687 = vmatpush1.msra.mxu0 0.0
    %5688 = vmatprep.mubr.f32.mxu0 0.0
    %5689 = vmatmul.mubr.f32.gmra.mrb[0].mxu0 %v5611
    %v5690 = vpop.f32.mrb[0].mxu0
    %v5691 = vadd.f32 0.0, %v5690
    %v5692 = vpop.f32.mrb[0].mxu0
    %5693 = vmatprep.mubr.f32.mxu0 0.0
    %5694 = vmatmul.mubr.f32.gmra.mrb[0].mxu0 %v5614
    %v5695 = vpop.f32.mrb[0].mxu0
    %v5696 = vadd.f32 0.0, %v5695
    %v5697 = vpop.f32.mrb[0].mxu0
    %5698 = vmatprep.mubr.f32.mxu0 0.0
    %5699 = vmatmul.mubr.f32.gmra.mrb[0].mxu0 %v5617
    %v5700 = vpop.f32.mrb[0].mxu0
    %v5701 = vadd.f32 0.0, %v5700
    %v5702 = vpop.f32.mrb[0].mxu0
    %5703 = vmatprep.mubr.f32.mxu0 0.0
    %5704 = vmatmul.mubr.f32.gmra.mrb[0].mxu0 %v5620
    %v5705 = vpop.f32.mrb[0].mxu0
    %v5706 = vadd.f32 0.0, %v5705
    %v5707 = vpop.f32.mrb[0].mxu0
    %5708 = vdwg.mxu0
    %v5709 = vadd.f32 %v3640, %v4998
    %v5710 = vadd.f32 %v3641, %v5003
    %v5711 = vadd.f32 %v3642, %v5008
    %v5712 = vadd.f32 %v3643, %v5013
    %v5713 = vadd.f32 %v3644, %v5097
    %v5714 = vadd.f32 %v3645, %v5102
    %v5715 = vadd.f32 %v3646, %v5107
    %v5716 = vadd.f32 %v3647, %v5112
    %v5717 = vadd.f32 %v3648, %v5196
    %v5718 = vadd.f32 %v3649, %v5201
    %v5719 = vadd.f32 %v3650, %v5206
    %v5720 = vadd.f32 %v3651, %v5211
    %v5721 = vadd.f32 %v3652, %v5295
    %v5722 = vadd.f32 %v3653, %v5300
    %v5723 = vadd.f32 %v3654, %v5305
    %v5724 = vadd.f32 %v3655, %v5310
    %v5725 = vadd.f32 %v3656, %v5394
    %v5726 = vadd.f32 %v3657, %v5399
    %v5727 = vadd.f32 %v3658, %v5404
    %v5728 = vadd.f32 %v3659, %v5409
    %v5729 = vadd.f32 %v3660, %v5493
    %v5730 = vadd.f32 %v3661, %v5498
    %v5731 = vadd.f32 %v3662, %v5503
    %v5732 = vadd.f32 %v3663, %v5508
    %v5733 = vadd.f32 %v3664, %v5592
    %v5734 = vadd.f32 %v3665, %v5597
    %v5735 = vadd.f32 %v3666, %v5602
    %v5736 = vadd.f32 %v3667, %v5607
    %v5737 = vadd.f32 %v3668, %v5691
    %v5738 = vadd.f32 %v3669, %v5696
    %v5739 = vadd.f32 %v3670, %v5701
    %v5740 = vadd.f32 %v3671, %v5706
    %v5741 = vld [vmem:[%s11 + $0x100] sm:$0xff]
    %v5742 = vld [vmem:[%s11 + $0x108] sm:$0xff]
    %v5743 = vld [vmem:[%s11 + $0x110] sm:$0xff]
    %v5744 = vld [vmem:[%s11 + $0x118] sm:$0xff]
    %v5745 = vld [vmem:[%s6] sm:$0xff]
    %v5746 = vld [vmem:[%s11 + $0x120] sm:$0xff]
    %v5747 = vld [vmem:[%s11 + $0x128] sm:$0xff]
    %v5749 = vsel %vm213, %v5745, 0
    %5751 = vmatprep.subr.mxu0 0.0
    %5752 = vmatpush1.msra.mxu0 %v5746
    %5753 = vmatprep.subr.mxu0 0.0
    %5754 = vmatpush1.msra.mxu0 %v5747
    %5755 = vmatprep.subr.mxu0 0.0
    %5756 = vmatpush1.msra.mxu0 0.0
    %5757 = vmatprep.subr.mxu0 0.0
    %5758 = vmatpush1.msra.mxu0 0.0
    %5759 = vmatprep.subr.mxu0 0.0
    %5760 = vmatpush1.msra.mxu0 0.0
    %5761 = vmatprep.subr.mxu0 0.0
    %5762 = vmatpush1.msra.mxu0 0.0
    %5763 = vmatprep.subr.mxu0 0.0
    %5764 = vmatpush1.msra.mxu0 0.0
    %5765 = vmatprep.subr.mxu0 0.0
    %5766 = vmatpush1.msra.mxu0 0.0
    %5767 = vmatprep.subr.mxu0 0.0
    %5768 = vmatpush1.msra.mxu0 0.0
    %5769 = vmatprep.subr.mxu0 0.0
    %5770 = vmatpush1.msra.mxu0 0.0
    %5771 = vmatprep.subr.mxu0 0.0
    %5772 = vmatpush1.msra.mxu0 0.0
    %5773 = vmatprep.subr.mxu0 0.0
    %5774 = vmatpush1.msra.mxu0 0.0
    %5775 = vmatprep.subr.mxu0 0.0
    %5776 = vmatpush1.msra.mxu0 0.0
    %5777 = vmatprep.subr.mxu0 0.0
    %5778 = vmatpush1.msra.mxu0 0.0
    %5779 = vmatprep.subr.mxu0 0.0
    %5780 = vmatpush1.msra.mxu0 0.0
    %5781 = vmatprep.subr.mxu0 0.0
    %5782 = vmatpush1.msra.mxu0 0.0
    %5783 = vmatprep.subr.mxu0 0.0
    %5784 = vmatpush1.msra.mxu0 0.0
    %5785 = vmatprep.subr.mxu0 0.0
    %5786 = vmatpush1.msra.mxu0 0.0
    %5787 = vmatprep.subr.mxu0 0.0
    %5788 = vmatpush1.msra.mxu0 0.0
    %5789 = vmatprep.subr.mxu0 0.0
    %5790 = vmatpush1.msra.mxu0 0.0
    %5791 = vmatprep.subr.mxu0 0.0
    %5792 = vmatpush1.msra.mxu0 0.0
    %5793 = vmatprep.subr.mxu0 0.0
    %5794 = vmatpush1.msra.mxu0 0.0
    %5795 = vmatprep.subr.mxu0 0.0
    %5796 = vmatpush1.msra.mxu0 0.0
    %5797 = vmatprep.subr.mxu0 0.0
    %5798 = vmatpush1.msra.mxu0 0.0
    %5799 = vmatprep.subr.mxu0 0.0
    %5800 = vmatpush1.msra.mxu0 0.0
    %5801 = vmatprep.subr.mxu0 0.0
    %5802 = vmatpush1.msra.mxu0 0.0
    %5803 = vmatprep.subr.mxu0 0.0
    %5804 = vmatpush1.msra.mxu0 0.0
    %5805 = vmatprep.subr.mxu0 0.0
    %5806 = vmatpush1.msra.mxu0 0.0
    %5807 = vmatprep.subr.mxu0 0.0
    %5808 = vmatpush1.msra.mxu0 0.0
    %5809 = vmatprep.subr.mxu0 0.0
    %5810 = vmatpush1.msra.mxu0 0.0
    %5811 = vmatprep.subr.mxu0 0.0
    %5812 = vmatpush1.msra.mxu0 0.0
    %5813 = vmatprep.subr.mxu0 0.0
    %5814 = vmatpush1.msra.mxu0 0.0
    %5815 = vmatprep.mubr.f32.mxu0 0.0
    %5816 = vmatmul.mubr.f32.gmra.mrb[0].mxu0 %v5749
    %v5817 = vpop.f32.mrb[0].mxu0
    %v5818 = vadd.f32 0.0, %v5817
    %v5819 = vpop.f32.mrb[0].mxu0
    %5820 = vdwg.mxu0
    %v5822 = vcombine.high %v5818, %v5818
    %v5824 = vunpack.c.l.s4 1966171168
    %v5825 = vunpack.c.0.s8 %v5824
    %v5826 = vlaneseq
    %v5827 = vshrl.u32 %v5826, 7
    %v5828 = vsub.s32 %v5825, %v5827
    %v5829 = vrot.slane %v5818, %v5828
    %v5831 = vunpack.c.l.s4 1966171168
    %v5832 = vunpack.c.0.s8 %v5831
    %v5833 = vlaneseq
    %v5834 = vshrl.u32 %v5833, 7
    %v5835 = vsub.s32 %v5832, %v5834
    %v5836 = vrot.slane %v5822, %v5835
    %v5837 = vcombine.high %v5829, %v5829
    %v5838 = vcombine.high %v5836, %v5836
    %v5840 = vunpack.c.l.s4 1966171168
    %v5841 = vunpack.c.0.s8 %v5840
    %v5842 = vlaneseq
    %v5843 = vshrl.u32 %v5842, 7
    %v5844 = vsub.s32 %v5841, %v5843
    %v5845 = vrot.slane %v5829, %v5844
    %v5847 = vunpack.c.l.s4 1966171168
    %v5848 = vunpack.c.0.s8 %v5847
    %v5849 = vlaneseq
    %v5850 = vshrl.u32 %v5849, 7
    %v5851 = vsub.s32 %v5848, %v5850
    %v5852 = vrot.slane %v5836, %v5851
    %v5854 = vunpack.c.l.s4 1966171168
    %v5855 = vunpack.c.0.s8 %v5854
    %v5856 = vlaneseq
    %v5857 = vshrl.u32 %v5856, 7
    %v5858 = vsub.s32 %v5855, %v5857
    %v5859 = vrot.slane %v5837, %v5858
    %v5861 = vunpack.c.l.s4 1966171168
    %v5862 = vunpack.c.0.s8 %v5861
    %v5863 = vlaneseq
    %v5864 = vshrl.u32 %v5863, 7
    %v5865 = vsub.s32 %v5862, %v5864
    %v5866 = vrot.slane %v5838, %v5865
    %v5867 = vcombine.high %v5845, %v5845
    %v5868 = vcombine.high %v5852, %v5852
    %v5869 = vcombine.high %v5859, %v5859
    %v5870 = vcombine.high %v5866, %v5866
    %v5871 = vlaneseq
    %v5872 = vshrl.u32 %v5871, 7
    %v5873 = vsub.s32 0, %v5872
    %v5874 = vrot.slane %v5845, %v5873
    %v5875 = vlaneseq
    %v5876 = vshrl.u32 %v5875, 7
    %v5877 = vsub.s32 0, %v5876
    %v5878 = vrot.slane %v5859, %v5877
    %v5879 = vlaneseq
    %v5880 = vshrl.u32 %v5879, 7
    %v5881 = vsub.s32 0, %v5880
    %v5882 = vrot.slane %v5867, %v5881
    %v5883 = vlaneseq
    %v5884 = vshrl.u32 %v5883, 7
    %v5885 = vsub.s32 0, %v5884
    %v5886 = vrot.slane %v5869, %v5885
    %v5887 = vlaneseq
    %v5888 = vshrl.u32 %v5887, 7
    %v5889 = vsub.s32 0, %v5888
    %v5890 = vrot.slane %v5852, %v5889
    %v5891 = vlaneseq
    %v5892 = vshrl.u32 %v5891, 7
    %v5893 = vsub.s32 0, %v5892
    %v5894 = vrot.slane %v5866, %v5893
    %v5895 = vlaneseq
    %v5896 = vshrl.u32 %v5895, 7
    %v5897 = vsub.s32 0, %v5896
    %v5898 = vrot.slane %v5868, %v5897
    %v5899 = vlaneseq
    %v5900 = vshrl.u32 %v5899, 7
    %v5901 = vsub.s32 0, %v5900
    %v5902 = vrot.slane %v5870, %v5901
    %v5912 = vsel %vm349, %v5709, 0
    %v5915 = vsel %vm349, %v5710, 0
    %v5918 = vsel %vm349, %v5711, 0
    %v5921 = vsel %vm349, %v5712, 0
    %v5924 = vsel %vm349, %v5713, 0
    %v5927 = vsel %vm349, %v5714, 0
    %v5930 = vsel %vm349, %v5715, 0
    %v5933 = vsel %vm349, %v5716, 0
    %v5936 = vsel %vm349, %v5717, 0
    %v5939 = vsel %vm349, %v5718, 0
    %v5942 = vsel %vm349, %v5719, 0
    %v5945 = vsel %vm349, %v5720, 0
    %v5948 = vsel %vm349, %v5721, 0
    %v5951 = vsel %vm349, %v5722, 0
    %v5954 = vsel %vm349, %v5723, 0
    %v5957 = vsel %vm349, %v5724, 0
    %v5960 = vsel %vm349, %v5725, 0
    %v5963 = vsel %vm349, %v5726, 0
    %v5966 = vsel %vm349, %v5727, 0
    %v5969 = vsel %vm349, %v5728, 0
    %v5972 = vsel %vm349, %v5729, 0
    %v5975 = vsel %vm349, %v5730, 0
    %v5978 = vsel %vm349, %v5731, 0
    %v5981 = vsel %vm349, %v5732, 0
    %v5984 = vsel %vm349, %v5733, 0
    %v5987 = vsel %vm349, %v5734, 0
    %v5990 = vsel %vm349, %v5735, 0
    %v5993 = vsel %vm349, %v5736, 0
    %v5996 = vsel %vm349, %v5737, 0
    %v5999 = vsel %vm349, %v5738, 0
    %v6002 = vsel %vm349, %v5739, 0
    %v6005 = vsel %vm349, %v5740, 0
    %6007 = vmatprep.subr.mxu0 0.0
    %6008 = vmatpush1.msra.mxu0 %v5741
    %6009 = vmatprep.subr.mxu0 0.0
    %6010 = vmatpush1.msra.mxu0 %v5742
    %6011 = vmatprep.subr.mxu0 0.0
    %6012 = vmatpush1.msra.mxu0 %v5743
    %6013 = vmatprep.subr.mxu0 0.0
    %6014 = vmatpush1.msra.mxu0 %v5744
    %6015 = vmatprep.subr.mxu0 0.0
    %6016 = vmatpush1.msra.mxu0 0.0
    %6017 = vmatprep.subr.mxu0 0.0
    %6018 = vmatpush1.msra.mxu0 0.0
    %6019 = vmatprep.subr.mxu0 0.0
    %6020 = vmatpush1.msra.mxu0 0.0
    %6021 = vmatprep.subr.mxu0 0.0
    %6022 = vmatpush1.msra.mxu0 0.0
    %6023 = vmatprep.subr.mxu0 0.0
    %6024 = vmatpush1.msra.mxu0 0.0
    %6025 = vmatprep.subr.mxu0 0.0
    %6026 = vmatpush1.msra.mxu0 0.0
    %6027 = vmatprep.subr.mxu0 0.0
    %6028 = vmatpush1.msra.mxu0 0.0
    %6029 = vmatprep.subr.mxu0 0.0
    %6030 = vmatpush1.msra.mxu0 0.0
    %6031 = vmatprep.subr.mxu0 0.0
    %6032 = vmatpush1.msra.mxu0 0.0
    %6033 = vmatprep.subr.mxu0 0.0
    %6034 = vmatpush1.msra.mxu0 0.0
    %6035 = vmatprep.subr.mxu0 0.0
    %6036 = vmatpush1.msra.mxu0 0.0
    %6037 = vmatprep.subr.mxu0 0.0
    %6038 = vmatpush1.msra.mxu0 0.0
    %6039 = vmatprep.subr.mxu0 0.0
    %6040 = vmatpush1.msra.mxu0 0.0
    %6041 = vmatprep.subr.mxu0 0.0
    %6042 = vmatpush1.msra.mxu0 0.0
    %6043 = vmatprep.subr.mxu0 0.0
    %6044 = vmatpush1.msra.mxu0 0.0
    %6045 = vmatprep.subr.mxu0 0.0
    %6046 = vmatpush1.msra.mxu0 0.0
    %6047 = vmatprep.subr.mxu0 0.0
    %6048 = vmatpush1.msra.mxu0 0.0
    %6049 = vmatprep.subr.mxu0 0.0
    %6050 = vmatpush1.msra.mxu0 0.0
    %6051 = vmatprep.subr.mxu0 0.0
    %6052 = vmatpush1.msra.mxu0 0.0
    %6053 = vmatprep.subr.mxu0 0.0
    %6054 = vmatpush1.msra.mxu0 0.0
    %6055 = vmatprep.subr.mxu0 0.0
    %6056 = vmatpush1.msra.mxu0 0.0
    %6057 = vmatprep.subr.mxu0 0.0
    %6058 = vmatpush1.msra.mxu0 0.0
    %6059 = vmatprep.subr.mxu0 0.0
    %6060 = vmatpush1.msra.mxu0 0.0
    %6061 = vmatprep.subr.mxu0 0.0
    %6062 = vmatpush1.msra.mxu0 0.0
    %6063 = vmatprep.subr.mxu0 0.0
    %6064 = vmatpush1.msra.mxu0 0.0
    %6065 = vmatprep.subr.mxu0 0.0
    %6066 = vmatpush1.msra.mxu0 0.0
    %6067 = vmatprep.subr.mxu0 0.0
    %6068 = vmatpush1.msra.mxu0 0.0
    %6069 = vmatprep.subr.mxu0 0.0
    %6070 = vmatpush1.msra.mxu0 0.0
    %6071 = vmatprep.mubr.f32.mxu0 0.0
    %6072 = vmatmul.mubr.f32.gmra.mrb[0].mxu0 %v5912
    %v6073 = vpop.f32.mrb[0].mxu0
    %v6074 = vadd.f32 %v5874, %v6073
    %v6075 = vpop.f32.mrb[0].mxu0
    %6076 = vmatprep.mubr.f32.mxu0 0.0
    %6077 = vmatmul.mubr.f32.gmra.mrb[0].mxu0 %v5915
    %v6078 = vpop.f32.mrb[0].mxu0
    %v6079 = vadd.f32 %v5874, %v6078
    %v6080 = vpop.f32.mrb[0].mxu0
    %6081 = vmatprep.mubr.f32.mxu0 0.0
    %6082 = vmatmul.mubr.f32.gmra.mrb[0].mxu0 %v5918
    %v6083 = vpop.f32.mrb[0].mxu0
    %v6084 = vadd.f32 %v5874, %v6083
    %v6085 = vpop.f32.mrb[0].mxu0
    %6086 = vmatprep.mubr.f32.mxu0 0.0
    %6087 = vmatmul.mubr.f32.gmra.mrb[0].mxu0 %v5921
    %v6088 = vpop.f32.mrb[0].mxu0
    %v6089 = vadd.f32 %v5874, %v6088
    %v6090 = vpop.f32.mrb[0].mxu0
    %6091 = vmatprep.mubr.f32.mxu0 0.0
    %6092 = vmatmul.mubr.f32.gmra.mrb[0].mxu0 %v5924
    %v6093 = vpop.f32.mrb[0].mxu0
    %v6094 = vadd.f32 %v5878, %v6093
    %v6095 = vpop.f32.mrb[0].mxu0
    %6096 = vmatprep.mubr.f32.mxu0 0.0
    %6097 = vmatmul.mubr.f32.gmra.mrb[0].mxu0 %v5927
    %v6098 = vpop.f32.mrb[0].mxu0
    %v6099 = vadd.f32 %v5878, %v6098
    %v6100 = vpop.f32.mrb[0].mxu0
    %6101 = vmatprep.mubr.f32.mxu0 0.0
    %6102 = vmatmul.mubr.f32.gmra.mrb[0].mxu0 %v5930
    %v6103 = vpop.f32.mrb[0].mxu0
    %v6104 = vadd.f32 %v5878, %v6103
    %v6105 = vpop.f32.mrb[0].mxu0
    %6106 = vmatprep.mubr.f32.mxu0 0.0
    %6107 = vmatmul.mubr.f32.gmra.mrb[0].mxu0 %v5933
    %v6108 = vpop.f32.mrb[0].mxu0
    %v6109 = vadd.f32 %v5878, %v6108
    %v6110 = vpop.f32.mrb[0].mxu0
    %6111 = vmatprep.mubr.f32.mxu0 0.0
    %6112 = vmatmul.mubr.f32.gmra.mrb[0].mxu0 %v5936
    %v6113 = vpop.f32.mrb[0].mxu0
    %v6114 = vadd.f32 %v5882, %v6113
    %v6115 = vpop.f32.mrb[0].mxu0
    %6116 = vmatprep.mubr.f32.mxu0 0.0
    %6117 = vmatmul.mubr.f32.gmra.mrb[0].mxu0 %v5939
    %v6118 = vpop.f32.mrb[0].mxu0
    %v6119 = vadd.f32 %v5882, %v6118
    %v6120 = vpop.f32.mrb[0].mxu0
    %6121 = vmatprep.mubr.f32.mxu0 0.0
    %6122 = vmatmul.mubr.f32.gmra.mrb[0].mxu0 %v5942
    %v6123 = vpop.f32.mrb[0].mxu0
    %v6124 = vadd.f32 %v5882, %v6123
    %v6125 = vpop.f32.mrb[0].mxu0
    %6126 = vmatprep.mubr.f32.mxu0 0.0
    %6127 = vmatmul.mubr.f32.gmra.mrb[0].mxu0 %v5945
    %v6128 = vpop.f32.mrb[0].mxu0
    %v6129 = vadd.f32 %v5882, %v6128
    %v6130 = vpop.f32.mrb[0].mxu0
    %6131 = vmatprep.mubr.f32.mxu0 0.0
    %6132 = vmatmul.mubr.f32.gmra.mrb[0].mxu0 %v5948
    %v6133 = vpop.f32.mrb[0].mxu0
    %v6134 = vadd.f32 %v5886, %v6133
    %v6135 = vpop.f32.mrb[0].mxu0
    %6136 = vmatprep.mubr.f32.mxu0 0.0
    %6137 = vmatmul.mubr.f32.gmra.mrb[0].mxu0 %v5951
    %v6138 = vpop.f32.mrb[0].mxu0
    %v6139 = vadd.f32 %v5886, %v6138
    %v6140 = vpop.f32.mrb[0].mxu0
    %6141 = vmatprep.mubr.f32.mxu0 0.0
    %6142 = vmatmul.mubr.f32.gmra.mrb[0].mxu0 %v5954
    %v6143 = vpop.f32.mrb[0].mxu0
    %v6144 = vadd.f32 %v5886, %v6143
    %v6145 = vpop.f32.mrb[0].mxu0
    %6146 = vmatprep.mubr.f32.mxu0 0.0
    %6147 = vmatmul.mubr.f32.gmra.mrb[0].mxu0 %v5957
    %v6148 = vpop.f32.mrb[0].mxu0
    %v6149 = vadd.f32 %v5886, %v6148
    %v6150 = vpop.f32.mrb[0].mxu0
    %6151 = vmatprep.mubr.f32.mxu0 0.0
    %6152 = vmatmul.mubr.f32.gmra.mrb[0].mxu0 %v5960
    %v6153 = vpop.f32.mrb[0].mxu0
    %v6154 = vadd.f32 %v5890, %v6153
    %v6155 = vpop.f32.mrb[0].mxu0
    %6156 = vmatprep.mubr.f32.mxu0 0.0
    %6157 = vmatmul.mubr.f32.gmra.mrb[0].mxu0 %v5963
    %v6158 = vpop.f32.mrb[0].mxu0
    %v6159 = vadd.f32 %v5890, %v6158
    %v6160 = vpop.f32.mrb[0].mxu0
    %6161 = vmatprep.mubr.f32.mxu0 0.0
    %6162 = vmatmul.mubr.f32.gmra.mrb[0].mxu0 %v5966
    %v6163 = vpop.f32.mrb[0].mxu0
    %v6164 = vadd.f32 %v5890, %v6163
    %v6165 = vpop.f32.mrb[0].mxu0
    %6166 = vmatprep.mubr.f32.mxu0 0.0
    %6167 = vmatmul.mubr.f32.gmra.mrb[0].mxu0 %v5969
    %v6168 = vpop.f32.mrb[0].mxu0
    %v6169 = vadd.f32 %v5890, %v6168
    %v6170 = vpop.f32.mrb[0].mxu0
    %6171 = vmatprep.mubr.f32.mxu0 0.0
    %6172 = vmatmul.mubr.f32.gmra.mrb[0].mxu0 %v5972
    %v6173 = vpop.f32.mrb[0].mxu0
    %v6174 = vadd.f32 %v5894, %v6173
    %v6175 = vpop.f32.mrb[0].mxu0
    %6176 = vmatprep.mubr.f32.mxu0 0.0
    %6177 = vmatmul.mubr.f32.gmra.mrb[0].mxu0 %v5975
    %v6178 = vpop.f32.mrb[0].mxu0
    %v6179 = vadd.f32 %v5894, %v6178
    %v6180 = vpop.f32.mrb[0].mxu0
    %6181 = vmatprep.mubr.f32.mxu0 0.0
    %6182 = vmatmul.mubr.f32.gmra.mrb[0].mxu0 %v5978
    %v6183 = vpop.f32.mrb[0].mxu0
    %v6184 = vadd.f32 %v5894, %v6183
    %v6185 = vpop.f32.mrb[0].mxu0
    %6186 = vmatprep.mubr.f32.mxu0 0.0
    %6187 = vmatmul.mubr.f32.gmra.mrb[0].mxu0 %v5981
    %v6188 = vpop.f32.mrb[0].mxu0
    %v6189 = vadd.f32 %v5894, %v6188
    %v6190 = vpop.f32.mrb[0].mxu0
    %6191 = vmatprep.mubr.f32.mxu0 0.0
    %6192 = vmatmul.mubr.f32.gmra.mrb[0].mxu0 %v5984
    %v6193 = vpop.f32.mrb[0].mxu0
    %v6194 = vadd.f32 %v5898, %v6193
    %v6195 = vpop.f32.mrb[0].mxu0
    %6196 = vmatprep.mubr.f32.mxu0 0.0
    %6197 = vmatmul.mubr.f32.gmra.mrb[0].mxu0 %v5987
    %v6198 = vpop.f32.mrb[0].mxu0
    %v6199 = vadd.f32 %v5898, %v6198
    %v6200 = vpop.f32.mrb[0].mxu0
    %6201 = vmatprep.mubr.f32.mxu0 0.0
    %6202 = vmatmul.mubr.f32.gmra.mrb[0].mxu0 %v5990
    %v6203 = vpop.f32.mrb[0].mxu0
    %v6204 = vadd.f32 %v5898, %v6203
    %v6205 = vpop.f32.mrb[0].mxu0
    %6206 = vmatprep.mubr.f32.mxu0 0.0
    %6207 = vmatmul.mubr.f32.gmra.mrb[0].mxu0 %v5993
    %v6208 = vpop.f32.mrb[0].mxu0
    %v6209 = vadd.f32 %v5898, %v6208
    %v6210 = vpop.f32.mrb[0].mxu0
    %6211 = vmatprep.mubr.f32.mxu0 0.0
    %6212 = vmatmul.mubr.f32.gmra.mrb[0].mxu0 %v5996
    %v6213 = vpop.f32.mrb[0].mxu0
    %v6214 = vadd.f32 %v5902, %v6213
    %v6215 = vpop.f32.mrb[0].mxu0
    %6216 = vmatprep.mubr.f32.mxu0 0.0
    %6217 = vmatmul.mubr.f32.gmra.mrb[0].mxu0 %v5999
    %v6218 = vpop.f32.mrb[0].mxu0
    %v6219 = vadd.f32 %v5902, %v6218
    %v6220 = vpop.f32.mrb[0].mxu0
    %6221 = vmatprep.mubr.f32.mxu0 0.0
    %6222 = vmatmul.mubr.f32.gmra.mrb[0].mxu0 %v6002
    %v6223 = vpop.f32.mrb[0].mxu0
    %v6224 = vadd.f32 %v5902, %v6223
    %v6225 = vpop.f32.mrb[0].mxu0
    %6226 = vmatprep.mubr.f32.mxu0 0.0
    %6227 = vmatmul.mubr.f32.gmra.mrb[0].mxu0 %v6005
    %v6228 = vpop.f32.mrb[0].mxu0
    %v6229 = vadd.f32 %v5902, %v6228
    %v6230 = vpop.f32.mrb[0].mxu0
    %6231 = vdwg.mxu0
    %v6232 = vld [vmem:[%s11 + $0x130] sm:$0x1]
    %v6233 = vlaneseq
    %v6234 = vshrl.u32 %v6233, 7
    %v6235 = vsub.s32 0, %v6234
    %v6236 = vrot.slane %v6232, %v6235
    %v6237 = vadd.f32 %v6074, %v6236
    %v6238 = vadd.f32 %v6079, %v6236
    %v6239 = vadd.f32 %v6084, %v6236
    %v6240 = vadd.f32 %v6089, %v6236
    %v6241 = vadd.f32 %v6094, %v6236
    %v6242 = vadd.f32 %v6099, %v6236
    %v6243 = vadd.f32 %v6104, %v6236
    %v6244 = vadd.f32 %v6109, %v6236
    %v6245 = vadd.f32 %v6114, %v6236
    %v6246 = vadd.f32 %v6119, %v6236
    %v6247 = vadd.f32 %v6124, %v6236
    %v6248 = vadd.f32 %v6129, %v6236
    %v6249 = vadd.f32 %v6134, %v6236
    %v6250 = vadd.f32 %v6139, %v6236
    %v6251 = vadd.f32 %v6144, %v6236
    %v6252 = vadd.f32 %v6149, %v6236
    %v6253 = vadd.f32 %v6154, %v6236
    %v6254 = vadd.f32 %v6159, %v6236
    %v6255 = vadd.f32 %v6164, %v6236
    %v6256 = vadd.f32 %v6169, %v6236
    %v6257 = vadd.f32 %v6174, %v6236
    %v6258 = vadd.f32 %v6179, %v6236
    %v6259 = vadd.f32 %v6184, %v6236
    %v6260 = vadd.f32 %v6189, %v6236
    %v6261 = vadd.f32 %v6194, %v6236
    %v6262 = vadd.f32 %v6199, %v6236
    %v6263 = vadd.f32 %v6204, %v6236
    %v6264 = vadd.f32 %v6209, %v6236
    %v6265 = vadd.f32 %v6214, %v6236
    %v6266 = vadd.f32 %v6219, %v6236
    %v6267 = vadd.f32 %v6224, %v6236
    %v6268 = vadd.f32 %v6229, %v6236
    %v6269 = vmax.f32 %v6237, 0.0
    %v6270 = vmax.f32 %v6238, 0.0
    %v6271 = vmax.f32 %v6239, 0.0
    %v6272 = vmax.f32 %v6240, 0.0
    %v6273 = vmax.f32 %v6241, 0.0
    %v6274 = vmax.f32 %v6242, 0.0
    %v6275 = vmax.f32 %v6243, 0.0
    %v6276 = vmax.f32 %v6244, 0.0
    %v6277 = vmax.f32 %v6245, 0.0
    %v6278 = vmax.f32 %v6246, 0.0
    %v6279 = vmax.f32 %v6247, 0.0
    %v6280 = vmax.f32 %v6248, 0.0
    %v6281 = vmax.f32 %v6249, 0.0
    %v6282 = vmax.f32 %v6250, 0.0
    %v6283 = vmax.f32 %v6251, 0.0
    %v6284 = vmax.f32 %v6252, 0.0
    %v6285 = vmax.f32 %v6253, 0.0
    %v6286 = vmax.f32 %v6254, 0.0
    %v6287 = vmax.f32 %v6255, 0.0
    %v6288 = vmax.f32 %v6256, 0.0
    %v6289 = vmax.f32 %v6257, 0.0
    %v6290 = vmax.f32 %v6258, 0.0
    %v6291 = vmax.f32 %v6259, 0.0
    %v6292 = vmax.f32 %v6260, 0.0
    %v6293 = vmax.f32 %v6261, 0.0
    %v6294 = vmax.f32 %v6262, 0.0
    %v6295 = vmax.f32 %v6263, 0.0
    %v6296 = vmax.f32 %v6264, 0.0
    %v6297 = vmax.f32 %v6265, 0.0
    %v6298 = vmax.f32 %v6266, 0.0
    %v6299 = vmax.f32 %v6267, 0.0
    %v6300 = vmax.f32 %v6268, 0.0
    %v6301 = vld [vmem:[%s11 + $0x138] sm:$0xff]
    %v6302 = vld [vmem:[%s11 + $0x140] sm:$0xff]
    %v6303 = vld [vmem:[%s11 + $0x148] sm:$0xff]
    %v6304 = vld [vmem:[%s11 + $0x150] sm:$0xff]
    %v6305 = vld [vmem:[%s11 + $0x158] sm:$0x1]
    %v6306 = vlaneseq
    %v6307 = vshrl.u32 %v6306, 7
    %v6308 = vsub.s32 0, %v6307
    %v6309 = vrot.slane %v6305, %v6308
    %v6311 = vsel %vm349, %v6269, 0
    %v6314 = vsel %vm349, %v6270, 0
    %v6317 = vsel %vm349, %v6271, 0
    %v6320 = vsel %vm349, %v6272, 0
    %v6323 = vsel %vm349, %v6273, 0
    %v6326 = vsel %vm349, %v6274, 0
    %v6329 = vsel %vm349, %v6275, 0
    %v6332 = vsel %vm349, %v6276, 0
    %v6335 = vsel %vm349, %v6277, 0
    %v6338 = vsel %vm349, %v6278, 0
    %v6341 = vsel %vm349, %v6279, 0
    %v6344 = vsel %vm349, %v6280, 0
    %v6347 = vsel %vm349, %v6281, 0
    %v6350 = vsel %vm349, %v6282, 0
    %v6353 = vsel %vm349, %v6283, 0
    %v6356 = vsel %vm349, %v6284, 0
    %v6359 = vsel %vm349, %v6285, 0
    %v6362 = vsel %vm349, %v6286, 0
    %v6365 = vsel %vm349, %v6287, 0
    %v6368 = vsel %vm349, %v6288, 0
    %v6371 = vsel %vm349, %v6289, 0
    %v6374 = vsel %vm349, %v6290, 0
    %v6377 = vsel %vm349, %v6291, 0
    %v6380 = vsel %vm349, %v6292, 0
    %v6383 = vsel %vm349, %v6293, 0
    %v6386 = vsel %vm349, %v6294, 0
    %v6389 = vsel %vm349, %v6295, 0
    %v6392 = vsel %vm349, %v6296, 0
    %v6395 = vsel %vm349, %v6297, 0
    %v6398 = vsel %vm349, %v6298, 0
    %v6401 = vsel %vm349, %v6299, 0
    %v6404 = vsel %vm349, %v6300, 0
    %6406 = vmatprep.subr.mxu0 0.0
    %6407 = vmatpush1.msra.mxu0 %v6301
    %6408 = vmatprep.subr.mxu0 0.0
    %6409 = vmatpush1.msra.mxu0 %v6302
    %6410 = vmatprep.subr.mxu0 0.0
    %6411 = vmatpush1.msra.mxu0 %v6303
    %6412 = vmatprep.subr.mxu0 0.0
    %6413 = vmatpush1.msra.mxu0 %v6304
    %6414 = vmatprep.subr.mxu0 0.0
    %6415 = vmatpush1.msra.mxu0 0.0
    %6416 = vmatprep.subr.mxu0 0.0
    %6417 = vmatpush1.msra.mxu0 0.0
    %6418 = vmatprep.subr.mxu0 0.0
    %6419 = vmatpush1.msra.mxu0 0.0
    %6420 = vmatprep.subr.mxu0 0.0
    %6421 = vmatpush1.msra.mxu0 0.0
    %6422 = vmatprep.subr.mxu0 0.0
    %6423 = vmatpush1.msra.mxu0 0.0
    %6424 = vmatprep.subr.mxu0 0.0
    %6425 = vmatpush1.msra.mxu0 0.0
    %6426 = vmatprep.subr.mxu0 0.0
    %6427 = vmatpush1.msra.mxu0 0.0
    %6428 = vmatprep.subr.mxu0 0.0
    %6429 = vmatpush1.msra.mxu0 0.0
    %6430 = vmatprep.subr.mxu0 0.0
    %6431 = vmatpush1.msra.mxu0 0.0
    %6432 = vmatprep.subr.mxu0 0.0
    %6433 = vmatpush1.msra.mxu0 0.0
    %6434 = vmatprep.subr.mxu0 0.0
    %6435 = vmatpush1.msra.mxu0 0.0
    %6436 = vmatprep.subr.mxu0 0.0
    %6437 = vmatpush1.msra.mxu0 0.0
    %6438 = vmatprep.subr.mxu0 0.0
    %6439 = vmatpush1.msra.mxu0 0.0
    %6440 = vmatprep.subr.mxu0 0.0
    %6441 = vmatpush1.msra.mxu0 0.0
    %6442 = vmatprep.subr.mxu0 0.0
    %6443 = vmatpush1.msra.mxu0 0.0
    %6444 = vmatprep.subr.mxu0 0.0
    %6445 = vmatpush1.msra.mxu0 0.0
    %6446 = vmatprep.subr.mxu0 0.0
    %6447 = vmatpush1.msra.mxu0 0.0
    %6448 = vmatprep.subr.mxu0 0.0
    %6449 = vmatpush1.msra.mxu0 0.0
    %6450 = vmatprep.subr.mxu0 0.0
    %6451 = vmatpush1.msra.mxu0 0.0
    %6452 = vmatprep.subr.mxu0 0.0
    %6453 = vmatpush1.msra.mxu0 0.0
    %6454 = vmatprep.subr.mxu0 0.0
    %6455 = vmatpush1.msra.mxu0 0.0
    %6456 = vmatprep.subr.mxu0 0.0
    %6457 = vmatpush1.msra.mxu0 0.0
    %6458 = vmatprep.subr.mxu0 0.0
    %6459 = vmatpush1.msra.mxu0 0.0
    %6460 = vmatprep.subr.mxu0 0.0
    %6461 = vmatpush1.msra.mxu0 0.0
    %6462 = vmatprep.subr.mxu0 0.0
    %6463 = vmatpush1.msra.mxu0 0.0
    %6464 = vmatprep.subr.mxu0 0.0
    %6465 = vmatpush1.msra.mxu0 0.0
    %6466 = vmatprep.subr.mxu0 0.0
    %6467 = vmatpush1.msra.mxu0 0.0
    %6468 = vmatprep.subr.mxu0 0.0
    %6469 = vmatpush1.msra.mxu0 0.0
    %6470 = vmatprep.mubr.f32.mxu0 0.0
    %6471 = vmatmul.mubr.f32.gmra.mrb[0].mxu0 %v6311
    %v6472 = vpop.f32.mrb[0].mxu0
    %v6473 = vadd.f32 %v6309, %v6472
    %v6474 = vpop.f32.mrb[0].mxu0
    %6475 = vmatprep.mubr.f32.mxu0 0.0
    %6476 = vmatmul.mubr.f32.gmra.mrb[0].mxu0 %v6314
    %v6477 = vpop.f32.mrb[0].mxu0
    %v6478 = vadd.f32 %v6309, %v6477
    %v6479 = vpop.f32.mrb[0].mxu0
    %6480 = vmatprep.mubr.f32.mxu0 0.0
    %6481 = vmatmul.mubr.f32.gmra.mrb[0].mxu0 %v6317
    %v6482 = vpop.f32.mrb[0].mxu0
    %v6483 = vadd.f32 %v6309, %v6482
    %v6484 = vpop.f32.mrb[0].mxu0
    %6485 = vmatprep.mubr.f32.mxu0 0.0
    %6486 = vmatmul.mubr.f32.gmra.mrb[0].mxu0 %v6320
    %v6487 = vpop.f32.mrb[0].mxu0
    %v6488 = vadd.f32 %v6309, %v6487
    %v6489 = vpop.f32.mrb[0].mxu0
    %6490 = vmatprep.mubr.f32.mxu0 0.0
    %6491 = vmatmul.mubr.f32.gmra.mrb[0].mxu0 %v6323
    %v6492 = vpop.f32.mrb[0].mxu0
    %v6493 = vadd.f32 %v6309, %v6492
    %v6494 = vpop.f32.mrb[0].mxu0
    %6495 = vmatprep.mubr.f32.mxu0 0.0
    %6496 = vmatmul.mubr.f32.gmra.mrb[0].mxu0 %v6326
    %v6497 = vpop.f32.mrb[0].mxu0
    %v6498 = vadd.f32 %v6309, %v6497
    %v6499 = vpop.f32.mrb[0].mxu0
    %6500 = vmatprep.mubr.f32.mxu0 0.0
    %6501 = vmatmul.mubr.f32.gmra.mrb[0].mxu0 %v6329
    %v6502 = vpop.f32.mrb[0].mxu0
    %v6503 = vadd.f32 %v6309, %v6502
    %v6504 = vpop.f32.mrb[0].mxu0
    %6505 = vmatprep.mubr.f32.mxu0 0.0
    %6506 = vmatmul.mubr.f32.gmra.mrb[0].mxu0 %v6332
    %v6507 = vpop.f32.mrb[0].mxu0
    %v6508 = vadd.f32 %v6309, %v6507
    %v6509 = vpop.f32.mrb[0].mxu0
    %6510 = vmatprep.mubr.f32.mxu0 0.0
    %6511 = vmatmul.mubr.f32.gmra.mrb[0].mxu0 %v6335
    %v6512 = vpop.f32.mrb[0].mxu0
    %v6513 = vadd.f32 %v6309, %v6512
    %v6514 = vpop.f32.mrb[0].mxu0
    %6515 = vmatprep.mubr.f32.mxu0 0.0
    %6516 = vmatmul.mubr.f32.gmra.mrb[0].mxu0 %v6338
    %v6517 = vpop.f32.mrb[0].mxu0
    %v6518 = vadd.f32 %v6309, %v6517
    %v6519 = vpop.f32.mrb[0].mxu0
    %6520 = vmatprep.mubr.f32.mxu0 0.0
    %6521 = vmatmul.mubr.f32.gmra.mrb[0].mxu0 %v6341
    %v6522 = vpop.f32.mrb[0].mxu0
    %v6523 = vadd.f32 %v6309, %v6522
    %v6524 = vpop.f32.mrb[0].mxu0
    %6525 = vmatprep.mubr.f32.mxu0 0.0
    %6526 = vmatmul.mubr.f32.gmra.mrb[0].mxu0 %v6344
    %v6527 = vpop.f32.mrb[0].mxu0
    %v6528 = vadd.f32 %v6309, %v6527
    %v6529 = vpop.f32.mrb[0].mxu0
    %6530 = vmatprep.mubr.f32.mxu0 0.0
    %6531 = vmatmul.mubr.f32.gmra.mrb[0].mxu0 %v6347
    %v6532 = vpop.f32.mrb[0].mxu0
    %v6533 = vadd.f32 %v6309, %v6532
    %v6534 = vpop.f32.mrb[0].mxu0
    %6535 = vmatprep.mubr.f32.mxu0 0.0
    %6536 = vmatmul.mubr.f32.gmra.mrb[0].mxu0 %v6350
    %v6537 = vpop.f32.mrb[0].mxu0
    %v6538 = vadd.f32 %v6309, %v6537
    %v6539 = vpop.f32.mrb[0].mxu0
    %6540 = vmatprep.mubr.f32.mxu0 0.0
    %6541 = vmatmul.mubr.f32.gmra.mrb[0].mxu0 %v6353
    %v6542 = vpop.f32.mrb[0].mxu0
    %v6543 = vadd.f32 %v6309, %v6542
    %v6544 = vpop.f32.mrb[0].mxu0
    %6545 = vmatprep.mubr.f32.mxu0 0.0
    %6546 = vmatmul.mubr.f32.gmra.mrb[0].mxu0 %v6356
    %v6547 = vpop.f32.mrb[0].mxu0
    %v6548 = vadd.f32 %v6309, %v6547
    %v6549 = vpop.f32.mrb[0].mxu0
    %6550 = vmatprep.mubr.f32.mxu0 0.0
    %6551 = vmatmul.mubr.f32.gmra.mrb[0].mxu0 %v6359
    %v6552 = vpop.f32.mrb[0].mxu0
    %v6553 = vadd.f32 %v6309, %v6552
    %v6554 = vpop.f32.mrb[0].mxu0
    %6555 = vmatprep.mubr.f32.mxu0 0.0
    %6556 = vmatmul.mubr.f32.gmra.mrb[0].mxu0 %v6362
    %v6557 = vpop.f32.mrb[0].mxu0
    %v6558 = vadd.f32 %v6309, %v6557
    %v6559 = vpop.f32.mrb[0].mxu0
    %6560 = vmatprep.mubr.f32.mxu0 0.0
    %6561 = vmatmul.mubr.f32.gmra.mrb[0].mxu0 %v6365
    %v6562 = vpop.f32.mrb[0].mxu0
    %v6563 = vadd.f32 %v6309, %v6562
    %v6564 = vpop.f32.mrb[0].mxu0
    %6565 = vmatprep.mubr.f32.mxu0 0.0
    %6566 = vmatmul.mubr.f32.gmra.mrb[0].mxu0 %v6368
    %v6567 = vpop.f32.mrb[0].mxu0
    %v6568 = vadd.f32 %v6309, %v6567
    %v6569 = vpop.f32.mrb[0].mxu0
    %6570 = vmatprep.mubr.f32.mxu0 0.0
    %6571 = vmatmul.mubr.f32.gmra.mrb[0].mxu0 %v6371
    %v6572 = vpop.f32.mrb[0].mxu0
    %v6573 = vadd.f32 %v6309, %v6572
    %v6574 = vpop.f32.mrb[0].mxu0
    %6575 = vmatprep.mubr.f32.mxu0 0.0
    %6576 = vmatmul.mubr.f32.gmra.mrb[0].mxu0 %v6374
    %v6577 = vpop.f32.mrb[0].mxu0
    %v6578 = vadd.f32 %v6309, %v6577
    %v6579 = vpop.f32.mrb[0].mxu0
    %6580 = vmatprep.mubr.f32.mxu0 0.0
    %6581 = vmatmul.mubr.f32.gmra.mrb[0].mxu0 %v6377
    %v6582 = vpop.f32.mrb[0].mxu0
    %v6583 = vadd.f32 %v6309, %v6582
    %v6584 = vpop.f32.mrb[0].mxu0
    %6585 = vmatprep.mubr.f32.mxu0 0.0
    %6586 = vmatmul.mubr.f32.gmra.mrb[0].mxu0 %v6380
    %v6587 = vpop.f32.mrb[0].mxu0
    %v6588 = vadd.f32 %v6309, %v6587
    %v6589 = vpop.f32.mrb[0].mxu0
    %6590 = vmatprep.mubr.f32.mxu0 0.0
    %6591 = vmatmul.mubr.f32.gmra.mrb[0].mxu0 %v6383
    %v6592 = vpop.f32.mrb[0].mxu0
    %v6593 = vadd.f32 %v6309, %v6592
    %v6594 = vpop.f32.mrb[0].mxu0
    %6595 = vmatprep.mubr.f32.mxu0 0.0
    %6596 = vmatmul.mubr.f32.gmra.mrb[0].mxu0 %v6386
    %v6597 = vpop.f32.mrb[0].mxu0
    %v6598 = vadd.f32 %v6309, %v6597
    %v6599 = vpop.f32.mrb[0].mxu0
    %6600 = vmatprep.mubr.f32.mxu0 0.0
    %6601 = vmatmul.mubr.f32.gmra.mrb[0].mxu0 %v6389
    %v6602 = vpop.f32.mrb[0].mxu0
    %v6603 = vadd.f32 %v6309, %v6602
    %v6604 = vpop.f32.mrb[0].mxu0
    %6605 = vmatprep.mubr.f32.mxu0 0.0
    %6606 = vmatmul.mubr.f32.gmra.mrb[0].mxu0 %v6392
    %v6607 = vpop.f32.mrb[0].mxu0
    %v6608 = vadd.f32 %v6309, %v6607
    %v6609 = vpop.f32.mrb[0].mxu0
    %6610 = vmatprep.mubr.f32.mxu0 0.0
    %6611 = vmatmul.mubr.f32.gmra.mrb[0].mxu0 %v6395
    %v6612 = vpop.f32.mrb[0].mxu0
    %v6613 = vadd.f32 %v6309, %v6612
    %v6614 = vpop.f32.mrb[0].mxu0
    %6615 = vmatprep.mubr.f32.mxu0 0.0
    %6616 = vmatmul.mubr.f32.gmra.mrb[0].mxu0 %v6398
    %v6617 = vpop.f32.mrb[0].mxu0
    %v6618 = vadd.f32 %v6309, %v6617
    %v6619 = vpop.f32.mrb[0].mxu0
    %6620 = vmatprep.mubr.f32.mxu0 0.0
    %6621 = vmatmul.mubr.f32.gmra.mrb[0].mxu0 %v6401
    %v6622 = vpop.f32.mrb[0].mxu0
    %v6623 = vadd.f32 %v6309, %v6622
    %v6624 = vpop.f32.mrb[0].mxu0
    %6625 = vmatprep.mubr.f32.mxu0 0.0
    %6626 = vmatmul.mubr.f32.gmra.mrb[0].mxu0 %v6404
    %v6627 = vpop.f32.mrb[0].mxu0
    %v6628 = vadd.f32 %v6309, %v6627
    %v6629 = vpop.f32.mrb[0].mxu0
    %6630 = vdwg.mxu0
    %v6631 = vxor.u32 %v6473, 2147483648
    %v6632 = vxor.u32 %v6478, 2147483648
    %v6633 = vxor.u32 %v6483, 2147483648
    %v6634 = vxor.u32 %v6488, 2147483648
    %v6635 = vxor.u32 %v6493, 2147483648
    %v6636 = vxor.u32 %v6498, 2147483648
    %v6637 = vxor.u32 %v6503, 2147483648
    %v6638 = vxor.u32 %v6508, 2147483648
    %v6639 = vxor.u32 %v6513, 2147483648
    %v6640 = vxor.u32 %v6518, 2147483648
    %v6641 = vxor.u32 %v6523, 2147483648
    %v6642 = vxor.u32 %v6528, 2147483648
    %v6643 = vxor.u32 %v6533, 2147483648
    %v6644 = vxor.u32 %v6538, 2147483648
    %v6645 = vxor.u32 %v6543, 2147483648
    %v6646 = vxor.u32 %v6548, 2147483648
    %v6647 = vxor.u32 %v6553, 2147483648
    %v6648 = vxor.u32 %v6558, 2147483648
    %v6649 = vxor.u32 %v6563, 2147483648
    %v6650 = vxor.u32 %v6568, 2147483648
    %v6651 = vxor.u32 %v6573, 2147483648
    %v6652 = vxor.u32 %v6578, 2147483648
    %v6653 = vxor.u32 %v6583, 2147483648
    %v6654 = vxor.u32 %v6588, 2147483648
    %v6655 = vxor.u32 %v6593, 2147483648
    %v6656 = vxor.u32 %v6598, 2147483648
    %v6657 = vxor.u32 %v6603, 2147483648
    %v6658 = vxor.u32 %v6608, 2147483648
    %v6659 = vxor.u32 %v6613, 2147483648
    %v6660 = vxor.u32 %v6618, 2147483648
    %v6661 = vxor.u32 %v6623, 2147483648
    %v6662 = vxor.u32 %v6628, 2147483648
    %v6663 = vmul.f32 %v6631, 1.442695
    %v6664 = vpow.pop %v6663
    %v6665 = vmul.f32 %v6632, 1.442695
    %v6666 = vpow.pop %v6665
    %v6667 = vmul.f32 %v6633, 1.442695
    %v6668 = vpow.pop %v6667
    %v6669 = vmul.f32 %v6634, 1.442695
    %v6670 = vpow.pop %v6669
    %v6671 = vmul.f32 %v6635, 1.442695
    %v6672 = vpow.pop %v6671
    %v6673 = vmul.f32 %v6636, 1.442695
    %v6674 = vpow.pop %v6673
    %v6675 = vmul.f32 %v6637, 1.442695
    %v6676 = vpow.pop %v6675
    %v6677 = vmul.f32 %v6638, 1.442695
    %v6678 = vpow.pop %v6677
    %v6679 = vmul.f32 %v6639, 1.442695
    %v6680 = vpow.pop %v6679
    %v6681 = vmul.f32 %v6640, 1.442695
    %v6682 = vpow.pop %v6681
    %v6683 = vmul.f32 %v6641, 1.442695
    %v6684 = vpow.pop %v6683
    %v6685 = vmul.f32 %v6642, 1.442695
    %v6686 = vpow.pop %v6685
    %v6687 = vmul.f32 %v6643, 1.442695
    %v6688 = vpow.pop %v6687
    %v6689 = vmul.f32 %v6644, 1.442695
    %v6690 = vpow.pop %v6689
    %v6691 = vmul.f32 %v6645, 1.442695
    %v6692 = vpow.pop %v6691
    %v6693 = vmul.f32 %v6646, 1.442695
    %v6694 = vpow.pop %v6693
    %v6695 = vmul.f32 %v6647, 1.442695
    %v6696 = vpow.pop %v6695
    %v6697 = vmul.f32 %v6648, 1.442695
    %v6698 = vpow.pop %v6697
    %v6699 = vmul.f32 %v6649, 1.442695
    %v6700 = vpow.pop %v6699
    %v6701 = vmul.f32 %v6650, 1.442695
    %v6702 = vpow.pop %v6701
    %v6703 = vmul.f32 %v6651, 1.442695
    %v6704 = vpow.pop %v6703
    %v6705 = vmul.f32 %v6652, 1.442695
    %v6706 = vpow.pop %v6705
    %v6707 = vmul.f32 %v6653, 1.442695
    %v6708 = vpow.pop %v6707
    %v6709 = vmul.f32 %v6654, 1.442695
    %v6710 = vpow.pop %v6709
    %v6711 = vmul.f32 %v6655, 1.442695
    %v6712 = vpow.pop %v6711
    %v6713 = vmul.f32 %v6656, 1.442695
    %v6714 = vpow.pop %v6713
    %v6715 = vmul.f32 %v6657, 1.442695
    %v6716 = vpow.pop %v6715
    %v6717 = vmul.f32 %v6658, 1.442695
    %v6718 = vpow.pop %v6717
    %v6719 = vmul.f32 %v6659, 1.442695
    %v6720 = vpow.pop %v6719
    %v6721 = vmul.f32 %v6660, 1.442695
    %v6722 = vpow.pop %v6721
    %v6723 = vmul.f32 %v6661, 1.442695
    %v6724 = vpow.pop %v6723
    %v6725 = vmul.f32 %v6662, 1.442695
    %v6726 = vpow.pop %v6725
    %v6727 = vadd.f32 %v6664, 1.0
    %v6728 = vadd.f32 %v6666, 1.0
    %v6729 = vadd.f32 %v6668, 1.0
    %v6730 = vadd.f32 %v6670, 1.0
    %v6731 = vadd.f32 %v6672, 1.0
    %v6732 = vadd.f32 %v6674, 1.0
    %v6733 = vadd.f32 %v6676, 1.0
    %v6734 = vadd.f32 %v6678, 1.0
    %v6735 = vadd.f32 %v6680, 1.0
    %v6736 = vadd.f32 %v6682, 1.0
    %v6737 = vadd.f32 %v6684, 1.0
    %v6738 = vadd.f32 %v6686, 1.0
    %v6739 = vadd.f32 %v6688, 1.0
    %v6740 = vadd.f32 %v6690, 1.0
    %v6741 = vadd.f32 %v6692, 1.0
    %v6742 = vadd.f32 %v6694, 1.0
    %v6743 = vadd.f32 %v6696, 1.0
    %v6744 = vadd.f32 %v6698, 1.0
    %v6745 = vadd.f32 %v6700, 1.0
    %v6746 = vadd.f32 %v6702, 1.0
    %v6747 = vadd.f32 %v6704, 1.0
    %v6748 = vadd.f32 %v6706, 1.0
    %v6749 = vadd.f32 %v6708, 1.0
    %v6750 = vadd.f32 %v6710, 1.0
    %v6751 = vadd.f32 %v6712, 1.0
    %v6752 = vadd.f32 %v6714, 1.0
    %v6753 = vadd.f32 %v6716, 1.0
    %v6754 = vadd.f32 %v6718, 1.0
    %v6755 = vadd.f32 %v6720, 1.0
    %v6756 = vadd.f32 %v6722, 1.0
    %v6757 = vadd.f32 %v6724, 1.0
    %v6758 = vadd.f32 %v6726, 1.0
    %v6759 = vrcp.pop %v6727
    %v6760 = vmul.f32 1.0, %v6759
    %v6761 = vrcp.pop %v6728
    %v6762 = vmul.f32 1.0, %v6761
    %v6763 = vrcp.pop %v6729
    %v6764 = vmul.f32 1.0, %v6763
    %v6765 = vrcp.pop %v6730
    %v6766 = vmul.f32 1.0, %v6765
    %v6767 = vrcp.pop %v6731
    %v6768 = vmul.f32 1.0, %v6767
    %v6769 = vrcp.pop %v6732
    %v6770 = vmul.f32 1.0, %v6769
    %v6771 = vrcp.pop %v6733
    %v6772 = vmul.f32 1.0, %v6771
    %v6773 = vrcp.pop %v6734
    %v6774 = vmul.f32 1.0, %v6773
    %v6775 = vrcp.pop %v6735
    %v6776 = vmul.f32 1.0, %v6775
    %v6777 = vrcp.pop %v6736
    %v6778 = vmul.f32 1.0, %v6777
    %v6779 = vrcp.pop %v6737
    %v6780 = vmul.f32 1.0, %v6779
    %v6781 = vrcp.pop %v6738
    %v6782 = vmul.f32 1.0, %v6781
    %v6783 = vrcp.pop %v6739
    %v6784 = vmul.f32 1.0, %v6783
    %v6785 = vrcp.pop %v6740
    %v6786 = vmul.f32 1.0, %v6785
    %v6787 = vrcp.pop %v6741
    %v6788 = vmul.f32 1.0, %v6787
    %v6789 = vrcp.pop %v6742
    %v6790 = vmul.f32 1.0, %v6789
    %v6791 = vrcp.pop %v6743
    %v6792 = vmul.f32 1.0, %v6791
    %v6793 = vrcp.pop %v6744
    %v6794 = vmul.f32 1.0, %v6793
    %v6795 = vrcp.pop %v6745
    %v6796 = vmul.f32 1.0, %v6795
    %v6797 = vrcp.pop %v6746
    %v6798 = vmul.f32 1.0, %v6797
    %v6799 = vrcp.pop %v6747
    %v6800 = vmul.f32 1.0, %v6799
    %v6801 = vrcp.pop %v6748
    %v6802 = vmul.f32 1.0, %v6801
    %v6803 = vrcp.pop %v6749
    %v6804 = vmul.f32 1.0, %v6803
    %v6805 = vrcp.pop %v6750
    %v6806 = vmul.f32 1.0, %v6805
    %v6807 = vrcp.pop %v6751
    %v6808 = vmul.f32 1.0, %v6807
    %v6809 = vrcp.pop %v6752
    %v6810 = vmul.f32 1.0, %v6809
    %v6811 = vrcp.pop %v6753
    %v6812 = vmul.f32 1.0, %v6811
    %v6813 = vrcp.pop %v6754
    %v6814 = vmul.f32 1.0, %v6813
    %v6815 = vrcp.pop %v6755
    %v6816 = vmul.f32 1.0, %v6815
    %v6817 = vrcp.pop %v6756
    %v6818 = vmul.f32 1.0, %v6817
    %v6819 = vrcp.pop %v6757
    %v6820 = vmul.f32 1.0, %v6819
    %v6821 = vrcp.pop %v6758
    %v6822 = vmul.f32 1.0, %v6821
    %v6823 = vsel %vm1330, %v6760, %v6473
    %v6824 = vsel %vm1330, %v6762, %v6478
    %v6825 = vsel %vm1330, %v6764, %v6483
    %v6826 = vsel %vm1330, %v6766, %v6488
    %v6827 = vsel %vm1330, %v6768, %v6493
    %v6828 = vsel %vm1330, %v6770, %v6498
    %v6829 = vsel %vm1330, %v6772, %v6503
    %v6830 = vsel %vm1330, %v6774, %v6508
    %v6831 = vsel %vm1330, %v6776, %v6513
    %v6832 = vsel %vm1330, %v6778, %v6518
    %v6833 = vsel %vm1330, %v6780, %v6523
    %v6834 = vsel %vm1330, %v6782, %v6528
    %v6835 = vsel %vm1330, %v6784, %v6533
    %v6836 = vsel %vm1330, %v6786, %v6538
    %v6837 = vsel %vm1330, %v6788, %v6543
    %v6838 = vsel %vm1330, %v6790, %v6548
    %v6839 = vsel %vm1330, %v6792, %v6553
    %v6840 = vsel %vm1330, %v6794, %v6558
    %v6841 = vsel %vm1330, %v6796, %v6563
    %v6842 = vsel %vm1330, %v6798, %v6568
    %v6843 = vsel %vm1330, %v6800, %v6573
    %v6844 = vsel %vm1330, %v6802, %v6578
    %v6845 = vsel %vm1330, %v6804, %v6583
    %v6846 = vsel %vm1330, %v6806, %v6588
    %v6847 = vsel %vm1330, %v6808, %v6593
    %v6848 = vsel %vm1330, %v6810, %v6598
    %v6849 = vsel %vm1330, %v6812, %v6603
    %v6850 = vsel %vm1330, %v6814, %v6608
    %v6851 = vsel %vm1330, %v6816, %v6613
    %v6852 = vsel %vm1330, %v6818, %v6618
    %v6853 = vsel %vm1330, %v6820, %v6623
    %v6854 = vsel %vm1330, %v6822, %v6628
    %v6855 = vld [vmem:[%s9] sm:$0xff]
    %v6856 = vld [vmem:[%s9 + $0x8] sm:$0xff]
    %v6857 = vld [vmem:[%s9 + $0x10] sm:$0xff]
    %v6858 = vld [vmem:[%s9 + $0x18] sm:$0xff]
    %v6859 = vld [vmem:[%s9 + $0x20] sm:$0xff]
    %v6860 = vld [vmem:[%s9 + $0x28] sm:$0xff]
    %v6861 = vld [vmem:[%s9 + $0x30] sm:$0xff]
    %v6862 = vld [vmem:[%s9 + $0x38] sm:$0xff]
    %v6863 = vld [vmem:[%s9 + $0x40] sm:$0xff]
    %v6864 = vld [vmem:[%s9 + $0x48] sm:$0xff]
    %v6865 = vld [vmem:[%s9 + $0x50] sm:$0xff]
    %v6866 = vld [vmem:[%s9 + $0x58] sm:$0xff]
    %v6867 = vld [vmem:[%s9 + $0x60] sm:$0xff]
    %v6868 = vld [vmem:[%s9 + $0x68] sm:$0xff]
    %v6869 = vld [vmem:[%s9 + $0x70] sm:$0xff]
    %v6870 = vld [vmem:[%s9 + $0x78] sm:$0xff]
    %v6871 = vld [vmem:[%s9 + $0x80] sm:$0xff]
    %v6872 = vld [vmem:[%s9 + $0x88] sm:$0xff]
    %v6873 = vld [vmem:[%s9 + $0x90] sm:$0xff]
    %v6874 = vld [vmem:[%s9 + $0x98] sm:$0xff]
    %v6875 = vld [vmem:[%s9 + $0xa0] sm:$0xff]
    %v6876 = vld [vmem:[%s9 + $0xa8] sm:$0xff]
    %v6877 = vld [vmem:[%s9 + $0xb0] sm:$0xff]
    %v6878 = vld [vmem:[%s9 + $0xb8] sm:$0xff]
    %v6879 = vld [vmem:[%s9 + $0xc0] sm:$0xff]
    %v6880 = vld [vmem:[%s9 + $0xc8] sm:$0xff]
    %v6881 = vld [vmem:[%s9 + $0xd0] sm:$0xff]
    %v6882 = vld [vmem:[%s9 + $0xd8] sm:$0xff]
    %v6883 = vld [vmem:[%s9 + $0xe0] sm:$0xff]
    %v6884 = vld [vmem:[%s9 + $0xe8] sm:$0xff]
    %v6885 = vld [vmem:[%s9 + $0xf0] sm:$0xff]
    %v6886 = vld [vmem:[%s9 + $0xf8] sm:$0xff]
    %v6887 = vld [vmem:[%s10] sm:$0xff]
    %v6888 = vld [vmem:[%s10 + $0x8] sm:$0xff]
    %v6889 = vld [vmem:[%s10 + $0x10] sm:$0xff]
    %v6890 = vld [vmem:[%s10 + $0x18] sm:$0xff]
    %v6891 = vld [vmem:[%s10 + $0x20] sm:$0xff]
    %v6892 = vld [vmem:[%s10 + $0x28] sm:$0xff]
    %v6893 = vld [vmem:[%s10 + $0x30] sm:$0xff]
    %v6894 = vld [vmem:[%s10 + $0x38] sm:$0xff]
    %v6895 = vld [vmem:[%s10 + $0x40] sm:$0xff]
    %v6896 = vld [vmem:[%s10 + $0x48] sm:$0xff]
    %v6897 = vld [vmem:[%s10 + $0x50] sm:$0xff]
    %v6898 = vld [vmem:[%s10 + $0x58] sm:$0xff]
    %v6899 = vld [vmem:[%s10 + $0x60] sm:$0xff]
    %v6900 = vld [vmem:[%s10 + $0x68] sm:$0xff]
    %v6901 = vld [vmem:[%s10 + $0x70] sm:$0xff]
    %v6902 = vld [vmem:[%s10 + $0x78] sm:$0xff]
    %v6903 = vld [vmem:[%s10 + $0x80] sm:$0xff]
    %v6904 = vld [vmem:[%s10 + $0x88] sm:$0xff]
    %v6905 = vld [vmem:[%s10 + $0x90] sm:$0xff]
    %v6906 = vld [vmem:[%s10 + $0x98] sm:$0xff]
    %v6907 = vld [vmem:[%s10 + $0xa0] sm:$0xff]
    %v6908 = vld [vmem:[%s10 + $0xa8] sm:$0xff]
    %v6909 = vld [vmem:[%s10 + $0xb0] sm:$0xff]
    %v6910 = vld [vmem:[%s10 + $0xb8] sm:$0xff]
    %v6911 = vld [vmem:[%s10 + $0xc0] sm:$0xff]
    %v6912 = vld [vmem:[%s10 + $0xc8] sm:$0xff]
    %v6913 = vld [vmem:[%s10 + $0xd0] sm:$0xff]
    %v6914 = vld [vmem:[%s10 + $0xd8] sm:$0xff]
    %v6915 = vld [vmem:[%s10 + $0xe0] sm:$0xff]
    %v6916 = vld [vmem:[%s10 + $0xe8] sm:$0xff]
    %v6917 = vld [vmem:[%s10 + $0xf0] sm:$0xff]
    %v6918 = vld [vmem:[%s10 + $0xf8] sm:$0xff]
    %v6919 = vmul.f32 %v6855, %v6887
    %v6920 = vmul.f32 %v6856, %v6888
    %v6921 = vmul.f32 %v6857, %v6889
    %v6922 = vmul.f32 %v6858, %v6890
    %v6923 = vmul.f32 %v6859, %v6891
    %v6924 = vmul.f32 %v6860, %v6892
    %v6925 = vmul.f32 %v6861, %v6893
    %v6926 = vmul.f32 %v6862, %v6894
    %v6927 = vmul.f32 %v6863, %v6895
    %v6928 = vmul.f32 %v6864, %v6896
    %v6929 = vmul.f32 %v6865, %v6897
    %v6930 = vmul.f32 %v6866, %v6898
    %v6931 = vmul.f32 %v6867, %v6899
    %v6932 = vmul.f32 %v6868, %v6900
    %v6933 = vmul.f32 %v6869, %v6901
    %v6934 = vmul.f32 %v6870, %v6902
    %v6935 = vmul.f32 %v6871, %v6903
    %v6936 = vmul.f32 %v6872, %v6904
    %v6937 = vmul.f32 %v6873, %v6905
    %v6938 = vmul.f32 %v6874, %v6906
    %v6939 = vmul.f32 %v6875, %v6907
    %v6940 = vmul.f32 %v6876, %v6908
    %v6941 = vmul.f32 %v6877, %v6909
    %v6942 = vmul.f32 %v6878, %v6910
    %v6943 = vmul.f32 %v6879, %v6911
    %v6944 = vmul.f32 %v6880, %v6912
    %v6945 = vmul.f32 %v6881, %v6913
    %v6946 = vmul.f32 %v6882, %v6914
    %v6947 = vmul.f32 %v6883, %v6915
    %v6948 = vmul.f32 %v6884, %v6916
    %v6949 = vmul.f32 %v6885, %v6917
    %v6950 = vmul.f32 %v6886, %v6918
    %v6951 = vmul.f32 %v6823, %v6887
    %v6952 = vmul.f32 %v6824, %v6888
    %v6953 = vmul.f32 %v6825, %v6889
    %v6954 = vmul.f32 %v6826, %v6890
    %v6955 = vmul.f32 %v6827, %v6891
    %v6956 = vmul.f32 %v6828, %v6892
    %v6957 = vmul.f32 %v6829, %v6893
    %v6958 = vmul.f32 %v6830, %v6894
    %v6959 = vmul.f32 %v6831, %v6895
    %v6960 = vmul.f32 %v6832, %v6896
    %v6961 = vmul.f32 %v6833, %v6897
    %v6962 = vmul.f32 %v6834, %v6898
    %v6963 = vmul.f32 %v6835, %v6899
    %v6964 = vmul.f32 %v6836, %v6900
    %v6965 = vmul.f32 %v6837, %v6901
    %v6966 = vmul.f32 %v6838, %v6902
    %v6967 = vmul.f32 %v6839, %v6903
    %v6968 = vmul.f32 %v6840, %v6904
    %v6969 = vmul.f32 %v6841, %v6905
    %v6970 = vmul.f32 %v6842, %v6906
    %v6971 = vmul.f32 %v6843, %v6907
    %v6972 = vmul.f32 %v6844, %v6908
    %v6973 = vmul.f32 %v6845, %v6909
    %v6974 = vmul.f32 %v6846, %v6910
    %v6975 = vmul.f32 %v6847, %v6911
    %v6976 = vmul.f32 %v6848, %v6912
    %v6977 = vmul.f32 %v6849, %v6913
    %v6978 = vmul.f32 %v6850, %v6914
    %v6979 = vmul.f32 %v6851, %v6915
    %v6980 = vmul.f32 %v6852, %v6916
    %v6981 = vmul.f32 %v6853, %v6917
    %v6982 = vmul.f32 %v6854, %v6918
    %v6983 = vsub.f32 %v6919, %v6951
    %v6984 = vsub.f32 %v6920, %v6952
    %v6985 = vsub.f32 %v6921, %v6953
    %v6986 = vsub.f32 %v6922, %v6954
    %v6987 = vsub.f32 %v6923, %v6955
    %v6988 = vsub.f32 %v6924, %v6956
    %v6989 = vsub.f32 %v6925, %v6957
    %v6990 = vsub.f32 %v6926, %v6958
    %v6991 = vsub.f32 %v6927, %v6959
    %v6992 = vsub.f32 %v6928, %v6960
    %v6993 = vsub.f32 %v6929, %v6961
    %v6994 = vsub.f32 %v6930, %v6962
    %v6995 = vsub.f32 %v6931, %v6963
    %v6996 = vsub.f32 %v6932, %v6964
    %v6997 = vsub.f32 %v6933, %v6965
    %v6998 = vsub.f32 %v6934, %v6966
    %v6999 = vsub.f32 %v6935, %v6967
    %v7000 = vsub.f32 %v6936, %v6968
    %v7001 = vsub.f32 %v6937, %v6969
    %v7002 = vsub.f32 %v6938, %v6970
    %v7003 = vsub.f32 %v6939, %v6971
    %v7004 = vsub.f32 %v6940, %v6972
    %v7005 = vsub.f32 %v6941, %v6973
    %v7006 = vsub.f32 %v6942, %v6974
    %v7007 = vsub.f32 %v6943, %v6975
    %v7008 = vsub.f32 %v6944, %v6976
    %v7009 = vsub.f32 %v6945, %v6977
    %v7010 = vsub.f32 %v6946, %v6978
    %v7011 = vsub.f32 %v6947, %v6979
    %v7012 = vsub.f32 %v6948, %v6980
    %v7013 = vsub.f32 %v6949, %v6981
    %v7014 = vsub.f32 %v6950, %v6982
    %v7015 = vand.u32 2147483647, %v6983
    %v7016 = vand.u32 2147483647, %v6984
    %v7017 = vand.u32 2147483647, %v6985
    %v7018 = vand.u32 2147483647, %v6986
    %v7019 = vand.u32 2147483647, %v6987
    %v7020 = vand.u32 2147483647, %v6988
    %v7021 = vand.u32 2147483647, %v6989
    %v7022 = vand.u32 2147483647, %v6990
    %v7023 = vand.u32 2147483647, %v6991
    %v7024 = vand.u32 2147483647, %v6992
    %v7025 = vand.u32 2147483647, %v6993
    %v7026 = vand.u32 2147483647, %v6994
    %v7027 = vand.u32 2147483647, %v6995
    %v7028 = vand.u32 2147483647, %v6996
    %v7029 = vand.u32 2147483647, %v6997
    %v7030 = vand.u32 2147483647, %v6998
    %v7031 = vand.u32 2147483647, %v6999
    %v7032 = vand.u32 2147483647, %v7000
    %v7033 = vand.u32 2147483647, %v7001
    %v7034 = vand.u32 2147483647, %v7002
    %v7035 = vand.u32 2147483647, %v7003
    %v7036 = vand.u32 2147483647, %v7004
    %v7037 = vand.u32 2147483647, %v7005
    %v7038 = vand.u32 2147483647, %v7006
    %v7039 = vand.u32 2147483647, %v7007
    %v7040 = vand.u32 2147483647, %v7008
    %v7041 = vand.u32 2147483647, %v7009
    %v7042 = vand.u32 2147483647, %v7010
    %v7043 = vand.u32 2147483647, %v7011
    %v7044 = vand.u32 2147483647, %v7012
    %v7045 = vand.u32 2147483647, %v7013
    %v7046 = vand.u32 2147483647, %v7014
    %vm7047 = vcmp.lt.f32.partialorder %v7015, 1.0
    %vm7048 = vcmp.lt.f32.partialorder %v7016, 1.0
    %vm7049 = vcmp.lt.f32.partialorder %v7017, 1.0
    %vm7050 = vcmp.lt.f32.partialorder %v7018, 1.0
    %vm7051 = vcmp.lt.f32.partialorder %v7019, 1.0
    %vm7052 = vcmp.lt.f32.partialorder %v7020, 1.0
    %vm7053 = vcmp.lt.f32.partialorder %v7021, 1.0
    %vm7054 = vcmp.lt.f32.partialorder %v7022, 1.0
    %vm7055 = vcmp.lt.f32.partialorder %v7023, 1.0
    %vm7056 = vcmp.lt.f32.partialorder %v7024, 1.0
    %vm7057 = vcmp.lt.f32.partialorder %v7025, 1.0
    %vm7058 = vcmp.lt.f32.partialorder %v7026, 1.0
    %vm7059 = vcmp.lt.f32.partialorder %v7027, 1.0
    %vm7060 = vcmp.lt.f32.partialorder %v7028, 1.0
    %vm7061 = vcmp.lt.f32.partialorder %v7029, 1.0
    %vm7062 = vcmp.lt.f32.partialorder %v7030, 1.0
    %vm7063 = vcmp.lt.f32.partialorder %v7031, 1.0
    %vm7064 = vcmp.lt.f32.partialorder %v7032, 1.0
    %vm7065 = vcmp.lt.f32.partialorder %v7033, 1.0
    %vm7066 = vcmp.lt.f32.partialorder %v7034, 1.0
    %vm7067 = vcmp.lt.f32.partialorder %v7035, 1.0
    %vm7068 = vcmp.lt.f32.partialorder %v7036, 1.0
    %vm7069 = vcmp.lt.f32.partialorder %v7037, 1.0
    %vm7070 = vcmp.lt.f32.partialorder %v7038, 1.0
    %vm7071 = vcmp.lt.f32.partialorder %v7039, 1.0
    %vm7072 = vcmp.lt.f32.partialorder %v7040, 1.0
    %vm7073 = vcmp.lt.f32.partialorder %v7041, 1.0
    %vm7074 = vcmp.lt.f32.partialorder %v7042, 1.0
    %vm7075 = vcmp.lt.f32.partialorder %v7043, 1.0
    %vm7076 = vcmp.lt.f32.partialorder %v7044, 1.0
    %vm7077 = vcmp.lt.f32.partialorder %v7045, 1.0
    %vm7078 = vcmp.lt.f32.partialorder %v7046, 1.0
    %v7079 = vmul.f32 %v6983, 0.5
    %v7080 = vmul.f32 %v6984, 0.5
    %v7081 = vmul.f32 %v6985, 0.5
    %v7082 = vmul.f32 %v6986, 0.5
    %v7083 = vmul.f32 %v6987, 0.5
    %v7084 = vmul.f32 %v6988, 0.5
    %v7085 = vmul.f32 %v6989, 0.5
    %v7086 = vmul.f32 %v6990, 0.5
    %v7087 = vmul.f32 %v6991, 0.5
    %v7088 = vmul.f32 %v6992, 0.5
    %v7089 = vmul.f32 %v6993, 0.5
    %v7090 = vmul.f32 %v6994, 0.5
    %v7091 = vmul.f32 %v6995, 0.5
    %v7092 = vmul.f32 %v6996, 0.5
    %v7093 = vmul.f32 %v6997, 0.5
    %v7094 = vmul.f32 %v6998, 0.5
    %v7095 = vmul.f32 %v6999, 0.5
    %v7096 = vmul.f32 %v7000, 0.5
    %v7097 = vmul.f32 %v7001, 0.5
    %v7098 = vmul.f32 %v7002, 0.5
    %v7099 = vmul.f32 %v7003, 0.5
    %v7100 = vmul.f32 %v7004, 0.5
    %v7101 = vmul.f32 %v7005, 0.5
    %v7102 = vmul.f32 %v7006, 0.5
    %v7103 = vmul.f32 %v7007, 0.5
    %v7104 = vmul.f32 %v7008, 0.5
    %v7105 = vmul.f32 %v7009, 0.5
    %v7106 = vmul.f32 %v7010, 0.5
    %v7107 = vmul.f32 %v7011, 0.5
    %v7108 = vmul.f32 %v7012, 0.5
    %v7109 = vmul.f32 %v7013, 0.5
    %v7110 = vmul.f32 %v7014, 0.5
    %v7111 = vmul.f32 %v7079, %v6983
    %v7112 = vmul.f32 %v7080, %v6984
    %v7113 = vmul.f32 %v7081, %v6985
    %v7114 = vmul.f32 %v7082, %v6986
    %v7115 = vmul.f32 %v7083, %v6987
    %v7116 = vmul.f32 %v7084, %v6988
    %v7117 = vmul.f32 %v7085, %v6989
    %v7118 = vmul.f32 %v7086, %v6990
    %v7119 = vmul.f32 %v7087, %v6991
    %v7120 = vmul.f32 %v7088, %v6992
    %v7121 = vmul.f32 %v7089, %v6993
    %v7122 = vmul.f32 %v7090, %v6994
    %v7123 = vmul.f32 %v7091, %v6995
    %v7124 = vmul.f32 %v7092, %v6996
    %v7125 = vmul.f32 %v7093, %v6997
    %v7126 = vmul.f32 %v7094, %v6998
    %v7127 = vmul.f32 %v7095, %v6999
    %v7128 = vmul.f32 %v7096, %v7000
    %v7129 = vmul.f32 %v7097, %v7001
    %v7130 = vmul.f32 %v7098, %v7002
    %v7131 = vmul.f32 %v7099, %v7003
    %v7132 = vmul.f32 %v7100, %v7004
    %v7133 = vmul.f32 %v7101, %v7005
    %v7134 = vmul.f32 %v7102, %v7006
    %v7135 = vmul.f32 %v7103, %v7007
    %v7136 = vmul.f32 %v7104, %v7008
    %v7137 = vmul.f32 %v7105, %v7009
    %v7138 = vmul.f32 %v7106, %v7010
    %v7139 = vmul.f32 %v7107, %v7011
    %v7140 = vmul.f32 %v7108, %v7012
    %v7141 = vmul.f32 %v7109, %v7013
    %v7142 = vmul.f32 %v7110, %v7014
    %v7143 = vsub.f32 %v7015, 0.5
    %v7144 = vsub.f32 %v7016, 0.5
    %v7145 = vsub.f32 %v7017, 0.5
    %v7146 = vsub.f32 %v7018, 0.5
    %v7147 = vsub.f32 %v7019, 0.5
    %v7148 = vsub.f32 %v7020, 0.5
    %v7149 = vsub.f32 %v7021, 0.5
    %v7150 = vsub.f32 %v7022, 0.5
    %v7151 = vsub.f32 %v7023, 0.5
    %v7152 = vsub.f32 %v7024, 0.5
    %v7153 = vsub.f32 %v7025, 0.5
    %v7154 = vsub.f32 %v7026, 0.5
    %v7155 = vsub.f32 %v7027, 0.5
    %v7156 = vsub.f32 %v7028, 0.5
    %v7157 = vsub.f32 %v7029, 0.5
    %v7158 = vsub.f32 %v7030, 0.5
    %v7159 = vsub.f32 %v7031, 0.5
    %v7160 = vsub.f32 %v7032, 0.5
    %v7161 = vsub.f32 %v7033, 0.5
    %v7162 = vsub.f32 %v7034, 0.5
    %v7163 = vsub.f32 %v7035, 0.5
    %v7164 = vsub.f32 %v7036, 0.5
    %v7165 = vsub.f32 %v7037, 0.5
    %v7166 = vsub.f32 %v7038, 0.5
    %v7167 = vsub.f32 %v7039, 0.5
    %v7168 = vsub.f32 %v7040, 0.5
    %v7169 = vsub.f32 %v7041, 0.5
    %v7170 = vsub.f32 %v7042, 0.5
    %v7171 = vsub.f32 %v7043, 0.5
    %v7172 = vsub.f32 %v7044, 0.5
    %v7173 = vsub.f32 %v7045, 0.5
    %v7174 = vsub.f32 %v7046, 0.5
    %v7175 = vsel %vm7047, %v7111, %v7143
    %v7176 = vsel %vm7048, %v7112, %v7144
    %v7177 = vsel %vm7049, %v7113, %v7145
    %v7178 = vsel %vm7050, %v7114, %v7146
    %v7179 = vsel %vm7051, %v7115, %v7147
    %v7180 = vsel %vm7052, %v7116, %v7148
    %v7181 = vsel %vm7053, %v7117, %v7149
    %v7182 = vsel %vm7054, %v7118, %v7150
    %v7183 = vsel %vm7055, %v7119, %v7151
    %v7184 = vsel %vm7056, %v7120, %v7152
    %v7185 = vsel %vm7057, %v7121, %v7153
    %v7186 = vsel %vm7058, %v7122, %v7154
    %v7187 = vsel %vm7059, %v7123, %v7155
    %v7188 = vsel %vm7060, %v7124, %v7156
    %v7189 = vsel %vm7061, %v7125, %v7157
    %v7190 = vsel %vm7062, %v7126, %v7158
    %v7191 = vsel %vm7063, %v7127, %v7159
    %v7192 = vsel %vm7064, %v7128, %v7160
    %v7193 = vsel %vm7065, %v7129, %v7161
    %v7194 = vsel %vm7066, %v7130, %v7162
    %v7195 = vsel %vm7067, %v7131, %v7163
    %v7196 = vsel %vm7068, %v7132, %v7164
    %v7197 = vsel %vm7069, %v7133, %v7165
    %v7198 = vsel %vm7070, %v7134, %v7166
    %v7199 = vsel %vm7071, %v7135, %v7167
    %v7200 = vsel %vm7072, %v7136, %v7168
    %v7201 = vsel %vm7073, %v7137, %v7169
    %v7202 = vsel %vm7074, %v7138, %v7170
    %v7203 = vsel %vm7075, %v7139, %v7171
    %v7204 = vsel %vm7076, %v7140, %v7172
    %v7205 = vsel %vm7077, %v7141, %v7173
    %v7206 = vsel %vm7078, %v7142, %v7174
    %v7207 = vsel %vm1330, %v7175, 0.0
    %v7208 = vsel %vm1330, %v7176, 0.0
    %v7209 = vsel %vm1330, %v7177, 0.0
    %v7210 = vsel %vm1330, %v7178, 0.0
    %v7211 = vsel %vm1330, %v7179, 0.0
    %v7212 = vsel %vm1330, %v7180, 0.0
    %v7213 = vsel %vm1330, %v7181, 0.0
    %v7214 = vsel %vm1330, %v7182, 0.0
    %v7215 = vsel %vm1330, %v7183, 0.0
    %v7216 = vsel %vm1330, %v7184, 0.0
    %v7217 = vsel %vm1330, %v7185, 0.0
    %v7218 = vsel %vm1330, %v7186, 0.0
    %v7219 = vsel %vm1330, %v7187, 0.0
    %v7220 = vsel %vm1330, %v7188, 0.0
    %v7221 = vsel %vm1330, %v7189, 0.0
    %v7222 = vsel %vm1330, %v7190, 0.0
    %v7223 = vsel %vm1330, %v7191, 0.0
    %v7224 = vsel %vm1330, %v7192, 0.0
    %v7225 = vsel %vm1330, %v7193, 0.0
    %v7226 = vsel %vm1330, %v7194, 0.0
    %v7227 = vsel %vm1330, %v7195, 0.0
    %v7228 = vsel %vm1330, %v7196, 0.0
    %v7229 = vsel %vm1330, %v7197, 0.0
    %v7230 = vsel %vm1330, %v7198, 0.0
    %v7231 = vsel %vm1330, %v7199, 0.0
    %v7232 = vsel %vm1330, %v7200, 0.0
    %v7233 = vsel %vm1330, %v7201, 0.0
    %v7234 = vsel %vm1330, %v7202, 0.0
    %v7235 = vsel %vm1330, %v7203, 0.0
    %v7236 = vsel %vm1330, %v7204, 0.0
    %v7237 = vsel %vm1330, %v7205, 0.0
    %v7238 = vsel %vm1330, %v7206, 0.0
    %v7239 = vsel %vm64, %v7207, 0.0
    %v7240 = vsel %vm64, %v7208, 0.0
    %v7241 = vadd.f32 %v7239, %v7240
    %v7242 = vsel %vm64, %v7209, 0.0
    %v7243 = vadd.f32 %v7241, %v7242
    %v7244 = vsel %vm64, %v7210, 0.0
    %v7245 = vadd.f32 %v7243, %v7244
    %v7246 = vsel %vm64, %v7211, 0.0
    %v7247 = vadd.f32 %v7245, %v7246
    %v7248 = vsel %vm64, %v7212, 0.0
    %v7249 = vadd.f32 %v7247, %v7248
    %v7250 = vsel %vm64, %v7213, 0.0
    %v7251 = vadd.f32 %v7249, %v7250
    %v7252 = vsel %vm64, %v7214, 0.0
    %v7253 = vadd.f32 %v7251, %v7252
    %v7254 = vsel %vm64, %v7215, 0.0
    %v7255 = vadd.f32 %v7253, %v7254
    %v7256 = vsel %vm64, %v7216, 0.0
    %v7257 = vadd.f32 %v7255, %v7256
    %v7258 = vsel %vm64, %v7217, 0.0
    %v7259 = vadd.f32 %v7257, %v7258
    %v7260 = vsel %vm64, %v7218, 0.0
    %v7261 = vadd.f32 %v7259, %v7260
    %v7262 = vsel %vm64, %v7219, 0.0
    %v7263 = vadd.f32 %v7261, %v7262
    %v7264 = vsel %vm64, %v7220, 0.0
    %v7265 = vadd.f32 %v7263, %v7264
    %v7266 = vsel %vm64, %v7221, 0.0
    %v7267 = vadd.f32 %v7265, %v7266
    %v7268 = vsel %vm64, %v7222, 0.0
    %v7269 = vadd.f32 %v7267, %v7268
    %v7270 = vsel %vm64, %v7223, 0.0
    %v7271 = vadd.f32 %v7269, %v7270
    %v7272 = vsel %vm64, %v7224, 0.0
    %v7273 = vadd.f32 %v7271, %v7272
    %v7274 = vsel %vm64, %v7225, 0.0
    %v7275 = vadd.f32 %v7273, %v7274
    %v7276 = vsel %vm64, %v7226, 0.0
    %v7277 = vadd.f32 %v7275, %v7276
    %v7278 = vsel %vm64, %v7227, 0.0
    %v7279 = vadd.f32 %v7277, %v7278
    %v7280 = vsel %vm64, %v7228, 0.0
    %v7281 = vadd.f32 %v7279, %v7280
    %v7282 = vsel %vm64, %v7229, 0.0
    %v7283 = vadd.f32 %v7281, %v7282
    %v7284 = vsel %vm64, %v7230, 0.0
    %v7285 = vadd.f32 %v7283, %v7284
    %v7286 = vsel %vm64, %v7231, 0.0
    %v7287 = vadd.f32 %v7285, %v7286
    %v7288 = vsel %vm64, %v7232, 0.0
    %v7289 = vadd.f32 %v7287, %v7288
    %v7290 = vsel %vm64, %v7233, 0.0
    %v7291 = vadd.f32 %v7289, %v7290
    %v7292 = vsel %vm64, %v7234, 0.0
    %v7293 = vadd.f32 %v7291, %v7292
    %v7294 = vsel %vm64, %v7235, 0.0
    %v7295 = vadd.f32 %v7293, %v7294
    %v7296 = vsel %vm64, %v7236, 0.0
    %v7297 = vadd.f32 %v7295, %v7296
    %v7298 = vsel %vm64, %v7237, 0.0
    %v7299 = vadd.f32 %v7297, %v7298
    %v7300 = vsel %vm64, %v7238, 0.0
    %v7301 = vadd.f32 %v7299, %v7300
    %7302 = vadd.xlane.f32.xlu0 %v7301
    %v7303 = vpop.xlane.xlu0 %7302
    %v7304 = vrot.slane %v7303, 4
    %v7305 = vadd.f32 %v7303, %v7304
    %v7306 = vrot.slane %v7305, 2
    %v7307 = vadd.f32 %v7305, %v7306
    %v7308 = vrot.slane %v7307, 1
    %v7309 = vadd.f32 %v7307, %v7308
    %s7310 = vtos %v7309
    %v7311 = vsel %vm1330, 0.0, %v7175
    %v7312 = vsel %vm1330, 0.0, %v7176
    %v7313 = vsel %vm1330, 0.0, %v7177
    %v7314 = vsel %vm1330, 0.0, %v7178
    %v7315 = vsel %vm1330, 0.0, %v7179
    %v7316 = vsel %vm1330, 0.0, %v7180
    %v7317 = vsel %vm1330, 0.0, %v7181
    %v7318 = vsel %vm1330, 0.0, %v7182
    %v7319 = vsel %vm1330, 0.0, %v7183
    %v7320 = vsel %vm1330, 0.0, %v7184
    %v7321 = vsel %vm1330, 0.0, %v7185
    %v7322 = vsel %vm1330, 0.0, %v7186
    %v7323 = vsel %vm1330, 0.0, %v7187
    %v7324 = vsel %vm1330, 0.0, %v7188
    %v7325 = vsel %vm1330, 0.0, %v7189
    %v7326 = vsel %vm1330, 0.0, %v7190
    %v7327 = vsel %vm1330, 0.0, %v7191
    %v7328 = vsel %vm1330, 0.0, %v7192
    %v7329 = vsel %vm1330, 0.0, %v7193
    %v7330 = vsel %vm1330, 0.0, %v7194
    %v7331 = vsel %vm1330, 0.0, %v7195
    %v7332 = vsel %vm1330, 0.0, %v7196
    %v7333 = vsel %vm1330, 0.0, %v7197
    %v7334 = vsel %vm1330, 0.0, %v7198
    %v7335 = vsel %vm1330, 0.0, %v7199
    %v7336 = vsel %vm1330, 0.0, %v7200
    %v7337 = vsel %vm1330, 0.0, %v7201
    %v7338 = vsel %vm1330, 0.0, %v7202
    %v7339 = vsel %vm1330, 0.0, %v7203
    %v7340 = vsel %vm1330, 0.0, %v7204
    %v7341 = vsel %vm1330, 0.0, %v7205
    %v7342 = vsel %vm1330, 0.0, %v7206
    %v7343 = vsel %vm64, %v7311, 0.0
    %v7344 = vsel %vm64, %v7312, 0.0
    %v7345 = vadd.f32 %v7343, %v7344
    %v7346 = vsel %vm64, %v7313, 0.0
    %v7347 = vadd.f32 %v7345, %v7346
    %v7348 = vsel %vm64, %v7314, 0.0
    %v7349 = vadd.f32 %v7347, %v7348
    %v7350 = vsel %vm64, %v7315, 0.0
    %v7351 = vadd.f32 %v7349, %v7350
    %v7352 = vsel %vm64, %v7316, 0.0
    %v7353 = vadd.f32 %v7351, %v7352
    %v7354 = vsel %vm64, %v7317, 0.0
    %v7355 = vadd.f32 %v7353, %v7354
    %v7356 = vsel %vm64, %v7318, 0.0
    %v7357 = vadd.f32 %v7355, %v7356
    %v7358 = vsel %vm64, %v7319, 0.0
    %v7359 = vadd.f32 %v7357, %v7358
    %v7360 = vsel %vm64, %v7320, 0.0
    %v7361 = vadd.f32 %v7359, %v7360
    %v7362 = vsel %vm64, %v7321, 0.0
    %v7363 = vadd.f32 %v7361, %v7362
    %v7364 = vsel %vm64, %v7322, 0.0
    %v7365 = vadd.f32 %v7363, %v7364
    %v7366 = vsel %vm64, %v7323, 0.0
    %v7367 = vadd.f32 %v7365, %v7366
    %v7368 = vsel %vm64, %v7324, 0.0
    %v7369 = vadd.f32 %v7367, %v7368
    %v7370 = vsel %vm64, %v7325, 0.0
    %v7371 = vadd.f32 %v7369, %v7370
    %v7372 = vsel %vm64, %v7326, 0.0
    %v7373 = vadd.f32 %v7371, %v7372
    %v7374 = vsel %vm64, %v7327, 0.0
    %v7375 = vadd.f32 %v7373, %v7374
    %v7376 = vsel %vm64, %v7328, 0.0
    %v7377 = vadd.f32 %v7375, %v7376
    %v7378 = vsel %vm64, %v7329, 0.0
    %v7379 = vadd.f32 %v7377, %v7378
    %v7380 = vsel %vm64, %v7330, 0.0
    %v7381 = vadd.f32 %v7379, %v7380
    %v7382 = vsel %vm64, %v7331, 0.0
    %v7383 = vadd.f32 %v7381, %v7382
    %v7384 = vsel %vm64, %v7332, 0.0
    %v7385 = vadd.f32 %v7383, %v7384
    %v7386 = vsel %vm64, %v7333, 0.0
    %v7387 = vadd.f32 %v7385, %v7386
    %v7388 = vsel %vm64, %v7334, 0.0
    %v7389 = vadd.f32 %v7387, %v7388
    %v7390 = vsel %vm64, %v7335, 0.0
    %v7391 = vadd.f32 %v7389, %v7390
    %v7392 = vsel %vm64, %v7336, 0.0
    %v7393 = vadd.f32 %v7391, %v7392
    %v7394 = vsel %vm64, %v7337, 0.0
    %v7395 = vadd.f32 %v7393, %v7394
    %v7396 = vsel %vm64, %v7338, 0.0
    %v7397 = vadd.f32 %v7395, %v7396
    %v7398 = vsel %vm64, %v7339, 0.0
    %v7399 = vadd.f32 %v7397, %v7398
    %v7400 = vsel %vm64, %v7340, 0.0
    %v7401 = vadd.f32 %v7399, %v7400
    %v7402 = vsel %vm64, %v7341, 0.0
    %v7403 = vadd.f32 %v7401, %v7402
    %v7404 = vsel %vm64, %v7342, 0.0
    %v7405 = vadd.f32 %v7403, %v7404
    %7406 = vadd.xlane.f32.xlu0 %v7405
    %v7407 = vpop.xlane.xlu0 %7406
    %v7408 = vrot.slane %v7407, 4
    %v7409 = vadd.f32 %v7407, %v7408
    %v7410 = vrot.slane %v7409, 2
    %v7411 = vadd.f32 %v7409, %v7410
    %v7412 = vrot.slane %v7411, 1
    %v7413 = vadd.f32 %v7411, %v7412
    %s7414 = vtos %v7413
    %v7415 = vrcp.pop 64.0
    %s7416 = vtos %v7415
    %s7417 = smul.f32 %s1514, %s7416
    %v7418 = vrcp.pop 128.0
    %s7419 = vtos %v7418
    %s7420 = smul.f32 %s1546, %s7419
    %v7421 = vrcp.pop 64.0
    %s7422 = vtos %v7421
    %s7423 = smul.f32 %s1619, %s7422
    %s7424 = smul.f32 %s7423, 0.1
    %v7425 = vrcp.pop 256.0
    %s7426 = vtos %v7425
    %s7427 = smul.f32 %s7310, %s7426
    %v7428 = vrcp.pop 512.0
    %s7429 = vtos %v7428
    %s7430 = smul.f32 %s7414, %s7429
    %s7431 = sadd.f32 %s7417, %s7420
    %s7432 = sadd.f32 %s7431, %s7424
    %s7433 = sadd.f32 %s7432, %s7427
    %s7434 = sadd.f32 %s7433, %s7430
    %s7435 = scalar_lea.smem [#allocation2], 0
    %7436 = sst [smem:[%s7435]] %s7434
    %s7437 = scalar_lea.smem [#allocation2], 1
    %7438 = sst [smem:[%s7437]] %s7417
    %s7439 = scalar_lea.smem [#allocation2], 2
    %7440 = sst [smem:[%s7439]] %s7420
    %s7441 = scalar_lea.smem [#allocation2], 3
    %7442 = sst [smem:[%s7441]] %s7424
    %s7443 = scalar_lea.smem [#allocation2], 4
    %7444 = sst [smem:[%s7443]] %s7427
    %s7445 = scalar_lea.smem [#allocation2], 5
    %7446 = sst [smem:[%s7445]] %s7430
    // Predicated region
    $region50: #{tscnet_train_by_gt.1} parent=1 // pred_check
      _
    $region51: #{tscnet_train_by_gt.1} parent=1 // pred_check_branch
      %7448 = sbr.rel (0) target = $region53
    $region52: #{tscnet_train_by_gt.1} parent=1 // pred_region
      %s7450 = ssub.s32 16, 16
      %7451 = vsyncadd [#allocation3], %s7450
      %s7453 = sshll.u32 %s12, 4
      %s7454 = int_to_ptr.vmem [resolvable:$true] %s7453
      %7456 = dma.smem_to_vmem [#allocation2], 16, %s7454, [#allocation3]
    $region53: #{tscnet_train_by_gt.1} parent=1 // pred_fallthru
      _
    // Predicated region
    $region54: #{tscnet_train_by_gt.1} parent=1 // pred_check
      _
    $region55: #{tscnet_train_by_gt.1} parent=1 // pred_check_branch
      %7458 = sbr.rel (0) target = $region57
    $region56: #{tscnet_train_by_gt.1} parent=1 // pred_region
      %7459 = dma.done [#allocation3], 16
    $region57: #{tscnet_train_by_gt.1} parent=1 // pred_fallthru
      _
    %7460 = sfence
    %7461 = vsyncpa [#allocation3], 1

</llo_original>
